<compile_context>
chip_gen: v7x
topology: tpu7x:2x2x1
jax: 0.10.0
libtpu: 0.0.40
codegen_flags: <defaults>
</compile_context>

<pallas_src>
import functools

import jax
import jax.numpy as jnp
from jax import lax
from jax.experimental import pallas as pl
from jax.experimental.pallas import tpu as pltpu

_VMEM = pl.BlockSpec(memory_space=pltpu.MemorySpace.VMEM)
_SMEM = pl.BlockSpec(memory_space=pltpu.MemorySpace.SMEM)
_NEG_INF = -1e9


# ----------------------------------------------------------------------------
# In-kernel helpers (traced inline, everything stays in VMEM / vregs)
# ----------------------------------------------------------------------------
def _gat(x, adj_bias, w_cat, a_pack, *, heads, f_out):
    """One fused GraphAttentionLayer on VMEM-resident values.

    x:        [N, F_in]
    adj_bias: [N, N]                  0 where edge, -1e9 where non-edge
    w_cat:    [F_in, (H+1)*F_out]     concat([W_heads, W_res], axis=1)
    a_pack:   [H*F_out, 2H]           block-diagonal packing of (a_src, a_dst)
    returns:  [N, F_out]
    """
    n = x.shape[0]
    # merged projection: heads + residual in a single MXU push
    proj = jnp.dot(x, w_cat, preferred_element_type=jnp.float32)
    h_flat = proj[:, : heads * f_out]                        # [N, H*F_out]
    res = proj[:, heads * f_out:]                            # [N, F_out]
    # all-heads src/dst attention logits with ONE matmul
    f = jnp.dot(h_flat, a_pack, preferred_element_type=jnp.float32)   # [N, 2H]
    # hoisted: a single XLU transpose for ALL heads' dst logits
    f_dst_t = jnp.transpose(f[:, heads:])                    # [H, N]

    acc = jnp.zeros((n, f_out), jnp.float32)
    for hh in range(heads):                                  # static unroll, H is tiny
        hd = h_flat[:, hh * f_out:(hh + 1) * f_out]          # [N, F_out]
        e = f[:, hh:hh + 1] + f_dst_t[hh:hh + 1, :]          # [N, N]
        e = jnp.where(e > 0, e, 0.2 * e) + adj_bias          # LeakyReLU(0.2) + mask bias
        e = e - jnp.max(e, axis=1, keepdims=True)
        p = jnp.exp(e)
        alpha = p / jnp.sum(p, axis=1, keepdims=True)        # masked softmax
        acc = acc + jnp.dot(alpha, hd, preferred_element_type=jnp.float32)

    out = acc * (1.0 / heads) + res
    # ELU. exp(min(x,0))-1 avoids inf in the unselected branch.
    neg = jnp.minimum(out, 0.0)
    return jnp.where(out > 0, out, jnp.exp(neg) - 1.0)


def _netsim(x, prefs, *, heads, hid, end):
    """One Netsim forward on a VMEM-resident input x: [N, F_in] -> [N, end]."""
    (dat_ref, bias_ref,
     w1_ref, a1_ref, w1d_ref, a1d_ref,
     w2_ref, a2_ref, w2d_ref, a2d_ref,
     fc1w_ref, fc1b_ref, fc2w_ref, fc2b_ref,
     convw_ref, convb_ref) = prefs

    bias = bias_ref[...]
    x1 = _gat(x, bias, w1_ref[...], a1_ref[...], heads=heads, f_out=hid)
    xdw1 = _gat(dat_ref[...], bias, w1d_ref[...], a1d_ref[...], heads=heads, f_out=hid)
    x2 = _gat(x1, bias, w2_ref[...], a2_ref[...], heads=heads, f_out=end)
    xdw2 = _gat(xdw1, bias, w2d_ref[...], a2d_ref[...], heads=heads, f_out=end)

    # SE channel attention + 1x1 conv, per channel on lane-dense [N, end] tiles.
    # torch channel order: cat((x1, x2, xdw1, xdw2), 1).t().view(1, 4, end, N)
    chans = (x1, x2, xdw1, xdw2)

    # global average pool as a single [1,4] vector, then two small MXU matmuls
    means = jnp.concatenate(
        [jnp.mean(jnp.mean(c, axis=1, keepdims=True), axis=0, keepdims=True)
         for c in chans], axis=1)                            # [1, 4]
    z1 = jnp.dot(means, fc1w_ref[...],
                 preferred_element_type=jnp.float32) + fc1b_ref[...]   # [1, 10*l]
    z2 = jnp.dot(z1, fc2w_ref[...],
                 preferred_element_type=jnp.float32) + fc2b_ref[...]   # [1, 4]
    gate = jax.nn.sigmoid(z2)                                # [1, 4]

    # y = sum_c conv_w[c] * relu(gate[c] * X_c) + conv_b   (1x1 Conv2d)
    y = jnp.zeros((x.shape[0], end), jnp.float32)
    for c in range(4):
        y = y + convw_ref[c] * jnp.maximum(gate[0, c] * chans[c], 0.0)
    # TODO(synk): nn.Dropout(0.55) is identity in eval mode.
    return y + convb_ref[0]


# ----------------------------------------------------------------------------
# ONE fused kernel: 3x Netsim + attention-combine + inner-product decode
# ----------------------------------------------------------------------------
def _model_kernel(*refs, heads, hid, end, num_r):
    x_ref, s1_ref, s2_ref, att_ref = refs[0:4]
    pm, pm1, pm2 = refs[4:20], refs[20:36], refs[36:52]
    o_ref = refs[-1]

    ex = _netsim(x_ref[...], pm, heads=heads, hid=hid, end=end)     # [Nx,  end]
    e1 = _netsim(s1_ref[...], pm1, heads=heads, hid=hid, end=end)   # [Nr,  end]
    e2 = _netsim(s2_ref[...], pm2, heads=heads, hid=hid, end=end)   # [Nd,  end]

    a0 = att_ref[0]                                                 # SMEM scalars
    a1 = att_ref[1]
    r = a0 * ex[:num_r, :] + a1 * e1                                # embd[:num_r]
    d = a0 * ex[num_r:, :] + a1 * e2                                # embd[num_r:]
    # contract on the last dim of both operands -> no explicit transpose of d
    logits = lax.dot_general(r, d, (((1,), (1,)), ((), ())),
                             preferred_element_type=jnp.float32)
    o_ref[...] = jax.nn.sigmoid(logits)


def _layer_dims(layer):
    heads = layer["a"].shape[1] // 2
    f_out = layer["a"].shape[0] // heads
    return heads, f_out


def _netsim_inputs(p):
    return [p["dat"], p["adj_bias"],
            p["conv1"]["w"], p["conv1"]["a"],
            p["conv1_dw"]["w"], p["conv1_dw"]["a"],
            p["conv2"]["w"], p["conv2"]["a"],
            p["conv2_dw"]["w"], p["conv2_dw"]["a"],
            p["fc1_w"], p["fc1_b"], p["fc2_w"], p["fc2_b"],
            p["conv_w"], p["conv_b"]]


_NETSIM_SPECS = [_VMEM] * 14 + [_SMEM, _SMEM]


def model_forward(x, sim1, sim2, params):
    heads, hid = _layer_dims(params["m"]["conv1"])
    _, end = _layer_dims(params["m"]["conv2"])
    num_r = sim1.shape[0]
    n_x = x.shape[0]

    kernel = functools.partial(_model_kernel, heads=heads, hid=hid, end=end,
                               num_r=num_r)
    inputs = ([x, sim1, sim2, params["att"]]
              + _netsim_inputs(params["m"])
              + _netsim_inputs(params["m1"])
              + _netsim_inputs(params["m2"]))
    in_specs = [_VMEM, _VMEM, _VMEM, _SMEM] + _NETSIM_SPECS * 3
    # TODO(synk): at real graph sizes the three independent Netsims could be
    # sharded across the two v7x TensorCores and the O(N^2) attention tiled
    # flash-style; at these toy sizes a single launch dominates.
    return pl.pallas_call(
        kernel,
        out_shape=jax.ShapeDtypeStruct((num_r, n_x - num_r), jnp.float32),
        in_specs=in_specs,
        out_specs=_VMEM,
    )(*inputs)


# ----------------------------------------------------------------------------
# Deterministic parameter initialization (weights pre-packed for the kernel)
# ----------------------------------------------------------------------------
def _pack_attention(a_src, a_dst):
    """Block-diagonal packing: h_flat @ A -> [N, 2H] = [f_src | f_dst]."""
    heads, f = a_src.shape
    eye = jnp.eye(heads, dtype=jnp.float32)
    src = (a_src[:, :, None] * eye[:, None, :]).reshape(heads * f, heads)
    dst = (a_dst[:, :, None] * eye[:, None, :]).reshape(heads * f, heads)
    return jnp.concatenate([src, dst], axis=1)               # [H*F, 2H]


def init_gat(key, f_in, f_out, heads):
    k1, k2, k3, k4 = jax.random.split(key, 4)
    s = 0.2
    w = s * jax.random.normal(k1, (f_in, heads * f_out), jnp.float32)
    a_src = s * jax.random.normal(k2, (heads, f_out), jnp.float32)
    a_dst = s * jax.random.normal(k3, (heads, f_out), jnp.float32)
    w_res = s * jax.random.normal(k4, (f_in, f_out), jnp.float32)
    return {"w": jnp.concatenate([w, w_res], axis=1),        # [F_in, (H+1)*F_out]
            "a": _pack_attention(a_src, a_dst)}              # [H*F_out, 2H]


def init_netsim(key, n_nodes, f_in, hid, num_walk, end, heads):
    keys = jax.random.split(key, 9)
    l = 2
    adj = (jax.random.uniform(keys[0], (n_nodes, n_nodes)) < 0.3).astype(jnp.float32)
    adj = jnp.clip(adj + jnp.eye(n_nodes, dtype=jnp.float32), 0.0, 1.0)
    return {
        # additive mask bias, hoisted out of the per-head loop
        "adj_bias": jnp.where(adj > 0, 0.0, _NEG_INF).astype(jnp.float32),
        "dat": jax.random.normal(keys[1], (n_nodes, num_walk), jnp.float32),
        "conv1": init_gat(keys[2], f_in, hid, heads),
        "conv2": init_gat(keys[3], hid, end, heads),
        "conv1_dw": init_gat(keys[4], num_walk, hid, heads),
        "conv2_dw": init_gat(keys[5], hid, end, heads),
        "fc1_w": 0.2 * jax.random.normal(keys[6], (2 * l, 10 * l), jnp.float32),
        "fc1_b": jnp.zeros((1, 10 * l), jnp.float32),
        "fc2_w": 0.2 * jax.random.normal(keys[7], (10 * l, 2 * l), jnp.float32),
        "fc2_b": jnp.zeros((1, 2 * l), jnp.float32),
        "conv_w": 0.2 * jax.random.normal(keys[8], (2 * l,), jnp.float32),   # SMEM
        "conv_b": jnp.zeros((1,), jnp.float32),                             # SMEM
    }


if __name__ == "__main__":
    key = jax.random.PRNGKey(0)
    # small shapes consistent with the module:
    N_X, F_X = 16, 16          # x
    N1, F1 = 8, 8              # sim1  (N_X must equal N1 + N2 for the embd add)
    N2, F2 = 8, 8              # sim2
    HID = END = 8              # hid_features == end_embd (required by Netsim view)
    HEADS = 2
    NUM_WALK = 16

    k_in, k_m, k_m1, k_m2, k_att = jax.random.split(key, 5)
    kx, ks1, ks2 = jax.random.split(k_in, 3)
    x = jax.random.normal(kx, (N_X, F_X), jnp.float32)
    sim1 = jax.random.normal(ks1, (N1, F1), jnp.float32)
    sim2 = jax.random.normal(ks2, (N2, F2), jnp.float32)

    params = {
        "m": init_netsim(k_m, N_X, F_X, HID, NUM_WALK, END, HEADS),
        "m1": init_netsim(k_m1, N1, F1, HID, NUM_WALK, END, HEADS),
        "m2": init_netsim(k_m2, N2, F2, HID, NUM_WALK, END, HEADS),
        "att": jax.random.uniform(k_att, (2,), jnp.float32),
    }

    fwd = jax.jit(model_forward)
    out = jax.block_until_ready(fwd(x, sim1, sim2, params))
    assert out.shape == (N1, N_X - N1), out.shape
    assert bool(jnp.all(jnp.isfinite(out)))
    print("KERNEL_OK")
</pallas_src>

<mosaic_0001>
module attributes {stable_mosaic.version = 11 : i64} {
  func.func @_model_kernel(%arg0: memref<16x16xf32, #tpu.memory_space<vmem>>, %arg1: memref<8x8xf32, #tpu.memory_space<vmem>>, %arg2: memref<8x8xf32, #tpu.memory_space<vmem>>, %arg3: memref<2xf32, #tpu.memory_space<smem>>, %arg4: memref<16x16xf32, #tpu.memory_space<vmem>>, %arg5: memref<16x16xf32, #tpu.memory_space<vmem>>, %arg6: memref<16x24xf32, #tpu.memory_space<vmem>>, %arg7: memref<16x4xf32, #tpu.memory_space<vmem>>, %arg8: memref<16x24xf32, #tpu.memory_space<vmem>>, %arg9: memref<16x4xf32, #tpu.memory_space<vmem>>, %arg10: memref<8x24xf32, #tpu.memory_space<vmem>>, %arg11: memref<16x4xf32, #tpu.memory_space<vmem>>, %arg12: memref<8x24xf32, #tpu.memory_space<vmem>>, %arg13: memref<16x4xf32, #tpu.memory_space<vmem>>, %arg14: memref<4x20xf32, #tpu.memory_space<vmem>>, %arg15: memref<1x20xf32, #tpu.memory_space<vmem>>, %arg16: memref<20x4xf32, #tpu.memory_space<vmem>>, %arg17: memref<1x4xf32, #tpu.memory_space<vmem>>, %arg18: memref<4xf32, #tpu.memory_space<smem>>, %arg19: memref<1xf32, #tpu.memory_space<smem>>, %arg20: memref<8x16xf32, #tpu.memory_space<vmem>>, %arg21: memref<8x8xf32, #tpu.memory_space<vmem>>, %arg22: memref<8x24xf32, #tpu.memory_space<vmem>>, %arg23: memref<16x4xf32, #tpu.memory_space<vmem>>, %arg24: memref<16x24xf32, #tpu.memory_space<vmem>>, %arg25: memref<16x4xf32, #tpu.memory_space<vmem>>, %arg26: memref<8x24xf32, #tpu.memory_space<vmem>>, %arg27: memref<16x4xf32, #tpu.memory_space<vmem>>, %arg28: memref<8x24xf32, #tpu.memory_space<vmem>>, %arg29: memref<16x4xf32, #tpu.memory_space<vmem>>, %arg30: memref<4x20xf32, #tpu.memory_space<vmem>>, %arg31: memref<1x20xf32, #tpu.memory_space<vmem>>, %arg32: memref<20x4xf32, #tpu.memory_space<vmem>>, %arg33: memref<1x4xf32, #tpu.memory_space<vmem>>, %arg34: memref<4xf32, #tpu.memory_space<smem>>, %arg35: memref<1xf32, #tpu.memory_space<smem>>, %arg36: memref<8x16xf32, #tpu.memory_space<vmem>>, %arg37: memref<8x8xf32, #tpu.memory_space<vmem>>, %arg38: memref<8x24xf32, #tpu.memory_space<vmem>>, %arg39: memref<16x4xf32, #tpu.memory_space<vmem>>, %arg40: memref<16x24xf32, #tpu.memory_space<vmem>>, %arg41: memref<16x4xf32, #tpu.memory_space<vmem>>, %arg42: memref<8x24xf32, #tpu.memory_space<vmem>>, %arg43: memref<16x4xf32, #tpu.memory_space<vmem>>, %arg44: memref<8x24xf32, #tpu.memory_space<vmem>>, %arg45: memref<16x4xf32, #tpu.memory_space<vmem>>, %arg46: memref<4x20xf32, #tpu.memory_space<vmem>>, %arg47: memref<1x20xf32, #tpu.memory_space<vmem>>, %arg48: memref<20x4xf32, #tpu.memory_space<vmem>>, %arg49: memref<1x4xf32, #tpu.memory_space<vmem>>, %arg50: memref<4xf32, #tpu.memory_space<smem>>, %arg51: memref<1xf32, #tpu.memory_space<smem>>, %arg52: memref<8x8xf32, #tpu.memory_space<vmem>>) attributes {dimension_semantics = [], scalar_prefetch = 0 : i64, scratch_operands = 0 : i64, tpu.core_type = #tpu.core_type<tc>} {
    %c0 = arith.constant 0 : index
    %c0_0 = arith.constant 0 : index
    %0 = vector.load %arg0[%c0, %c0_0] : memref<16x16xf32, #tpu.memory_space<vmem>>, vector<16x16xf32>
    %c0_1 = arith.constant 0 : index
    %c0_2 = arith.constant 0 : index
    %1 = vector.load %arg5[%c0_1, %c0_2] : memref<16x16xf32, #tpu.memory_space<vmem>>, vector<16x16xf32>
    %c0_3 = arith.constant 0 : index
    %c0_4 = arith.constant 0 : index
    %2 = vector.load %arg6[%c0_3, %c0_4] : memref<16x24xf32, #tpu.memory_space<vmem>>, vector<16x24xf32>
    %c0_5 = arith.constant 0 : index
    %c0_6 = arith.constant 0 : index
    %3 = vector.load %arg7[%c0_5, %c0_6] : memref<16x4xf32, #tpu.memory_space<vmem>>, vector<16x4xf32>
    %cst = arith.constant dense<0.000000e+00> : vector<16x24xf32>
    %4 = tpu.matmul %0, %2, %cst {dimension_numbers = #tpu.dot_dimension_numbers<[1], [0], [0], [1], [0, 0, 1, 1], [], []>} : vector<16x16xf32>, vector<16x24xf32>, vector<16x24xf32> -> vector<16x24xf32>
    %5 = vector.extract_strided_slice %4 {offsets = [0, 0], sizes = [16, 16], strides = [1, 1]} : vector<16x24xf32> to vector<16x16xf32>
    %6 = vector.extract_strided_slice %4 {offsets = [0, 16], sizes = [16, 8], strides = [1, 1]} : vector<16x24xf32> to vector<16x8xf32>
    %cst_7 = arith.constant dense<0.000000e+00> : vector<16x4xf32>
    %7 = tpu.matmul %5, %3, %cst_7 {dimension_numbers = #tpu.dot_dimension_numbers<[1], [0], [0], [1], [0, 0, 1, 1], [], []>} : vector<16x16xf32>, vector<16x4xf32>, vector<16x4xf32> -> vector<16x4xf32>
    %8 = vector.extract_strided_slice %7 {offsets = [0, 2], sizes = [16, 2], strides = [1, 1]} : vector<16x4xf32> to vector<16x2xf32>
    %9 = tpu.transpose %8, [1, 0] : vector<16x2xf32> -> vector<2x16xf32>
    %cst_8 = arith.constant 0.000000e+00 : f32
    %10 = vector.broadcast %cst_8 : f32 to vector<16x8xf32>
    %11 = vector.extract_strided_slice %5 {offsets = [0, 0], sizes = [16, 8], strides = [1, 1]} : vector<16x16xf32> to vector<16x8xf32>
    %12 = vector.extract_strided_slice %7 {offsets = [0, 0], sizes = [16, 1], strides = [1, 1]} : vector<16x4xf32> to vector<16x1xf32>
    %13 = vector.extract_strided_slice %9 {offsets = [0, 0], sizes = [1, 16], strides = [1, 1]} : vector<2x16xf32> to vector<1x16xf32>
    %14 = vector.broadcast %12 : vector<16x1xf32> to vector<16x16xf32>
    %15 = vector.broadcast %13 : vector<1x16xf32> to vector<16x16xf32>
    %16 = arith.addf %14, %15 : vector<16x16xf32>
    %cst_9 = arith.constant 0.000000e+00 : f32
    %17 = vector.broadcast %cst_9 : f32 to vector<16x16xf32>
    %18 = arith.cmpf ogt, %16, %17 : vector<16x16xf32>
    %cst_10 = arith.constant 2.000000e-01 : f32
    %19 = vector.broadcast %cst_10 : f32 to vector<16x16xf32>
    %20 = arith.mulf %19, %16 : vector<16x16xf32>
    %21 = arith.select %18, %16, %20 : vector<16x16xi1>, vector<16x16xf32>
    %22 = arith.addf %21, %1 : vector<16x16xf32>
    %cst_11 = arith.constant dense<0xFF800000> : vector<16xf32>
    %23 = vector.multi_reduction <maximumf>, %22, %cst_11 [1] : vector<16x16xf32> to vector<16xf32>
    %24 = vector.shape_cast %23 : vector<16xf32> to vector<16x1xf32>
    %25 = vector.broadcast %24 : vector<16x1xf32> to vector<16x16xf32>
    %26 = arith.subf %22, %25 : vector<16x16xf32>
    %27 = math.exp %26 : vector<16x16xf32>
    %cst_12 = arith.constant dense<0.000000e+00> : vector<16xf32>
    %28 = vector.multi_reduction <add>, %27, %cst_12 [1] : vector<16x16xf32> to vector<16xf32>
    %29 = vector.shape_cast %28 : vector<16xf32> to vector<16x1xf32>
    %30 = vector.broadcast %29 : vector<16x1xf32> to vector<16x16xf32>
    %31 = arith.divf %27, %30 : vector<16x16xf32>
    %cst_13 = arith.constant dense<0.000000e+00> : vector<16x8xf32>
    %32 = tpu.matmul %31, %11, %cst_13 {dimension_numbers = #tpu.dot_dimension_numbers<[1], [0], [0], [1], [0, 0, 1, 1], [], []>} : vector<16x16xf32>, vector<16x8xf32>, vector<16x8xf32> -> vector<16x8xf32>
    %33 = arith.addf %10, %32 : vector<16x8xf32>
    %34 = vector.extract_strided_slice %5 {offsets = [0, 8], sizes = [16, 8], strides = [1, 1]} : vector<16x16xf32> to vector<16x8xf32>
    %35 = vector.extract_strided_slice %7 {offsets = [0, 1], sizes = [16, 1], strides = [1, 1]} : vector<16x4xf32> to vector<16x1xf32>
    %36 = vector.extract_strided_slice %9 {offsets = [1, 0], sizes = [1, 16], strides = [1, 1]} : vector<2x16xf32> to vector<1x16xf32>
    %37 = vector.broadcast %35 : vector<16x1xf32> to vector<16x16xf32>
    %38 = vector.broadcast %36 : vector<1x16xf32> to vector<16x16xf32>
    %39 = arith.addf %37, %38 : vector<16x16xf32>
    %cst_14 = arith.constant 0.000000e+00 : f32
    %40 = vector.broadcast %cst_14 : f32 to vector<16x16xf32>
    %41 = arith.cmpf ogt, %39, %40 : vector<16x16xf32>
    %cst_15 = arith.constant 2.000000e-01 : f32
    %42 = vector.broadcast %cst_15 : f32 to vector<16x16xf32>
    %43 = arith.mulf %42, %39 : vector<16x16xf32>
    %44 = arith.select %41, %39, %43 : vector<16x16xi1>, vector<16x16xf32>
    %45 = arith.addf %44, %1 : vector<16x16xf32>
    %cst_16 = arith.constant dense<0xFF800000> : vector<16xf32>
    %46 = vector.multi_reduction <maximumf>, %45, %cst_16 [1] : vector<16x16xf32> to vector<16xf32>
    %47 = vector.shape_cast %46 : vector<16xf32> to vector<16x1xf32>
    %48 = vector.broadcast %47 : vector<16x1xf32> to vector<16x16xf32>
    %49 = arith.subf %45, %48 : vector<16x16xf32>
    %50 = math.exp %49 : vector<16x16xf32>
    %cst_17 = arith.constant dense<0.000000e+00> : vector<16xf32>
    %51 = vector.multi_reduction <add>, %50, %cst_17 [1] : vector<16x16xf32> to vector<16xf32>
    %52 = vector.shape_cast %51 : vector<16xf32> to vector<16x1xf32>
    %53 = vector.broadcast %52 : vector<16x1xf32> to vector<16x16xf32>
    %54 = arith.divf %50, %53 : vector<16x16xf32>
    %cst_18 = arith.constant dense<0.000000e+00> : vector<16x8xf32>
    %55 = tpu.matmul %54, %34, %cst_18 {dimension_numbers = #tpu.dot_dimension_numbers<[1], [0], [0], [1], [0, 0, 1, 1], [], []>} : vector<16x16xf32>, vector<16x8xf32>, vector<16x8xf32> -> vector<16x8xf32>
    %56 = arith.addf %33, %55 : vector<16x8xf32>
    %cst_19 = arith.constant 5.000000e-01 : f32
    %57 = vector.broadcast %cst_19 : f32 to vector<16x8xf32>
    %58 = arith.mulf %56, %57 : vector<16x8xf32>
    %59 = arith.addf %58, %6 : vector<16x8xf32>
    %cst_20 = arith.constant 0.000000e+00 : f32
    %60 = vector.broadcast %cst_20 : f32 to vector<16x8xf32>
    %61 = arith.minimumf %59, %60 : vector<16x8xf32>
    %cst_21 = arith.constant 0.000000e+00 : f32
    %62 = vector.broadcast %cst_21 : f32 to vector<16x8xf32>
    %63 = arith.cmpf ogt, %59, %62 : vector<16x8xf32>
    %64 = math.exp %61 : vector<16x8xf32>
    %cst_22 = arith.constant 1.000000e+00 : f32
    %65 = vector.broadcast %cst_22 : f32 to vector<16x8xf32>
    %66 = arith.subf %64, %65 : vector<16x8xf32>
    %67 = arith.select %63, %59, %66 : vector<16x8xi1>, vector<16x8xf32>
    %c0_23 = arith.constant 0 : index
    %c0_24 = arith.constant 0 : index
    %68 = vector.load %arg4[%c0_23, %c0_24] : memref<16x16xf32, #tpu.memory_space<vmem>>, vector<16x16xf32>
    %c0_25 = arith.constant 0 : index
    %c0_26 = arith.constant 0 : index
    %69 = vector.load %arg8[%c0_25, %c0_26] : memref<16x24xf32, #tpu.memory_space<vmem>>, vector<16x24xf32>
    %c0_27 = arith.constant 0 : index
    %c0_28 = arith.constant 0 : index
    %70 = vector.load %arg9[%c0_27, %c0_28] : memref<16x4xf32, #tpu.memory_space<vmem>>, vector<16x4xf32>
    %cst_29 = arith.constant dense<0.000000e+00> : vector<16x24xf32>
    %71 = tpu.matmul %68, %69, %cst_29 {dimension_numbers = #tpu.dot_dimension_numbers<[1], [0], [0], [1], [0, 0, 1, 1], [], []>} : vector<16x16xf32>, vector<16x24xf32>, vector<16x24xf32> -> vector<16x24xf32>
    %72 = vector.extract_strided_slice %71 {offsets = [0, 0], sizes = [16, 16], strides = [1, 1]} : vector<16x24xf32> to vector<16x16xf32>
    %73 = vector.extract_strided_slice %71 {offsets = [0, 16], sizes = [16, 8], strides = [1, 1]} : vector<16x24xf32> to vector<16x8xf32>
    %cst_30 = arith.constant dense<0.000000e+00> : vector<16x4xf32>
    %74 = tpu.matmul %72, %70, %cst_30 {dimension_numbers = #tpu.dot_dimension_numbers<[1], [0], [0], [1], [0, 0, 1, 1], [], []>} : vector<16x16xf32>, vector<16x4xf32>, vector<16x4xf32> -> vector<16x4xf32>
    %75 = vector.extract_strided_slice %74 {offsets = [0, 2], sizes = [16, 2], strides = [1, 1]} : vector<16x4xf32> to vector<16x2xf32>
    %76 = tpu.transpose %75, [1, 0] : vector<16x2xf32> -> vector<2x16xf32>
    %cst_31 = arith.constant 0.000000e+00 : f32
    %77 = vector.broadcast %cst_31 : f32 to vector<16x8xf32>
    %78 = vector.extract_strided_slice %72 {offsets = [0, 0], sizes = [16, 8], strides = [1, 1]} : vector<16x16xf32> to vector<16x8xf32>
    %79 = vector.extract_strided_slice %74 {offsets = [0, 0], sizes = [16, 1], strides = [1, 1]} : vector<16x4xf32> to vector<16x1xf32>
    %80 = vector.extract_strided_slice %76 {offsets = [0, 0], sizes = [1, 16], strides = [1, 1]} : vector<2x16xf32> to vector<1x16xf32>
    %81 = vector.broadcast %79 : vector<16x1xf32> to vector<16x16xf32>
    %82 = vector.broadcast %80 : vector<1x16xf32> to vector<16x16xf32>
    %83 = arith.addf %81, %82 : vector<16x16xf32>
    %cst_32 = arith.constant 0.000000e+00 : f32
    %84 = vector.broadcast %cst_32 : f32 to vector<16x16xf32>
    %85 = arith.cmpf ogt, %83, %84 : vector<16x16xf32>
    %cst_33 = arith.constant 2.000000e-01 : f32
    %86 = vector.broadcast %cst_33 : f32 to vector<16x16xf32>
    %87 = arith.mulf %86, %83 : vector<16x16xf32>
    %88 = arith.select %85, %83, %87 : vector<16x16xi1>, vector<16x16xf32>
    %89 = arith.addf %88, %1 : vector<16x16xf32>
    %cst_34 = arith.constant dense<0xFF800000> : vector<16xf32>
    %90 = vector.multi_reduction <maximumf>, %89, %cst_34 [1] : vector<16x16xf32> to vector<16xf32>
    %91 = vector.shape_cast %90 : vector<16xf32> to vector<16x1xf32>
    %92 = vector.broadcast %91 : vector<16x1xf32> to vector<16x16xf32>
    %93 = arith.subf %89, %92 : vector<16x16xf32>
    %94 = math.exp %93 : vector<16x16xf32>
    %cst_35 = arith.constant dense<0.000000e+00> : vector<16xf32>
    %95 = vector.multi_reduction <add>, %94, %cst_35 [1] : vector<16x16xf32> to vector<16xf32>
    %96 = vector.shape_cast %95 : vector<16xf32> to vector<16x1xf32>
    %97 = vector.broadcast %96 : vector<16x1xf32> to vector<16x16xf32>
    %98 = arith.divf %94, %97 : vector<16x16xf32>
    %cst_36 = arith.constant dense<0.000000e+00> : vector<16x8xf32>
    %99 = tpu.matmul %98, %78, %cst_36 {dimension_numbers = #tpu.dot_dimension_numbers<[1], [0], [0], [1], [0, 0, 1, 1], [], []>} : vector<16x16xf32>, vector<16x8xf32>, vector<16x8xf32> -> vector<16x8xf32>
    %100 = arith.addf %77, %99 : vector<16x8xf32>
    %101 = vector.extract_strided_slice %72 {offsets = [0, 8], sizes = [16, 8], strides = [1, 1]} : vector<16x16xf32> to vector<16x8xf32>
    %102 = vector.extract_strided_slice %74 {offsets = [0, 1], sizes = [16, 1], strides = [1, 1]} : vector<16x4xf32> to vector<16x1xf32>
    %103 = vector.extract_strided_slice %76 {offsets = [1, 0], sizes = [1, 16], strides = [1, 1]} : vector<2x16xf32> to vector<1x16xf32>
    %104 = vector.broadcast %102 : vector<16x1xf32> to vector<16x16xf32>
    %105 = vector.broadcast %103 : vector<1x16xf32> to vector<16x16xf32>
    %106 = arith.addf %104, %105 : vector<16x16xf32>
    %cst_37 = arith.constant 0.000000e+00 : f32
    %107 = vector.broadcast %cst_37 : f32 to vector<16x16xf32>
    %108 = arith.cmpf ogt, %106, %107 : vector<16x16xf32>
    %cst_38 = arith.constant 2.000000e-01 : f32
    %109 = vector.broadcast %cst_38 : f32 to vector<16x16xf32>
    %110 = arith.mulf %109, %106 : vector<16x16xf32>
    %111 = arith.select %108, %106, %110 : vector<16x16xi1>, vector<16x16xf32>
    %112 = arith.addf %111, %1 : vector<16x16xf32>
    %cst_39 = arith.constant dense<0xFF800000> : vector<16xf32>
    %113 = vector.multi_reduction <maximumf>, %112, %cst_39 [1] : vector<16x16xf32> to vector<16xf32>
    %114 = vector.shape_cast %113 : vector<16xf32> to vector<16x1xf32>
    %115 = vector.broadcast %114 : vector<16x1xf32> to vector<16x16xf32>
    %116 = arith.subf %112, %115 : vector<16x16xf32>
    %117 = math.exp %116 : vector<16x16xf32>
    %cst_40 = arith.constant dense<0.000000e+00> : vector<16xf32>
    %118 = vector.multi_reduction <add>, %117, %cst_40 [1] : vector<16x16xf32> to vector<16xf32>
    %119 = vector.shape_cast %118 : vector<16xf32> to vector<16x1xf32>
    %120 = vector.broadcast %119 : vector<16x1xf32> to vector<16x16xf32>
    %121 = arith.divf %117, %120 : vector<16x16xf32>
    %cst_41 = arith.constant dense<0.000000e+00> : vector<16x8xf32>
    %122 = tpu.matmul %121, %101, %cst_41 {dimension_numbers = #tpu.dot_dimension_numbers<[1], [0], [0], [1], [0, 0, 1, 1], [], []>} : vector<16x16xf32>, vector<16x8xf32>, vector<16x8xf32> -> vector<16x8xf32>
    %123 = arith.addf %100, %122 : vector<16x8xf32>
    %cst_42 = arith.constant 5.000000e-01 : f32
    %124 = vector.broadcast %cst_42 : f32 to vector<16x8xf32>
    %125 = arith.mulf %123, %124 : vector<16x8xf32>
    %126 = arith.addf %125, %73 : vector<16x8xf32>
    %cst_43 = arith.constant 0.000000e+00 : f32
    %127 = vector.broadcast %cst_43 : f32 to vector<16x8xf32>
    %128 = arith.minimumf %126, %127 : vector<16x8xf32>
    %cst_44 = arith.constant 0.000000e+00 : f32
    %129 = vector.broadcast %cst_44 : f32 to vector<16x8xf32>
    %130 = arith.cmpf ogt, %126, %129 : vector<16x8xf32>
    %131 = math.exp %128 : vector<16x8xf32>
    %cst_45 = arith.constant 1.000000e+00 : f32
    %132 = vector.broadcast %cst_45 : f32 to vector<16x8xf32>
    %133 = arith.subf %131, %132 : vector<16x8xf32>
    %134 = arith.select %130, %126, %133 : vector<16x8xi1>, vector<16x8xf32>
    %c0_46 = arith.constant 0 : index
    %c0_47 = arith.constant 0 : index
    %135 = vector.load %arg10[%c0_46, %c0_47] : memref<8x24xf32, #tpu.memory_space<vmem>>, vector<8x24xf32>
    %c0_48 = arith.constant 0 : index
    %c0_49 = arith.constant 0 : index
    %136 = vector.load %arg11[%c0_48, %c0_49] : memref<16x4xf32, #tpu.memory_space<vmem>>, vector<16x4xf32>
    %cst_50 = arith.constant dense<0.000000e+00> : vector<16x24xf32>
    %137 = tpu.matmul %67, %135, %cst_50 {dimension_numbers = #tpu.dot_dimension_numbers<[1], [0], [0], [1], [0, 0, 1, 1], [], []>} : vector<16x8xf32>, vector<8x24xf32>, vector<16x24xf32> -> vector<16x24xf32>
    %138 = vector.extract_strided_slice %137 {offsets = [0, 0], sizes = [16, 16], strides = [1, 1]} : vector<16x24xf32> to vector<16x16xf32>
    %139 = vector.extract_strided_slice %137 {offsets = [0, 16], sizes = [16, 8], strides = [1, 1]} : vector<16x24xf32> to vector<16x8xf32>
    %cst_51 = arith.constant dense<0.000000e+00> : vector<16x4xf32>
    %140 = tpu.matmul %138, %136, %cst_51 {dimension_numbers = #tpu.dot_dimension_numbers<[1], [0], [0], [1], [0, 0, 1, 1], [], []>} : vector<16x16xf32>, vector<16x4xf32>, vector<16x4xf32> -> vector<16x4xf32>
    %141 = vector.extract_strided_slice %140 {offsets = [0, 2], sizes = [16, 2], strides = [1, 1]} : vector<16x4xf32> to vector<16x2xf32>
    %142 = tpu.transpose %141, [1, 0] : vector<16x2xf32> -> vector<2x16xf32>
    %cst_52 = arith.constant 0.000000e+00 : f32
    %143 = vector.broadcast %cst_52 : f32 to vector<16x8xf32>
    %144 = vector.extract_strided_slice %138 {offsets = [0, 0], sizes = [16, 8], strides = [1, 1]} : vector<16x16xf32> to vector<16x8xf32>
    %145 = vector.extract_strided_slice %140 {offsets = [0, 0], sizes = [16, 1], strides = [1, 1]} : vector<16x4xf32> to vector<16x1xf32>
    %146 = vector.extract_strided_slice %142 {offsets = [0, 0], sizes = [1, 16], strides = [1, 1]} : vector<2x16xf32> to vector<1x16xf32>
    %147 = vector.broadcast %145 : vector<16x1xf32> to vector<16x16xf32>
    %148 = vector.broadcast %146 : vector<1x16xf32> to vector<16x16xf32>
    %149 = arith.addf %147, %148 : vector<16x16xf32>
    %cst_53 = arith.constant 0.000000e+00 : f32
    %150 = vector.broadcast %cst_53 : f32 to vector<16x16xf32>
    %151 = arith.cmpf ogt, %149, %150 : vector<16x16xf32>
    %cst_54 = arith.constant 2.000000e-01 : f32
    %152 = vector.broadcast %cst_54 : f32 to vector<16x16xf32>
    %153 = arith.mulf %152, %149 : vector<16x16xf32>
    %154 = arith.select %151, %149, %153 : vector<16x16xi1>, vector<16x16xf32>
    %155 = arith.addf %154, %1 : vector<16x16xf32>
    %cst_55 = arith.constant dense<0xFF800000> : vector<16xf32>
    %156 = vector.multi_reduction <maximumf>, %155, %cst_55 [1] : vector<16x16xf32> to vector<16xf32>
    %157 = vector.shape_cast %156 : vector<16xf32> to vector<16x1xf32>
    %158 = vector.broadcast %157 : vector<16x1xf32> to vector<16x16xf32>
    %159 = arith.subf %155, %158 : vector<16x16xf32>
    %160 = math.exp %159 : vector<16x16xf32>
    %cst_56 = arith.constant dense<0.000000e+00> : vector<16xf32>
    %161 = vector.multi_reduction <add>, %160, %cst_56 [1] : vector<16x16xf32> to vector<16xf32>
    %162 = vector.shape_cast %161 : vector<16xf32> to vector<16x1xf32>
    %163 = vector.broadcast %162 : vector<16x1xf32> to vector<16x16xf32>
    %164 = arith.divf %160, %163 : vector<16x16xf32>
    %cst_57 = arith.constant dense<0.000000e+00> : vector<16x8xf32>
    %165 = tpu.matmul %164, %144, %cst_57 {dimension_numbers = #tpu.dot_dimension_numbers<[1], [0], [0], [1], [0, 0, 1, 1], [], []>} : vector<16x16xf32>, vector<16x8xf32>, vector<16x8xf32> -> vector<16x8xf32>
    %166 = arith.addf %143, %165 : vector<16x8xf32>
    %167 = vector.extract_strided_slice %138 {offsets = [0, 8], sizes = [16, 8], strides = [1, 1]} : vector<16x16xf32> to vector<16x8xf32>
    %168 = vector.extract_strided_slice %140 {offsets = [0, 1], sizes = [16, 1], strides = [1, 1]} : vector<16x4xf32> to vector<16x1xf32>
    %169 = vector.extract_strided_slice %142 {offsets = [1, 0], sizes = [1, 16], strides = [1, 1]} : vector<2x16xf32> to vector<1x16xf32>
    %170 = vector.broadcast %168 : vector<16x1xf32> to vector<16x16xf32>
    %171 = vector.broadcast %169 : vector<1x16xf32> to vector<16x16xf32>
    %172 = arith.addf %170, %171 : vector<16x16xf32>
    %cst_58 = arith.constant 0.000000e+00 : f32
    %173 = vector.broadcast %cst_58 : f32 to vector<16x16xf32>
    %174 = arith.cmpf ogt, %172, %173 : vector<16x16xf32>
    %cst_59 = arith.constant 2.000000e-01 : f32
    %175 = vector.broadcast %cst_59 : f32 to vector<16x16xf32>
    %176 = arith.mulf %175, %172 : vector<16x16xf32>
    %177 = arith.select %174, %172, %176 : vector<16x16xi1>, vector<16x16xf32>
    %178 = arith.addf %177, %1 : vector<16x16xf32>
    %cst_60 = arith.constant dense<0xFF800000> : vector<16xf32>
    %179 = vector.multi_reduction <maximumf>, %178, %cst_60 [1] : vector<16x16xf32> to vector<16xf32>
    %180 = vector.shape_cast %179 : vector<16xf32> to vector<16x1xf32>
    %181 = vector.broadcast %180 : vector<16x1xf32> to vector<16x16xf32>
    %182 = arith.subf %178, %181 : vector<16x16xf32>
    %183 = math.exp %182 : vector<16x16xf32>
    %cst_61 = arith.constant dense<0.000000e+00> : vector<16xf32>
    %184 = vector.multi_reduction <add>, %183, %cst_61 [1] : vector<16x16xf32> to vector<16xf32>
    %185 = vector.shape_cast %184 : vector<16xf32> to vector<16x1xf32>
    %186 = vector.broadcast %185 : vector<16x1xf32> to vector<16x16xf32>
    %187 = arith.divf %183, %186 : vector<16x16xf32>
    %cst_62 = arith.constant dense<0.000000e+00> : vector<16x8xf32>
    %188 = tpu.matmul %187, %167, %cst_62 {dimension_numbers = #tpu.dot_dimension_numbers<[1], [0], [0], [1], [0, 0, 1, 1], [], []>} : vector<16x16xf32>, vector<16x8xf32>, vector<16x8xf32> -> vector<16x8xf32>
    %189 = arith.addf %166, %188 : vector<16x8xf32>
    %cst_63 = arith.constant 5.000000e-01 : f32
    %190 = vector.broadcast %cst_63 : f32 to vector<16x8xf32>
    %191 = arith.mulf %189, %190 : vector<16x8xf32>
    %192 = arith.addf %191, %139 : vector<16x8xf32>
    %cst_64 = arith.constant 0.000000e+00 : f32
    %193 = vector.broadcast %cst_64 : f32 to vector<16x8xf32>
    %194 = arith.minimumf %192, %193 : vector<16x8xf32>
    %cst_65 = arith.constant 0.000000e+00 : f32
    %195 = vector.broadcast %cst_65 : f32 to vector<16x8xf32>
    %196 = arith.cmpf ogt, %192, %195 : vector<16x8xf32>
    %197 = math.exp %194 : vector<16x8xf32>
    %cst_66 = arith.constant 1.000000e+00 : f32
    %198 = vector.broadcast %cst_66 : f32 to vector<16x8xf32>
    %199 = arith.subf %197, %198 : vector<16x8xf32>
    %200 = arith.select %196, %192, %199 : vector<16x8xi1>, vector<16x8xf32>
    %c0_67 = arith.constant 0 : index
    %c0_68 = arith.constant 0 : index
    %201 = vector.load %arg12[%c0_67, %c0_68] : memref<8x24xf32, #tpu.memory_space<vmem>>, vector<8x24xf32>
    %c0_69 = arith.constant 0 : index
    %c0_70 = arith.constant 0 : index
    %202 = vector.load %arg13[%c0_69, %c0_70] : memref<16x4xf32, #tpu.memory_space<vmem>>, vector<16x4xf32>
    %cst_71 = arith.constant dense<0.000000e+00> : vector<16x24xf32>
    %203 = tpu.matmul %134, %201, %cst_71 {dimension_numbers = #tpu.dot_dimension_numbers<[1], [0], [0], [1], [0, 0, 1, 1], [], []>} : vector<16x8xf32>, vector<8x24xf32>, vector<16x24xf32> -> vector<16x24xf32>
    %204 = vector.extract_strided_slice %203 {offsets = [0, 0], sizes = [16, 16], strides = [1, 1]} : vector<16x24xf32> to vector<16x16xf32>
    %205 = vector.extract_strided_slice %203 {offsets = [0, 16], sizes = [16, 8], strides = [1, 1]} : vector<16x24xf32> to vector<16x8xf32>
    %cst_72 = arith.constant dense<0.000000e+00> : vector<16x4xf32>
    %206 = tpu.matmul %204, %202, %cst_72 {dimension_numbers = #tpu.dot_dimension_numbers<[1], [0], [0], [1], [0, 0, 1, 1], [], []>} : vector<16x16xf32>, vector<16x4xf32>, vector<16x4xf32> -> vector<16x4xf32>
    %207 = vector.extract_strided_slice %206 {offsets = [0, 2], sizes = [16, 2], strides = [1, 1]} : vector<16x4xf32> to vector<16x2xf32>
    %208 = tpu.transpose %207, [1, 0] : vector<16x2xf32> -> vector<2x16xf32>
    %cst_73 = arith.constant 0.000000e+00 : f32
    %209 = vector.broadcast %cst_73 : f32 to vector<16x8xf32>
    %210 = vector.extract_strided_slice %204 {offsets = [0, 0], sizes = [16, 8], strides = [1, 1]} : vector<16x16xf32> to vector<16x8xf32>
    %211 = vector.extract_strided_slice %206 {offsets = [0, 0], sizes = [16, 1], strides = [1, 1]} : vector<16x4xf32> to vector<16x1xf32>
    %212 = vector.extract_strided_slice %208 {offsets = [0, 0], sizes = [1, 16], strides = [1, 1]} : vector<2x16xf32> to vector<1x16xf32>
    %213 = vector.broadcast %211 : vector<16x1xf32> to vector<16x16xf32>
    %214 = vector.broadcast %212 : vector<1x16xf32> to vector<16x16xf32>
    %215 = arith.addf %213, %214 : vector<16x16xf32>
    %cst_74 = arith.constant 0.000000e+00 : f32
    %216 = vector.broadcast %cst_74 : f32 to vector<16x16xf32>
    %217 = arith.cmpf ogt, %215, %216 : vector<16x16xf32>
    %cst_75 = arith.constant 2.000000e-01 : f32
    %218 = vector.broadcast %cst_75 : f32 to vector<16x16xf32>
    %219 = arith.mulf %218, %215 : vector<16x16xf32>
    %220 = arith.select %217, %215, %219 : vector<16x16xi1>, vector<16x16xf32>
    %221 = arith.addf %220, %1 : vector<16x16xf32>
    %cst_76 = arith.constant dense<0xFF800000> : vector<16xf32>
    %222 = vector.multi_reduction <maximumf>, %221, %cst_76 [1] : vector<16x16xf32> to vector<16xf32>
    %223 = vector.shape_cast %222 : vector<16xf32> to vector<16x1xf32>
    %224 = vector.broadcast %223 : vector<16x1xf32> to vector<16x16xf32>
    %225 = arith.subf %221, %224 : vector<16x16xf32>
    %226 = math.exp %225 : vector<16x16xf32>
    %cst_77 = arith.constant dense<0.000000e+00> : vector<16xf32>
    %227 = vector.multi_reduction <add>, %226, %cst_77 [1] : vector<16x16xf32> to vector<16xf32>
    %228 = vector.shape_cast %227 : vector<16xf32> to vector<16x1xf32>
    %229 = vector.broadcast %228 : vector<16x1xf32> to vector<16x16xf32>
    %230 = arith.divf %226, %229 : vector<16x16xf32>
    %cst_78 = arith.constant dense<0.000000e+00> : vector<16x8xf32>
    %231 = tpu.matmul %230, %210, %cst_78 {dimension_numbers = #tpu.dot_dimension_numbers<[1], [0], [0], [1], [0, 0, 1, 1], [], []>} : vector<16x16xf32>, vector<16x8xf32>, vector<16x8xf32> -> vector<16x8xf32>
    %232 = arith.addf %209, %231 : vector<16x8xf32>
    %233 = vector.extract_strided_slice %204 {offsets = [0, 8], sizes = [16, 8], strides = [1, 1]} : vector<16x16xf32> to vector<16x8xf32>
    %234 = vector.extract_strided_slice %206 {offsets = [0, 1], sizes = [16, 1], strides = [1, 1]} : vector<16x4xf32> to vector<16x1xf32>
    %235 = vector.extract_strided_slice %208 {offsets = [1, 0], sizes = [1, 16], strides = [1, 1]} : vector<2x16xf32> to vector<1x16xf32>
    %236 = vector.broadcast %234 : vector<16x1xf32> to vector<16x16xf32>
    %237 = vector.broadcast %235 : vector<1x16xf32> to vector<16x16xf32>
    %238 = arith.addf %236, %237 : vector<16x16xf32>
    %cst_79 = arith.constant 0.000000e+00 : f32
    %239 = vector.broadcast %cst_79 : f32 to vector<16x16xf32>
    %240 = arith.cmpf ogt, %238, %239 : vector<16x16xf32>
    %cst_80 = arith.constant 2.000000e-01 : f32
    %241 = vector.broadcast %cst_80 : f32 to vector<16x16xf32>
    %242 = arith.mulf %241, %238 : vector<16x16xf32>
    %243 = arith.select %240, %238, %242 : vector<16x16xi1>, vector<16x16xf32>
    %244 = arith.addf %243, %1 : vector<16x16xf32>
    %cst_81 = arith.constant dense<0xFF800000> : vector<16xf32>
    %245 = vector.multi_reduction <maximumf>, %244, %cst_81 [1] : vector<16x16xf32> to vector<16xf32>
    %246 = vector.shape_cast %245 : vector<16xf32> to vector<16x1xf32>
    %247 = vector.broadcast %246 : vector<16x1xf32> to vector<16x16xf32>
    %248 = arith.subf %244, %247 : vector<16x16xf32>
    %249 = math.exp %248 : vector<16x16xf32>
    %cst_82 = arith.constant dense<0.000000e+00> : vector<16xf32>
    %250 = vector.multi_reduction <add>, %249, %cst_82 [1] : vector<16x16xf32> to vector<16xf32>
    %251 = vector.shape_cast %250 : vector<16xf32> to vector<16x1xf32>
    %252 = vector.broadcast %251 : vector<16x1xf32> to vector<16x16xf32>
    %253 = arith.divf %249, %252 : vector<16x16xf32>
    %cst_83 = arith.constant dense<0.000000e+00> : vector<16x8xf32>
    %254 = tpu.matmul %253, %233, %cst_83 {dimension_numbers = #tpu.dot_dimension_numbers<[1], [0], [0], [1], [0, 0, 1, 1], [], []>} : vector<16x16xf32>, vector<16x8xf32>, vector<16x8xf32> -> vector<16x8xf32>
    %255 = arith.addf %232, %254 : vector<16x8xf32>
    %cst_84 = arith.constant 5.000000e-01 : f32
    %256 = vector.broadcast %cst_84 : f32 to vector<16x8xf32>
    %257 = arith.mulf %255, %256 : vector<16x8xf32>
    %258 = arith.addf %257, %205 : vector<16x8xf32>
    %cst_85 = arith.constant 0.000000e+00 : f32
    %259 = vector.broadcast %cst_85 : f32 to vector<16x8xf32>
    %260 = arith.minimumf %258, %259 : vector<16x8xf32>
    %cst_86 = arith.constant 0.000000e+00 : f32
    %261 = vector.broadcast %cst_86 : f32 to vector<16x8xf32>
    %262 = arith.cmpf ogt, %258, %261 : vector<16x8xf32>
    %263 = math.exp %260 : vector<16x8xf32>
    %cst_87 = arith.constant 1.000000e+00 : f32
    %264 = vector.broadcast %cst_87 : f32 to vector<16x8xf32>
    %265 = arith.subf %263, %264 : vector<16x8xf32>
    %266 = arith.select %262, %258, %265 : vector<16x8xi1>, vector<16x8xf32>
    %cst_88 = arith.constant dense<0.000000e+00> : vector<16xf32>
    %267 = vector.multi_reduction <add>, %67, %cst_88 [1] : vector<16x8xf32> to vector<16xf32>
    %268 = vector.shape_cast %267 : vector<16xf32> to vector<16x1xf32>
    %cst_89 = arith.constant 8.000000e+00 : f32
    %269 = vector.broadcast %cst_89 : f32 to vector<16x1xf32>
    %270 = arith.divf %268, %269 : vector<16x1xf32>
    %cst_90 = arith.constant dense<0.000000e+00> : vector<1xf32>
    %271 = vector.multi_reduction <add>, %270, %cst_90 [0] : vector<16x1xf32> to vector<1xf32>
    %272 = vector.shape_cast %271 : vector<1xf32> to vector<1x1xf32>
    %cst_91 = arith.constant 1.600000e+01 : f32
    %273 = vector.broadcast %cst_91 : f32 to vector<1x1xf32>
    %274 = arith.divf %272, %273 : vector<1x1xf32>
    %cst_92 = arith.constant dense<0.000000e+00> : vector<16xf32>
    %275 = vector.multi_reduction <add>, %200, %cst_92 [1] : vector<16x8xf32> to vector<16xf32>
    %276 = vector.shape_cast %275 : vector<16xf32> to vector<16x1xf32>
    %cst_93 = arith.constant 8.000000e+00 : f32
    %277 = vector.broadcast %cst_93 : f32 to vector<16x1xf32>
    %278 = arith.divf %276, %277 : vector<16x1xf32>
    %cst_94 = arith.constant dense<0.000000e+00> : vector<1xf32>
    %279 = vector.multi_reduction <add>, %278, %cst_94 [0] : vector<16x1xf32> to vector<1xf32>
    %280 = vector.shape_cast %279 : vector<1xf32> to vector<1x1xf32>
    %cst_95 = arith.constant 1.600000e+01 : f32
    %281 = vector.broadcast %cst_95 : f32 to vector<1x1xf32>
    %282 = arith.divf %280, %281 : vector<1x1xf32>
    %cst_96 = arith.constant dense<0.000000e+00> : vector<16xf32>
    %283 = vector.multi_reduction <add>, %134, %cst_96 [1] : vector<16x8xf32> to vector<16xf32>
    %284 = vector.shape_cast %283 : vector<16xf32> to vector<16x1xf32>
    %cst_97 = arith.constant 8.000000e+00 : f32
    %285 = vector.broadcast %cst_97 : f32 to vector<16x1xf32>
    %286 = arith.divf %284, %285 : vector<16x1xf32>
    %cst_98 = arith.constant dense<0.000000e+00> : vector<1xf32>
    %287 = vector.multi_reduction <add>, %286, %cst_98 [0] : vector<16x1xf32> to vector<1xf32>
    %288 = vector.shape_cast %287 : vector<1xf32> to vector<1x1xf32>
    %cst_99 = arith.constant 1.600000e+01 : f32
    %289 = vector.broadcast %cst_99 : f32 to vector<1x1xf32>
    %290 = arith.divf %288, %289 : vector<1x1xf32>
    %cst_100 = arith.constant dense<0.000000e+00> : vector<16xf32>
    %291 = vector.multi_reduction <add>, %266, %cst_100 [1] : vector<16x8xf32> to vector<16xf32>
    %292 = vector.shape_cast %291 : vector<16xf32> to vector<16x1xf32>
    %cst_101 = arith.constant 8.000000e+00 : f32
    %293 = vector.broadcast %cst_101 : f32 to vector<16x1xf32>
    %294 = arith.divf %292, %293 : vector<16x1xf32>
    %cst_102 = arith.constant dense<0.000000e+00> : vector<1xf32>
    %295 = vector.multi_reduction <add>, %294, %cst_102 [0] : vector<16x1xf32> to vector<1xf32>
    %296 = vector.shape_cast %295 : vector<1xf32> to vector<1x1xf32>
    %cst_103 = arith.constant 1.600000e+01 : f32
    %297 = vector.broadcast %cst_103 : f32 to vector<1x1xf32>
    %298 = arith.divf %296, %297 : vector<1x1xf32>
    %299 = tpu.concatenate %274, %282, %290, %298 in 1 : vector<1x1xf32>, vector<1x1xf32>, vector<1x1xf32>, vector<1x1xf32> -> vector<1x4xf32>
    %c0_104 = arith.constant 0 : index
    %c0_105 = arith.constant 0 : index
    %300 = vector.load %arg14[%c0_104, %c0_105] : memref<4x20xf32, #tpu.memory_space<vmem>>, vector<4x20xf32>
    %cst_106 = arith.constant dense<0.000000e+00> : vector<1x20xf32>
    %301 = tpu.matmul %299, %300, %cst_106 {dimension_numbers = #tpu.dot_dimension_numbers<[1], [0], [0], [1], [0, 0, 1, 1], [], []>} : vector<1x4xf32>, vector<4x20xf32>, vector<1x20xf32> -> vector<1x20xf32>
    %c0_107 = arith.constant 0 : index
    %c0_108 = arith.constant 0 : index
    %302 = vector.load %arg15[%c0_107, %c0_108] : memref<1x20xf32, #tpu.memory_space<vmem>>, vector<1x20xf32>
    %303 = arith.addf %301, %302 : vector<1x20xf32>
    %c0_109 = arith.constant 0 : index
    %c0_110 = arith.constant 0 : index
    %304 = vector.load %arg16[%c0_109, %c0_110] : memref<20x4xf32, #tpu.memory_space<vmem>>, vector<20x4xf32>
    %cst_111 = arith.constant dense<0.000000e+00> : vector<1x4xf32>
    %305 = tpu.matmul %303, %304, %cst_111 {dimension_numbers = #tpu.dot_dimension_numbers<[1], [0], [0], [1], [0, 0, 1, 1], [], []>} : vector<1x20xf32>, vector<20x4xf32>, vector<1x4xf32> -> vector<1x4xf32>
    %c0_112 = arith.constant 0 : index
    %c0_113 = arith.constant 0 : index
    %306 = vector.load %arg17[%c0_112, %c0_113] : memref<1x4xf32, #tpu.memory_space<vmem>>, vector<1x4xf32>
    %307 = arith.addf %305, %306 : vector<1x4xf32>
    %308 = arith.negf %307 : vector<1x4xf32>
    %309 = math.exp %308 : vector<1x4xf32>
    %cst_114 = arith.constant 1.000000e+00 : f32
    %310 = vector.broadcast %cst_114 : f32 to vector<1x4xf32>
    %311 = arith.addf %310, %309 : vector<1x4xf32>
    %312 = arith.divf %310, %311 : vector<1x4xf32>
    %cst_115 = arith.constant 0.000000e+00 : f32
    %313 = vector.broadcast %cst_115 : f32 to vector<16x8xf32>
    %c0_116 = arith.constant 0 : index
    %314 = memref.load %arg18[%c0_116] : memref<4xf32, #tpu.memory_space<smem>>
    %315 = vector.extract_strided_slice %312 {offsets = [0, 0], sizes = [1, 1], strides = [1, 1]} : vector<1x4xf32> to vector<1x1xf32>
    %316 = vector.extract %315[0, 0] : f32 from vector<1x1xf32>
    %317 = vector.broadcast %316 : f32 to vector<16x8xf32>
    %318 = arith.mulf %317, %67 : vector<16x8xf32>
    %cst_117 = arith.constant 0.000000e+00 : f32
    %319 = vector.broadcast %cst_117 : f32 to vector<16x8xf32>
    %320 = arith.maximumf %318, %319 : vector<16x8xf32>
    %321 = vector.broadcast %314 : f32 to vector<16x8xf32>
    %322 = arith.mulf %321, %320 : vector<16x8xf32>
    %323 = arith.addf %313, %322 : vector<16x8xf32>
    %c1 = arith.constant 1 : index
    %324 = memref.load %arg18[%c1] : memref<4xf32, #tpu.memory_space<smem>>
    %325 = vector.extract_strided_slice %312 {offsets = [0, 1], sizes = [1, 1], strides = [1, 1]} : vector<1x4xf32> to vector<1x1xf32>
    %326 = vector.extract %325[0, 0] : f32 from vector<1x1xf32>
    %327 = vector.broadcast %326 : f32 to vector<16x8xf32>
    %328 = arith.mulf %327, %200 : vector<16x8xf32>
    %cst_118 = arith.constant 0.000000e+00 : f32
    %329 = vector.broadcast %cst_118 : f32 to vector<16x8xf32>
    %330 = arith.maximumf %328, %329 : vector<16x8xf32>
    %331 = vector.broadcast %324 : f32 to vector<16x8xf32>
    %332 = arith.mulf %331, %330 : vector<16x8xf32>
    %333 = arith.addf %323, %332 : vector<16x8xf32>
    %c2 = arith.constant 2 : index
    %334 = memref.load %arg18[%c2] : memref<4xf32, #tpu.memory_space<smem>>
    %335 = vector.extract_strided_slice %312 {offsets = [0, 2], sizes = [1, 1], strides = [1, 1]} : vector<1x4xf32> to vector<1x1xf32>
    %336 = vector.extract %335[0, 0] : f32 from vector<1x1xf32>
    %337 = vector.broadcast %336 : f32 to vector<16x8xf32>
    %338 = arith.mulf %337, %134 : vector<16x8xf32>
    %cst_119 = arith.constant 0.000000e+00 : f32
    %339 = vector.broadcast %cst_119 : f32 to vector<16x8xf32>
    %340 = arith.maximumf %338, %339 : vector<16x8xf32>
    %341 = vector.broadcast %334 : f32 to vector<16x8xf32>
    %342 = arith.mulf %341, %340 : vector<16x8xf32>
    %343 = arith.addf %333, %342 : vector<16x8xf32>
    %c3 = arith.constant 3 : index
    %344 = memref.load %arg18[%c3] : memref<4xf32, #tpu.memory_space<smem>>
    %345 = vector.extract_strided_slice %312 {offsets = [0, 3], sizes = [1, 1], strides = [1, 1]} : vector<1x4xf32> to vector<1x1xf32>
    %346 = vector.extract %345[0, 0] : f32 from vector<1x1xf32>
    %347 = vector.broadcast %346 : f32 to vector<16x8xf32>
    %348 = arith.mulf %347, %266 : vector<16x8xf32>
    %cst_120 = arith.constant 0.000000e+00 : f32
    %349 = vector.broadcast %cst_120 : f32 to vector<16x8xf32>
    %350 = arith.maximumf %348, %349 : vector<16x8xf32>
    %351 = vector.broadcast %344 : f32 to vector<16x8xf32>
    %352 = arith.mulf %351, %350 : vector<16x8xf32>
    %353 = arith.addf %343, %352 : vector<16x8xf32>
    %c0_121 = arith.constant 0 : index
    %354 = memref.load %arg19[%c0_121] : memref<1xf32, #tpu.memory_space<smem>>
    %355 = vector.broadcast %354 : f32 to vector<16x8xf32>
    %356 = arith.addf %353, %355 : vector<16x8xf32>
    %c0_122 = arith.constant 0 : index
    %c0_123 = arith.constant 0 : index
    %357 = vector.load %arg1[%c0_122, %c0_123] : memref<8x8xf32, #tpu.memory_space<vmem>>, vector<8x8xf32>
    %c0_124 = arith.constant 0 : index
    %c0_125 = arith.constant 0 : index
    %358 = vector.load %arg21[%c0_124, %c0_125] : memref<8x8xf32, #tpu.memory_space<vmem>>, vector<8x8xf32>
    %c0_126 = arith.constant 0 : index
    %c0_127 = arith.constant 0 : index
    %359 = vector.load %arg22[%c0_126, %c0_127] : memref<8x24xf32, #tpu.memory_space<vmem>>, vector<8x24xf32>
    %c0_128 = arith.constant 0 : index
    %c0_129 = arith.constant 0 : index
    %360 = vector.load %arg23[%c0_128, %c0_129] : memref<16x4xf32, #tpu.memory_space<vmem>>, vector<16x4xf32>
    %cst_130 = arith.constant dense<0.000000e+00> : vector<8x24xf32>
    %361 = tpu.matmul %357, %359, %cst_130 {dimension_numbers = #tpu.dot_dimension_numbers<[1], [0], [0], [1], [0, 0, 1, 1], [], []>} : vector<8x8xf32>, vector<8x24xf32>, vector<8x24xf32> -> vector<8x24xf32>
    %362 = vector.extract_strided_slice %361 {offsets = [0, 0], sizes = [8, 16], strides = [1, 1]} : vector<8x24xf32> to vector<8x16xf32>
    %363 = vector.extract_strided_slice %361 {offsets = [0, 16], sizes = [8, 8], strides = [1, 1]} : vector<8x24xf32> to vector<8x8xf32>
    %cst_131 = arith.constant dense<0.000000e+00> : vector<8x4xf32>
    %364 = tpu.matmul %362, %360, %cst_131 {dimension_numbers = #tpu.dot_dimension_numbers<[1], [0], [0], [1], [0, 0, 1, 1], [], []>} : vector<8x16xf32>, vector<16x4xf32>, vector<8x4xf32> -> vector<8x4xf32>
    %365 = vector.extract_strided_slice %364 {offsets = [0, 2], sizes = [8, 2], strides = [1, 1]} : vector<8x4xf32> to vector<8x2xf32>
    %366 = tpu.transpose %365, [1, 0] : vector<8x2xf32> -> vector<2x8xf32>
    %cst_132 = arith.constant 0.000000e+00 : f32
    %367 = vector.broadcast %cst_132 : f32 to vector<8x8xf32>
    %368 = vector.extract_strided_slice %362 {offsets = [0, 0], sizes = [8, 8], strides = [1, 1]} : vector<8x16xf32> to vector<8x8xf32>
    %369 = vector.extract_strided_slice %364 {offsets = [0, 0], sizes = [8, 1], strides = [1, 1]} : vector<8x4xf32> to vector<8x1xf32>
    %370 = vector.extract_strided_slice %366 {offsets = [0, 0], sizes = [1, 8], strides = [1, 1]} : vector<2x8xf32> to vector<1x8xf32>
    %371 = vector.broadcast %369 : vector<8x1xf32> to vector<8x8xf32>
    %372 = vector.broadcast %370 : vector<1x8xf32> to vector<8x8xf32>
    %373 = arith.addf %371, %372 : vector<8x8xf32>
    %cst_133 = arith.constant 0.000000e+00 : f32
    %374 = vector.broadcast %cst_133 : f32 to vector<8x8xf32>
    %375 = arith.cmpf ogt, %373, %374 : vector<8x8xf32>
    %cst_134 = arith.constant 2.000000e-01 : f32
    %376 = vector.broadcast %cst_134 : f32 to vector<8x8xf32>
    %377 = arith.mulf %376, %373 : vector<8x8xf32>
    %378 = arith.select %375, %373, %377 : vector<8x8xi1>, vector<8x8xf32>
    %379 = arith.addf %378, %358 : vector<8x8xf32>
    %cst_135 = arith.constant dense<0xFF800000> : vector<8xf32>
    %380 = vector.multi_reduction <maximumf>, %379, %cst_135 [1] : vector<8x8xf32> to vector<8xf32>
    %381 = vector.shape_cast %380 : vector<8xf32> to vector<8x1xf32>
    %382 = vector.broadcast %381 : vector<8x1xf32> to vector<8x8xf32>
    %383 = arith.subf %379, %382 : vector<8x8xf32>
    %384 = math.exp %383 : vector<8x8xf32>
    %cst_136 = arith.constant dense<0.000000e+00> : vector<8xf32>
    %385 = vector.multi_reduction <add>, %384, %cst_136 [1] : vector<8x8xf32> to vector<8xf32>
    %386 = vector.shape_cast %385 : vector<8xf32> to vector<8x1xf32>
    %387 = vector.broadcast %386 : vector<8x1xf32> to vector<8x8xf32>
    %388 = arith.divf %384, %387 : vector<8x8xf32>
    %cst_137 = arith.constant dense<0.000000e+00> : vector<8x8xf32>
    %389 = tpu.matmul %388, %368, %cst_137 {dimension_numbers = #tpu.dot_dimension_numbers<[1], [0], [0], [1], [0, 0, 1, 1], [], []>} : vector<8x8xf32>, vector<8x8xf32>, vector<8x8xf32> -> vector<8x8xf32>
    %390 = arith.addf %367, %389 : vector<8x8xf32>
    %391 = vector.extract_strided_slice %362 {offsets = [0, 8], sizes = [8, 8], strides = [1, 1]} : vector<8x16xf32> to vector<8x8xf32>
    %392 = vector.extract_strided_slice %364 {offsets = [0, 1], sizes = [8, 1], strides = [1, 1]} : vector<8x4xf32> to vector<8x1xf32>
    %393 = vector.extract_strided_slice %366 {offsets = [1, 0], sizes = [1, 8], strides = [1, 1]} : vector<2x8xf32> to vector<1x8xf32>
    %394 = vector.broadcast %392 : vector<8x1xf32> to vector<8x8xf32>
    %395 = vector.broadcast %393 : vector<1x8xf32> to vector<8x8xf32>
    %396 = arith.addf %394, %395 : vector<8x8xf32>
    %cst_138 = arith.constant 0.000000e+00 : f32
    %397 = vector.broadcast %cst_138 : f32 to vector<8x8xf32>
    %398 = arith.cmpf ogt, %396, %397 : vector<8x8xf32>
    %cst_139 = arith.constant 2.000000e-01 : f32
    %399 = vector.broadcast %cst_139 : f32 to vector<8x8xf32>
    %400 = arith.mulf %399, %396 : vector<8x8xf32>
    %401 = arith.select %398, %396, %400 : vector<8x8xi1>, vector<8x8xf32>
    %402 = arith.addf %401, %358 : vector<8x8xf32>
    %cst_140 = arith.constant dense<0xFF800000> : vector<8xf32>
    %403 = vector.multi_reduction <maximumf>, %402, %cst_140 [1] : vector<8x8xf32> to vector<8xf32>
    %404 = vector.shape_cast %403 : vector<8xf32> to vector<8x1xf32>
    %405 = vector.broadcast %404 : vector<8x1xf32> to vector<8x8xf32>
    %406 = arith.subf %402, %405 : vector<8x8xf32>
    %407 = math.exp %406 : vector<8x8xf32>
    %cst_141 = arith.constant dense<0.000000e+00> : vector<8xf32>
    %408 = vector.multi_reduction <add>, %407, %cst_141 [1] : vector<8x8xf32> to vector<8xf32>
    %409 = vector.shape_cast %408 : vector<8xf32> to vector<8x1xf32>
    %410 = vector.broadcast %409 : vector<8x1xf32> to vector<8x8xf32>
    %411 = arith.divf %407, %410 : vector<8x8xf32>
    %cst_142 = arith.constant dense<0.000000e+00> : vector<8x8xf32>
    %412 = tpu.matmul %411, %391, %cst_142 {dimension_numbers = #tpu.dot_dimension_numbers<[1], [0], [0], [1], [0, 0, 1, 1], [], []>} : vector<8x8xf32>, vector<8x8xf32>, vector<8x8xf32> -> vector<8x8xf32>
    %413 = arith.addf %390, %412 : vector<8x8xf32>
    %cst_143 = arith.constant 5.000000e-01 : f32
    %414 = vector.broadcast %cst_143 : f32 to vector<8x8xf32>
    %415 = arith.mulf %413, %414 : vector<8x8xf32>
    %416 = arith.addf %415, %363 : vector<8x8xf32>
    %cst_144 = arith.constant 0.000000e+00 : f32
    %417 = vector.broadcast %cst_144 : f32 to vector<8x8xf32>
    %418 = arith.minimumf %416, %417 : vector<8x8xf32>
    %cst_145 = arith.constant 0.000000e+00 : f32
    %419 = vector.broadcast %cst_145 : f32 to vector<8x8xf32>
    %420 = arith.cmpf ogt, %416, %419 : vector<8x8xf32>
    %421 = math.exp %418 : vector<8x8xf32>
    %cst_146 = arith.constant 1.000000e+00 : f32
    %422 = vector.broadcast %cst_146 : f32 to vector<8x8xf32>
    %423 = arith.subf %421, %422 : vector<8x8xf32>
    %424 = arith.select %420, %416, %423 : vector<8x8xi1>, vector<8x8xf32>
    %c0_147 = arith.constant 0 : index
    %c0_148 = arith.constant 0 : index
    %425 = vector.load %arg20[%c0_147, %c0_148] : memref<8x16xf32, #tpu.memory_space<vmem>>, vector<8x16xf32>
    %c0_149 = arith.constant 0 : index
    %c0_150 = arith.constant 0 : index
    %426 = vector.load %arg24[%c0_149, %c0_150] : memref<16x24xf32, #tpu.memory_space<vmem>>, vector<16x24xf32>
    %c0_151 = arith.constant 0 : index
    %c0_152 = arith.constant 0 : index
    %427 = vector.load %arg25[%c0_151, %c0_152] : memref<16x4xf32, #tpu.memory_space<vmem>>, vector<16x4xf32>
    %cst_153 = arith.constant dense<0.000000e+00> : vector<8x24xf32>
    %428 = tpu.matmul %425, %426, %cst_153 {dimension_numbers = #tpu.dot_dimension_numbers<[1], [0], [0], [1], [0, 0, 1, 1], [], []>} : vector<8x16xf32>, vector<16x24xf32>, vector<8x24xf32> -> vector<8x24xf32>
    %429 = vector.extract_strided_slice %428 {offsets = [0, 0], sizes = [8, 16], strides = [1, 1]} : vector<8x24xf32> to vector<8x16xf32>
    %430 = vector.extract_strided_slice %428 {offsets = [0, 16], sizes = [8, 8], strides = [1, 1]} : vector<8x24xf32> to vector<8x8xf32>
    %cst_154 = arith.constant dense<0.000000e+00> : vector<8x4xf32>
    %431 = tpu.matmul %429, %427, %cst_154 {dimension_numbers = #tpu.dot_dimension_numbers<[1], [0], [0], [1], [0, 0, 1, 1], [], []>} : vector<8x16xf32>, vector<16x4xf32>, vector<8x4xf32> -> vector<8x4xf32>
    %432 = vector.extract_strided_slice %431 {offsets = [0, 2], sizes = [8, 2], strides = [1, 1]} : vector<8x4xf32> to vector<8x2xf32>
    %433 = tpu.transpose %432, [1, 0] : vector<8x2xf32> -> vector<2x8xf32>
    %cst_155 = arith.constant 0.000000e+00 : f32
    %434 = vector.broadcast %cst_155 : f32 to vector<8x8xf32>
    %435 = vector.extract_strided_slice %429 {offsets = [0, 0], sizes = [8, 8], strides = [1, 1]} : vector<8x16xf32> to vector<8x8xf32>
    %436 = vector.extract_strided_slice %431 {offsets = [0, 0], sizes = [8, 1], strides = [1, 1]} : vector<8x4xf32> to vector<8x1xf32>
    %437 = vector.extract_strided_slice %433 {offsets = [0, 0], sizes = [1, 8], strides = [1, 1]} : vector<2x8xf32> to vector<1x8xf32>
    %438 = vector.broadcast %436 : vector<8x1xf32> to vector<8x8xf32>
    %439 = vector.broadcast %437 : vector<1x8xf32> to vector<8x8xf32>
    %440 = arith.addf %438, %439 : vector<8x8xf32>
    %cst_156 = arith.constant 0.000000e+00 : f32
    %441 = vector.broadcast %cst_156 : f32 to vector<8x8xf32>
    %442 = arith.cmpf ogt, %440, %441 : vector<8x8xf32>
    %cst_157 = arith.constant 2.000000e-01 : f32
    %443 = vector.broadcast %cst_157 : f32 to vector<8x8xf32>
    %444 = arith.mulf %443, %440 : vector<8x8xf32>
    %445 = arith.select %442, %440, %444 : vector<8x8xi1>, vector<8x8xf32>
    %446 = arith.addf %445, %358 : vector<8x8xf32>
    %cst_158 = arith.constant dense<0xFF800000> : vector<8xf32>
    %447 = vector.multi_reduction <maximumf>, %446, %cst_158 [1] : vector<8x8xf32> to vector<8xf32>
    %448 = vector.shape_cast %447 : vector<8xf32> to vector<8x1xf32>
    %449 = vector.broadcast %448 : vector<8x1xf32> to vector<8x8xf32>
    %450 = arith.subf %446, %449 : vector<8x8xf32>
    %451 = math.exp %450 : vector<8x8xf32>
    %cst_159 = arith.constant dense<0.000000e+00> : vector<8xf32>
    %452 = vector.multi_reduction <add>, %451, %cst_159 [1] : vector<8x8xf32> to vector<8xf32>
    %453 = vector.shape_cast %452 : vector<8xf32> to vector<8x1xf32>
    %454 = vector.broadcast %453 : vector<8x1xf32> to vector<8x8xf32>
    %455 = arith.divf %451, %454 : vector<8x8xf32>
    %cst_160 = arith.constant dense<0.000000e+00> : vector<8x8xf32>
    %456 = tpu.matmul %455, %435, %cst_160 {dimension_numbers = #tpu.dot_dimension_numbers<[1], [0], [0], [1], [0, 0, 1, 1], [], []>} : vector<8x8xf32>, vector<8x8xf32>, vector<8x8xf32> -> vector<8x8xf32>
    %457 = arith.addf %434, %456 : vector<8x8xf32>
    %458 = vector.extract_strided_slice %429 {offsets = [0, 8], sizes = [8, 8], strides = [1, 1]} : vector<8x16xf32> to vector<8x8xf32>
    %459 = vector.extract_strided_slice %431 {offsets = [0, 1], sizes = [8, 1], strides = [1, 1]} : vector<8x4xf32> to vector<8x1xf32>
    %460 = vector.extract_strided_slice %433 {offsets = [1, 0], sizes = [1, 8], strides = [1, 1]} : vector<2x8xf32> to vector<1x8xf32>
    %461 = vector.broadcast %459 : vector<8x1xf32> to vector<8x8xf32>
    %462 = vector.broadcast %460 : vector<1x8xf32> to vector<8x8xf32>
    %463 = arith.addf %461, %462 : vector<8x8xf32>
    %cst_161 = arith.constant 0.000000e+00 : f32
    %464 = vector.broadcast %cst_161 : f32 to vector<8x8xf32>
    %465 = arith.cmpf ogt, %463, %464 : vector<8x8xf32>
    %cst_162 = arith.constant 2.000000e-01 : f32
    %466 = vector.broadcast %cst_162 : f32 to vector<8x8xf32>
    %467 = arith.mulf %466, %463 : vector<8x8xf32>
    %468 = arith.select %465, %463, %467 : vector<8x8xi1>, vector<8x8xf32>
    %469 = arith.addf %468, %358 : vector<8x8xf32>
    %cst_163 = arith.constant dense<0xFF800000> : vector<8xf32>
    %470 = vector.multi_reduction <maximumf>, %469, %cst_163 [1] : vector<8x8xf32> to vector<8xf32>
    %471 = vector.shape_cast %470 : vector<8xf32> to vector<8x1xf32>
    %472 = vector.broadcast %471 : vector<8x1xf32> to vector<8x8xf32>
    %473 = arith.subf %469, %472 : vector<8x8xf32>
    %474 = math.exp %473 : vector<8x8xf32>
    %cst_164 = arith.constant dense<0.000000e+00> : vector<8xf32>
    %475 = vector.multi_reduction <add>, %474, %cst_164 [1] : vector<8x8xf32> to vector<8xf32>
    %476 = vector.shape_cast %475 : vector<8xf32> to vector<8x1xf32>
    %477 = vector.broadcast %476 : vector<8x1xf32> to vector<8x8xf32>
    %478 = arith.divf %474, %477 : vector<8x8xf32>
    %cst_165 = arith.constant dense<0.000000e+00> : vector<8x8xf32>
    %479 = tpu.matmul %478, %458, %cst_165 {dimension_numbers = #tpu.dot_dimension_numbers<[1], [0], [0], [1], [0, 0, 1, 1], [], []>} : vector<8x8xf32>, vector<8x8xf32>, vector<8x8xf32> -> vector<8x8xf32>
    %480 = arith.addf %457, %479 : vector<8x8xf32>
    %cst_166 = arith.constant 5.000000e-01 : f32
    %481 = vector.broadcast %cst_166 : f32 to vector<8x8xf32>
    %482 = arith.mulf %480, %481 : vector<8x8xf32>
    %483 = arith.addf %482, %430 : vector<8x8xf32>
    %cst_167 = arith.constant 0.000000e+00 : f32
    %484 = vector.broadcast %cst_167 : f32 to vector<8x8xf32>
    %485 = arith.minimumf %483, %484 : vector<8x8xf32>
    %cst_168 = arith.constant 0.000000e+00 : f32
    %486 = vector.broadcast %cst_168 : f32 to vector<8x8xf32>
    %487 = arith.cmpf ogt, %483, %486 : vector<8x8xf32>
    %488 = math.exp %485 : vector<8x8xf32>
    %cst_169 = arith.constant 1.000000e+00 : f32
    %489 = vector.broadcast %cst_169 : f32 to vector<8x8xf32>
    %490 = arith.subf %488, %489 : vector<8x8xf32>
    %491 = arith.select %487, %483, %490 : vector<8x8xi1>, vector<8x8xf32>
    %c0_170 = arith.constant 0 : index
    %c0_171 = arith.constant 0 : index
    %492 = vector.load %arg26[%c0_170, %c0_171] : memref<8x24xf32, #tpu.memory_space<vmem>>, vector<8x24xf32>
    %c0_172 = arith.constant 0 : index
    %c0_173 = arith.constant 0 : index
    %493 = vector.load %arg27[%c0_172, %c0_173] : memref<16x4xf32, #tpu.memory_space<vmem>>, vector<16x4xf32>
    %cst_174 = arith.constant dense<0.000000e+00> : vector<8x24xf32>
    %494 = tpu.matmul %424, %492, %cst_174 {dimension_numbers = #tpu.dot_dimension_numbers<[1], [0], [0], [1], [0, 0, 1, 1], [], []>} : vector<8x8xf32>, vector<8x24xf32>, vector<8x24xf32> -> vector<8x24xf32>
    %495 = vector.extract_strided_slice %494 {offsets = [0, 0], sizes = [8, 16], strides = [1, 1]} : vector<8x24xf32> to vector<8x16xf32>
    %496 = vector.extract_strided_slice %494 {offsets = [0, 16], sizes = [8, 8], strides = [1, 1]} : vector<8x24xf32> to vector<8x8xf32>
    %cst_175 = arith.constant dense<0.000000e+00> : vector<8x4xf32>
    %497 = tpu.matmul %495, %493, %cst_175 {dimension_numbers = #tpu.dot_dimension_numbers<[1], [0], [0], [1], [0, 0, 1, 1], [], []>} : vector<8x16xf32>, vector<16x4xf32>, vector<8x4xf32> -> vector<8x4xf32>
    %498 = vector.extract_strided_slice %497 {offsets = [0, 2], sizes = [8, 2], strides = [1, 1]} : vector<8x4xf32> to vector<8x2xf32>
    %499 = tpu.transpose %498, [1, 0] : vector<8x2xf32> -> vector<2x8xf32>
    %cst_176 = arith.constant 0.000000e+00 : f32
    %500 = vector.broadcast %cst_176 : f32 to vector<8x8xf32>
    %501 = vector.extract_strided_slice %495 {offsets = [0, 0], sizes = [8, 8], strides = [1, 1]} : vector<8x16xf32> to vector<8x8xf32>
    %502 = vector.extract_strided_slice %497 {offsets = [0, 0], sizes = [8, 1], strides = [1, 1]} : vector<8x4xf32> to vector<8x1xf32>
    %503 = vector.extract_strided_slice %499 {offsets = [0, 0], sizes = [1, 8], strides = [1, 1]} : vector<2x8xf32> to vector<1x8xf32>
    %504 = vector.broadcast %502 : vector<8x1xf32> to vector<8x8xf32>
    %505 = vector.broadcast %503 : vector<1x8xf32> to vector<8x8xf32>
    %506 = arith.addf %504, %505 : vector<8x8xf32>
    %cst_177 = arith.constant 0.000000e+00 : f32
    %507 = vector.broadcast %cst_177 : f32 to vector<8x8xf32>
    %508 = arith.cmpf ogt, %506, %507 : vector<8x8xf32>
    %cst_178 = arith.constant 2.000000e-01 : f32
    %509 = vector.broadcast %cst_178 : f32 to vector<8x8xf32>
    %510 = arith.mulf %509, %506 : vector<8x8xf32>
    %511 = arith.select %508, %506, %510 : vector<8x8xi1>, vector<8x8xf32>
    %512 = arith.addf %511, %358 : vector<8x8xf32>
    %cst_179 = arith.constant dense<0xFF800000> : vector<8xf32>
    %513 = vector.multi_reduction <maximumf>, %512, %cst_179 [1] : vector<8x8xf32> to vector<8xf32>
    %514 = vector.shape_cast %513 : vector<8xf32> to vector<8x1xf32>
    %515 = vector.broadcast %514 : vector<8x1xf32> to vector<8x8xf32>
    %516 = arith.subf %512, %515 : vector<8x8xf32>
    %517 = math.exp %516 : vector<8x8xf32>
    %cst_180 = arith.constant dense<0.000000e+00> : vector<8xf32>
    %518 = vector.multi_reduction <add>, %517, %cst_180 [1] : vector<8x8xf32> to vector<8xf32>
    %519 = vector.shape_cast %518 : vector<8xf32> to vector<8x1xf32>
    %520 = vector.broadcast %519 : vector<8x1xf32> to vector<8x8xf32>
    %521 = arith.divf %517, %520 : vector<8x8xf32>
    %cst_181 = arith.constant dense<0.000000e+00> : vector<8x8xf32>
    %522 = tpu.matmul %521, %501, %cst_181 {dimension_numbers = #tpu.dot_dimension_numbers<[1], [0], [0], [1], [0, 0, 1, 1], [], []>} : vector<8x8xf32>, vector<8x8xf32>, vector<8x8xf32> -> vector<8x8xf32>
    %523 = arith.addf %500, %522 : vector<8x8xf32>
    %524 = vector.extract_strided_slice %495 {offsets = [0, 8], sizes = [8, 8], strides = [1, 1]} : vector<8x16xf32> to vector<8x8xf32>
    %525 = vector.extract_strided_slice %497 {offsets = [0, 1], sizes = [8, 1], strides = [1, 1]} : vector<8x4xf32> to vector<8x1xf32>
    %526 = vector.extract_strided_slice %499 {offsets = [1, 0], sizes = [1, 8], strides = [1, 1]} : vector<2x8xf32> to vector<1x8xf32>
    %527 = vector.broadcast %525 : vector<8x1xf32> to vector<8x8xf32>
    %528 = vector.broadcast %526 : vector<1x8xf32> to vector<8x8xf32>
    %529 = arith.addf %527, %528 : vector<8x8xf32>
    %cst_182 = arith.constant 0.000000e+00 : f32
    %530 = vector.broadcast %cst_182 : f32 to vector<8x8xf32>
    %531 = arith.cmpf ogt, %529, %530 : vector<8x8xf32>
    %cst_183 = arith.constant 2.000000e-01 : f32
    %532 = vector.broadcast %cst_183 : f32 to vector<8x8xf32>
    %533 = arith.mulf %532, %529 : vector<8x8xf32>
    %534 = arith.select %531, %529, %533 : vector<8x8xi1>, vector<8x8xf32>
    %535 = arith.addf %534, %358 : vector<8x8xf32>
    %cst_184 = arith.constant dense<0xFF800000> : vector<8xf32>
    %536 = vector.multi_reduction <maximumf>, %535, %cst_184 [1] : vector<8x8xf32> to vector<8xf32>
    %537 = vector.shape_cast %536 : vector<8xf32> to vector<8x1xf32>
    %538 = vector.broadcast %537 : vector<8x1xf32> to vector<8x8xf32>
    %539 = arith.subf %535, %538 : vector<8x8xf32>
    %540 = math.exp %539 : vector<8x8xf32>
    %cst_185 = arith.constant dense<0.000000e+00> : vector<8xf32>
    %541 = vector.multi_reduction <add>, %540, %cst_185 [1] : vector<8x8xf32> to vector<8xf32>
    %542 = vector.shape_cast %541 : vector<8xf32> to vector<8x1xf32>
    %543 = vector.broadcast %542 : vector<8x1xf32> to vector<8x8xf32>
    %544 = arith.divf %540, %543 : vector<8x8xf32>
    %cst_186 = arith.constant dense<0.000000e+00> : vector<8x8xf32>
    %545 = tpu.matmul %544, %524, %cst_186 {dimension_numbers = #tpu.dot_dimension_numbers<[1], [0], [0], [1], [0, 0, 1, 1], [], []>} : vector<8x8xf32>, vector<8x8xf32>, vector<8x8xf32> -> vector<8x8xf32>
    %546 = arith.addf %523, %545 : vector<8x8xf32>
    %cst_187 = arith.constant 5.000000e-01 : f32
    %547 = vector.broadcast %cst_187 : f32 to vector<8x8xf32>
    %548 = arith.mulf %546, %547 : vector<8x8xf32>
    %549 = arith.addf %548, %496 : vector<8x8xf32>
    %cst_188 = arith.constant 0.000000e+00 : f32
    %550 = vector.broadcast %cst_188 : f32 to vector<8x8xf32>
    %551 = arith.minimumf %549, %550 : vector<8x8xf32>
    %cst_189 = arith.constant 0.000000e+00 : f32
    %552 = vector.broadcast %cst_189 : f32 to vector<8x8xf32>
    %553 = arith.cmpf ogt, %549, %552 : vector<8x8xf32>
    %554 = math.exp %551 : vector<8x8xf32>
    %cst_190 = arith.constant 1.000000e+00 : f32
    %555 = vector.broadcast %cst_190 : f32 to vector<8x8xf32>
    %556 = arith.subf %554, %555 : vector<8x8xf32>
    %557 = arith.select %553, %549, %556 : vector<8x8xi1>, vector<8x8xf32>
    %c0_191 = arith.constant 0 : index
    %c0_192 = arith.constant 0 : index
    %558 = vector.load %arg28[%c0_191, %c0_192] : memref<8x24xf32, #tpu.memory_space<vmem>>, vector<8x24xf32>
    %c0_193 = arith.constant 0 : index
    %c0_194 = arith.constant 0 : index
    %559 = vector.load %arg29[%c0_193, %c0_194] : memref<16x4xf32, #tpu.memory_space<vmem>>, vector<16x4xf32>
    %cst_195 = arith.constant dense<0.000000e+00> : vector<8x24xf32>
    %560 = tpu.matmul %491, %558, %cst_195 {dimension_numbers = #tpu.dot_dimension_numbers<[1], [0], [0], [1], [0, 0, 1, 1], [], []>} : vector<8x8xf32>, vector<8x24xf32>, vector<8x24xf32> -> vector<8x24xf32>
    %561 = vector.extract_strided_slice %560 {offsets = [0, 0], sizes = [8, 16], strides = [1, 1]} : vector<8x24xf32> to vector<8x16xf32>
    %562 = vector.extract_strided_slice %560 {offsets = [0, 16], sizes = [8, 8], strides = [1, 1]} : vector<8x24xf32> to vector<8x8xf32>
    %cst_196 = arith.constant dense<0.000000e+00> : vector<8x4xf32>
    %563 = tpu.matmul %561, %559, %cst_196 {dimension_numbers = #tpu.dot_dimension_numbers<[1], [0], [0], [1], [0, 0, 1, 1], [], []>} : vector<8x16xf32>, vector<16x4xf32>, vector<8x4xf32> -> vector<8x4xf32>
    %564 = vector.extract_strided_slice %563 {offsets = [0, 2], sizes = [8, 2], strides = [1, 1]} : vector<8x4xf32> to vector<8x2xf32>
    %565 = tpu.transpose %564, [1, 0] : vector<8x2xf32> -> vector<2x8xf32>
    %cst_197 = arith.constant 0.000000e+00 : f32
    %566 = vector.broadcast %cst_197 : f32 to vector<8x8xf32>
    %567 = vector.extract_strided_slice %561 {offsets = [0, 0], sizes = [8, 8], strides = [1, 1]} : vector<8x16xf32> to vector<8x8xf32>
    %568 = vector.extract_strided_slice %563 {offsets = [0, 0], sizes = [8, 1], strides = [1, 1]} : vector<8x4xf32> to vector<8x1xf32>
    %569 = vector.extract_strided_slice %565 {offsets = [0, 0], sizes = [1, 8], strides = [1, 1]} : vector<2x8xf32> to vector<1x8xf32>
    %570 = vector.broadcast %568 : vector<8x1xf32> to vector<8x8xf32>
    %571 = vector.broadcast %569 : vector<1x8xf32> to vector<8x8xf32>
    %572 = arith.addf %570, %571 : vector<8x8xf32>
    %cst_198 = arith.constant 0.000000e+00 : f32
    %573 = vector.broadcast %cst_198 : f32 to vector<8x8xf32>
    %574 = arith.cmpf ogt, %572, %573 : vector<8x8xf32>
    %cst_199 = arith.constant 2.000000e-01 : f32
    %575 = vector.broadcast %cst_199 : f32 to vector<8x8xf32>
    %576 = arith.mulf %575, %572 : vector<8x8xf32>
    %577 = arith.select %574, %572, %576 : vector<8x8xi1>, vector<8x8xf32>
    %578 = arith.addf %577, %358 : vector<8x8xf32>
    %cst_200 = arith.constant dense<0xFF800000> : vector<8xf32>
    %579 = vector.multi_reduction <maximumf>, %578, %cst_200 [1] : vector<8x8xf32> to vector<8xf32>
    %580 = vector.shape_cast %579 : vector<8xf32> to vector<8x1xf32>
    %581 = vector.broadcast %580 : vector<8x1xf32> to vector<8x8xf32>
    %582 = arith.subf %578, %581 : vector<8x8xf32>
    %583 = math.exp %582 : vector<8x8xf32>
    %cst_201 = arith.constant dense<0.000000e+00> : vector<8xf32>
    %584 = vector.multi_reduction <add>, %583, %cst_201 [1] : vector<8x8xf32> to vector<8xf32>
    %585 = vector.shape_cast %584 : vector<8xf32> to vector<8x1xf32>
    %586 = vector.broadcast %585 : vector<8x1xf32> to vector<8x8xf32>
    %587 = arith.divf %583, %586 : vector<8x8xf32>
    %cst_202 = arith.constant dense<0.000000e+00> : vector<8x8xf32>
    %588 = tpu.matmul %587, %567, %cst_202 {dimension_numbers = #tpu.dot_dimension_numbers<[1], [0], [0], [1], [0, 0, 1, 1], [], []>} : vector<8x8xf32>, vector<8x8xf32>, vector<8x8xf32> -> vector<8x8xf32>
    %589 = arith.addf %566, %588 : vector<8x8xf32>
    %590 = vector.extract_strided_slice %561 {offsets = [0, 8], sizes = [8, 8], strides = [1, 1]} : vector<8x16xf32> to vector<8x8xf32>
    %591 = vector.extract_strided_slice %563 {offsets = [0, 1], sizes = [8, 1], strides = [1, 1]} : vector<8x4xf32> to vector<8x1xf32>
    %592 = vector.extract_strided_slice %565 {offsets = [1, 0], sizes = [1, 8], strides = [1, 1]} : vector<2x8xf32> to vector<1x8xf32>
    %593 = vector.broadcast %591 : vector<8x1xf32> to vector<8x8xf32>
    %594 = vector.broadcast %592 : vector<1x8xf32> to vector<8x8xf32>
    %595 = arith.addf %593, %594 : vector<8x8xf32>
    %cst_203 = arith.constant 0.000000e+00 : f32
    %596 = vector.broadcast %cst_203 : f32 to vector<8x8xf32>
    %597 = arith.cmpf ogt, %595, %596 : vector<8x8xf32>
    %cst_204 = arith.constant 2.000000e-01 : f32
    %598 = vector.broadcast %cst_204 : f32 to vector<8x8xf32>
    %599 = arith.mulf %598, %595 : vector<8x8xf32>
    %600 = arith.select %597, %595, %599 : vector<8x8xi1>, vector<8x8xf32>
    %601 = arith.addf %600, %358 : vector<8x8xf32>
    %cst_205 = arith.constant dense<0xFF800000> : vector<8xf32>
    %602 = vector.multi_reduction <maximumf>, %601, %cst_205 [1] : vector<8x8xf32> to vector<8xf32>
    %603 = vector.shape_cast %602 : vector<8xf32> to vector<8x1xf32>
    %604 = vector.broadcast %603 : vector<8x1xf32> to vector<8x8xf32>
    %605 = arith.subf %601, %604 : vector<8x8xf32>
    %606 = math.exp %605 : vector<8x8xf32>
    %cst_206 = arith.constant dense<0.000000e+00> : vector<8xf32>
    %607 = vector.multi_reduction <add>, %606, %cst_206 [1] : vector<8x8xf32> to vector<8xf32>
    %608 = vector.shape_cast %607 : vector<8xf32> to vector<8x1xf32>
    %609 = vector.broadcast %608 : vector<8x1xf32> to vector<8x8xf32>
    %610 = arith.divf %606, %609 : vector<8x8xf32>
    %cst_207 = arith.constant dense<0.000000e+00> : vector<8x8xf32>
    %611 = tpu.matmul %610, %590, %cst_207 {dimension_numbers = #tpu.dot_dimension_numbers<[1], [0], [0], [1], [0, 0, 1, 1], [], []>} : vector<8x8xf32>, vector<8x8xf32>, vector<8x8xf32> -> vector<8x8xf32>
    %612 = arith.addf %589, %611 : vector<8x8xf32>
    %cst_208 = arith.constant 5.000000e-01 : f32
    %613 = vector.broadcast %cst_208 : f32 to vector<8x8xf32>
    %614 = arith.mulf %612, %613 : vector<8x8xf32>
    %615 = arith.addf %614, %562 : vector<8x8xf32>
    %cst_209 = arith.constant 0.000000e+00 : f32
    %616 = vector.broadcast %cst_209 : f32 to vector<8x8xf32>
    %617 = arith.minimumf %615, %616 : vector<8x8xf32>
    %cst_210 = arith.constant 0.000000e+00 : f32
    %618 = vector.broadcast %cst_210 : f32 to vector<8x8xf32>
    %619 = arith.cmpf ogt, %615, %618 : vector<8x8xf32>
    %620 = math.exp %617 : vector<8x8xf32>
    %cst_211 = arith.constant 1.000000e+00 : f32
    %621 = vector.broadcast %cst_211 : f32 to vector<8x8xf32>
    %622 = arith.subf %620, %621 : vector<8x8xf32>
    %623 = arith.select %619, %615, %622 : vector<8x8xi1>, vector<8x8xf32>
    %cst_212 = arith.constant dense<0.000000e+00> : vector<8xf32>
    %624 = vector.multi_reduction <add>, %424, %cst_212 [1] : vector<8x8xf32> to vector<8xf32>
    %625 = vector.shape_cast %624 : vector<8xf32> to vector<8x1xf32>
    %cst_213 = arith.constant 8.000000e+00 : f32
    %626 = vector.broadcast %cst_213 : f32 to vector<8x1xf32>
    %627 = arith.divf %625, %626 : vector<8x1xf32>
    %cst_214 = arith.constant dense<0.000000e+00> : vector<1xf32>
    %628 = vector.multi_reduction <add>, %627, %cst_214 [0] : vector<8x1xf32> to vector<1xf32>
    %629 = vector.shape_cast %628 : vector<1xf32> to vector<1x1xf32>
    %cst_215 = arith.constant 8.000000e+00 : f32
    %630 = vector.broadcast %cst_215 : f32 to vector<1x1xf32>
    %631 = arith.divf %629, %630 : vector<1x1xf32>
    %cst_216 = arith.constant dense<0.000000e+00> : vector<8xf32>
    %632 = vector.multi_reduction <add>, %557, %cst_216 [1] : vector<8x8xf32> to vector<8xf32>
    %633 = vector.shape_cast %632 : vector<8xf32> to vector<8x1xf32>
    %cst_217 = arith.constant 8.000000e+00 : f32
    %634 = vector.broadcast %cst_217 : f32 to vector<8x1xf32>
    %635 = arith.divf %633, %634 : vector<8x1xf32>
    %cst_218 = arith.constant dense<0.000000e+00> : vector<1xf32>
    %636 = vector.multi_reduction <add>, %635, %cst_218 [0] : vector<8x1xf32> to vector<1xf32>
    %637 = vector.shape_cast %636 : vector<1xf32> to vector<1x1xf32>
    %cst_219 = arith.constant 8.000000e+00 : f32
    %638 = vector.broadcast %cst_219 : f32 to vector<1x1xf32>
    %639 = arith.divf %637, %638 : vector<1x1xf32>
    %cst_220 = arith.constant dense<0.000000e+00> : vector<8xf32>
    %640 = vector.multi_reduction <add>, %491, %cst_220 [1] : vector<8x8xf32> to vector<8xf32>
    %641 = vector.shape_cast %640 : vector<8xf32> to vector<8x1xf32>
    %cst_221 = arith.constant 8.000000e+00 : f32
    %642 = vector.broadcast %cst_221 : f32 to vector<8x1xf32>
    %643 = arith.divf %641, %642 : vector<8x1xf32>
    %cst_222 = arith.constant dense<0.000000e+00> : vector<1xf32>
    %644 = vector.multi_reduction <add>, %643, %cst_222 [0] : vector<8x1xf32> to vector<1xf32>
    %645 = vector.shape_cast %644 : vector<1xf32> to vector<1x1xf32>
    %cst_223 = arith.constant 8.000000e+00 : f32
    %646 = vector.broadcast %cst_223 : f32 to vector<1x1xf32>
    %647 = arith.divf %645, %646 : vector<1x1xf32>
    %cst_224 = arith.constant dense<0.000000e+00> : vector<8xf32>
    %648 = vector.multi_reduction <add>, %623, %cst_224 [1] : vector<8x8xf32> to vector<8xf32>
    %649 = vector.shape_cast %648 : vector<8xf32> to vector<8x1xf32>
    %cst_225 = arith.constant 8.000000e+00 : f32
    %650 = vector.broadcast %cst_225 : f32 to vector<8x1xf32>
    %651 = arith.divf %649, %650 : vector<8x1xf32>
    %cst_226 = arith.constant dense<0.000000e+00> : vector<1xf32>
    %652 = vector.multi_reduction <add>, %651, %cst_226 [0] : vector<8x1xf32> to vector<1xf32>
    %653 = vector.shape_cast %652 : vector<1xf32> to vector<1x1xf32>
    %cst_227 = arith.constant 8.000000e+00 : f32
    %654 = vector.broadcast %cst_227 : f32 to vector<1x1xf32>
    %655 = arith.divf %653, %654 : vector<1x1xf32>
    %656 = tpu.concatenate %631, %639, %647, %655 in 1 : vector<1x1xf32>, vector<1x1xf32>, vector<1x1xf32>, vector<1x1xf32> -> vector<1x4xf32>
    %c0_228 = arith.constant 0 : index
    %c0_229 = arith.constant 0 : index
    %657 = vector.load %arg30[%c0_228, %c0_229] : memref<4x20xf32, #tpu.memory_space<vmem>>, vector<4x20xf32>
    %cst_230 = arith.constant dense<0.000000e+00> : vector<1x20xf32>
    %658 = tpu.matmul %656, %657, %cst_230 {dimension_numbers = #tpu.dot_dimension_numbers<[1], [0], [0], [1], [0, 0, 1, 1], [], []>} : vector<1x4xf32>, vector<4x20xf32>, vector<1x20xf32> -> vector<1x20xf32>
    %c0_231 = arith.constant 0 : index
    %c0_232 = arith.constant 0 : index
    %659 = vector.load %arg31[%c0_231, %c0_232] : memref<1x20xf32, #tpu.memory_space<vmem>>, vector<1x20xf32>
    %660 = arith.addf %658, %659 : vector<1x20xf32>
    %c0_233 = arith.constant 0 : index
    %c0_234 = arith.constant 0 : index
    %661 = vector.load %arg32[%c0_233, %c0_234] : memref<20x4xf32, #tpu.memory_space<vmem>>, vector<20x4xf32>
    %cst_235 = arith.constant dense<0.000000e+00> : vector<1x4xf32>
    %662 = tpu.matmul %660, %661, %cst_235 {dimension_numbers = #tpu.dot_dimension_numbers<[1], [0], [0], [1], [0, 0, 1, 1], [], []>} : vector<1x20xf32>, vector<20x4xf32>, vector<1x4xf32> -> vector<1x4xf32>
    %c0_236 = arith.constant 0 : index
    %c0_237 = arith.constant 0 : index
    %663 = vector.load %arg33[%c0_236, %c0_237] : memref<1x4xf32, #tpu.memory_space<vmem>>, vector<1x4xf32>
    %664 = arith.addf %662, %663 : vector<1x4xf32>
    %665 = arith.negf %664 : vector<1x4xf32>
    %666 = math.exp %665 : vector<1x4xf32>
    %cst_238 = arith.constant 1.000000e+00 : f32
    %667 = vector.broadcast %cst_238 : f32 to vector<1x4xf32>
    %668 = arith.addf %667, %666 : vector<1x4xf32>
    %669 = arith.divf %667, %668 : vector<1x4xf32>
    %cst_239 = arith.constant 0.000000e+00 : f32
    %670 = vector.broadcast %cst_239 : f32 to vector<8x8xf32>
    %c0_240 = arith.constant 0 : index
    %671 = memref.load %arg34[%c0_240] : memref<4xf32, #tpu.memory_space<smem>>
    %672 = vector.extract_strided_slice %669 {offsets = [0, 0], sizes = [1, 1], strides = [1, 1]} : vector<1x4xf32> to vector<1x1xf32>
    %673 = vector.extract %672[0, 0] : f32 from vector<1x1xf32>
    %674 = vector.broadcast %673 : f32 to vector<8x8xf32>
    %675 = arith.mulf %674, %424 : vector<8x8xf32>
    %cst_241 = arith.constant 0.000000e+00 : f32
    %676 = vector.broadcast %cst_241 : f32 to vector<8x8xf32>
    %677 = arith.maximumf %675, %676 : vector<8x8xf32>
    %678 = vector.broadcast %671 : f32 to vector<8x8xf32>
    %679 = arith.mulf %678, %677 : vector<8x8xf32>
    %680 = arith.addf %670, %679 : vector<8x8xf32>
    %c1_242 = arith.constant 1 : index
    %681 = memref.load %arg34[%c1_242] : memref<4xf32, #tpu.memory_space<smem>>
    %682 = vector.extract_strided_slice %669 {offsets = [0, 1], sizes = [1, 1], strides = [1, 1]} : vector<1x4xf32> to vector<1x1xf32>
    %683 = vector.extract %682[0, 0] : f32 from vector<1x1xf32>
    %684 = vector.broadcast %683 : f32 to vector<8x8xf32>
    %685 = arith.mulf %684, %557 : vector<8x8xf32>
    %cst_243 = arith.constant 0.000000e+00 : f32
    %686 = vector.broadcast %cst_243 : f32 to vector<8x8xf32>
    %687 = arith.maximumf %685, %686 : vector<8x8xf32>
    %688 = vector.broadcast %681 : f32 to vector<8x8xf32>
    %689 = arith.mulf %688, %687 : vector<8x8xf32>
    %690 = arith.addf %680, %689 : vector<8x8xf32>
    %c2_244 = arith.constant 2 : index
    %691 = memref.load %arg34[%c2_244] : memref<4xf32, #tpu.memory_space<smem>>
    %692 = vector.extract_strided_slice %669 {offsets = [0, 2], sizes = [1, 1], strides = [1, 1]} : vector<1x4xf32> to vector<1x1xf32>
    %693 = vector.extract %692[0, 0] : f32 from vector<1x1xf32>
    %694 = vector.broadcast %693 : f32 to vector<8x8xf32>
    %695 = arith.mulf %694, %491 : vector<8x8xf32>
    %cst_245 = arith.constant 0.000000e+00 : f32
    %696 = vector.broadcast %cst_245 : f32 to vector<8x8xf32>
    %697 = arith.maximumf %695, %696 : vector<8x8xf32>
    %698 = vector.broadcast %691 : f32 to vector<8x8xf32>
    %699 = arith.mulf %698, %697 : vector<8x8xf32>
    %700 = arith.addf %690, %699 : vector<8x8xf32>
    %c3_246 = arith.constant 3 : index
    %701 = memref.load %arg34[%c3_246] : memref<4xf32, #tpu.memory_space<smem>>
    %702 = vector.extract_strided_slice %669 {offsets = [0, 3], sizes = [1, 1], strides = [1, 1]} : vector<1x4xf32> to vector<1x1xf32>
    %703 = vector.extract %702[0, 0] : f32 from vector<1x1xf32>
    %704 = vector.broadcast %703 : f32 to vector<8x8xf32>
    %705 = arith.mulf %704, %623 : vector<8x8xf32>
    %cst_247 = arith.constant 0.000000e+00 : f32
    %706 = vector.broadcast %cst_247 : f32 to vector<8x8xf32>
    %707 = arith.maximumf %705, %706 : vector<8x8xf32>
    %708 = vector.broadcast %701 : f32 to vector<8x8xf32>
    %709 = arith.mulf %708, %707 : vector<8x8xf32>
    %710 = arith.addf %700, %709 : vector<8x8xf32>
    %c0_248 = arith.constant 0 : index
    %711 = memref.load %arg35[%c0_248] : memref<1xf32, #tpu.memory_space<smem>>
    %712 = vector.broadcast %711 : f32 to vector<8x8xf32>
    %713 = arith.addf %710, %712 : vector<8x8xf32>
    %c0_249 = arith.constant 0 : index
    %c0_250 = arith.constant 0 : index
    %714 = vector.load %arg2[%c0_249, %c0_250] : memref<8x8xf32, #tpu.memory_space<vmem>>, vector<8x8xf32>
    %c0_251 = arith.constant 0 : index
    %c0_252 = arith.constant 0 : index
    %715 = vector.load %arg37[%c0_251, %c0_252] : memref<8x8xf32, #tpu.memory_space<vmem>>, vector<8x8xf32>
    %c0_253 = arith.constant 0 : index
    %c0_254 = arith.constant 0 : index
    %716 = vector.load %arg38[%c0_253, %c0_254] : memref<8x24xf32, #tpu.memory_space<vmem>>, vector<8x24xf32>
    %c0_255 = arith.constant 0 : index
    %c0_256 = arith.constant 0 : index
    %717 = vector.load %arg39[%c0_255, %c0_256] : memref<16x4xf32, #tpu.memory_space<vmem>>, vector<16x4xf32>
    %cst_257 = arith.constant dense<0.000000e+00> : vector<8x24xf32>
    %718 = tpu.matmul %714, %716, %cst_257 {dimension_numbers = #tpu.dot_dimension_numbers<[1], [0], [0], [1], [0, 0, 1, 1], [], []>} : vector<8x8xf32>, vector<8x24xf32>, vector<8x24xf32> -> vector<8x24xf32>
    %719 = vector.extract_strided_slice %718 {offsets = [0, 0], sizes = [8, 16], strides = [1, 1]} : vector<8x24xf32> to vector<8x16xf32>
    %720 = vector.extract_strided_slice %718 {offsets = [0, 16], sizes = [8, 8], strides = [1, 1]} : vector<8x24xf32> to vector<8x8xf32>
    %cst_258 = arith.constant dense<0.000000e+00> : vector<8x4xf32>
    %721 = tpu.matmul %719, %717, %cst_258 {dimension_numbers = #tpu.dot_dimension_numbers<[1], [0], [0], [1], [0, 0, 1, 1], [], []>} : vector<8x16xf32>, vector<16x4xf32>, vector<8x4xf32> -> vector<8x4xf32>
    %722 = vector.extract_strided_slice %721 {offsets = [0, 2], sizes = [8, 2], strides = [1, 1]} : vector<8x4xf32> to vector<8x2xf32>
    %723 = tpu.transpose %722, [1, 0] : vector<8x2xf32> -> vector<2x8xf32>
    %cst_259 = arith.constant 0.000000e+00 : f32
    %724 = vector.broadcast %cst_259 : f32 to vector<8x8xf32>
    %725 = vector.extract_strided_slice %719 {offsets = [0, 0], sizes = [8, 8], strides = [1, 1]} : vector<8x16xf32> to vector<8x8xf32>
    %726 = vector.extract_strided_slice %721 {offsets = [0, 0], sizes = [8, 1], strides = [1, 1]} : vector<8x4xf32> to vector<8x1xf32>
    %727 = vector.extract_strided_slice %723 {offsets = [0, 0], sizes = [1, 8], strides = [1, 1]} : vector<2x8xf32> to vector<1x8xf32>
    %728 = vector.broadcast %726 : vector<8x1xf32> to vector<8x8xf32>
    %729 = vector.broadcast %727 : vector<1x8xf32> to vector<8x8xf32>
    %730 = arith.addf %728, %729 : vector<8x8xf32>
    %cst_260 = arith.constant 0.000000e+00 : f32
    %731 = vector.broadcast %cst_260 : f32 to vector<8x8xf32>
    %732 = arith.cmpf ogt, %730, %731 : vector<8x8xf32>
    %cst_261 = arith.constant 2.000000e-01 : f32
    %733 = vector.broadcast %cst_261 : f32 to vector<8x8xf32>
    %734 = arith.mulf %733, %730 : vector<8x8xf32>
    %735 = arith.select %732, %730, %734 : vector<8x8xi1>, vector<8x8xf32>
    %736 = arith.addf %735, %715 : vector<8x8xf32>
    %cst_262 = arith.constant dense<0xFF800000> : vector<8xf32>
    %737 = vector.multi_reduction <maximumf>, %736, %cst_262 [1] : vector<8x8xf32> to vector<8xf32>
    %738 = vector.shape_cast %737 : vector<8xf32> to vector<8x1xf32>
    %739 = vector.broadcast %738 : vector<8x1xf32> to vector<8x8xf32>
    %740 = arith.subf %736, %739 : vector<8x8xf32>
    %741 = math.exp %740 : vector<8x8xf32>
    %cst_263 = arith.constant dense<0.000000e+00> : vector<8xf32>
    %742 = vector.multi_reduction <add>, %741, %cst_263 [1] : vector<8x8xf32> to vector<8xf32>
    %743 = vector.shape_cast %742 : vector<8xf32> to vector<8x1xf32>
    %744 = vector.broadcast %743 : vector<8x1xf32> to vector<8x8xf32>
    %745 = arith.divf %741, %744 : vector<8x8xf32>
    %cst_264 = arith.constant dense<0.000000e+00> : vector<8x8xf32>
    %746 = tpu.matmul %745, %725, %cst_264 {dimension_numbers = #tpu.dot_dimension_numbers<[1], [0], [0], [1], [0, 0, 1, 1], [], []>} : vector<8x8xf32>, vector<8x8xf32>, vector<8x8xf32> -> vector<8x8xf32>
    %747 = arith.addf %724, %746 : vector<8x8xf32>
    %748 = vector.extract_strided_slice %719 {offsets = [0, 8], sizes = [8, 8], strides = [1, 1]} : vector<8x16xf32> to vector<8x8xf32>
    %749 = vector.extract_strided_slice %721 {offsets = [0, 1], sizes = [8, 1], strides = [1, 1]} : vector<8x4xf32> to vector<8x1xf32>
    %750 = vector.extract_strided_slice %723 {offsets = [1, 0], sizes = [1, 8], strides = [1, 1]} : vector<2x8xf32> to vector<1x8xf32>
    %751 = vector.broadcast %749 : vector<8x1xf32> to vector<8x8xf32>
    %752 = vector.broadcast %750 : vector<1x8xf32> to vector<8x8xf32>
    %753 = arith.addf %751, %752 : vector<8x8xf32>
    %cst_265 = arith.constant 0.000000e+00 : f32
    %754 = vector.broadcast %cst_265 : f32 to vector<8x8xf32>
    %755 = arith.cmpf ogt, %753, %754 : vector<8x8xf32>
    %cst_266 = arith.constant 2.000000e-01 : f32
    %756 = vector.broadcast %cst_266 : f32 to vector<8x8xf32>
    %757 = arith.mulf %756, %753 : vector<8x8xf32>
    %758 = arith.select %755, %753, %757 : vector<8x8xi1>, vector<8x8xf32>
    %759 = arith.addf %758, %715 : vector<8x8xf32>
    %cst_267 = arith.constant dense<0xFF800000> : vector<8xf32>
    %760 = vector.multi_reduction <maximumf>, %759, %cst_267 [1] : vector<8x8xf32> to vector<8xf32>
    %761 = vector.shape_cast %760 : vector<8xf32> to vector<8x1xf32>
    %762 = vector.broadcast %761 : vector<8x1xf32> to vector<8x8xf32>
    %763 = arith.subf %759, %762 : vector<8x8xf32>
    %764 = math.exp %763 : vector<8x8xf32>
    %cst_268 = arith.constant dense<0.000000e+00> : vector<8xf32>
    %765 = vector.multi_reduction <add>, %764, %cst_268 [1] : vector<8x8xf32> to vector<8xf32>
    %766 = vector.shape_cast %765 : vector<8xf32> to vector<8x1xf32>
    %767 = vector.broadcast %766 : vector<8x1xf32> to vector<8x8xf32>
    %768 = arith.divf %764, %767 : vector<8x8xf32>
    %cst_269 = arith.constant dense<0.000000e+00> : vector<8x8xf32>
    %769 = tpu.matmul %768, %748, %cst_269 {dimension_numbers = #tpu.dot_dimension_numbers<[1], [0], [0], [1], [0, 0, 1, 1], [], []>} : vector<8x8xf32>, vector<8x8xf32>, vector<8x8xf32> -> vector<8x8xf32>
    %770 = arith.addf %747, %769 : vector<8x8xf32>
    %cst_270 = arith.constant 5.000000e-01 : f32
    %771 = vector.broadcast %cst_270 : f32 to vector<8x8xf32>
    %772 = arith.mulf %770, %771 : vector<8x8xf32>
    %773 = arith.addf %772, %720 : vector<8x8xf32>
    %cst_271 = arith.constant 0.000000e+00 : f32
    %774 = vector.broadcast %cst_271 : f32 to vector<8x8xf32>
    %775 = arith.minimumf %773, %774 : vector<8x8xf32>
    %cst_272 = arith.constant 0.000000e+00 : f32
    %776 = vector.broadcast %cst_272 : f32 to vector<8x8xf32>
    %777 = arith.cmpf ogt, %773, %776 : vector<8x8xf32>
    %778 = math.exp %775 : vector<8x8xf32>
    %cst_273 = arith.constant 1.000000e+00 : f32
    %779 = vector.broadcast %cst_273 : f32 to vector<8x8xf32>
    %780 = arith.subf %778, %779 : vector<8x8xf32>
    %781 = arith.select %777, %773, %780 : vector<8x8xi1>, vector<8x8xf32>
    %c0_274 = arith.constant 0 : index
    %c0_275 = arith.constant 0 : index
    %782 = vector.load %arg36[%c0_274, %c0_275] : memref<8x16xf32, #tpu.memory_space<vmem>>, vector<8x16xf32>
    %c0_276 = arith.constant 0 : index
    %c0_277 = arith.constant 0 : index
    %783 = vector.load %arg40[%c0_276, %c0_277] : memref<16x24xf32, #tpu.memory_space<vmem>>, vector<16x24xf32>
    %c0_278 = arith.constant 0 : index
    %c0_279 = arith.constant 0 : index
    %784 = vector.load %arg41[%c0_278, %c0_279] : memref<16x4xf32, #tpu.memory_space<vmem>>, vector<16x4xf32>
    %cst_280 = arith.constant dense<0.000000e+00> : vector<8x24xf32>
    %785 = tpu.matmul %782, %783, %cst_280 {dimension_numbers = #tpu.dot_dimension_numbers<[1], [0], [0], [1], [0, 0, 1, 1], [], []>} : vector<8x16xf32>, vector<16x24xf32>, vector<8x24xf32> -> vector<8x24xf32>
    %786 = vector.extract_strided_slice %785 {offsets = [0, 0], sizes = [8, 16], strides = [1, 1]} : vector<8x24xf32> to vector<8x16xf32>
    %787 = vector.extract_strided_slice %785 {offsets = [0, 16], sizes = [8, 8], strides = [1, 1]} : vector<8x24xf32> to vector<8x8xf32>
    %cst_281 = arith.constant dense<0.000000e+00> : vector<8x4xf32>
    %788 = tpu.matmul %786, %784, %cst_281 {dimension_numbers = #tpu.dot_dimension_numbers<[1], [0], [0], [1], [0, 0, 1, 1], [], []>} : vector<8x16xf32>, vector<16x4xf32>, vector<8x4xf32> -> vector<8x4xf32>
    %789 = vector.extract_strided_slice %788 {offsets = [0, 2], sizes = [8, 2], strides = [1, 1]} : vector<8x4xf32> to vector<8x2xf32>
    %790 = tpu.transpose %789, [1, 0] : vector<8x2xf32> -> vector<2x8xf32>
    %cst_282 = arith.constant 0.000000e+00 : f32
    %791 = vector.broadcast %cst_282 : f32 to vector<8x8xf32>
    %792 = vector.extract_strided_slice %786 {offsets = [0, 0], sizes = [8, 8], strides = [1, 1]} : vector<8x16xf32> to vector<8x8xf32>
    %793 = vector.extract_strided_slice %788 {offsets = [0, 0], sizes = [8, 1], strides = [1, 1]} : vector<8x4xf32> to vector<8x1xf32>
    %794 = vector.extract_strided_slice %790 {offsets = [0, 0], sizes = [1, 8], strides = [1, 1]} : vector<2x8xf32> to vector<1x8xf32>
    %795 = vector.broadcast %793 : vector<8x1xf32> to vector<8x8xf32>
    %796 = vector.broadcast %794 : vector<1x8xf32> to vector<8x8xf32>
    %797 = arith.addf %795, %796 : vector<8x8xf32>
    %cst_283 = arith.constant 0.000000e+00 : f32
    %798 = vector.broadcast %cst_283 : f32 to vector<8x8xf32>
    %799 = arith.cmpf ogt, %797, %798 : vector<8x8xf32>
    %cst_284 = arith.constant 2.000000e-01 : f32
    %800 = vector.broadcast %cst_284 : f32 to vector<8x8xf32>
    %801 = arith.mulf %800, %797 : vector<8x8xf32>
    %802 = arith.select %799, %797, %801 : vector<8x8xi1>, vector<8x8xf32>
    %803 = arith.addf %802, %715 : vector<8x8xf32>
    %cst_285 = arith.constant dense<0xFF800000> : vector<8xf32>
    %804 = vector.multi_reduction <maximumf>, %803, %cst_285 [1] : vector<8x8xf32> to vector<8xf32>
    %805 = vector.shape_cast %804 : vector<8xf32> to vector<8x1xf32>
    %806 = vector.broadcast %805 : vector<8x1xf32> to vector<8x8xf32>
    %807 = arith.subf %803, %806 : vector<8x8xf32>
    %808 = math.exp %807 : vector<8x8xf32>
    %cst_286 = arith.constant dense<0.000000e+00> : vector<8xf32>
    %809 = vector.multi_reduction <add>, %808, %cst_286 [1] : vector<8x8xf32> to vector<8xf32>
    %810 = vector.shape_cast %809 : vector<8xf32> to vector<8x1xf32>
    %811 = vector.broadcast %810 : vector<8x1xf32> to vector<8x8xf32>
    %812 = arith.divf %808, %811 : vector<8x8xf32>
    %cst_287 = arith.constant dense<0.000000e+00> : vector<8x8xf32>
    %813 = tpu.matmul %812, %792, %cst_287 {dimension_numbers = #tpu.dot_dimension_numbers<[1], [0], [0], [1], [0, 0, 1, 1], [], []>} : vector<8x8xf32>, vector<8x8xf32>, vector<8x8xf32> -> vector<8x8xf32>
    %814 = arith.addf %791, %813 : vector<8x8xf32>
    %815 = vector.extract_strided_slice %786 {offsets = [0, 8], sizes = [8, 8], strides = [1, 1]} : vector<8x16xf32> to vector<8x8xf32>
    %816 = vector.extract_strided_slice %788 {offsets = [0, 1], sizes = [8, 1], strides = [1, 1]} : vector<8x4xf32> to vector<8x1xf32>
    %817 = vector.extract_strided_slice %790 {offsets = [1, 0], sizes = [1, 8], strides = [1, 1]} : vector<2x8xf32> to vector<1x8xf32>
    %818 = vector.broadcast %816 : vector<8x1xf32> to vector<8x8xf32>
    %819 = vector.broadcast %817 : vector<1x8xf32> to vector<8x8xf32>
    %820 = arith.addf %818, %819 : vector<8x8xf32>
    %cst_288 = arith.constant 0.000000e+00 : f32
    %821 = vector.broadcast %cst_288 : f32 to vector<8x8xf32>
    %822 = arith.cmpf ogt, %820, %821 : vector<8x8xf32>
    %cst_289 = arith.constant 2.000000e-01 : f32
    %823 = vector.broadcast %cst_289 : f32 to vector<8x8xf32>
    %824 = arith.mulf %823, %820 : vector<8x8xf32>
    %825 = arith.select %822, %820, %824 : vector<8x8xi1>, vector<8x8xf32>
    %826 = arith.addf %825, %715 : vector<8x8xf32>
    %cst_290 = arith.constant dense<0xFF800000> : vector<8xf32>
    %827 = vector.multi_reduction <maximumf>, %826, %cst_290 [1] : vector<8x8xf32> to vector<8xf32>
    %828 = vector.shape_cast %827 : vector<8xf32> to vector<8x1xf32>
    %829 = vector.broadcast %828 : vector<8x1xf32> to vector<8x8xf32>
    %830 = arith.subf %826, %829 : vector<8x8xf32>
    %831 = math.exp %830 : vector<8x8xf32>
    %cst_291 = arith.constant dense<0.000000e+00> : vector<8xf32>
    %832 = vector.multi_reduction <add>, %831, %cst_291 [1] : vector<8x8xf32> to vector<8xf32>
    %833 = vector.shape_cast %832 : vector<8xf32> to vector<8x1xf32>
    %834 = vector.broadcast %833 : vector<8x1xf32> to vector<8x8xf32>
    %835 = arith.divf %831, %834 : vector<8x8xf32>
    %cst_292 = arith.constant dense<0.000000e+00> : vector<8x8xf32>
    %836 = tpu.matmul %835, %815, %cst_292 {dimension_numbers = #tpu.dot_dimension_numbers<[1], [0], [0], [1], [0, 0, 1, 1], [], []>} : vector<8x8xf32>, vector<8x8xf32>, vector<8x8xf32> -> vector<8x8xf32>
    %837 = arith.addf %814, %836 : vector<8x8xf32>
    %cst_293 = arith.constant 5.000000e-01 : f32
    %838 = vector.broadcast %cst_293 : f32 to vector<8x8xf32>
    %839 = arith.mulf %837, %838 : vector<8x8xf32>
    %840 = arith.addf %839, %787 : vector<8x8xf32>
    %cst_294 = arith.constant 0.000000e+00 : f32
    %841 = vector.broadcast %cst_294 : f32 to vector<8x8xf32>
    %842 = arith.minimumf %840, %841 : vector<8x8xf32>
    %cst_295 = arith.constant 0.000000e+00 : f32
    %843 = vector.broadcast %cst_295 : f32 to vector<8x8xf32>
    %844 = arith.cmpf ogt, %840, %843 : vector<8x8xf32>
    %845 = math.exp %842 : vector<8x8xf32>
    %cst_296 = arith.constant 1.000000e+00 : f32
    %846 = vector.broadcast %cst_296 : f32 to vector<8x8xf32>
    %847 = arith.subf %845, %846 : vector<8x8xf32>
    %848 = arith.select %844, %840, %847 : vector<8x8xi1>, vector<8x8xf32>
    %c0_297 = arith.constant 0 : index
    %c0_298 = arith.constant 0 : index
    %849 = vector.load %arg42[%c0_297, %c0_298] : memref<8x24xf32, #tpu.memory_space<vmem>>, vector<8x24xf32>
    %c0_299 = arith.constant 0 : index
    %c0_300 = arith.constant 0 : index
    %850 = vector.load %arg43[%c0_299, %c0_300] : memref<16x4xf32, #tpu.memory_space<vmem>>, vector<16x4xf32>
    %cst_301 = arith.constant dense<0.000000e+00> : vector<8x24xf32>
    %851 = tpu.matmul %781, %849, %cst_301 {dimension_numbers = #tpu.dot_dimension_numbers<[1], [0], [0], [1], [0, 0, 1, 1], [], []>} : vector<8x8xf32>, vector<8x24xf32>, vector<8x24xf32> -> vector<8x24xf32>
    %852 = vector.extract_strided_slice %851 {offsets = [0, 0], sizes = [8, 16], strides = [1, 1]} : vector<8x24xf32> to vector<8x16xf32>
    %853 = vector.extract_strided_slice %851 {offsets = [0, 16], sizes = [8, 8], strides = [1, 1]} : vector<8x24xf32> to vector<8x8xf32>
    %cst_302 = arith.constant dense<0.000000e+00> : vector<8x4xf32>
    %854 = tpu.matmul %852, %850, %cst_302 {dimension_numbers = #tpu.dot_dimension_numbers<[1], [0], [0], [1], [0, 0, 1, 1], [], []>} : vector<8x16xf32>, vector<16x4xf32>, vector<8x4xf32> -> vector<8x4xf32>
    %855 = vector.extract_strided_slice %854 {offsets = [0, 2], sizes = [8, 2], strides = [1, 1]} : vector<8x4xf32> to vector<8x2xf32>
    %856 = tpu.transpose %855, [1, 0] : vector<8x2xf32> -> vector<2x8xf32>
    %cst_303 = arith.constant 0.000000e+00 : f32
    %857 = vector.broadcast %cst_303 : f32 to vector<8x8xf32>
    %858 = vector.extract_strided_slice %852 {offsets = [0, 0], sizes = [8, 8], strides = [1, 1]} : vector<8x16xf32> to vector<8x8xf32>
    %859 = vector.extract_strided_slice %854 {offsets = [0, 0], sizes = [8, 1], strides = [1, 1]} : vector<8x4xf32> to vector<8x1xf32>
    %860 = vector.extract_strided_slice %856 {offsets = [0, 0], sizes = [1, 8], strides = [1, 1]} : vector<2x8xf32> to vector<1x8xf32>
    %861 = vector.broadcast %859 : vector<8x1xf32> to vector<8x8xf32>
    %862 = vector.broadcast %860 : vector<1x8xf32> to vector<8x8xf32>
    %863 = arith.addf %861, %862 : vector<8x8xf32>
    %cst_304 = arith.constant 0.000000e+00 : f32
    %864 = vector.broadcast %cst_304 : f32 to vector<8x8xf32>
    %865 = arith.cmpf ogt, %863, %864 : vector<8x8xf32>
    %cst_305 = arith.constant 2.000000e-01 : f32
    %866 = vector.broadcast %cst_305 : f32 to vector<8x8xf32>
    %867 = arith.mulf %866, %863 : vector<8x8xf32>
    %868 = arith.select %865, %863, %867 : vector<8x8xi1>, vector<8x8xf32>
    %869 = arith.addf %868, %715 : vector<8x8xf32>
    %cst_306 = arith.constant dense<0xFF800000> : vector<8xf32>
    %870 = vector.multi_reduction <maximumf>, %869, %cst_306 [1] : vector<8x8xf32> to vector<8xf32>
    %871 = vector.shape_cast %870 : vector<8xf32> to vector<8x1xf32>
    %872 = vector.broadcast %871 : vector<8x1xf32> to vector<8x8xf32>
    %873 = arith.subf %869, %872 : vector<8x8xf32>
    %874 = math.exp %873 : vector<8x8xf32>
    %cst_307 = arith.constant dense<0.000000e+00> : vector<8xf32>
    %875 = vector.multi_reduction <add>, %874, %cst_307 [1] : vector<8x8xf32> to vector<8xf32>
    %876 = vector.shape_cast %875 : vector<8xf32> to vector<8x1xf32>
    %877 = vector.broadcast %876 : vector<8x1xf32> to vector<8x8xf32>
    %878 = arith.divf %874, %877 : vector<8x8xf32>
    %cst_308 = arith.constant dense<0.000000e+00> : vector<8x8xf32>
    %879 = tpu.matmul %878, %858, %cst_308 {dimension_numbers = #tpu.dot_dimension_numbers<[1], [0], [0], [1], [0, 0, 1, 1], [], []>} : vector<8x8xf32>, vector<8x8xf32>, vector<8x8xf32> -> vector<8x8xf32>
    %880 = arith.addf %857, %879 : vector<8x8xf32>
    %881 = vector.extract_strided_slice %852 {offsets = [0, 8], sizes = [8, 8], strides = [1, 1]} : vector<8x16xf32> to vector<8x8xf32>
    %882 = vector.extract_strided_slice %854 {offsets = [0, 1], sizes = [8, 1], strides = [1, 1]} : vector<8x4xf32> to vector<8x1xf32>
    %883 = vector.extract_strided_slice %856 {offsets = [1, 0], sizes = [1, 8], strides = [1, 1]} : vector<2x8xf32> to vector<1x8xf32>
    %884 = vector.broadcast %882 : vector<8x1xf32> to vector<8x8xf32>
    %885 = vector.broadcast %883 : vector<1x8xf32> to vector<8x8xf32>
    %886 = arith.addf %884, %885 : vector<8x8xf32>
    %cst_309 = arith.constant 0.000000e+00 : f32
    %887 = vector.broadcast %cst_309 : f32 to vector<8x8xf32>
    %888 = arith.cmpf ogt, %886, %887 : vector<8x8xf32>
    %cst_310 = arith.constant 2.000000e-01 : f32
    %889 = vector.broadcast %cst_310 : f32 to vector<8x8xf32>
    %890 = arith.mulf %889, %886 : vector<8x8xf32>
    %891 = arith.select %888, %886, %890 : vector<8x8xi1>, vector<8x8xf32>
    %892 = arith.addf %891, %715 : vector<8x8xf32>
    %cst_311 = arith.constant dense<0xFF800000> : vector<8xf32>
    %893 = vector.multi_reduction <maximumf>, %892, %cst_311 [1] : vector<8x8xf32> to vector<8xf32>
    %894 = vector.shape_cast %893 : vector<8xf32> to vector<8x1xf32>
    %895 = vector.broadcast %894 : vector<8x1xf32> to vector<8x8xf32>
    %896 = arith.subf %892, %895 : vector<8x8xf32>
    %897 = math.exp %896 : vector<8x8xf32>
    %cst_312 = arith.constant dense<0.000000e+00> : vector<8xf32>
    %898 = vector.multi_reduction <add>, %897, %cst_312 [1] : vector<8x8xf32> to vector<8xf32>
    %899 = vector.shape_cast %898 : vector<8xf32> to vector<8x1xf32>
    %900 = vector.broadcast %899 : vector<8x1xf32> to vector<8x8xf32>
    %901 = arith.divf %897, %900 : vector<8x8xf32>
    %cst_313 = arith.constant dense<0.000000e+00> : vector<8x8xf32>
    %902 = tpu.matmul %901, %881, %cst_313 {dimension_numbers = #tpu.dot_dimension_numbers<[1], [0], [0], [1], [0, 0, 1, 1], [], []>} : vector<8x8xf32>, vector<8x8xf32>, vector<8x8xf32> -> vector<8x8xf32>
    %903 = arith.addf %880, %902 : vector<8x8xf32>
    %cst_314 = arith.constant 5.000000e-01 : f32
    %904 = vector.broadcast %cst_314 : f32 to vector<8x8xf32>
    %905 = arith.mulf %903, %904 : vector<8x8xf32>
    %906 = arith.addf %905, %853 : vector<8x8xf32>
    %cst_315 = arith.constant 0.000000e+00 : f32
    %907 = vector.broadcast %cst_315 : f32 to vector<8x8xf32>
    %908 = arith.minimumf %906, %907 : vector<8x8xf32>
    %cst_316 = arith.constant 0.000000e+00 : f32
    %909 = vector.broadcast %cst_316 : f32 to vector<8x8xf32>
    %910 = arith.cmpf ogt, %906, %909 : vector<8x8xf32>
    %911 = math.exp %908 : vector<8x8xf32>
    %cst_317 = arith.constant 1.000000e+00 : f32
    %912 = vector.broadcast %cst_317 : f32 to vector<8x8xf32>
    %913 = arith.subf %911, %912 : vector<8x8xf32>
    %914 = arith.select %910, %906, %913 : vector<8x8xi1>, vector<8x8xf32>
    %c0_318 = arith.constant 0 : index
    %c0_319 = arith.constant 0 : index
    %915 = vector.load %arg44[%c0_318, %c0_319] : memref<8x24xf32, #tpu.memory_space<vmem>>, vector<8x24xf32>
    %c0_320 = arith.constant 0 : index
    %c0_321 = arith.constant 0 : index
    %916 = vector.load %arg45[%c0_320, %c0_321] : memref<16x4xf32, #tpu.memory_space<vmem>>, vector<16x4xf32>
    %cst_322 = arith.constant dense<0.000000e+00> : vector<8x24xf32>
    %917 = tpu.matmul %848, %915, %cst_322 {dimension_numbers = #tpu.dot_dimension_numbers<[1], [0], [0], [1], [0, 0, 1, 1], [], []>} : vector<8x8xf32>, vector<8x24xf32>, vector<8x24xf32> -> vector<8x24xf32>
    %918 = vector.extract_strided_slice %917 {offsets = [0, 0], sizes = [8, 16], strides = [1, 1]} : vector<8x24xf32> to vector<8x16xf32>
    %919 = vector.extract_strided_slice %917 {offsets = [0, 16], sizes = [8, 8], strides = [1, 1]} : vector<8x24xf32> to vector<8x8xf32>
    %cst_323 = arith.constant dense<0.000000e+00> : vector<8x4xf32>
    %920 = tpu.matmul %918, %916, %cst_323 {dimension_numbers = #tpu.dot_dimension_numbers<[1], [0], [0], [1], [0, 0, 1, 1], [], []>} : vector<8x16xf32>, vector<16x4xf32>, vector<8x4xf32> -> vector<8x4xf32>
    %921 = vector.extract_strided_slice %920 {offsets = [0, 2], sizes = [8, 2], strides = [1, 1]} : vector<8x4xf32> to vector<8x2xf32>
    %922 = tpu.transpose %921, [1, 0] : vector<8x2xf32> -> vector<2x8xf32>
    %cst_324 = arith.constant 0.000000e+00 : f32
    %923 = vector.broadcast %cst_324 : f32 to vector<8x8xf32>
    %924 = vector.extract_strided_slice %918 {offsets = [0, 0], sizes = [8, 8], strides = [1, 1]} : vector<8x16xf32> to vector<8x8xf32>
    %925 = vector.extract_strided_slice %920 {offsets = [0, 0], sizes = [8, 1], strides = [1, 1]} : vector<8x4xf32> to vector<8x1xf32>
    %926 = vector.extract_strided_slice %922 {offsets = [0, 0], sizes = [1, 8], strides = [1, 1]} : vector<2x8xf32> to vector<1x8xf32>
    %927 = vector.broadcast %925 : vector<8x1xf32> to vector<8x8xf32>
    %928 = vector.broadcast %926 : vector<1x8xf32> to vector<8x8xf32>
    %929 = arith.addf %927, %928 : vector<8x8xf32>
    %cst_325 = arith.constant 0.000000e+00 : f32
    %930 = vector.broadcast %cst_325 : f32 to vector<8x8xf32>
    %931 = arith.cmpf ogt, %929, %930 : vector<8x8xf32>
    %cst_326 = arith.constant 2.000000e-01 : f32
    %932 = vector.broadcast %cst_326 : f32 to vector<8x8xf32>
    %933 = arith.mulf %932, %929 : vector<8x8xf32>
    %934 = arith.select %931, %929, %933 : vector<8x8xi1>, vector<8x8xf32>
    %935 = arith.addf %934, %715 : vector<8x8xf32>
    %cst_327 = arith.constant dense<0xFF800000> : vector<8xf32>
    %936 = vector.multi_reduction <maximumf>, %935, %cst_327 [1] : vector<8x8xf32> to vector<8xf32>
    %937 = vector.shape_cast %936 : vector<8xf32> to vector<8x1xf32>
    %938 = vector.broadcast %937 : vector<8x1xf32> to vector<8x8xf32>
    %939 = arith.subf %935, %938 : vector<8x8xf32>
    %940 = math.exp %939 : vector<8x8xf32>
    %cst_328 = arith.constant dense<0.000000e+00> : vector<8xf32>
    %941 = vector.multi_reduction <add>, %940, %cst_328 [1] : vector<8x8xf32> to vector<8xf32>
    %942 = vector.shape_cast %941 : vector<8xf32> to vector<8x1xf32>
    %943 = vector.broadcast %942 : vector<8x1xf32> to vector<8x8xf32>
    %944 = arith.divf %940, %943 : vector<8x8xf32>
    %cst_329 = arith.constant dense<0.000000e+00> : vector<8x8xf32>
    %945 = tpu.matmul %944, %924, %cst_329 {dimension_numbers = #tpu.dot_dimension_numbers<[1], [0], [0], [1], [0, 0, 1, 1], [], []>} : vector<8x8xf32>, vector<8x8xf32>, vector<8x8xf32> -> vector<8x8xf32>
    %946 = arith.addf %923, %945 : vector<8x8xf32>
    %947 = vector.extract_strided_slice %918 {offsets = [0, 8], sizes = [8, 8], strides = [1, 1]} : vector<8x16xf32> to vector<8x8xf32>
    %948 = vector.extract_strided_slice %920 {offsets = [0, 1], sizes = [8, 1], strides = [1, 1]} : vector<8x4xf32> to vector<8x1xf32>
    %949 = vector.extract_strided_slice %922 {offsets = [1, 0], sizes = [1, 8], strides = [1, 1]} : vector<2x8xf32> to vector<1x8xf32>
    %950 = vector.broadcast %948 : vector<8x1xf32> to vector<8x8xf32>
    %951 = vector.broadcast %949 : vector<1x8xf32> to vector<8x8xf32>
    %952 = arith.addf %950, %951 : vector<8x8xf32>
    %cst_330 = arith.constant 0.000000e+00 : f32
    %953 = vector.broadcast %cst_330 : f32 to vector<8x8xf32>
    %954 = arith.cmpf ogt, %952, %953 : vector<8x8xf32>
    %cst_331 = arith.constant 2.000000e-01 : f32
    %955 = vector.broadcast %cst_331 : f32 to vector<8x8xf32>
    %956 = arith.mulf %955, %952 : vector<8x8xf32>
    %957 = arith.select %954, %952, %956 : vector<8x8xi1>, vector<8x8xf32>
    %958 = arith.addf %957, %715 : vector<8x8xf32>
    %cst_332 = arith.constant dense<0xFF800000> : vector<8xf32>
    %959 = vector.multi_reduction <maximumf>, %958, %cst_332 [1] : vector<8x8xf32> to vector<8xf32>
    %960 = vector.shape_cast %959 : vector<8xf32> to vector<8x1xf32>
    %961 = vector.broadcast %960 : vector<8x1xf32> to vector<8x8xf32>
    %962 = arith.subf %958, %961 : vector<8x8xf32>
    %963 = math.exp %962 : vector<8x8xf32>
    %cst_333 = arith.constant dense<0.000000e+00> : vector<8xf32>
    %964 = vector.multi_reduction <add>, %963, %cst_333 [1] : vector<8x8xf32> to vector<8xf32>
    %965 = vector.shape_cast %964 : vector<8xf32> to vector<8x1xf32>
    %966 = vector.broadcast %965 : vector<8x1xf32> to vector<8x8xf32>
    %967 = arith.divf %963, %966 : vector<8x8xf32>
    %cst_334 = arith.constant dense<0.000000e+00> : vector<8x8xf32>
    %968 = tpu.matmul %967, %947, %cst_334 {dimension_numbers = #tpu.dot_dimension_numbers<[1], [0], [0], [1], [0, 0, 1, 1], [], []>} : vector<8x8xf32>, vector<8x8xf32>, vector<8x8xf32> -> vector<8x8xf32>
    %969 = arith.addf %946, %968 : vector<8x8xf32>
    %cst_335 = arith.constant 5.000000e-01 : f32
    %970 = vector.broadcast %cst_335 : f32 to vector<8x8xf32>
    %971 = arith.mulf %969, %970 : vector<8x8xf32>
    %972 = arith.addf %971, %919 : vector<8x8xf32>
    %cst_336 = arith.constant 0.000000e+00 : f32
    %973 = vector.broadcast %cst_336 : f32 to vector<8x8xf32>
    %974 = arith.minimumf %972, %973 : vector<8x8xf32>
    %cst_337 = arith.constant 0.000000e+00 : f32
    %975 = vector.broadcast %cst_337 : f32 to vector<8x8xf32>
    %976 = arith.cmpf ogt, %972, %975 : vector<8x8xf32>
    %977 = math.exp %974 : vector<8x8xf32>
    %cst_338 = arith.constant 1.000000e+00 : f32
    %978 = vector.broadcast %cst_338 : f32 to vector<8x8xf32>
    %979 = arith.subf %977, %978 : vector<8x8xf32>
    %980 = arith.select %976, %972, %979 : vector<8x8xi1>, vector<8x8xf32>
    %cst_339 = arith.constant dense<0.000000e+00> : vector<8xf32>
    %981 = vector.multi_reduction <add>, %781, %cst_339 [1] : vector<8x8xf32> to vector<8xf32>
    %982 = vector.shape_cast %981 : vector<8xf32> to vector<8x1xf32>
    %cst_340 = arith.constant 8.000000e+00 : f32
    %983 = vector.broadcast %cst_340 : f32 to vector<8x1xf32>
    %984 = arith.divf %982, %983 : vector<8x1xf32>
    %cst_341 = arith.constant dense<0.000000e+00> : vector<1xf32>
    %985 = vector.multi_reduction <add>, %984, %cst_341 [0] : vector<8x1xf32> to vector<1xf32>
    %986 = vector.shape_cast %985 : vector<1xf32> to vector<1x1xf32>
    %cst_342 = arith.constant 8.000000e+00 : f32
    %987 = vector.broadcast %cst_342 : f32 to vector<1x1xf32>
    %988 = arith.divf %986, %987 : vector<1x1xf32>
    %cst_343 = arith.constant dense<0.000000e+00> : vector<8xf32>
    %989 = vector.multi_reduction <add>, %914, %cst_343 [1] : vector<8x8xf32> to vector<8xf32>
    %990 = vector.shape_cast %989 : vector<8xf32> to vector<8x1xf32>
    %cst_344 = arith.constant 8.000000e+00 : f32
    %991 = vector.broadcast %cst_344 : f32 to vector<8x1xf32>
    %992 = arith.divf %990, %991 : vector<8x1xf32>
    %cst_345 = arith.constant dense<0.000000e+00> : vector<1xf32>
    %993 = vector.multi_reduction <add>, %992, %cst_345 [0] : vector<8x1xf32> to vector<1xf32>
    %994 = vector.shape_cast %993 : vector<1xf32> to vector<1x1xf32>
    %cst_346 = arith.constant 8.000000e+00 : f32
    %995 = vector.broadcast %cst_346 : f32 to vector<1x1xf32>
    %996 = arith.divf %994, %995 : vector<1x1xf32>
    %cst_347 = arith.constant dense<0.000000e+00> : vector<8xf32>
    %997 = vector.multi_reduction <add>, %848, %cst_347 [1] : vector<8x8xf32> to vector<8xf32>
    %998 = vector.shape_cast %997 : vector<8xf32> to vector<8x1xf32>
    %cst_348 = arith.constant 8.000000e+00 : f32
    %999 = vector.broadcast %cst_348 : f32 to vector<8x1xf32>
    %1000 = arith.divf %998, %999 : vector<8x1xf32>
    %cst_349 = arith.constant dense<0.000000e+00> : vector<1xf32>
    %1001 = vector.multi_reduction <add>, %1000, %cst_349 [0] : vector<8x1xf32> to vector<1xf32>
    %1002 = vector.shape_cast %1001 : vector<1xf32> to vector<1x1xf32>
    %cst_350 = arith.constant 8.000000e+00 : f32
    %1003 = vector.broadcast %cst_350 : f32 to vector<1x1xf32>
    %1004 = arith.divf %1002, %1003 : vector<1x1xf32>
    %cst_351 = arith.constant dense<0.000000e+00> : vector<8xf32>
    %1005 = vector.multi_reduction <add>, %980, %cst_351 [1] : vector<8x8xf32> to vector<8xf32>
    %1006 = vector.shape_cast %1005 : vector<8xf32> to vector<8x1xf32>
    %cst_352 = arith.constant 8.000000e+00 : f32
    %1007 = vector.broadcast %cst_352 : f32 to vector<8x1xf32>
    %1008 = arith.divf %1006, %1007 : vector<8x1xf32>
    %cst_353 = arith.constant dense<0.000000e+00> : vector<1xf32>
    %1009 = vector.multi_reduction <add>, %1008, %cst_353 [0] : vector<8x1xf32> to vector<1xf32>
    %1010 = vector.shape_cast %1009 : vector<1xf32> to vector<1x1xf32>
    %cst_354 = arith.constant 8.000000e+00 : f32
    %1011 = vector.broadcast %cst_354 : f32 to vector<1x1xf32>
    %1012 = arith.divf %1010, %1011 : vector<1x1xf32>
    %1013 = tpu.concatenate %988, %996, %1004, %1012 in 1 : vector<1x1xf32>, vector<1x1xf32>, vector<1x1xf32>, vector<1x1xf32> -> vector<1x4xf32>
    %c0_355 = arith.constant 0 : index
    %c0_356 = arith.constant 0 : index
    %1014 = vector.load %arg46[%c0_355, %c0_356] : memref<4x20xf32, #tpu.memory_space<vmem>>, vector<4x20xf32>
    %cst_357 = arith.constant dense<0.000000e+00> : vector<1x20xf32>
    %1015 = tpu.matmul %1013, %1014, %cst_357 {dimension_numbers = #tpu.dot_dimension_numbers<[1], [0], [0], [1], [0, 0, 1, 1], [], []>} : vector<1x4xf32>, vector<4x20xf32>, vector<1x20xf32> -> vector<1x20xf32>
    %c0_358 = arith.constant 0 : index
    %c0_359 = arith.constant 0 : index
    %1016 = vector.load %arg47[%c0_358, %c0_359] : memref<1x20xf32, #tpu.memory_space<vmem>>, vector<1x20xf32>
    %1017 = arith.addf %1015, %1016 : vector<1x20xf32>
    %c0_360 = arith.constant 0 : index
    %c0_361 = arith.constant 0 : index
    %1018 = vector.load %arg48[%c0_360, %c0_361] : memref<20x4xf32, #tpu.memory_space<vmem>>, vector<20x4xf32>
    %cst_362 = arith.constant dense<0.000000e+00> : vector<1x4xf32>
    %1019 = tpu.matmul %1017, %1018, %cst_362 {dimension_numbers = #tpu.dot_dimension_numbers<[1], [0], [0], [1], [0, 0, 1, 1], [], []>} : vector<1x20xf32>, vector<20x4xf32>, vector<1x4xf32> -> vector<1x4xf32>
    %c0_363 = arith.constant 0 : index
    %c0_364 = arith.constant 0 : index
    %1020 = vector.load %arg49[%c0_363, %c0_364] : memref<1x4xf32, #tpu.memory_space<vmem>>, vector<1x4xf32>
    %1021 = arith.addf %1019, %1020 : vector<1x4xf32>
    %1022 = arith.negf %1021 : vector<1x4xf32>
    %1023 = math.exp %1022 : vector<1x4xf32>
    %cst_365 = arith.constant 1.000000e+00 : f32
    %1024 = vector.broadcast %cst_365 : f32 to vector<1x4xf32>
    %1025 = arith.addf %1024, %1023 : vector<1x4xf32>
    %1026 = arith.divf %1024, %1025 : vector<1x4xf32>
    %cst_366 = arith.constant 0.000000e+00 : f32
    %1027 = vector.broadcast %cst_366 : f32 to vector<8x8xf32>
    %c0_367 = arith.constant 0 : index
    %1028 = memref.load %arg50[%c0_367] : memref<4xf32, #tpu.memory_space<smem>>
    %1029 = vector.extract_strided_slice %1026 {offsets = [0, 0], sizes = [1, 1], strides = [1, 1]} : vector<1x4xf32> to vector<1x1xf32>
    %1030 = vector.extract %1029[0, 0] : f32 from vector<1x1xf32>
    %1031 = vector.broadcast %1030 : f32 to vector<8x8xf32>
    %1032 = arith.mulf %1031, %781 : vector<8x8xf32>
    %cst_368 = arith.constant 0.000000e+00 : f32
    %1033 = vector.broadcast %cst_368 : f32 to vector<8x8xf32>
    %1034 = arith.maximumf %1032, %1033 : vector<8x8xf32>
    %1035 = vector.broadcast %1028 : f32 to vector<8x8xf32>
    %1036 = arith.mulf %1035, %1034 : vector<8x8xf32>
    %1037 = arith.addf %1027, %1036 : vector<8x8xf32>
    %c1_369 = arith.constant 1 : index
    %1038 = memref.load %arg50[%c1_369] : memref<4xf32, #tpu.memory_space<smem>>
    %1039 = vector.extract_strided_slice %1026 {offsets = [0, 1], sizes = [1, 1], strides = [1, 1]} : vector<1x4xf32> to vector<1x1xf32>
    %1040 = vector.extract %1039[0, 0] : f32 from vector<1x1xf32>
    %1041 = vector.broadcast %1040 : f32 to vector<8x8xf32>
    %1042 = arith.mulf %1041, %914 : vector<8x8xf32>
    %cst_370 = arith.constant 0.000000e+00 : f32
    %1043 = vector.broadcast %cst_370 : f32 to vector<8x8xf32>
    %1044 = arith.maximumf %1042, %1043 : vector<8x8xf32>
    %1045 = vector.broadcast %1038 : f32 to vector<8x8xf32>
    %1046 = arith.mulf %1045, %1044 : vector<8x8xf32>
    %1047 = arith.addf %1037, %1046 : vector<8x8xf32>
    %c2_371 = arith.constant 2 : index
    %1048 = memref.load %arg50[%c2_371] : memref<4xf32, #tpu.memory_space<smem>>
    %1049 = vector.extract_strided_slice %1026 {offsets = [0, 2], sizes = [1, 1], strides = [1, 1]} : vector<1x4xf32> to vector<1x1xf32>
    %1050 = vector.extract %1049[0, 0] : f32 from vector<1x1xf32>
    %1051 = vector.broadcast %1050 : f32 to vector<8x8xf32>
    %1052 = arith.mulf %1051, %848 : vector<8x8xf32>
    %cst_372 = arith.constant 0.000000e+00 : f32
    %1053 = vector.broadcast %cst_372 : f32 to vector<8x8xf32>
    %1054 = arith.maximumf %1052, %1053 : vector<8x8xf32>
    %1055 = vector.broadcast %1048 : f32 to vector<8x8xf32>
    %1056 = arith.mulf %1055, %1054 : vector<8x8xf32>
    %1057 = arith.addf %1047, %1056 : vector<8x8xf32>
    %c3_373 = arith.constant 3 : index
    %1058 = memref.load %arg50[%c3_373] : memref<4xf32, #tpu.memory_space<smem>>
    %1059 = vector.extract_strided_slice %1026 {offsets = [0, 3], sizes = [1, 1], strides = [1, 1]} : vector<1x4xf32> to vector<1x1xf32>
    %1060 = vector.extract %1059[0, 0] : f32 from vector<1x1xf32>
    %1061 = vector.broadcast %1060 : f32 to vector<8x8xf32>
    %1062 = arith.mulf %1061, %980 : vector<8x8xf32>
    %cst_374 = arith.constant 0.000000e+00 : f32
    %1063 = vector.broadcast %cst_374 : f32 to vector<8x8xf32>
    %1064 = arith.maximumf %1062, %1063 : vector<8x8xf32>
    %1065 = vector.broadcast %1058 : f32 to vector<8x8xf32>
    %1066 = arith.mulf %1065, %1064 : vector<8x8xf32>
    %1067 = arith.addf %1057, %1066 : vector<8x8xf32>
    %c0_375 = arith.constant 0 : index
    %1068 = memref.load %arg51[%c0_375] : memref<1xf32, #tpu.memory_space<smem>>
    %1069 = vector.broadcast %1068 : f32 to vector<8x8xf32>
    %1070 = arith.addf %1067, %1069 : vector<8x8xf32>
    %c0_376 = arith.constant 0 : index
    %1071 = memref.load %arg3[%c0_376] : memref<2xf32, #tpu.memory_space<smem>>
    %c1_377 = arith.constant 1 : index
    %1072 = memref.load %arg3[%c1_377] : memref<2xf32, #tpu.memory_space<smem>>
    %1073 = vector.extract_strided_slice %356 {offsets = [0, 0], sizes = [8, 8], strides = [1, 1]} : vector<16x8xf32> to vector<8x8xf32>
    %1074 = vector.broadcast %1071 : f32 to vector<8x8xf32>
    %1075 = arith.mulf %1074, %1073 : vector<8x8xf32>
    %1076 = vector.broadcast %1072 : f32 to vector<8x8xf32>
    %1077 = arith.mulf %1076, %713 : vector<8x8xf32>
    %1078 = arith.addf %1075, %1077 : vector<8x8xf32>
    %1079 = vector.extract_strided_slice %356 {offsets = [8, 0], sizes = [8, 8], strides = [1, 1]} : vector<16x8xf32> to vector<8x8xf32>
    %1080 = vector.broadcast %1071 : f32 to vector<8x8xf32>
    %1081 = arith.mulf %1080, %1079 : vector<8x8xf32>
    %1082 = vector.broadcast %1072 : f32 to vector<8x8xf32>
    %1083 = arith.mulf %1082, %1070 : vector<8x8xf32>
    %1084 = arith.addf %1081, %1083 : vector<8x8xf32>
    %cst_378 = arith.constant dense<0.000000e+00> : vector<8x8xf32>
    %1085 = tpu.matmul %1078, %1084, %cst_378 {dimension_numbers = #tpu.dot_dimension_numbers<[1], [1], [0], [0], [0, 0, 1, 0], [], []>} : vector<8x8xf32>, vector<8x8xf32>, vector<8x8xf32> -> vector<8x8xf32>
    %1086 = arith.negf %1085 : vector<8x8xf32>
    %1087 = math.exp %1086 : vector<8x8xf32>
    %cst_379 = arith.constant 1.000000e+00 : f32
    %1088 = vector.broadcast %cst_379 : f32 to vector<8x8xf32>
    %1089 = arith.addf %1088, %1087 : vector<8x8xf32>
    %1090 = arith.divf %1088, %1089 : vector<8x8xf32>
    %c0_380 = arith.constant 0 : index
    %c0_381 = arith.constant 0 : index
    %1091 = vector.load %arg52[%c0_380, %c0_381] : memref<8x8xf32, #tpu.memory_space<vmem>>, vector<8x8xf32>
    tpu.vector_store %arg52[%c0_380, %c0_381], %1090 {strides = array<i32>} : memref<8x8xf32, #tpu.memory_space<vmem>>, vector<8x8xf32>,
    return
  }
}

</mosaic_0001>

<llo_original>
// kernel: model_forward.1
$region0: #{model_forward.1}
  #allocation0 [shape = 'u32[]', space=smem, size = 0x4, offset = 0x4, fixed_abs, tag = 'smem constant byte address 0x4 - core index']
  #allocation1 [shape = 'u32[144,128]{1,0:T(1,128)}', space=vmem, size = 0x12000, scoped, tag = 'internal scratch']
  #allocation2 [shape = 'f32[1]{0:T(128)S(6)}', space=smem, size = 0x200, scoped, tag = 'scoped memory for model_forward.1']
  #allocation3 [shape = 'f32[1]{0:T(128)S(6)}', space=smem, size = 0x200, scoped, tag = 'scoped memory for model_forward.1']
  #allocation4 [shape = 'f32[1]{0:T(128)S(6)}', space=smem, size = 0x200, scoped, tag = 'scoped memory for model_forward.1']
  %s0 = inlined_call_operand.smem [shape: u32[53], index: -1, kind: input, shape index: {}]
  %s1 = sld [smem:[%s0]]
  %s2 = scalar_lea.smem %s0, 1
  %s3 = sld [smem:[%s2]]
  %s4 = scalar_lea.smem %s0, 2
  %s5 = sld [smem:[%s4]]
  %s6 = scalar_lea.smem %s0, 3
  %s7 = sld [smem:[%s6]]
  %s8 = scalar_lea.smem %s0, 4
  %s9 = sld [smem:[%s8]]
  %s10 = scalar_lea.smem %s0, 5
  %s11 = sld [smem:[%s10]]
  %s12 = scalar_lea.smem %s0, 6
  %s13 = sld [smem:[%s12]]
  %s14 = scalar_lea.smem %s0, 7
  %s15 = sld [smem:[%s14]]
  %s16 = scalar_lea.smem %s0, 8
  %s17 = sld [smem:[%s16]]
  %s18 = scalar_lea.smem %s0, 9
  %s19 = sld [smem:[%s18]]
  %s20 = scalar_lea.smem %s0, 10
  %s21 = sld [smem:[%s20]]
  %s22 = scalar_lea.smem %s0, 11
  %s23 = sld [smem:[%s22]]
  %s24 = scalar_lea.smem %s0, 12
  %s25 = sld [smem:[%s24]]
  %s26 = scalar_lea.smem %s0, 13
  %s27 = sld [smem:[%s26]]
  %s28 = scalar_lea.smem %s0, 14
  %s29 = sld [smem:[%s28]]
  %s30 = scalar_lea.smem %s0, 15
  %s31 = sld [smem:[%s30]]
  %s32 = scalar_lea.smem %s0, 16
  %s33 = sld [smem:[%s32]]
  %s34 = scalar_lea.smem %s0, 17
  %s35 = sld [smem:[%s34]]
  %s36 = scalar_lea.smem %s0, 18
  %s37 = sld [smem:[%s36]]
  %s38 = scalar_lea.smem %s0, 19
  %s39 = sld [smem:[%s38]]
  %s40 = scalar_lea.smem %s0, 20
  %s41 = sld [smem:[%s40]]
  %s42 = scalar_lea.smem %s0, 21
  %s43 = sld [smem:[%s42]]
  %s44 = scalar_lea.smem %s0, 22
  %s45 = sld [smem:[%s44]]
  %s46 = scalar_lea.smem %s0, 23
  %s47 = sld [smem:[%s46]]
  %s48 = scalar_lea.smem %s0, 24
  %s49 = sld [smem:[%s48]]
  %s50 = scalar_lea.smem %s0, 25
  %s51 = sld [smem:[%s50]]
  %s52 = scalar_lea.smem %s0, 26
  %s53 = sld [smem:[%s52]]
  %s54 = scalar_lea.smem %s0, 27
  %s55 = sld [smem:[%s54]]
  %s56 = scalar_lea.smem %s0, 28
  %s57 = sld [smem:[%s56]]
  %s58 = scalar_lea.smem %s0, 29
  %s59 = sld [smem:[%s58]]
  %s60 = scalar_lea.smem %s0, 30
  %s61 = sld [smem:[%s60]]
  %s62 = scalar_lea.smem %s0, 31
  %s63 = sld [smem:[%s62]]
  %s64 = scalar_lea.smem %s0, 32
  %s65 = sld [smem:[%s64]]
  %s66 = scalar_lea.smem %s0, 33
  %s67 = sld [smem:[%s66]]
  %s68 = scalar_lea.smem %s0, 34
  %s69 = sld [smem:[%s68]]
  %s70 = scalar_lea.smem %s0, 35
  %s71 = sld [smem:[%s70]]
  %s72 = scalar_lea.smem %s0, 36
  %s73 = sld [smem:[%s72]]
  %s74 = scalar_lea.smem %s0, 37
  %s75 = sld [smem:[%s74]]
  %s76 = scalar_lea.smem %s0, 38
  %s77 = sld [smem:[%s76]]
  %s78 = scalar_lea.smem %s0, 39
  %s79 = sld [smem:[%s78]]
  %s80 = scalar_lea.smem %s0, 40
  %s81 = sld [smem:[%s80]]
  %s82 = scalar_lea.smem %s0, 41
  %s83 = sld [smem:[%s82]]
  %s84 = scalar_lea.smem %s0, 42
  %s85 = sld [smem:[%s84]]
  %s86 = scalar_lea.smem %s0, 43
  %s87 = sld [smem:[%s86]]
  %s88 = scalar_lea.smem %s0, 44
  %s89 = sld [smem:[%s88]]
  %s90 = scalar_lea.smem %s0, 45
  %s91 = sld [smem:[%s90]]
  %s92 = scalar_lea.smem %s0, 46
  %s93 = sld [smem:[%s92]]
  %s94 = scalar_lea.smem %s0, 47
  %s95 = sld [smem:[%s94]]
  %s96 = scalar_lea.smem %s0, 48
  %s97 = sld [smem:[%s96]]
  %s98 = scalar_lea.smem %s0, 49
  %s99 = sld [smem:[%s98]]
  %s100 = scalar_lea.smem %s0, 50
  %s101 = sld [smem:[%s100]]
  %s102 = scalar_lea.smem %s0, 51
  %s103 = sld [smem:[%s102]]
  %s104 = scalar_lea.smem %s0, 52
  %s105 = sld [smem:[%s104]]
  %s106 = sld [smem:[#allocation0]]
  $region258: #{model_forward.1} parent=0
    _
  %s108 = ssub.s32 1, %s106
  %s109 = scalar_select 0, %s108, %s106
  %110 = sst [smem:[#allocation2]] %s39
  %111 = sst [smem:[#allocation3]] %s71
  %112 = sst [smem:[#allocation4]] %s103
  $region1: #{model_forward.1} parent=0
    #allocation5 [shape = 'u8[512]{0}', space=smem, size = 0x200, scoped, tag = 'input window, operand 3, single buffered']
    #allocation6 [shape = 's32[1]{0}', space=sflag, size = 0x4, scoped, tag = 'scoped memory for model_forward.1']
    #allocation7 [shape = 's32[1]{0}', space=sflag, size = 0x4, scoped, tag = 'scoped memory for model_forward.1']
    #allocation8 [shape = 's32[1]{0}', space=sflag, size = 0x4, scoped, tag = 'scoped memory for model_forward.1']
    #allocation9 [shape = 's32[1]{0}', space=sflag, size = 0x4, scoped, tag = 'scoped memory for model_forward.1']
    #allocation10 [shape = 'u8[512]{0}', space=vmem, size = 0x400, scoped, tag = 'input window, operand 15, single buffered']
    #allocation11 [shape = 'u8[512]{0}', space=vmem, size = 0x400, scoped, tag = 'input window, operand 17, single buffered']
    #allocation12 [shape = 's32[1]{0}', space=sflag, size = 0x4, scoped, tag = 'scoped memory for model_forward.1']
    #allocation13 [shape = 'u8[512]{0}', space=smem, size = 0x200, scoped, tag = 'input window, operand 18, single buffered']
    #allocation14 [shape = 'u8[512]{0}', space=vmem, size = 0x400, scoped, tag = 'input window, operand 31, single buffered']
    #allocation15 [shape = 'u8[512]{0}', space=vmem, size = 0x400, scoped, tag = 'input window, operand 33, single buffered']
    #allocation16 [shape = 's32[1]{0}', space=sflag, size = 0x4, scoped, tag = 'scoped memory for model_forward.1']
    #allocation17 [shape = 'u8[512]{0}', space=smem, size = 0x200, scoped, tag = 'input window, operand 34, single buffered']
    #allocation18 [shape = 's32[1]{0}', space=sflag, size = 0x4, scoped, tag = 'scoped memory for model_forward.1']
    #allocation19 [shape = 'u8[512]{0}', space=vmem, size = 0x400, scoped, tag = 'input window, operand 47, single buffered']
    #allocation20 [shape = 'u8[512]{0}', space=vmem, size = 0x400, scoped, tag = 'input window, operand 49, single buffered']
    #allocation21 [shape = 's32[1]{0}', space=sflag, size = 0x4, scoped, tag = 'scoped memory for model_forward.1']
    #allocation22 [shape = 'u8[512]{0}', space=smem, size = 0x200, scoped, tag = 'input window, operand 50, single buffered']
    #allocation23 [shape = 'u8[4096]{0}', space=vmem, size = 0x1000, scoped, tag = 'output window, operand 0, single buffered']
    %113 = vsyncpa [#allocation9], 0
    %114 = vsyncpa [#allocation6], 0
    %115 = vsyncpa [#allocation12], 0
    %116 = vsyncpa [#allocation8], 0
    %117 = vsyncpa [#allocation16], 0
    %118 = vsyncpa [#allocation18], 0
    %119 = vsyncpa [#allocation21], 0
    %120 = vsyncpa [#allocation7], 0
    // Predicated region
    $region2: #{model_forward.1} parent=1 // pred_check
      _
    $region3: #{model_forward.1} parent=1 // pred_check_branch
      %122 = sbr.rel (0) target = $region5
    $region4: #{model_forward.1} parent=1 // pred_region
      _
    $region5: #{model_forward.1} parent=1 // pred_fallthru
      _
    // Predicated region
    $region6: #{model_forward.1} parent=1 // pred_check
      _
    $region7: #{model_forward.1} parent=1 // pred_check_branch
      %124 = sbr.rel (0) target = $region9
    $region8: #{model_forward.1} parent=1 // pred_region
      _
    $region9: #{model_forward.1} parent=1 // pred_fallthru
      _
    // Predicated region
    $region10: #{model_forward.1} parent=1 // pred_check
      _
    $region11: #{model_forward.1} parent=1 // pred_check_branch
      %126 = sbr.rel (0) target = $region13
    $region12: #{model_forward.1} parent=1 // pred_region
      _
    $region13: #{model_forward.1} parent=1 // pred_fallthru
      _
    // Predicated region
    $region14: #{model_forward.1} parent=1 // pred_check
      _
    $region15: #{model_forward.1} parent=1 // pred_check_branch
      %128 = sbr.rel (0) target = $region17
    $region16: #{model_forward.1} parent=1 // pred_region
      %s130 = ssub.s32 16, 16
      %131 = vsyncadd [#allocation9], %s130
      %s133 = sshll.u32 %s7, 4
      %s134 = int_to_ptr.vmem [resolvable:$true] %s133
      %136 = dma.vmem_to_smem %s134, 16, [#allocation5], [#allocation9]
    $region17: #{model_forward.1} parent=1 // pred_fallthru
      _
    // Predicated region
    $region18: #{model_forward.1} parent=1 // pred_check
      _
    $region19: #{model_forward.1} parent=1 // pred_check_branch
      %138 = sbr.rel (0) target = $region21
    $region20: #{model_forward.1} parent=1 // pred_region
      _
    $region21: #{model_forward.1} parent=1 // pred_fallthru
      _
    // Predicated region
    $region22: #{model_forward.1} parent=1 // pred_check
      _
    $region23: #{model_forward.1} parent=1 // pred_check_branch
      %140 = sbr.rel (0) target = $region25
    $region24: #{model_forward.1} parent=1 // pred_region
      _
    $region25: #{model_forward.1} parent=1 // pred_fallthru
      _
    // Predicated region
    $region26: #{model_forward.1} parent=1 // pred_check
      _
    $region27: #{model_forward.1} parent=1 // pred_check_branch
      %142 = sbr.rel (0) target = $region29
    $region28: #{model_forward.1} parent=1 // pred_region
      _
    $region29: #{model_forward.1} parent=1 // pred_fallthru
      _
    // Predicated region
    $region30: #{model_forward.1} parent=1 // pred_check
      _
    $region31: #{model_forward.1} parent=1 // pred_check_branch
      %144 = sbr.rel (0) target = $region33
    $region32: #{model_forward.1} parent=1 // pred_region
      _
    $region33: #{model_forward.1} parent=1 // pred_fallthru
      _
    // Predicated region
    $region34: #{model_forward.1} parent=1 // pred_check
      _
    $region35: #{model_forward.1} parent=1 // pred_check_branch
      %146 = sbr.rel (0) target = $region37
    $region36: #{model_forward.1} parent=1 // pred_region
      _
    $region37: #{model_forward.1} parent=1 // pred_fallthru
      _
    // Predicated region
    $region38: #{model_forward.1} parent=1 // pred_check
      _
    $region39: #{model_forward.1} parent=1 // pred_check_branch
      %148 = sbr.rel (0) target = $region41
    $region40: #{model_forward.1} parent=1 // pred_region
      _
    $region41: #{model_forward.1} parent=1 // pred_fallthru
      _
    // Predicated region
    $region42: #{model_forward.1} parent=1 // pred_check
      _
    $region43: #{model_forward.1} parent=1 // pred_check_branch
      %150 = sbr.rel (0) target = $region45
    $region44: #{model_forward.1} parent=1 // pred_region
      _
    $region45: #{model_forward.1} parent=1 // pred_fallthru
      _
    // Predicated region
    $region46: #{model_forward.1} parent=1 // pred_check
      _
    $region47: #{model_forward.1} parent=1 // pred_check_branch
      %152 = sbr.rel (0) target = $region49
    $region48: #{model_forward.1} parent=1 // pred_region
      _
    $region49: #{model_forward.1} parent=1 // pred_fallthru
      _
    // Predicated region
    $region50: #{model_forward.1} parent=1 // pred_check
      _
    $region51: #{model_forward.1} parent=1 // pred_check_branch
      %154 = sbr.rel (0) target = $region53
    $region52: #{model_forward.1} parent=1 // pred_region
      _
    $region53: #{model_forward.1} parent=1 // pred_fallthru
      _
    // Predicated region
    $region54: #{model_forward.1} parent=1 // pred_check
      _
    $region55: #{model_forward.1} parent=1 // pred_check_branch
      %156 = sbr.rel (0) target = $region57
    $region56: #{model_forward.1} parent=1 // pred_region
      _
    $region57: #{model_forward.1} parent=1 // pred_fallthru
      _
    // Predicated region
    $region58: #{model_forward.1} parent=1 // pred_check
      _
    $region59: #{model_forward.1} parent=1 // pred_check_branch
      %158 = sbr.rel (0) target = $region61
    $region60: #{model_forward.1} parent=1 // pred_region
      _
    $region61: #{model_forward.1} parent=1 // pred_fallthru
      _
    // Predicated region
    $region62: #{model_forward.1} parent=1 // pred_check
      _
    $region63: #{model_forward.1} parent=1 // pred_check_branch
      %160 = sbr.rel (0) target = $region65
    $region64: #{model_forward.1} parent=1 // pred_region
      %s162 = ssub.s32 16, 16
      %163 = vsyncadd [#allocation6], %s162
      %s165 = sshll.u32 [#allocation10], 4
      %s166 = int_to_ptr.vmem [resolvable:$true] %s165
      %168 = dma.hbm_to_vmem [thread:$0]  %s31, 16, %s166, [#allocation6]
    $region65: #{model_forward.1} parent=1 // pred_fallthru
      _
    // Predicated region
    $region66: #{model_forward.1} parent=1 // pred_check
      _
    $region67: #{model_forward.1} parent=1 // pred_check_branch
      %170 = sbr.rel (0) target = $region69
    $region68: #{model_forward.1} parent=1 // pred_region
      _
    $region69: #{model_forward.1} parent=1 // pred_fallthru
      _
    // Predicated region
    $region70: #{model_forward.1} parent=1 // pred_check
      _
    $region71: #{model_forward.1} parent=1 // pred_check_branch
      %172 = sbr.rel (0) target = $region73
    $region72: #{model_forward.1} parent=1 // pred_region
      %s174 = ssub.s32 16, 16
      %175 = vsyncadd [#allocation12], %s174
      %s177 = sshll.u32 [#allocation11], 4
      %s178 = int_to_ptr.vmem [resolvable:$true] %s177
      %180 = dma.hbm_to_vmem [thread:$0]  %s35, 16, %s178, [#allocation12]
    $region73: #{model_forward.1} parent=1 // pred_fallthru
      _
    // Predicated region
    $region74: #{model_forward.1} parent=1 // pred_check
      _
    $region75: #{model_forward.1} parent=1 // pred_check_branch
      %182 = sbr.rel (0) target = $region77
    $region76: #{model_forward.1} parent=1 // pred_region
      %s184 = ssub.s32 16, 16
      %185 = vsyncadd [#allocation8], %s184
      %188 = dma.hbm_to_smem %s37, 16, [#allocation13], [#allocation8]
    $region77: #{model_forward.1} parent=1 // pred_fallthru
      _
    // Predicated region
    $region78: #{model_forward.1} parent=1 // pred_check
      _
    $region79: #{model_forward.1} parent=1 // pred_check_branch
      %190 = sbr.rel (0) target = $region81
    $region80: #{model_forward.1} parent=1 // pred_region
      _
    $region81: #{model_forward.1} parent=1 // pred_fallthru
      _
    // Predicated region
    $region82: #{model_forward.1} parent=1 // pred_check
      _
    $region83: #{model_forward.1} parent=1 // pred_check_branch
      %192 = sbr.rel (0) target = $region85
    $region84: #{model_forward.1} parent=1 // pred_region
      _
    $region85: #{model_forward.1} parent=1 // pred_fallthru
      _
    // Predicated region
    $region86: #{model_forward.1} parent=1 // pred_check
      _
    $region87: #{model_forward.1} parent=1 // pred_check_branch
      %194 = sbr.rel (0) target = $region89
    $region88: #{model_forward.1} parent=1 // pred_region
      _
    $region89: #{model_forward.1} parent=1 // pred_fallthru
      _
    // Predicated region
    $region90: #{model_forward.1} parent=1 // pred_check
      _
    $region91: #{model_forward.1} parent=1 // pred_check_branch
      %196 = sbr.rel (0) target = $region93
    $region92: #{model_forward.1} parent=1 // pred_region
      _
    $region93: #{model_forward.1} parent=1 // pred_fallthru
      _
    // Predicated region
    $region94: #{model_forward.1} parent=1 // pred_check
      _
    $region95: #{model_forward.1} parent=1 // pred_check_branch
      %198 = sbr.rel (0) target = $region97
    $region96: #{model_forward.1} parent=1 // pred_region
      _
    $region97: #{model_forward.1} parent=1 // pred_fallthru
      _
    // Predicated region
    $region98: #{model_forward.1} parent=1 // pred_check
      _
    $region99: #{model_forward.1} parent=1 // pred_check_branch
      %200 = sbr.rel (0) target = $region101
    $region100: #{model_forward.1} parent=1 // pred_region
      _
    $region101: #{model_forward.1} parent=1 // pred_fallthru
      _
    // Predicated region
    $region102: #{model_forward.1} parent=1 // pred_check
      _
    $region103: #{model_forward.1} parent=1 // pred_check_branch
      %202 = sbr.rel (0) target = $region105
    $region104: #{model_forward.1} parent=1 // pred_region
      _
    $region105: #{model_forward.1} parent=1 // pred_fallthru
      _
    // Predicated region
    $region106: #{model_forward.1} parent=1 // pred_check
      _
    $region107: #{model_forward.1} parent=1 // pred_check_branch
      %204 = sbr.rel (0) target = $region109
    $region108: #{model_forward.1} parent=1 // pred_region
      _
    $region109: #{model_forward.1} parent=1 // pred_fallthru
      _
    // Predicated region
    $region110: #{model_forward.1} parent=1 // pred_check
      _
    $region111: #{model_forward.1} parent=1 // pred_check_branch
      %206 = sbr.rel (0) target = $region113
    $region112: #{model_forward.1} parent=1 // pred_region
      _
    $region113: #{model_forward.1} parent=1 // pred_fallthru
      _
    // Predicated region
    $region114: #{model_forward.1} parent=1 // pred_check
      _
    $region115: #{model_forward.1} parent=1 // pred_check_branch
      %208 = sbr.rel (0) target = $region117
    $region116: #{model_forward.1} parent=1 // pred_region
      _
    $region117: #{model_forward.1} parent=1 // pred_fallthru
      _
    // Predicated region
    $region118: #{model_forward.1} parent=1 // pred_check
      _
    $region119: #{model_forward.1} parent=1 // pred_check_branch
      %210 = sbr.rel (0) target = $region121
    $region120: #{model_forward.1} parent=1 // pred_region
      _
    $region121: #{model_forward.1} parent=1 // pred_fallthru
      _
    // Predicated region
    $region122: #{model_forward.1} parent=1 // pred_check
      _
    $region123: #{model_forward.1} parent=1 // pred_check_branch
      %212 = sbr.rel (0) target = $region125
    $region124: #{model_forward.1} parent=1 // pred_region
      _
    $region125: #{model_forward.1} parent=1 // pred_fallthru
      _
    // Predicated region
    $region126: #{model_forward.1} parent=1 // pred_check
      _
    $region127: #{model_forward.1} parent=1 // pred_check_branch
      %214 = sbr.rel (0) target = $region129
    $region128: #{model_forward.1} parent=1 // pred_region
      %s216 = ssub.s32 16, 16
      %217 = vsyncadd [#allocation12], %s216
      %s219 = sshll.u32 [#allocation14], 4
      %s220 = int_to_ptr.vmem [resolvable:$true] %s219
      %222 = dma.hbm_to_vmem [thread:$0]  %s63, 16, %s220, [#allocation12]
    $region129: #{model_forward.1} parent=1 // pred_fallthru
      _
    // Predicated region
    $region130: #{model_forward.1} parent=1 // pred_check
      _
    $region131: #{model_forward.1} parent=1 // pred_check_branch
      %224 = sbr.rel (0) target = $region133
    $region132: #{model_forward.1} parent=1 // pred_region
      _
    $region133: #{model_forward.1} parent=1 // pred_fallthru
      _
    // Predicated region
    $region134: #{model_forward.1} parent=1 // pred_check
      _
    $region135: #{model_forward.1} parent=1 // pred_check_branch
      %226 = sbr.rel (0) target = $region137
    $region136: #{model_forward.1} parent=1 // pred_region
      %s228 = ssub.s32 16, 16
      %229 = vsyncadd [#allocation16], %s228
      %s231 = sshll.u32 [#allocation15], 4
      %s232 = int_to_ptr.vmem [resolvable:$true] %s231
      %234 = dma.hbm_to_vmem [thread:$0]  %s67, 16, %s232, [#allocation16]
    $region137: #{model_forward.1} parent=1 // pred_fallthru
      _
    // Predicated region
    $region138: #{model_forward.1} parent=1 // pred_check
      _
    $region139: #{model_forward.1} parent=1 // pred_check_branch
      %236 = sbr.rel (0) target = $region141
    $region140: #{model_forward.1} parent=1 // pred_region
      %s238 = ssub.s32 16, 16
      %239 = vsyncadd [#allocation18], %s238
      %242 = dma.hbm_to_smem %s69, 16, [#allocation17], [#allocation18]
    $region141: #{model_forward.1} parent=1 // pred_fallthru
      _
    // Predicated region
    $region142: #{model_forward.1} parent=1 // pred_check
      _
    $region143: #{model_forward.1} parent=1 // pred_check_branch
      %244 = sbr.rel (0) target = $region145
    $region144: #{model_forward.1} parent=1 // pred_region
      _
    $region145: #{model_forward.1} parent=1 // pred_fallthru
      _
    // Predicated region
    $region146: #{model_forward.1} parent=1 // pred_check
      _
    $region147: #{model_forward.1} parent=1 // pred_check_branch
      %246 = sbr.rel (0) target = $region149
    $region148: #{model_forward.1} parent=1 // pred_region
      _
    $region149: #{model_forward.1} parent=1 // pred_fallthru
      _
    // Predicated region
    $region150: #{model_forward.1} parent=1 // pred_check
      _
    $region151: #{model_forward.1} parent=1 // pred_check_branch
      %248 = sbr.rel (0) target = $region153
    $region152: #{model_forward.1} parent=1 // pred_region
      _
    $region153: #{model_forward.1} parent=1 // pred_fallthru
      _
    // Predicated region
    $region154: #{model_forward.1} parent=1 // pred_check
      _
    $region155: #{model_forward.1} parent=1 // pred_check_branch
      %250 = sbr.rel (0) target = $region157
    $region156: #{model_forward.1} parent=1 // pred_region
      _
    $region157: #{model_forward.1} parent=1 // pred_fallthru
      _
    // Predicated region
    $region158: #{model_forward.1} parent=1 // pred_check
      _
    $region159: #{model_forward.1} parent=1 // pred_check_branch
      %252 = sbr.rel (0) target = $region161
    $region160: #{model_forward.1} parent=1 // pred_region
      _
    $region161: #{model_forward.1} parent=1 // pred_fallthru
      _
    // Predicated region
    $region162: #{model_forward.1} parent=1 // pred_check
      _
    $region163: #{model_forward.1} parent=1 // pred_check_branch
      %254 = sbr.rel (0) target = $region165
    $region164: #{model_forward.1} parent=1 // pred_region
      _
    $region165: #{model_forward.1} parent=1 // pred_fallthru
      _
    // Predicated region
    $region166: #{model_forward.1} parent=1 // pred_check
      _
    $region167: #{model_forward.1} parent=1 // pred_check_branch
      %256 = sbr.rel (0) target = $region169
    $region168: #{model_forward.1} parent=1 // pred_region
      _
    $region169: #{model_forward.1} parent=1 // pred_fallthru
      _
    // Predicated region
    $region170: #{model_forward.1} parent=1 // pred_check
      _
    $region171: #{model_forward.1} parent=1 // pred_check_branch
      %258 = sbr.rel (0) target = $region173
    $region172: #{model_forward.1} parent=1 // pred_region
      _
    $region173: #{model_forward.1} parent=1 // pred_fallthru
      _
    // Predicated region
    $region174: #{model_forward.1} parent=1 // pred_check
      _
    $region175: #{model_forward.1} parent=1 // pred_check_branch
      %260 = sbr.rel (0) target = $region177
    $region176: #{model_forward.1} parent=1 // pred_region
      _
    $region177: #{model_forward.1} parent=1 // pred_fallthru
      _
    // Predicated region
    $region178: #{model_forward.1} parent=1 // pred_check
      _
    $region179: #{model_forward.1} parent=1 // pred_check_branch
      %262 = sbr.rel (0) target = $region181
    $region180: #{model_forward.1} parent=1 // pred_region
      _
    $region181: #{model_forward.1} parent=1 // pred_fallthru
      _
    // Predicated region
    $region182: #{model_forward.1} parent=1 // pred_check
      _
    $region183: #{model_forward.1} parent=1 // pred_check_branch
      %264 = sbr.rel (0) target = $region185
    $region184: #{model_forward.1} parent=1 // pred_region
      _
    $region185: #{model_forward.1} parent=1 // pred_fallthru
      _
    // Predicated region
    $region186: #{model_forward.1} parent=1 // pred_check
      _
    $region187: #{model_forward.1} parent=1 // pred_check_branch
      %266 = sbr.rel (0) target = $region189
    $region188: #{model_forward.1} parent=1 // pred_region
      _
    $region189: #{model_forward.1} parent=1 // pred_fallthru
      _
    // Predicated region
    $region190: #{model_forward.1} parent=1 // pred_check
      _
    $region191: #{model_forward.1} parent=1 // pred_check_branch
      %268 = sbr.rel (0) target = $region193
    $region192: #{model_forward.1} parent=1 // pred_region
      %s270 = ssub.s32 16, 16
      %271 = vsyncadd [#allocation16], %s270
      %s273 = sshll.u32 [#allocation19], 4
      %s274 = int_to_ptr.vmem [resolvable:$true] %s273
      %276 = dma.hbm_to_vmem [thread:$0]  %s95, 16, %s274, [#allocation16]
    $region193: #{model_forward.1} parent=1 // pred_fallthru
      _
    // Predicated region
    $region194: #{model_forward.1} parent=1 // pred_check
      _
    $region195: #{model_forward.1} parent=1 // pred_check_branch
      %278 = sbr.rel (0) target = $region197
    $region196: #{model_forward.1} parent=1 // pred_region
      _
    $region197: #{model_forward.1} parent=1 // pred_fallthru
      _
    // Predicated region
    $region198: #{model_forward.1} parent=1 // pred_check
      _
    $region199: #{model_forward.1} parent=1 // pred_check_branch
      %280 = sbr.rel (0) target = $region201
    $region200: #{model_forward.1} parent=1 // pred_region
      %s282 = ssub.s32 16, 16
      %283 = vsyncadd [#allocation21], %s282
      %s285 = sshll.u32 [#allocation20], 4
      %s286 = int_to_ptr.vmem [resolvable:$true] %s285
      %288 = dma.hbm_to_vmem [thread:$0]  %s99, 16, %s286, [#allocation21]
    $region201: #{model_forward.1} parent=1 // pred_fallthru
      _
    // Predicated region
    $region202: #{model_forward.1} parent=1 // pred_check
      _
    $region203: #{model_forward.1} parent=1 // pred_check_branch
      %290 = sbr.rel (0) target = $region205
    $region204: #{model_forward.1} parent=1 // pred_region
      %s292 = ssub.s32 16, 16
      %293 = vsyncadd [#allocation18], %s292
      %296 = dma.hbm_to_smem %s101, 16, [#allocation22], [#allocation18]
    $region205: #{model_forward.1} parent=1 // pred_fallthru
      _
    // Predicated region
    $region206: #{model_forward.1} parent=1 // pred_check
      _
    $region207: #{model_forward.1} parent=1 // pred_check_branch
      %298 = sbr.rel (0) target = $region209
    $region208: #{model_forward.1} parent=1 // pred_region
      _
    $region209: #{model_forward.1} parent=1 // pred_fallthru
      _
    // Predicated region
    $region210: #{model_forward.1} parent=1 // pred_check
      _
    $region211: #{model_forward.1} parent=1 // pred_check_branch
      %300 = sbr.rel (0) target = $region213
    $region212: #{model_forward.1} parent=1 // pred_region
      %301 = dma.done [#allocation9], 16
    $region213: #{model_forward.1} parent=1 // pred_fallthru
      _
    // Predicated region
    $region214: #{model_forward.1} parent=1 // pred_check
      _
    $region215: #{model_forward.1} parent=1 // pred_check_branch
      %303 = sbr.rel (0) target = $region217
    $region216: #{model_forward.1} parent=1 // pred_region
      %304 = dma.done [#allocation6], 16
    $region217: #{model_forward.1} parent=1 // pred_fallthru
      _
    // Predicated region
    $region218: #{model_forward.1} parent=1 // pred_check
      _
    $region219: #{model_forward.1} parent=1 // pred_check_branch
      %306 = sbr.rel (0) target = $region221
    $region220: #{model_forward.1} parent=1 // pred_region
      %307 = dma.done [#allocation12], 16
    $region221: #{model_forward.1} parent=1 // pred_fallthru
      _
    // Predicated region
    $region222: #{model_forward.1} parent=1 // pred_check
      _
    $region223: #{model_forward.1} parent=1 // pred_check_branch
      %309 = sbr.rel (0) target = $region225
    $region224: #{model_forward.1} parent=1 // pred_region
      %310 = dma.done [#allocation8], 16
    $region225: #{model_forward.1} parent=1 // pred_fallthru
      _
    // Predicated region
    $region226: #{model_forward.1} parent=1 // pred_check
      _
    $region227: #{model_forward.1} parent=1 // pred_check_branch
      %312 = sbr.rel (0) target = $region229
    $region228: #{model_forward.1} parent=1 // pred_region
      %313 = dma.done [#allocation12], 16
    $region229: #{model_forward.1} parent=1 // pred_fallthru
      _
    // Predicated region
    $region230: #{model_forward.1} parent=1 // pred_check
      _
    $region231: #{model_forward.1} parent=1 // pred_check_branch
      %315 = sbr.rel (0) target = $region233
    $region232: #{model_forward.1} parent=1 // pred_region
      %316 = dma.done [#allocation16], 16
    $region233: #{model_forward.1} parent=1 // pred_fallthru
      _
    // Predicated region
    $region234: #{model_forward.1} parent=1 // pred_check
      _
    $region235: #{model_forward.1} parent=1 // pred_check_branch
      %318 = sbr.rel (0) target = $region237
    $region236: #{model_forward.1} parent=1 // pred_region
      %319 = dma.done [#allocation18], 16
    $region237: #{model_forward.1} parent=1 // pred_fallthru
      _
    // Predicated region
    $region238: #{model_forward.1} parent=1 // pred_check
      _
    $region239: #{model_forward.1} parent=1 // pred_check_branch
      %321 = sbr.rel (0) target = $region241
    $region240: #{model_forward.1} parent=1 // pred_region
      %322 = dma.done [#allocation16], 16
    $region241: #{model_forward.1} parent=1 // pred_fallthru
      _
    // Predicated region
    $region242: #{model_forward.1} parent=1 // pred_check
      _
    $region243: #{model_forward.1} parent=1 // pred_check_branch
      %324 = sbr.rel (0) target = $region245
    $region244: #{model_forward.1} parent=1 // pred_region
      %325 = dma.done [#allocation21], 16
    $region245: #{model_forward.1} parent=1 // pred_fallthru
      _
    // Predicated region
    $region246: #{model_forward.1} parent=1 // pred_check
      _
    $region247: #{model_forward.1} parent=1 // pred_check_branch
      %327 = sbr.rel (0) target = $region249
    $region248: #{model_forward.1} parent=1 // pred_region
      %328 = dma.done [#allocation18], 16
    $region249: #{model_forward.1} parent=1 // pred_fallthru
      _
    %329 = sfence
    %v330 = vld [vmem:[%s1] sm:$0xff]
    %v331 = vld [vmem:[%s1 + $0x8] sm:$0xff]
    %v332 = vld [vmem:[%s11] sm:$0xff]
    %v333 = vld [vmem:[%s11 + $0x8] sm:$0xff]
    %v334 = vld [vmem:[%s13] sm:$0xff]
    %v335 = vld [vmem:[%s13 + $0x8] sm:$0xff]
    %v336 = vld [vmem:[%s15] sm:$0xff]
    %v337 = vld [vmem:[%s15 + $0x8] sm:$0xff]
    %vm338 = vcmask 130048
    %v340 = vsel %vm338, %v330, 0
    %v343 = vsel %vm338, %v331, 0
    %345 = vmatprep.subr.mxu0 0.0
    %346 = vmatpush1.msra.mxu0 %v334
    %347 = vmatprep.subr.mxu0 0.0
    %348 = vmatpush1.msra.mxu0 %v335
    %349 = vmatprep.subr.mxu0 0.0
    %350 = vmatpush1.msra.mxu0 0.0
    %351 = vmatprep.subr.mxu0 0.0
    %352 = vmatpush1.msra.mxu0 0.0
    %353 = vmatprep.subr.mxu0 0.0
    %354 = vmatpush1.msra.mxu0 0.0
    %355 = vmatprep.subr.mxu0 0.0
    %356 = vmatpush1.msra.mxu0 0.0
    %357 = vmatprep.subr.mxu0 0.0
    %358 = vmatpush1.msra.mxu0 0.0
    %359 = vmatprep.subr.mxu0 0.0
    %360 = vmatpush1.msra.mxu0 0.0
    %361 = vmatprep.subr.mxu0 0.0
    %362 = vmatpush1.msra.mxu0 0.0
    %363 = vmatprep.subr.mxu0 0.0
    %364 = vmatpush1.msra.mxu0 0.0
    %365 = vmatprep.subr.mxu0 0.0
    %366 = vmatpush1.msra.mxu0 0.0
    %367 = vmatprep.subr.mxu0 0.0
    %368 = vmatpush1.msra.mxu0 0.0
    %369 = vmatprep.subr.mxu0 0.0
    %370 = vmatpush1.msra.mxu0 0.0
    %371 = vmatprep.subr.mxu0 0.0
    %372 = vmatpush1.msra.mxu0 0.0
    %373 = vmatprep.subr.mxu0 0.0
    %374 = vmatpush1.msra.mxu0 0.0
    %375 = vmatprep.subr.mxu0 0.0
    %376 = vmatpush1.msra.mxu0 0.0
    %377 = vmatprep.subr.mxu0 0.0
    %378 = vmatpush1.msra.mxu0 0.0
    %379 = vmatprep.subr.mxu0 0.0
    %380 = vmatpush1.msra.mxu0 0.0
    %381 = vmatprep.subr.mxu0 0.0
    %382 = vmatpush1.msra.mxu0 0.0
    %383 = vmatprep.subr.mxu0 0.0
    %384 = vmatpush1.msra.mxu0 0.0
    %385 = vmatprep.subr.mxu0 0.0
    %386 = vmatpush1.msra.mxu0 0.0
    %387 = vmatprep.subr.mxu0 0.0
    %388 = vmatpush1.msra.mxu0 0.0
    %389 = vmatprep.subr.mxu0 0.0
    %390 = vmatpush1.msra.mxu0 0.0
    %391 = vmatprep.subr.mxu0 0.0
    %392 = vmatpush1.msra.mxu0 0.0
    %393 = vmatprep.subr.mxu0 0.0
    %394 = vmatpush1.msra.mxu0 0.0
    %395 = vmatprep.subr.mxu0 0.0
    %396 = vmatpush1.msra.mxu0 0.0
    %397 = vmatprep.subr.mxu0 0.0
    %398 = vmatpush1.msra.mxu0 0.0
    %399 = vmatprep.subr.mxu0 0.0
    %400 = vmatpush1.msra.mxu0 0.0
    %401 = vmatprep.subr.mxu0 0.0
    %402 = vmatpush1.msra.mxu0 0.0
    %403 = vmatprep.subr.mxu0 0.0
    %404 = vmatpush1.msra.mxu0 0.0
    %405 = vmatprep.subr.mxu0 0.0
    %406 = vmatpush1.msra.mxu0 0.0
    %407 = vmatprep.subr.mxu0 0.0
    %408 = vmatpush1.msra.mxu0 0.0
    %409 = vmatprep.mubr.f32.mxu0 0.0
    %410 = vmatmul.mubr.f32.gmra.mrb[0].mxu0 %v340
    %v411 = vpop.f32.mrb[0].mxu0
    %v412 = vadd.f32 0.0, %v411
    %v413 = vpop.f32.mrb[0].mxu0
    %414 = vmatprep.mubr.f32.mxu0 0.0
    %415 = vmatmul.mubr.f32.gmra.mrb[0].mxu0 %v343
    %v416 = vpop.f32.mrb[0].mxu0
    %v417 = vadd.f32 0.0, %v416
    %v418 = vpop.f32.mrb[0].mxu0
    %419 = vdwg.mxu0
    %v421 = vsel %vm338, %v412, 0
    %v424 = vsel %vm338, %v417, 0
    %426 = vmatprep.subr.mxu0 0.0
    %427 = vmatpush1.msra.mxu0 %v336
    %428 = vmatprep.subr.mxu0 0.0
    %429 = vmatpush1.msra.mxu0 %v337
    %430 = vmatprep.subr.mxu0 0.0
    %431 = vmatpush1.msra.mxu0 0.0
    %432 = vmatprep.subr.mxu0 0.0
    %433 = vmatpush1.msra.mxu0 0.0
    %434 = vmatprep.subr.mxu0 0.0
    %435 = vmatpush1.msra.mxu0 0.0
    %436 = vmatprep.subr.mxu0 0.0
    %437 = vmatpush1.msra.mxu0 0.0
    %438 = vmatprep.subr.mxu0 0.0
    %439 = vmatpush1.msra.mxu0 0.0
    %440 = vmatprep.subr.mxu0 0.0
    %441 = vmatpush1.msra.mxu0 0.0
    %442 = vmatprep.subr.mxu0 0.0
    %443 = vmatpush1.msra.mxu0 0.0
    %444 = vmatprep.subr.mxu0 0.0
    %445 = vmatpush1.msra.mxu0 0.0
    %446 = vmatprep.subr.mxu0 0.0
    %447 = vmatpush1.msra.mxu0 0.0
    %448 = vmatprep.subr.mxu0 0.0
    %449 = vmatpush1.msra.mxu0 0.0
    %450 = vmatprep.subr.mxu0 0.0
    %451 = vmatpush1.msra.mxu0 0.0
    %452 = vmatprep.subr.mxu0 0.0
    %453 = vmatpush1.msra.mxu0 0.0
    %454 = vmatprep.subr.mxu0 0.0
    %455 = vmatpush1.msra.mxu0 0.0
    %456 = vmatprep.subr.mxu0 0.0
    %457 = vmatpush1.msra.mxu0 0.0
    %458 = vmatprep.subr.mxu0 0.0
    %459 = vmatpush1.msra.mxu0 0.0
    %460 = vmatprep.subr.mxu0 0.0
    %461 = vmatpush1.msra.mxu0 0.0
    %462 = vmatprep.subr.mxu0 0.0
    %463 = vmatpush1.msra.mxu0 0.0
    %464 = vmatprep.subr.mxu0 0.0
    %465 = vmatpush1.msra.mxu0 0.0
    %466 = vmatprep.subr.mxu0 0.0
    %467 = vmatpush1.msra.mxu0 0.0
    %468 = vmatprep.subr.mxu0 0.0
    %469 = vmatpush1.msra.mxu0 0.0
    %470 = vmatprep.subr.mxu0 0.0
    %471 = vmatpush1.msra.mxu0 0.0
    %472 = vmatprep.subr.mxu0 0.0
    %473 = vmatpush1.msra.mxu0 0.0
    %474 = vmatprep.subr.mxu0 0.0
    %475 = vmatpush1.msra.mxu0 0.0
    %476 = vmatprep.subr.mxu0 0.0
    %477 = vmatpush1.msra.mxu0 0.0
    %478 = vmatprep.subr.mxu0 0.0
    %479 = vmatpush1.msra.mxu0 0.0
    %480 = vmatprep.subr.mxu0 0.0
    %481 = vmatpush1.msra.mxu0 0.0
    %482 = vmatprep.subr.mxu0 0.0
    %483 = vmatpush1.msra.mxu0 0.0
    %484 = vmatprep.subr.mxu0 0.0
    %485 = vmatpush1.msra.mxu0 0.0
    %486 = vmatprep.subr.mxu0 0.0
    %487 = vmatpush1.msra.mxu0 0.0
    %488 = vmatprep.subr.mxu0 0.0
    %489 = vmatpush1.msra.mxu0 0.0
    %490 = vmatprep.mubr.f32.mxu0 0.0
    %491 = vmatmul.mubr.f32.gmra.mrb[0].mxu0 %v421
    %v492 = vpop.f32.mrb[0].mxu0
    %v493 = vadd.f32 0.0, %v492
    %v494 = vpop.f32.mrb[0].mxu0
    %495 = vmatprep.mubr.f32.mxu0 0.0
    %496 = vmatmul.mubr.f32.gmra.mrb[0].mxu0 %v424
    %v497 = vpop.f32.mrb[0].mxu0
    %v498 = vadd.f32 0.0, %v497
    %v499 = vpop.f32.mrb[0].mxu0
    %500 = vdwg.mxu0
    %503 = vrot.lane.b32.xlu0 %v493, 126
    %v504 = vpop.permute.xlu0 %503
    %505 = vrot.lane.b32.xlu0 %v498, 126
    %v506 = vpop.permute.xlu0 %505
    %509 = vxpose.xlu0.b32.start [1/16] %v504, 128
    %510 = vxpose.xlu0.b32.cont [2/16] %v506, 128
    %511 = vxpose.xlu0.b32.cont [3/16] 0.0, 128
    %512 = vxpose.xlu0.b32.cont [4/16] 0.0, 128
    %513 = vxpose.xlu0.b32.cont [5/16] 0.0, 128
    %514 = vxpose.xlu0.b32.cont [6/16] 0.0, 128
    %515 = vxpose.xlu0.b32.cont [7/16] 0.0, 128
    %516 = vxpose.xlu0.b32.cont [8/16] 0.0, 128
    %517 = vxpose.xlu0.b32.cont [9/16] 0.0, 128
    %518 = vxpose.xlu0.b32.cont [10/16] 0.0, 128
    %519 = vxpose.xlu0.b32.cont [11/16] 0.0, 128
    %520 = vxpose.xlu0.b32.cont [12/16] 0.0, 128
    %521 = vxpose.xlu0.b32.cont [13/16] 0.0, 128
    %522 = vxpose.xlu0.b32.cont [14/16] 0.0, 128
    %523 = vxpose.xlu0.b32.cont [15/16] 0.0, 128
    %524 = vxpose.xlu0.b32.end [16/16] 0.0, 128
    %v525 = vpop.trf.xlu0
    %v526 = vpop.trf.xlu0
    %v527 = vpop.trf.xlu0
    %v528 = vpop.trf.xlu0
    %v529 = vpop.trf.xlu0
    %v530 = vpop.trf.xlu0
    %v531 = vpop.trf.xlu0
    %v532 = vpop.trf.xlu0
    %v533 = vpop.trf.xlu0
    %v534 = vpop.trf.xlu0
    %v535 = vpop.trf.xlu0
    %v536 = vpop.trf.xlu0
    %v537 = vpop.trf.xlu0
    %v538 = vpop.trf.xlu0
    %v539 = vpop.trf.xlu0
    %v540 = vpop.trf.xlu0
    %541 = vset.pattern.permute.xlu0 0
    %542 = vperm.xlu0 %541, %v493
    %v543 = vpop.permute.xlu0 %542
    %545 = vset.pattern.permute.xlu0 0
    %546 = vperm.xlu0 %545, %v498
    %v547 = vpop.permute.xlu0 %546
    %v549 = vlaneseq
    %v550 = vshrl.u32 %v549, 7
    %v551 = vsub.s32 0, %v550
    %v552 = vrot.slane %v525, %v551
    %v553 = vadd.f32 %v543, %v552
    %v554 = vadd.f32 %v547, %v552
    %vm555 = vcmp.gt.f32.partialorder %v553, 0.0
    %vm556 = vcmp.gt.f32.partialorder %v554, 0.0
    %v557 = vmul.f32 %v553, 0.2
    %v558 = vmul.f32 %v554, 0.2
    %v559 = vsel %vm555, %v553, %v557
    %v560 = vsel %vm556, %v554, %v558
    %v561 = vadd.f32 %v559, %v332
    %v562 = vadd.f32 %v560, %v333
    %v563 = vsel %vm338, %v561, -inf
    %564 = vmax.xlane.f32.xlu0 %v563
    %v565 = vpop.xlane.xlu0 %564
    %v566 = vsel %vm338, %v562, -inf
    %567 = vmax.xlane.f32.xlu0 %v566
    %v568 = vpop.xlane.xlu0 %567
    %v569 = vsub.f32 %v561, %v565
    %v570 = vsub.f32 %v562, %v568
    %v571 = vmul.f32 %v569, 1.442695
    %v572 = vpow.pop %v571
    %v573 = vmul.f32 %v570, 1.442695
    %v574 = vpow.pop %v573
    %v575 = vsel %vm338, %v572, 0.0
    %576 = vadd.xlane.f32.xlu0 %v575
    %v577 = vpop.xlane.xlu0 %576
    %v578 = vsel %vm338, %v574, 0.0
    %579 = vadd.xlane.f32.xlu0 %v578
    %v580 = vpop.xlane.xlu0 %579
    %v581 = vrcp.pop %v577
    %v582 = vmul.f32 %v572, %v581
    %v583 = vrcp.pop %v580
    %v584 = vmul.f32 %v574, %v583
    %585 = vset.pattern.permute.xlu0 1
    %586 = vperm.xlu0 %585, %v493
    %v587 = vpop.permute.xlu0 %586
    %589 = vset.pattern.permute.xlu0 1
    %590 = vperm.xlu0 %589, %v498
    %v591 = vpop.permute.xlu0 %590
    %v593 = vlaneseq
    %v594 = vshrl.u32 %v593, 7
    %v595 = vsub.s32 1, %v594
    %v596 = vrot.slane %v525, %v595
    %v597 = vadd.f32 %v587, %v596
    %v598 = vadd.f32 %v591, %v596
    %vm599 = vcmp.gt.f32.partialorder %v597, 0.0
    %vm600 = vcmp.gt.f32.partialorder %v598, 0.0
    %v601 = vmul.f32 %v597, 0.2
    %v602 = vmul.f32 %v598, 0.2
    %v603 = vsel %vm599, %v597, %v601
    %v604 = vsel %vm600, %v598, %v602
    %v605 = vadd.f32 %v603, %v332
    %v606 = vadd.f32 %v604, %v333
    %v607 = vsel %vm338, %v605, -inf
    %608 = vmax.xlane.f32.xlu0 %v607
    %v609 = vpop.xlane.xlu0 %608
    %v610 = vsel %vm338, %v606, -inf
    %611 = vmax.xlane.f32.xlu0 %v610
    %v612 = vpop.xlane.xlu0 %611
    %v613 = vsub.f32 %v605, %v609
    %v614 = vsub.f32 %v606, %v612
    %v615 = vmul.f32 %v613, 1.442695
    %v616 = vpow.pop %v615
    %v617 = vmul.f32 %v614, 1.442695
    %v618 = vpow.pop %v617
    %v619 = vsel %vm338, %v616, 0.0
    %620 = vadd.xlane.f32.xlu0 %v619
    %v621 = vpop.xlane.xlu0 %620
    %v622 = vsel %vm338, %v618, 0.0
    %623 = vadd.xlane.f32.xlu0 %v622
    %v624 = vpop.xlane.xlu0 %623
    %v625 = vrcp.pop %v621
    %v626 = vmul.f32 %v616, %v625
    %v627 = vrcp.pop %v624
    %v628 = vmul.f32 %v618, %v627
    %629 = vrot.lane.b32.xlu0 %v412, 120
    %v630 = vpop.permute.xlu0 %629
    %631 = vrot.lane.b32.xlu0 %v417, 120
    %v632 = vpop.permute.xlu0 %631
    %v636 = vsel %vm338, %v626, 0
    %v639 = vsel %vm338, %v628, 0
    %641 = vmatprep.subr.mxu0 0.0
    %642 = vmatpush1.msra.mxu0 %v630
    %643 = vmatprep.subr.mxu0 0.0
    %644 = vmatpush1.msra.mxu0 %v632
    %645 = vmatprep.subr.mxu0 0.0
    %646 = vmatpush1.msra.mxu0 0.0
    %647 = vmatprep.subr.mxu0 0.0
    %648 = vmatpush1.msra.mxu0 0.0
    %649 = vmatprep.subr.mxu0 0.0
    %650 = vmatpush1.msra.mxu0 0.0
    %651 = vmatprep.subr.mxu0 0.0
    %652 = vmatpush1.msra.mxu0 0.0
    %653 = vmatprep.subr.mxu0 0.0
    %654 = vmatpush1.msra.mxu0 0.0
    %655 = vmatprep.subr.mxu0 0.0
    %656 = vmatpush1.msra.mxu0 0.0
    %657 = vmatprep.subr.mxu0 0.0
    %658 = vmatpush1.msra.mxu0 0.0
    %659 = vmatprep.subr.mxu0 0.0
    %660 = vmatpush1.msra.mxu0 0.0
    %661 = vmatprep.subr.mxu0 0.0
    %662 = vmatpush1.msra.mxu0 0.0
    %663 = vmatprep.subr.mxu0 0.0
    %664 = vmatpush1.msra.mxu0 0.0
    %665 = vmatprep.subr.mxu0 0.0
    %666 = vmatpush1.msra.mxu0 0.0
    %667 = vmatprep.subr.mxu0 0.0
    %668 = vmatpush1.msra.mxu0 0.0
    %669 = vmatprep.subr.mxu0 0.0
    %670 = vmatpush1.msra.mxu0 0.0
    %671 = vmatprep.subr.mxu0 0.0
    %672 = vmatpush1.msra.mxu0 0.0
    %673 = vmatprep.subr.mxu0 0.0
    %674 = vmatpush1.msra.mxu0 0.0
    %675 = vmatprep.subr.mxu0 0.0
    %676 = vmatpush1.msra.mxu0 0.0
    %677 = vmatprep.subr.mxu0 0.0
    %678 = vmatpush1.msra.mxu0 0.0
    %679 = vmatprep.subr.mxu0 0.0
    %680 = vmatpush1.msra.mxu0 0.0
    %681 = vmatprep.subr.mxu0 0.0
    %682 = vmatpush1.msra.mxu0 0.0
    %683 = vmatprep.subr.mxu0 0.0
    %684 = vmatpush1.msra.mxu0 0.0
    %685 = vmatprep.subr.mxu0 0.0
    %686 = vmatpush1.msra.mxu0 0.0
    %687 = vmatprep.subr.mxu0 0.0
    %688 = vmatpush1.msra.mxu0 0.0
    %689 = vmatprep.subr.mxu0 0.0
    %690 = vmatpush1.msra.mxu0 0.0
    %691 = vmatprep.subr.mxu0 0.0
    %692 = vmatpush1.msra.mxu0 0.0
    %693 = vmatprep.subr.mxu0 0.0
    %694 = vmatpush1.msra.mxu0 0.0
    %695 = vmatprep.subr.mxu0 0.0
    %696 = vmatpush1.msra.mxu0 0.0
    %697 = vmatprep.subr.mxu0 0.0
    %698 = vmatpush1.msra.mxu0 0.0
    %699 = vmatprep.subr.mxu0 0.0
    %700 = vmatpush1.msra.mxu0 0.0
    %701 = vmatprep.subr.mxu0 0.0
    %702 = vmatpush1.msra.mxu0 0.0
    %703 = vmatprep.subr.mxu0 0.0
    %704 = vmatpush1.msra.mxu0 0.0
    %705 = vmatprep.mubr.f32.mxu0 0.0
    %706 = vmatmul.mubr.f32.gmra.mrb[0].mxu0 %v636
    %v707 = vpop.f32.mrb[0].mxu0
    %v708 = vadd.f32 0.0, %v707
    %v709 = vpop.f32.mrb[0].mxu0
    %710 = vmatprep.mubr.f32.mxu0 0.0
    %711 = vmatmul.mubr.f32.gmra.mrb[0].mxu0 %v639
    %v712 = vpop.f32.mrb[0].mxu0
    %v713 = vadd.f32 0.0, %v712
    %v714 = vpop.f32.mrb[0].mxu0
    %715 = vdwg.mxu0
    %v717 = vsel %vm338, %v582, 0
    %v720 = vsel %vm338, %v584, 0
    %722 = vmatprep.subr.mxu0 0.0
    %723 = vmatpush1.msra.mxu0 %v412
    %724 = vmatprep.subr.mxu0 0.0
    %725 = vmatpush1.msra.mxu0 %v417
    %726 = vmatprep.subr.mxu0 0.0
    %727 = vmatpush1.msra.mxu0 0.0
    %728 = vmatprep.subr.mxu0 0.0
    %729 = vmatpush1.msra.mxu0 0.0
    %730 = vmatprep.subr.mxu0 0.0
    %731 = vmatpush1.msra.mxu0 0.0
    %732 = vmatprep.subr.mxu0 0.0
    %733 = vmatpush1.msra.mxu0 0.0
    %734 = vmatprep.subr.mxu0 0.0
    %735 = vmatpush1.msra.mxu0 0.0
    %736 = vmatprep.subr.mxu0 0.0
    %737 = vmatpush1.msra.mxu0 0.0
    %738 = vmatprep.subr.mxu0 0.0
    %739 = vmatpush1.msra.mxu0 0.0
    %740 = vmatprep.subr.mxu0 0.0
    %741 = vmatpush1.msra.mxu0 0.0
    %742 = vmatprep.subr.mxu0 0.0
    %743 = vmatpush1.msra.mxu0 0.0
    %744 = vmatprep.subr.mxu0 0.0
    %745 = vmatpush1.msra.mxu0 0.0
    %746 = vmatprep.subr.mxu0 0.0
    %747 = vmatpush1.msra.mxu0 0.0
    %748 = vmatprep.subr.mxu0 0.0
    %749 = vmatpush1.msra.mxu0 0.0
    %750 = vmatprep.subr.mxu0 0.0
    %751 = vmatpush1.msra.mxu0 0.0
    %752 = vmatprep.subr.mxu0 0.0
    %753 = vmatpush1.msra.mxu0 0.0
    %754 = vmatprep.subr.mxu0 0.0
    %755 = vmatpush1.msra.mxu0 0.0
    %756 = vmatprep.subr.mxu0 0.0
    %757 = vmatpush1.msra.mxu0 0.0
    %758 = vmatprep.subr.mxu0 0.0
    %759 = vmatpush1.msra.mxu0 0.0
    %760 = vmatprep.subr.mxu0 0.0
    %761 = vmatpush1.msra.mxu0 0.0
    %762 = vmatprep.subr.mxu0 0.0
    %763 = vmatpush1.msra.mxu0 0.0
    %764 = vmatprep.subr.mxu0 0.0
    %765 = vmatpush1.msra.mxu0 0.0
    %766 = vmatprep.subr.mxu0 0.0
    %767 = vmatpush1.msra.mxu0 0.0
    %768 = vmatprep.subr.mxu0 0.0
    %769 = vmatpush1.msra.mxu0 0.0
    %770 = vmatprep.subr.mxu0 0.0
    %771 = vmatpush1.msra.mxu0 0.0
    %772 = vmatprep.subr.mxu0 0.0
    %773 = vmatpush1.msra.mxu0 0.0
    %774 = vmatprep.subr.mxu0 0.0
    %775 = vmatpush1.msra.mxu0 0.0
    %776 = vmatprep.subr.mxu0 0.0
    %777 = vmatpush1.msra.mxu0 0.0
    %778 = vmatprep.subr.mxu0 0.0
    %779 = vmatpush1.msra.mxu0 0.0
    %780 = vmatprep.subr.mxu0 0.0
    %781 = vmatpush1.msra.mxu0 0.0
    %782 = vmatprep.subr.mxu0 0.0
    %783 = vmatpush1.msra.mxu0 0.0
    %784 = vmatprep.subr.mxu0 0.0
    %785 = vmatpush1.msra.mxu0 0.0
    %786 = vmatprep.mubr.f32.mxu0 0.0
    %787 = vmatmul.mubr.f32.gmra.mrb[0].mxu0 %v717
    %v788 = vpop.f32.mrb[0].mxu0
    %v789 = vadd.f32 %v708, %v788
    %v790 = vpop.f32.mrb[0].mxu0
    %791 = vmatprep.mubr.f32.mxu0 0.0
    %792 = vmatmul.mubr.f32.gmra.mrb[0].mxu0 %v720
    %v793 = vpop.f32.mrb[0].mxu0
    %v794 = vadd.f32 %v713, %v793
    %v795 = vpop.f32.mrb[0].mxu0
    %796 = vdwg.mxu0
    %v797 = vmul.f32 %v789, 0.5
    %v798 = vmul.f32 %v794, 0.5
    %799 = vrot.lane.b32.xlu0 %v412, 112
    %v800 = vpop.permute.xlu0 %799
    %801 = vrot.lane.b32.xlu0 %v417, 112
    %v802 = vpop.permute.xlu0 %801
    %v805 = vadd.f32 %v797, %v800
    %v806 = vadd.f32 %v798, %v802
    %v807 = vmin.f32 %v805, 0.0
    %v808 = vmin.f32 %v806, 0.0
    %vm809 = vcmp.gt.f32.partialorder %v805, 0.0
    %vm810 = vcmp.gt.f32.partialorder %v806, 0.0
    %v811 = vmul.f32 %v807, 1.442695
    %v812 = vpow.pop %v811
    %v813 = vmul.f32 %v808, 1.442695
    %v814 = vpow.pop %v813
    %v815 = vsub.f32 %v812, 1.0
    %v816 = vsub.f32 %v814, 1.0
    %v817 = vsel %vm809, %v805, %v815
    %v818 = vsel %vm810, %v806, %v816
    %v819 = vld [vmem:[%s9] sm:$0xff]
    %v820 = vld [vmem:[%s9 + $0x8] sm:$0xff]
    %v821 = vld [vmem:[%s17] sm:$0xff]
    %v822 = vld [vmem:[%s17 + $0x8] sm:$0xff]
    %v823 = vld [vmem:[%s19] sm:$0xff]
    %v824 = vld [vmem:[%s19 + $0x8] sm:$0xff]
    %v826 = vsel %vm338, %v819, 0
    %v829 = vsel %vm338, %v820, 0
    %831 = vmatprep.subr.mxu0 0.0
    %832 = vmatpush1.msra.mxu0 %v821
    %833 = vmatprep.subr.mxu0 0.0
    %834 = vmatpush1.msra.mxu0 %v822
    %835 = vmatprep.subr.mxu0 0.0
    %836 = vmatpush1.msra.mxu0 0.0
    %837 = vmatprep.subr.mxu0 0.0
    %838 = vmatpush1.msra.mxu0 0.0
    %839 = vmatprep.subr.mxu0 0.0
    %840 = vmatpush1.msra.mxu0 0.0
    %841 = vmatprep.subr.mxu0 0.0
    %842 = vmatpush1.msra.mxu0 0.0
    %843 = vmatprep.subr.mxu0 0.0
    %844 = vmatpush1.msra.mxu0 0.0
    %845 = vmatprep.subr.mxu0 0.0
    %846 = vmatpush1.msra.mxu0 0.0
    %847 = vmatprep.subr.mxu0 0.0
    %848 = vmatpush1.msra.mxu0 0.0
    %849 = vmatprep.subr.mxu0 0.0
    %850 = vmatpush1.msra.mxu0 0.0
    %851 = vmatprep.subr.mxu0 0.0
    %852 = vmatpush1.msra.mxu0 0.0
    %853 = vmatprep.subr.mxu0 0.0
    %854 = vmatpush1.msra.mxu0 0.0
    %855 = vmatprep.subr.mxu0 0.0
    %856 = vmatpush1.msra.mxu0 0.0
    %857 = vmatprep.subr.mxu0 0.0
    %858 = vmatpush1.msra.mxu0 0.0
    %859 = vmatprep.subr.mxu0 0.0
    %860 = vmatpush1.msra.mxu0 0.0
    %861 = vmatprep.subr.mxu0 0.0
    %862 = vmatpush1.msra.mxu0 0.0
    %863 = vmatprep.subr.mxu0 0.0
    %864 = vmatpush1.msra.mxu0 0.0
    %865 = vmatprep.subr.mxu0 0.0
    %866 = vmatpush1.msra.mxu0 0.0
    %867 = vmatprep.subr.mxu0 0.0
    %868 = vmatpush1.msra.mxu0 0.0
    %869 = vmatprep.subr.mxu0 0.0
    %870 = vmatpush1.msra.mxu0 0.0
    %871 = vmatprep.subr.mxu0 0.0
    %872 = vmatpush1.msra.mxu0 0.0
    %873 = vmatprep.subr.mxu0 0.0
    %874 = vmatpush1.msra.mxu0 0.0
    %875 = vmatprep.subr.mxu0 0.0
    %876 = vmatpush1.msra.mxu0 0.0
    %877 = vmatprep.subr.mxu0 0.0
    %878 = vmatpush1.msra.mxu0 0.0
    %879 = vmatprep.subr.mxu0 0.0
    %880 = vmatpush1.msra.mxu0 0.0
    %881 = vmatprep.subr.mxu0 0.0
    %882 = vmatpush1.msra.mxu0 0.0
    %883 = vmatprep.subr.mxu0 0.0
    %884 = vmatpush1.msra.mxu0 0.0
    %885 = vmatprep.subr.mxu0 0.0
    %886 = vmatpush1.msra.mxu0 0.0
    %887 = vmatprep.subr.mxu0 0.0
    %888 = vmatpush1.msra.mxu0 0.0
    %889 = vmatprep.subr.mxu0 0.0
    %890 = vmatpush1.msra.mxu0 0.0
    %891 = vmatprep.subr.mxu0 0.0
    %892 = vmatpush1.msra.mxu0 0.0
    %893 = vmatprep.subr.mxu0 0.0
    %894 = vmatpush1.msra.mxu0 0.0
    %895 = vmatprep.mubr.f32.mxu0 0.0
    %896 = vmatmul.mubr.f32.gmra.mrb[0].mxu0 %v826
    %v897 = vpop.f32.mrb[0].mxu0
    %v898 = vadd.f32 0.0, %v897
    %v899 = vpop.f32.mrb[0].mxu0
    %900 = vmatprep.mubr.f32.mxu0 0.0
    %901 = vmatmul.mubr.f32.gmra.mrb[0].mxu0 %v829
    %v902 = vpop.f32.mrb[0].mxu0
    %v903 = vadd.f32 0.0, %v902
    %v904 = vpop.f32.mrb[0].mxu0
    %905 = vdwg.mxu0
    %v907 = vsel %vm338, %v898, 0
    %v910 = vsel %vm338, %v903, 0
    %912 = vmatprep.subr.mxu0 0.0
    %913 = vmatpush1.msra.mxu0 %v823
    %914 = vmatprep.subr.mxu0 0.0
    %915 = vmatpush1.msra.mxu0 %v824
    %916 = vmatprep.subr.mxu0 0.0
    %917 = vmatpush1.msra.mxu0 0.0
    %918 = vmatprep.subr.mxu0 0.0
    %919 = vmatpush1.msra.mxu0 0.0
    %920 = vmatprep.subr.mxu0 0.0
    %921 = vmatpush1.msra.mxu0 0.0
    %922 = vmatprep.subr.mxu0 0.0
    %923 = vmatpush1.msra.mxu0 0.0
    %924 = vmatprep.subr.mxu0 0.0
    %925 = vmatpush1.msra.mxu0 0.0
    %926 = vmatprep.subr.mxu0 0.0
    %927 = vmatpush1.msra.mxu0 0.0
    %928 = vmatprep.subr.mxu0 0.0
    %929 = vmatpush1.msra.mxu0 0.0
    %930 = vmatprep.subr.mxu0 0.0
    %931 = vmatpush1.msra.mxu0 0.0
    %932 = vmatprep.subr.mxu0 0.0
    %933 = vmatpush1.msra.mxu0 0.0
    %934 = vmatprep.subr.mxu0 0.0
    %935 = vmatpush1.msra.mxu0 0.0
    %936 = vmatprep.subr.mxu0 0.0
    %937 = vmatpush1.msra.mxu0 0.0
    %938 = vmatprep.subr.mxu0 0.0
    %939 = vmatpush1.msra.mxu0 0.0
    %940 = vmatprep.subr.mxu0 0.0
    %941 = vmatpush1.msra.mxu0 0.0
    %942 = vmatprep.subr.mxu0 0.0
    %943 = vmatpush1.msra.mxu0 0.0
    %944 = vmatprep.subr.mxu0 0.0
    %945 = vmatpush1.msra.mxu0 0.0
    %946 = vmatprep.subr.mxu0 0.0
    %947 = vmatpush1.msra.mxu0 0.0
    %948 = vmatprep.subr.mxu0 0.0
    %949 = vmatpush1.msra.mxu0 0.0
    %950 = vmatprep.subr.mxu0 0.0
    %951 = vmatpush1.msra.mxu0 0.0
    %952 = vmatprep.subr.mxu0 0.0
    %953 = vmatpush1.msra.mxu0 0.0
    %954 = vmatprep.subr.mxu0 0.0
    %955 = vmatpush1.msra.mxu0 0.0
    %956 = vmatprep.subr.mxu0 0.0
    %957 = vmatpush1.msra.mxu0 0.0
    %958 = vmatprep.subr.mxu0 0.0
    %959 = vmatpush1.msra.mxu0 0.0
    %960 = vmatprep.subr.mxu0 0.0
    %961 = vmatpush1.msra.mxu0 0.0
    %962 = vmatprep.subr.mxu0 0.0
    %963 = vmatpush1.msra.mxu0 0.0
    %964 = vmatprep.subr.mxu0 0.0
    %965 = vmatpush1.msra.mxu0 0.0
    %966 = vmatprep.subr.mxu0 0.0
    %967 = vmatpush1.msra.mxu0 0.0
    %968 = vmatprep.subr.mxu0 0.0
    %969 = vmatpush1.msra.mxu0 0.0
    %970 = vmatprep.subr.mxu0 0.0
    %971 = vmatpush1.msra.mxu0 0.0
    %972 = vmatprep.subr.mxu0 0.0
    %973 = vmatpush1.msra.mxu0 0.0
    %974 = vmatprep.subr.mxu0 0.0
    %975 = vmatpush1.msra.mxu0 0.0
    %976 = vmatprep.mubr.f32.mxu0 0.0
    %977 = vmatmul.mubr.f32.gmra.mrb[0].mxu0 %v907
    %v978 = vpop.f32.mrb[0].mxu0
    %v979 = vadd.f32 0.0, %v978
    %v980 = vpop.f32.mrb[0].mxu0
    %981 = vmatprep.mubr.f32.mxu0 0.0
    %982 = vmatmul.mubr.f32.gmra.mrb[0].mxu0 %v910
    %v983 = vpop.f32.mrb[0].mxu0
    %v984 = vadd.f32 0.0, %v983
    %v985 = vpop.f32.mrb[0].mxu0
    %986 = vdwg.mxu0
    %989 = vrot.lane.b32.xlu0 %v979, 126
    %v990 = vpop.permute.xlu0 %989
    %991 = vrot.lane.b32.xlu0 %v984, 126
    %v992 = vpop.permute.xlu0 %991
    %995 = vxpose.xlu0.b32.start [1/16] %v990, 128
    %996 = vxpose.xlu0.b32.cont [2/16] %v992, 128
    %997 = vxpose.xlu0.b32.cont [3/16] 0.0, 128
    %998 = vxpose.xlu0.b32.cont [4/16] 0.0, 128
    %999 = vxpose.xlu0.b32.cont [5/16] 0.0, 128
    %1000 = vxpose.xlu0.b32.cont [6/16] 0.0, 128
    %1001 = vxpose.xlu0.b32.cont [7/16] 0.0, 128
    %1002 = vxpose.xlu0.b32.cont [8/16] 0.0, 128
    %1003 = vxpose.xlu0.b32.cont [9/16] 0.0, 128
    %1004 = vxpose.xlu0.b32.cont [10/16] 0.0, 128
    %1005 = vxpose.xlu0.b32.cont [11/16] 0.0, 128
    %1006 = vxpose.xlu0.b32.cont [12/16] 0.0, 128
    %1007 = vxpose.xlu0.b32.cont [13/16] 0.0, 128
    %1008 = vxpose.xlu0.b32.cont [14/16] 0.0, 128
    %1009 = vxpose.xlu0.b32.cont [15/16] 0.0, 128
    %1010 = vxpose.xlu0.b32.end [16/16] 0.0, 128
    %v1011 = vpop.trf.xlu0
    %v1012 = vpop.trf.xlu0
    %v1013 = vpop.trf.xlu0
    %v1014 = vpop.trf.xlu0
    %v1015 = vpop.trf.xlu0
    %v1016 = vpop.trf.xlu0
    %v1017 = vpop.trf.xlu0
    %v1018 = vpop.trf.xlu0
    %v1019 = vpop.trf.xlu0
    %v1020 = vpop.trf.xlu0
    %v1021 = vpop.trf.xlu0
    %v1022 = vpop.trf.xlu0
    %v1023 = vpop.trf.xlu0
    %v1024 = vpop.trf.xlu0
    %v1025 = vpop.trf.xlu0
    %v1026 = vpop.trf.xlu0
    %1027 = vset.pattern.permute.xlu0 0
    %1028 = vperm.xlu0 %1027, %v979
    %v1029 = vpop.permute.xlu0 %1028
    %1031 = vset.pattern.permute.xlu0 0
    %1032 = vperm.xlu0 %1031, %v984
    %v1033 = vpop.permute.xlu0 %1032
    %v1035 = vlaneseq
    %v1036 = vshrl.u32 %v1035, 7
    %v1037 = vsub.s32 0, %v1036
    %v1038 = vrot.slane %v1011, %v1037
    %v1039 = vadd.f32 %v1029, %v1038
    %v1040 = vadd.f32 %v1033, %v1038
    %vm1041 = vcmp.gt.f32.partialorder %v1039, 0.0
    %vm1042 = vcmp.gt.f32.partialorder %v1040, 0.0
    %v1043 = vmul.f32 %v1039, 0.2
    %v1044 = vmul.f32 %v1040, 0.2
    %v1045 = vsel %vm1041, %v1039, %v1043
    %v1046 = vsel %vm1042, %v1040, %v1044
    %v1047 = vadd.f32 %v1045, %v332
    %v1048 = vadd.f32 %v1046, %v333
    %v1049 = vsel %vm338, %v1047, -inf
    %1050 = vmax.xlane.f32.xlu0 %v1049
    %v1051 = vpop.xlane.xlu0 %1050
    %v1052 = vsel %vm338, %v1048, -inf
    %1053 = vmax.xlane.f32.xlu0 %v1052
    %v1054 = vpop.xlane.xlu0 %1053
    %v1055 = vsub.f32 %v1047, %v1051
    %v1056 = vsub.f32 %v1048, %v1054
    %v1057 = vmul.f32 %v1055, 1.442695
    %v1058 = vpow.pop %v1057
    %v1059 = vmul.f32 %v1056, 1.442695
    %v1060 = vpow.pop %v1059
    %v1061 = vsel %vm338, %v1058, 0.0
    %1062 = vadd.xlane.f32.xlu0 %v1061
    %v1063 = vpop.xlane.xlu0 %1062
    %v1064 = vsel %vm338, %v1060, 0.0
    %1065 = vadd.xlane.f32.xlu0 %v1064
    %v1066 = vpop.xlane.xlu0 %1065
    %v1067 = vrcp.pop %v1063
    %v1068 = vmul.f32 %v1058, %v1067
    %v1069 = vrcp.pop %v1066
    %v1070 = vmul.f32 %v1060, %v1069
    %1071 = vset.pattern.permute.xlu0 1
    %1072 = vperm.xlu0 %1071, %v979
    %v1073 = vpop.permute.xlu0 %1072
    %1075 = vset.pattern.permute.xlu0 1
    %1076 = vperm.xlu0 %1075, %v984
    %v1077 = vpop.permute.xlu0 %1076
    %v1079 = vlaneseq
    %v1080 = vshrl.u32 %v1079, 7
    %v1081 = vsub.s32 1, %v1080
    %v1082 = vrot.slane %v1011, %v1081
    %v1083 = vadd.f32 %v1073, %v1082
    %v1084 = vadd.f32 %v1077, %v1082
    %vm1085 = vcmp.gt.f32.partialorder %v1083, 0.0
    %vm1086 = vcmp.gt.f32.partialorder %v1084, 0.0
    %v1087 = vmul.f32 %v1083, 0.2
    %v1088 = vmul.f32 %v1084, 0.2
    %v1089 = vsel %vm1085, %v1083, %v1087
    %v1090 = vsel %vm1086, %v1084, %v1088
    %v1091 = vadd.f32 %v1089, %v332
    %v1092 = vadd.f32 %v1090, %v333
    %v1093 = vsel %vm338, %v1091, -inf
    %1094 = vmax.xlane.f32.xlu0 %v1093
    %v1095 = vpop.xlane.xlu0 %1094
    %v1096 = vsel %vm338, %v1092, -inf
    %1097 = vmax.xlane.f32.xlu0 %v1096
    %v1098 = vpop.xlane.xlu0 %1097
    %v1099 = vsub.f32 %v1091, %v1095
    %v1100 = vsub.f32 %v1092, %v1098
    %v1101 = vmul.f32 %v1099, 1.442695
    %v1102 = vpow.pop %v1101
    %v1103 = vmul.f32 %v1100, 1.442695
    %v1104 = vpow.pop %v1103
    %v1105 = vsel %vm338, %v1102, 0.0
    %1106 = vadd.xlane.f32.xlu0 %v1105
    %v1107 = vpop.xlane.xlu0 %1106
    %v1108 = vsel %vm338, %v1104, 0.0
    %1109 = vadd.xlane.f32.xlu0 %v1108
    %v1110 = vpop.xlane.xlu0 %1109
    %v1111 = vrcp.pop %v1107
    %v1112 = vmul.f32 %v1102, %v1111
    %v1113 = vrcp.pop %v1110
    %v1114 = vmul.f32 %v1104, %v1113
    %1115 = vrot.lane.b32.xlu0 %v898, 120
    %v1116 = vpop.permute.xlu0 %1115
    %1117 = vrot.lane.b32.xlu0 %v903, 120
    %v1118 = vpop.permute.xlu0 %1117
    %v1122 = vsel %vm338, %v1112, 0
    %v1125 = vsel %vm338, %v1114, 0
    %1127 = vmatprep.subr.mxu0 0.0
    %1128 = vmatpush1.msra.mxu0 %v1116
    %1129 = vmatprep.subr.mxu0 0.0
    %1130 = vmatpush1.msra.mxu0 %v1118
    %1131 = vmatprep.subr.mxu0 0.0
    %1132 = vmatpush1.msra.mxu0 0.0
    %1133 = vmatprep.subr.mxu0 0.0
    %1134 = vmatpush1.msra.mxu0 0.0
    %1135 = vmatprep.subr.mxu0 0.0
    %1136 = vmatpush1.msra.mxu0 0.0
    %1137 = vmatprep.subr.mxu0 0.0
    %1138 = vmatpush1.msra.mxu0 0.0
    %1139 = vmatprep.subr.mxu0 0.0
    %1140 = vmatpush1.msra.mxu0 0.0
    %1141 = vmatprep.subr.mxu0 0.0
    %1142 = vmatpush1.msra.mxu0 0.0
    %1143 = vmatprep.subr.mxu0 0.0
    %1144 = vmatpush1.msra.mxu0 0.0
    %1145 = vmatprep.subr.mxu0 0.0
    %1146 = vmatpush1.msra.mxu0 0.0
    %1147 = vmatprep.subr.mxu0 0.0
    %1148 = vmatpush1.msra.mxu0 0.0
    %1149 = vmatprep.subr.mxu0 0.0
    %1150 = vmatpush1.msra.mxu0 0.0
    %1151 = vmatprep.subr.mxu0 0.0
    %1152 = vmatpush1.msra.mxu0 0.0
    %1153 = vmatprep.subr.mxu0 0.0
    %1154 = vmatpush1.msra.mxu0 0.0
    %1155 = vmatprep.subr.mxu0 0.0
    %1156 = vmatpush1.msra.mxu0 0.0
    %1157 = vmatprep.subr.mxu0 0.0
    %1158 = vmatpush1.msra.mxu0 0.0
    %1159 = vmatprep.subr.mxu0 0.0
    %1160 = vmatpush1.msra.mxu0 0.0
    %1161 = vmatprep.subr.mxu0 0.0
    %1162 = vmatpush1.msra.mxu0 0.0
    %1163 = vmatprep.subr.mxu0 0.0
    %1164 = vmatpush1.msra.mxu0 0.0
    %1165 = vmatprep.subr.mxu0 0.0
    %1166 = vmatpush1.msra.mxu0 0.0
    %1167 = vmatprep.subr.mxu0 0.0
    %1168 = vmatpush1.msra.mxu0 0.0
    %1169 = vmatprep.subr.mxu0 0.0
    %1170 = vmatpush1.msra.mxu0 0.0
    %1171 = vmatprep.subr.mxu0 0.0
    %1172 = vmatpush1.msra.mxu0 0.0
    %1173 = vmatprep.subr.mxu0 0.0
    %1174 = vmatpush1.msra.mxu0 0.0
    %1175 = vmatprep.subr.mxu0 0.0
    %1176 = vmatpush1.msra.mxu0 0.0
    %1177 = vmatprep.subr.mxu0 0.0
    %1178 = vmatpush1.msra.mxu0 0.0
    %1179 = vmatprep.subr.mxu0 0.0
    %1180 = vmatpush1.msra.mxu0 0.0
    %1181 = vmatprep.subr.mxu0 0.0
    %1182 = vmatpush1.msra.mxu0 0.0
    %1183 = vmatprep.subr.mxu0 0.0
    %1184 = vmatpush1.msra.mxu0 0.0
    %1185 = vmatprep.subr.mxu0 0.0
    %1186 = vmatpush1.msra.mxu0 0.0
    %1187 = vmatprep.subr.mxu0 0.0
    %1188 = vmatpush1.msra.mxu0 0.0
    %1189 = vmatprep.subr.mxu0 0.0
    %1190 = vmatpush1.msra.mxu0 0.0
    %1191 = vmatprep.mubr.f32.mxu0 0.0
    %1192 = vmatmul.mubr.f32.gmra.mrb[0].mxu0 %v1122
    %v1193 = vpop.f32.mrb[0].mxu0
    %v1194 = vadd.f32 0.0, %v1193
    %v1195 = vpop.f32.mrb[0].mxu0
    %1196 = vmatprep.mubr.f32.mxu0 0.0
    %1197 = vmatmul.mubr.f32.gmra.mrb[0].mxu0 %v1125
    %v1198 = vpop.f32.mrb[0].mxu0
    %v1199 = vadd.f32 0.0, %v1198
    %v1200 = vpop.f32.mrb[0].mxu0
    %1201 = vdwg.mxu0
    %v1203 = vsel %vm338, %v1068, 0
    %v1206 = vsel %vm338, %v1070, 0
    %1208 = vmatprep.subr.mxu0 0.0
    %1209 = vmatpush1.msra.mxu0 %v898
    %1210 = vmatprep.subr.mxu0 0.0
    %1211 = vmatpush1.msra.mxu0 %v903
    %1212 = vmatprep.subr.mxu0 0.0
    %1213 = vmatpush1.msra.mxu0 0.0
    %1214 = vmatprep.subr.mxu0 0.0
    %1215 = vmatpush1.msra.mxu0 0.0
    %1216 = vmatprep.subr.mxu0 0.0
    %1217 = vmatpush1.msra.mxu0 0.0
    %1218 = vmatprep.subr.mxu0 0.0
    %1219 = vmatpush1.msra.mxu0 0.0
    %1220 = vmatprep.subr.mxu0 0.0
    %1221 = vmatpush1.msra.mxu0 0.0
    %1222 = vmatprep.subr.mxu0 0.0
    %1223 = vmatpush1.msra.mxu0 0.0
    %1224 = vmatprep.subr.mxu0 0.0
    %1225 = vmatpush1.msra.mxu0 0.0
    %1226 = vmatprep.subr.mxu0 0.0
    %1227 = vmatpush1.msra.mxu0 0.0
    %1228 = vmatprep.subr.mxu0 0.0
    %1229 = vmatpush1.msra.mxu0 0.0
    %1230 = vmatprep.subr.mxu0 0.0
    %1231 = vmatpush1.msra.mxu0 0.0
    %1232 = vmatprep.subr.mxu0 0.0
    %1233 = vmatpush1.msra.mxu0 0.0
    %1234 = vmatprep.subr.mxu0 0.0
    %1235 = vmatpush1.msra.mxu0 0.0
    %1236 = vmatprep.subr.mxu0 0.0
    %1237 = vmatpush1.msra.mxu0 0.0
    %1238 = vmatprep.subr.mxu0 0.0
    %1239 = vmatpush1.msra.mxu0 0.0
    %1240 = vmatprep.subr.mxu0 0.0
    %1241 = vmatpush1.msra.mxu0 0.0
    %1242 = vmatprep.subr.mxu0 0.0
    %1243 = vmatpush1.msra.mxu0 0.0
    %1244 = vmatprep.subr.mxu0 0.0
    %1245 = vmatpush1.msra.mxu0 0.0
    %1246 = vmatprep.subr.mxu0 0.0
    %1247 = vmatpush1.msra.mxu0 0.0
    %1248 = vmatprep.subr.mxu0 0.0
    %1249 = vmatpush1.msra.mxu0 0.0
    %1250 = vmatprep.subr.mxu0 0.0
    %1251 = vmatpush1.msra.mxu0 0.0
    %1252 = vmatprep.subr.mxu0 0.0
    %1253 = vmatpush1.msra.mxu0 0.0
    %1254 = vmatprep.subr.mxu0 0.0
    %1255 = vmatpush1.msra.mxu0 0.0
    %1256 = vmatprep.subr.mxu0 0.0
    %1257 = vmatpush1.msra.mxu0 0.0
    %1258 = vmatprep.subr.mxu0 0.0
    %1259 = vmatpush1.msra.mxu0 0.0
    %1260 = vmatprep.subr.mxu0 0.0
    %1261 = vmatpush1.msra.mxu0 0.0
    %1262 = vmatprep.subr.mxu0 0.0
    %1263 = vmatpush1.msra.mxu0 0.0
    %1264 = vmatprep.subr.mxu0 0.0
    %1265 = vmatpush1.msra.mxu0 0.0
    %1266 = vmatprep.subr.mxu0 0.0
    %1267 = vmatpush1.msra.mxu0 0.0
    %1268 = vmatprep.subr.mxu0 0.0
    %1269 = vmatpush1.msra.mxu0 0.0
    %1270 = vmatprep.subr.mxu0 0.0
    %1271 = vmatpush1.msra.mxu0 0.0
    %1272 = vmatprep.mubr.f32.mxu0 0.0
    %1273 = vmatmul.mubr.f32.gmra.mrb[0].mxu0 %v1203
    %v1274 = vpop.f32.mrb[0].mxu0
    %v1275 = vadd.f32 %v1194, %v1274
    %v1276 = vpop.f32.mrb[0].mxu0
    %1277 = vmatprep.mubr.f32.mxu0 0.0
    %1278 = vmatmul.mubr.f32.gmra.mrb[0].mxu0 %v1206
    %v1279 = vpop.f32.mrb[0].mxu0
    %v1280 = vadd.f32 %v1199, %v1279
    %v1281 = vpop.f32.mrb[0].mxu0
    %1282 = vdwg.mxu0
    %v1283 = vmul.f32 %v1275, 0.5
    %v1284 = vmul.f32 %v1280, 0.5
    %1285 = vrot.lane.b32.xlu0 %v898, 112
    %v1286 = vpop.permute.xlu0 %1285
    %1287 = vrot.lane.b32.xlu0 %v903, 112
    %v1288 = vpop.permute.xlu0 %1287
    %v1291 = vadd.f32 %v1283, %v1286
    %v1292 = vadd.f32 %v1284, %v1288
    %v1293 = vmin.f32 %v1291, 0.0
    %v1294 = vmin.f32 %v1292, 0.0
    %vm1295 = vcmp.gt.f32.partialorder %v1291, 0.0
    %vm1296 = vcmp.gt.f32.partialorder %v1292, 0.0
    %v1297 = vmul.f32 %v1293, 1.442695
    %v1298 = vpow.pop %v1297
    %v1299 = vmul.f32 %v1294, 1.442695
    %v1300 = vpow.pop %v1299
    %v1301 = vsub.f32 %v1298, 1.0
    %v1302 = vsub.f32 %v1300, 1.0
    %v1303 = vsel %vm1295, %v1291, %v1301
    %v1304 = vsel %vm1296, %v1292, %v1302
    %v1305 = vld [vmem:[%s21] sm:$0xff]
    %v1306 = vld [vmem:[%s23] sm:$0xff]
    %v1307 = vld [vmem:[%s23 + $0x8] sm:$0xff]
    %vm1308 = vcmask 64512
    %v1310 = vsel %vm1308, %v817, 0
    %v1313 = vsel %vm1308, %v818, 0
    %1315 = vmatprep.subr.mxu0 0.0
    %1316 = vmatpush1.msra.mxu0 %v1305
    %1317 = vmatprep.subr.mxu0 0.0
    %1318 = vmatpush1.msra.mxu0 0.0
    %1319 = vmatprep.subr.mxu0 0.0
    %1320 = vmatpush1.msra.mxu0 0.0
    %1321 = vmatprep.subr.mxu0 0.0
    %1322 = vmatpush1.msra.mxu0 0.0
    %1323 = vmatprep.subr.mxu0 0.0
    %1324 = vmatpush1.msra.mxu0 0.0
    %1325 = vmatprep.subr.mxu0 0.0
    %1326 = vmatpush1.msra.mxu0 0.0
    %1327 = vmatprep.subr.mxu0 0.0
    %1328 = vmatpush1.msra.mxu0 0.0
    %1329 = vmatprep.subr.mxu0 0.0
    %1330 = vmatpush1.msra.mxu0 0.0
    %1331 = vmatprep.subr.mxu0 0.0
    %1332 = vmatpush1.msra.mxu0 0.0
    %1333 = vmatprep.subr.mxu0 0.0
    %1334 = vmatpush1.msra.mxu0 0.0
    %1335 = vmatprep.subr.mxu0 0.0
    %1336 = vmatpush1.msra.mxu0 0.0
    %1337 = vmatprep.subr.mxu0 0.0
    %1338 = vmatpush1.msra.mxu0 0.0
    %1339 = vmatprep.subr.mxu0 0.0
    %1340 = vmatpush1.msra.mxu0 0.0
    %1341 = vmatprep.subr.mxu0 0.0
    %1342 = vmatpush1.msra.mxu0 0.0
    %1343 = vmatprep.subr.mxu0 0.0
    %1344 = vmatpush1.msra.mxu0 0.0
    %1345 = vmatprep.subr.mxu0 0.0
    %1346 = vmatpush1.msra.mxu0 0.0
    %1347 = vmatprep.subr.mxu0 0.0
    %1348 = vmatpush1.msra.mxu0 0.0
    %1349 = vmatprep.subr.mxu0 0.0
    %1350 = vmatpush1.msra.mxu0 0.0
    %1351 = vmatprep.subr.mxu0 0.0
    %1352 = vmatpush1.msra.mxu0 0.0
    %1353 = vmatprep.subr.mxu0 0.0
    %1354 = vmatpush1.msra.mxu0 0.0
    %1355 = vmatprep.subr.mxu0 0.0
    %1356 = vmatpush1.msra.mxu0 0.0
    %1357 = vmatprep.subr.mxu0 0.0
    %1358 = vmatpush1.msra.mxu0 0.0
    %1359 = vmatprep.subr.mxu0 0.0
    %1360 = vmatpush1.msra.mxu0 0.0
    %1361 = vmatprep.subr.mxu0 0.0
    %1362 = vmatpush1.msra.mxu0 0.0
    %1363 = vmatprep.subr.mxu0 0.0
    %1364 = vmatpush1.msra.mxu0 0.0
    %1365 = vmatprep.subr.mxu0 0.0
    %1366 = vmatpush1.msra.mxu0 0.0
    %1367 = vmatprep.subr.mxu0 0.0
    %1368 = vmatpush1.msra.mxu0 0.0
    %1369 = vmatprep.subr.mxu0 0.0
    %1370 = vmatpush1.msra.mxu0 0.0
    %1371 = vmatprep.subr.mxu0 0.0
    %1372 = vmatpush1.msra.mxu0 0.0
    %1373 = vmatprep.subr.mxu0 0.0
    %1374 = vmatpush1.msra.mxu0 0.0
    %1375 = vmatprep.subr.mxu0 0.0
    %1376 = vmatpush1.msra.mxu0 0.0
    %1377 = vmatprep.subr.mxu0 0.0
    %1378 = vmatpush1.msra.mxu0 0.0
    %1379 = vmatprep.mubr.f32.mxu0 0.0
    %1380 = vmatmul.mubr.f32.gmra.mrb[0].mxu0 %v1310
    %v1381 = vpop.f32.mrb[0].mxu0
    %v1382 = vadd.f32 0.0, %v1381
    %v1383 = vpop.f32.mrb[0].mxu0
    %1384 = vmatprep.mubr.f32.mxu0 0.0
    %1385 = vmatmul.mubr.f32.gmra.mrb[0].mxu0 %v1313
    %v1386 = vpop.f32.mrb[0].mxu0
    %v1387 = vadd.f32 0.0, %v1386
    %v1388 = vpop.f32.mrb[0].mxu0
    %1389 = vdwg.mxu0
    %v1391 = vsel %vm338, %v1382, 0
    %v1394 = vsel %vm338, %v1387, 0
    %1396 = vmatprep.subr.mxu0 0.0
    %1397 = vmatpush1.msra.mxu0 %v1306
    %1398 = vmatprep.subr.mxu0 0.0
    %1399 = vmatpush1.msra.mxu0 %v1307
    %1400 = vmatprep.subr.mxu0 0.0
    %1401 = vmatpush1.msra.mxu0 0.0
    %1402 = vmatprep.subr.mxu0 0.0
    %1403 = vmatpush1.msra.mxu0 0.0
    %1404 = vmatprep.subr.mxu0 0.0
    %1405 = vmatpush1.msra.mxu0 0.0
    %1406 = vmatprep.subr.mxu0 0.0
    %1407 = vmatpush1.msra.mxu0 0.0
    %1408 = vmatprep.subr.mxu0 0.0
    %1409 = vmatpush1.msra.mxu0 0.0
    %1410 = vmatprep.subr.mxu0 0.0
    %1411 = vmatpush1.msra.mxu0 0.0
    %1412 = vmatprep.subr.mxu0 0.0
    %1413 = vmatpush1.msra.mxu0 0.0
    %1414 = vmatprep.subr.mxu0 0.0
    %1415 = vmatpush1.msra.mxu0 0.0
    %1416 = vmatprep.subr.mxu0 0.0
    %1417 = vmatpush1.msra.mxu0 0.0
    %1418 = vmatprep.subr.mxu0 0.0
    %1419 = vmatpush1.msra.mxu0 0.0
    %1420 = vmatprep.subr.mxu0 0.0
    %1421 = vmatpush1.msra.mxu0 0.0
    %1422 = vmatprep.subr.mxu0 0.0
    %1423 = vmatpush1.msra.mxu0 0.0
    %1424 = vmatprep.subr.mxu0 0.0
    %1425 = vmatpush1.msra.mxu0 0.0
    %1426 = vmatprep.subr.mxu0 0.0
    %1427 = vmatpush1.msra.mxu0 0.0
    %1428 = vmatprep.subr.mxu0 0.0
    %1429 = vmatpush1.msra.mxu0 0.0
    %1430 = vmatprep.subr.mxu0 0.0
    %1431 = vmatpush1.msra.mxu0 0.0
    %1432 = vmatprep.subr.mxu0 0.0
    %1433 = vmatpush1.msra.mxu0 0.0
    %1434 = vmatprep.subr.mxu0 0.0
    %1435 = vmatpush1.msra.mxu0 0.0
    %1436 = vmatprep.subr.mxu0 0.0
    %1437 = vmatpush1.msra.mxu0 0.0
    %1438 = vmatprep.subr.mxu0 0.0
    %1439 = vmatpush1.msra.mxu0 0.0
    %1440 = vmatprep.subr.mxu0 0.0
    %1441 = vmatpush1.msra.mxu0 0.0
    %1442 = vmatprep.subr.mxu0 0.0
    %1443 = vmatpush1.msra.mxu0 0.0
    %1444 = vmatprep.subr.mxu0 0.0
    %1445 = vmatpush1.msra.mxu0 0.0
    %1446 = vmatprep.subr.mxu0 0.0
    %1447 = vmatpush1.msra.mxu0 0.0
    %1448 = vmatprep.subr.mxu0 0.0
    %1449 = vmatpush1.msra.mxu0 0.0
    %1450 = vmatprep.subr.mxu0 0.0
    %1451 = vmatpush1.msra.mxu0 0.0
    %1452 = vmatprep.subr.mxu0 0.0
    %1453 = vmatpush1.msra.mxu0 0.0
    %1454 = vmatprep.subr.mxu0 0.0
    %1455 = vmatpush1.msra.mxu0 0.0
    %1456 = vmatprep.subr.mxu0 0.0
    %1457 = vmatpush1.msra.mxu0 0.0
    %1458 = vmatprep.subr.mxu0 0.0
    %1459 = vmatpush1.msra.mxu0 0.0
    %1460 = vmatprep.mubr.f32.mxu0 0.0
    %1461 = vmatmul.mubr.f32.gmra.mrb[0].mxu0 %v1391
    %v1462 = vpop.f32.mrb[0].mxu0
    %v1463 = vadd.f32 0.0, %v1462
    %v1464 = vpop.f32.mrb[0].mxu0
    %1465 = vmatprep.mubr.f32.mxu0 0.0
    %1466 = vmatmul.mubr.f32.gmra.mrb[0].mxu0 %v1394
    %v1467 = vpop.f32.mrb[0].mxu0
    %v1468 = vadd.f32 0.0, %v1467
    %v1469 = vpop.f32.mrb[0].mxu0
    %1470 = vdwg.mxu0
    %1473 = vrot.lane.b32.xlu0 %v1463, 126
    %v1474 = vpop.permute.xlu0 %1473
    %1475 = vrot.lane.b32.xlu0 %v1468, 126
    %v1476 = vpop.permute.xlu0 %1475
    %1479 = vxpose.xlu0.b32.start [1/16] %v1474, 128
    %1480 = vxpose.xlu0.b32.cont [2/16] %v1476, 128
    %1481 = vxpose.xlu0.b32.cont [3/16] 0.0, 128
    %1482 = vxpose.xlu0.b32.cont [4/16] 0.0, 128
    %1483 = vxpose.xlu0.b32.cont [5/16] 0.0, 128
    %1484 = vxpose.xlu0.b32.cont [6/16] 0.0, 128
    %1485 = vxpose.xlu0.b32.cont [7/16] 0.0, 128
    %1486 = vxpose.xlu0.b32.cont [8/16] 0.0, 128
    %1487 = vxpose.xlu0.b32.cont [9/16] 0.0, 128
    %1488 = vxpose.xlu0.b32.cont [10/16] 0.0, 128
    %1489 = vxpose.xlu0.b32.cont [11/16] 0.0, 128
    %1490 = vxpose.xlu0.b32.cont [12/16] 0.0, 128
    %1491 = vxpose.xlu0.b32.cont [13/16] 0.0, 128
    %1492 = vxpose.xlu0.b32.cont [14/16] 0.0, 128
    %1493 = vxpose.xlu0.b32.cont [15/16] 0.0, 128
    %1494 = vxpose.xlu0.b32.end [16/16] 0.0, 128
    %v1495 = vpop.trf.xlu0
    %v1496 = vpop.trf.xlu0
    %v1497 = vpop.trf.xlu0
    %v1498 = vpop.trf.xlu0
    %v1499 = vpop.trf.xlu0
    %v1500 = vpop.trf.xlu0
    %v1501 = vpop.trf.xlu0
    %v1502 = vpop.trf.xlu0
    %v1503 = vpop.trf.xlu0
    %v1504 = vpop.trf.xlu0
    %v1505 = vpop.trf.xlu0
    %v1506 = vpop.trf.xlu0
    %v1507 = vpop.trf.xlu0
    %v1508 = vpop.trf.xlu0
    %v1509 = vpop.trf.xlu0
    %v1510 = vpop.trf.xlu0
    %1511 = vset.pattern.permute.xlu0 0
    %1512 = vperm.xlu0 %1511, %v1463
    %v1513 = vpop.permute.xlu0 %1512
    %1515 = vset.pattern.permute.xlu0 0
    %1516 = vperm.xlu0 %1515, %v1468
    %v1517 = vpop.permute.xlu0 %1516
    %v1519 = vlaneseq
    %v1520 = vshrl.u32 %v1519, 7
    %v1521 = vsub.s32 0, %v1520
    %v1522 = vrot.slane %v1495, %v1521
    %v1523 = vadd.f32 %v1513, %v1522
    %v1524 = vadd.f32 %v1517, %v1522
    %vm1525 = vcmp.gt.f32.partialorder %v1523, 0.0
    %vm1526 = vcmp.gt.f32.partialorder %v1524, 0.0
    %v1527 = vmul.f32 %v1523, 0.2
    %v1528 = vmul.f32 %v1524, 0.2
    %v1529 = vsel %vm1525, %v1523, %v1527
    %v1530 = vsel %vm1526, %v1524, %v1528
    %v1531 = vadd.f32 %v1529, %v332
    %v1532 = vadd.f32 %v1530, %v333
    %v1533 = vsel %vm338, %v1531, -inf
    %1534 = vmax.xlane.f32.xlu0 %v1533
    %v1535 = vpop.xlane.xlu0 %1534
    %v1536 = vsel %vm338, %v1532, -inf
    %1537 = vmax.xlane.f32.xlu0 %v1536
    %v1538 = vpop.xlane.xlu0 %1537
    %v1539 = vsub.f32 %v1531, %v1535
    %v1540 = vsub.f32 %v1532, %v1538
    %v1541 = vmul.f32 %v1539, 1.442695
    %v1542 = vpow.pop %v1541
    %v1543 = vmul.f32 %v1540, 1.442695
    %v1544 = vpow.pop %v1543
    %v1545 = vsel %vm338, %v1542, 0.0
    %1546 = vadd.xlane.f32.xlu0 %v1545
    %v1547 = vpop.xlane.xlu0 %1546
    %v1548 = vsel %vm338, %v1544, 0.0
    %1549 = vadd.xlane.f32.xlu0 %v1548
    %v1550 = vpop.xlane.xlu0 %1549
    %v1551 = vrcp.pop %v1547
    %v1552 = vmul.f32 %v1542, %v1551
    %v1553 = vrcp.pop %v1550
    %v1554 = vmul.f32 %v1544, %v1553
    %1555 = vset.pattern.permute.xlu0 1
    %1556 = vperm.xlu0 %1555, %v1463
    %v1557 = vpop.permute.xlu0 %1556
    %1559 = vset.pattern.permute.xlu0 1
    %1560 = vperm.xlu0 %1559, %v1468
    %v1561 = vpop.permute.xlu0 %1560
    %v1563 = vlaneseq
    %v1564 = vshrl.u32 %v1563, 7
    %v1565 = vsub.s32 1, %v1564
    %v1566 = vrot.slane %v1495, %v1565
    %v1567 = vadd.f32 %v1557, %v1566
    %v1568 = vadd.f32 %v1561, %v1566
    %vm1569 = vcmp.gt.f32.partialorder %v1567, 0.0
    %vm1570 = vcmp.gt.f32.partialorder %v1568, 0.0
    %v1571 = vmul.f32 %v1567, 0.2
    %v1572 = vmul.f32 %v1568, 0.2
    %v1573 = vsel %vm1569, %v1567, %v1571
    %v1574 = vsel %vm1570, %v1568, %v1572
    %v1575 = vadd.f32 %v1573, %v332
    %v1576 = vadd.f32 %v1574, %v333
    %v1577 = vsel %vm338, %v1575, -inf
    %1578 = vmax.xlane.f32.xlu0 %v1577
    %v1579 = vpop.xlane.xlu0 %1578
    %v1580 = vsel %vm338, %v1576, -inf
    %1581 = vmax.xlane.f32.xlu0 %v1580
    %v1582 = vpop.xlane.xlu0 %1581
    %v1583 = vsub.f32 %v1575, %v1579
    %v1584 = vsub.f32 %v1576, %v1582
    %v1585 = vmul.f32 %v1583, 1.442695
    %v1586 = vpow.pop %v1585
    %v1587 = vmul.f32 %v1584, 1.442695
    %v1588 = vpow.pop %v1587
    %v1589 = vsel %vm338, %v1586, 0.0
    %1590 = vadd.xlane.f32.xlu0 %v1589
    %v1591 = vpop.xlane.xlu0 %1590
    %v1592 = vsel %vm338, %v1588, 0.0
    %1593 = vadd.xlane.f32.xlu0 %v1592
    %v1594 = vpop.xlane.xlu0 %1593
    %v1595 = vrcp.pop %v1591
    %v1596 = vmul.f32 %v1586, %v1595
    %v1597 = vrcp.pop %v1594
    %v1598 = vmul.f32 %v1588, %v1597
    %1599 = vrot.lane.b32.xlu0 %v1382, 120
    %v1600 = vpop.permute.xlu0 %1599
    %1601 = vrot.lane.b32.xlu0 %v1387, 120
    %v1602 = vpop.permute.xlu0 %1601
    %v1606 = vsel %vm338, %v1596, 0
    %v1609 = vsel %vm338, %v1598, 0
    %1611 = vmatprep.subr.mxu0 0.0
    %1612 = vmatpush1.msra.mxu0 %v1600
    %1613 = vmatprep.subr.mxu0 0.0
    %1614 = vmatpush1.msra.mxu0 %v1602
    %1615 = vmatprep.subr.mxu0 0.0
    %1616 = vmatpush1.msra.mxu0 0.0
    %1617 = vmatprep.subr.mxu0 0.0
    %1618 = vmatpush1.msra.mxu0 0.0
    %1619 = vmatprep.subr.mxu0 0.0
    %1620 = vmatpush1.msra.mxu0 0.0
    %1621 = vmatprep.subr.mxu0 0.0
    %1622 = vmatpush1.msra.mxu0 0.0
    %1623 = vmatprep.subr.mxu0 0.0
    %1624 = vmatpush1.msra.mxu0 0.0
    %1625 = vmatprep.subr.mxu0 0.0
    %1626 = vmatpush1.msra.mxu0 0.0
    %1627 = vmatprep.subr.mxu0 0.0
    %1628 = vmatpush1.msra.mxu0 0.0
    %1629 = vmatprep.subr.mxu0 0.0
    %1630 = vmatpush1.msra.mxu0 0.0
    %1631 = vmatprep.subr.mxu0 0.0
    %1632 = vmatpush1.msra.mxu0 0.0
    %1633 = vmatprep.subr.mxu0 0.0
    %1634 = vmatpush1.msra.mxu0 0.0
    %1635 = vmatprep.subr.mxu0 0.0
    %1636 = vmatpush1.msra.mxu0 0.0
    %1637 = vmatprep.subr.mxu0 0.0
    %1638 = vmatpush1.msra.mxu0 0.0
    %1639 = vmatprep.subr.mxu0 0.0
    %1640 = vmatpush1.msra.mxu0 0.0
    %1641 = vmatprep.subr.mxu0 0.0
    %1642 = vmatpush1.msra.mxu0 0.0
    %1643 = vmatprep.subr.mxu0 0.0
    %1644 = vmatpush1.msra.mxu0 0.0
    %1645 = vmatprep.subr.mxu0 0.0
    %1646 = vmatpush1.msra.mxu0 0.0
    %1647 = vmatprep.subr.mxu0 0.0
    %1648 = vmatpush1.msra.mxu0 0.0
    %1649 = vmatprep.subr.mxu0 0.0
    %1650 = vmatpush1.msra.mxu0 0.0
    %1651 = vmatprep.subr.mxu0 0.0
    %1652 = vmatpush1.msra.mxu0 0.0
    %1653 = vmatprep.subr.mxu0 0.0
    %1654 = vmatpush1.msra.mxu0 0.0
    %1655 = vmatprep.subr.mxu0 0.0
    %1656 = vmatpush1.msra.mxu0 0.0
    %1657 = vmatprep.subr.mxu0 0.0
    %1658 = vmatpush1.msra.mxu0 0.0
    %1659 = vmatprep.subr.mxu0 0.0
    %1660 = vmatpush1.msra.mxu0 0.0
    %1661 = vmatprep.subr.mxu0 0.0
    %1662 = vmatpush1.msra.mxu0 0.0
    %1663 = vmatprep.subr.mxu0 0.0
    %1664 = vmatpush1.msra.mxu0 0.0
    %1665 = vmatprep.subr.mxu0 0.0
    %1666 = vmatpush1.msra.mxu0 0.0
    %1667 = vmatprep.subr.mxu0 0.0
    %1668 = vmatpush1.msra.mxu0 0.0
    %1669 = vmatprep.subr.mxu0 0.0
    %1670 = vmatpush1.msra.mxu0 0.0
    %1671 = vmatprep.subr.mxu0 0.0
    %1672 = vmatpush1.msra.mxu0 0.0
    %1673 = vmatprep.subr.mxu0 0.0
    %1674 = vmatpush1.msra.mxu0 0.0
    %1675 = vmatprep.mubr.f32.mxu0 0.0
    %1676 = vmatmul.mubr.f32.gmra.mrb[0].mxu0 %v1606
    %v1677 = vpop.f32.mrb[0].mxu0
    %v1678 = vadd.f32 0.0, %v1677
    %v1679 = vpop.f32.mrb[0].mxu0
    %1680 = vmatprep.mubr.f32.mxu0 0.0
    %1681 = vmatmul.mubr.f32.gmra.mrb[0].mxu0 %v1609
    %v1682 = vpop.f32.mrb[0].mxu0
    %v1683 = vadd.f32 0.0, %v1682
    %v1684 = vpop.f32.mrb[0].mxu0
    %1685 = vdwg.mxu0
    %v1687 = vsel %vm338, %v1552, 0
    %v1690 = vsel %vm338, %v1554, 0
    %1692 = vmatprep.subr.mxu0 0.0
    %1693 = vmatpush1.msra.mxu0 %v1382
    %1694 = vmatprep.subr.mxu0 0.0
    %1695 = vmatpush1.msra.mxu0 %v1387
    %1696 = vmatprep.subr.mxu0 0.0
    %1697 = vmatpush1.msra.mxu0 0.0
    %1698 = vmatprep.subr.mxu0 0.0
    %1699 = vmatpush1.msra.mxu0 0.0
    %1700 = vmatprep.subr.mxu0 0.0
    %1701 = vmatpush1.msra.mxu0 0.0
    %1702 = vmatprep.subr.mxu0 0.0
    %1703 = vmatpush1.msra.mxu0 0.0
    %1704 = vmatprep.subr.mxu0 0.0
    %1705 = vmatpush1.msra.mxu0 0.0
    %1706 = vmatprep.subr.mxu0 0.0
    %1707 = vmatpush1.msra.mxu0 0.0
    %1708 = vmatprep.subr.mxu0 0.0
    %1709 = vmatpush1.msra.mxu0 0.0
    %1710 = vmatprep.subr.mxu0 0.0
    %1711 = vmatpush1.msra.mxu0 0.0
    %1712 = vmatprep.subr.mxu0 0.0
    %1713 = vmatpush1.msra.mxu0 0.0
    %1714 = vmatprep.subr.mxu0 0.0
    %1715 = vmatpush1.msra.mxu0 0.0
    %1716 = vmatprep.subr.mxu0 0.0
    %1717 = vmatpush1.msra.mxu0 0.0
    %1718 = vmatprep.subr.mxu0 0.0
    %1719 = vmatpush1.msra.mxu0 0.0
    %1720 = vmatprep.subr.mxu0 0.0
    %1721 = vmatpush1.msra.mxu0 0.0
    %1722 = vmatprep.subr.mxu0 0.0
    %1723 = vmatpush1.msra.mxu0 0.0
    %1724 = vmatprep.subr.mxu0 0.0
    %1725 = vmatpush1.msra.mxu0 0.0
    %1726 = vmatprep.subr.mxu0 0.0
    %1727 = vmatpush1.msra.mxu0 0.0
    %1728 = vmatprep.subr.mxu0 0.0
    %1729 = vmatpush1.msra.mxu0 0.0
    %1730 = vmatprep.subr.mxu0 0.0
    %1731 = vmatpush1.msra.mxu0 0.0
    %1732 = vmatprep.subr.mxu0 0.0
    %1733 = vmatpush1.msra.mxu0 0.0
    %1734 = vmatprep.subr.mxu0 0.0
    %1735 = vmatpush1.msra.mxu0 0.0
    %1736 = vmatprep.subr.mxu0 0.0
    %1737 = vmatpush1.msra.mxu0 0.0
    %1738 = vmatprep.subr.mxu0 0.0
    %1739 = vmatpush1.msra.mxu0 0.0
    %1740 = vmatprep.subr.mxu0 0.0
    %1741 = vmatpush1.msra.mxu0 0.0
    %1742 = vmatprep.subr.mxu0 0.0
    %1743 = vmatpush1.msra.mxu0 0.0
    %1744 = vmatprep.subr.mxu0 0.0
    %1745 = vmatpush1.msra.mxu0 0.0
    %1746 = vmatprep.subr.mxu0 0.0
    %1747 = vmatpush1.msra.mxu0 0.0
    %1748 = vmatprep.subr.mxu0 0.0
    %1749 = vmatpush1.msra.mxu0 0.0
    %1750 = vmatprep.subr.mxu0 0.0
    %1751 = vmatpush1.msra.mxu0 0.0
    %1752 = vmatprep.subr.mxu0 0.0
    %1753 = vmatpush1.msra.mxu0 0.0
    %1754 = vmatprep.subr.mxu0 0.0
    %1755 = vmatpush1.msra.mxu0 0.0
    %1756 = vmatprep.mubr.f32.mxu0 0.0
    %1757 = vmatmul.mubr.f32.gmra.mrb[0].mxu0 %v1687
    %v1758 = vpop.f32.mrb[0].mxu0
    %v1759 = vadd.f32 %v1678, %v1758
    %v1760 = vpop.f32.mrb[0].mxu0
    %1761 = vmatprep.mubr.f32.mxu0 0.0
    %1762 = vmatmul.mubr.f32.gmra.mrb[0].mxu0 %v1690
    %v1763 = vpop.f32.mrb[0].mxu0
    %v1764 = vadd.f32 %v1683, %v1763
    %v1765 = vpop.f32.mrb[0].mxu0
    %1766 = vdwg.mxu0
    %v1767 = vmul.f32 %v1759, 0.5
    %v1768 = vmul.f32 %v1764, 0.5
    %1769 = vrot.lane.b32.xlu0 %v1382, 112
    %v1770 = vpop.permute.xlu0 %1769
    %1771 = vrot.lane.b32.xlu0 %v1387, 112
    %v1772 = vpop.permute.xlu0 %1771
    %v1775 = vadd.f32 %v1767, %v1770
    %v1776 = vadd.f32 %v1768, %v1772
    %v1777 = vmin.f32 %v1775, 0.0
    %v1778 = vmin.f32 %v1776, 0.0
    %vm1779 = vcmp.gt.f32.partialorder %v1775, 0.0
    %vm1780 = vcmp.gt.f32.partialorder %v1776, 0.0
    %v1781 = vmul.f32 %v1777, 1.442695
    %v1782 = vpow.pop %v1781
    %v1783 = vmul.f32 %v1778, 1.442695
    %v1784 = vpow.pop %v1783
    %v1785 = vsub.f32 %v1782, 1.0
    %v1786 = vsub.f32 %v1784, 1.0
    %v1787 = vsel %vm1779, %v1775, %v1785
    %v1788 = vsel %vm1780, %v1776, %v1786
    %v1789 = vld [vmem:[%s25] sm:$0xff]
    %v1790 = vld [vmem:[%s27] sm:$0xff]
    %v1791 = vld [vmem:[%s27 + $0x8] sm:$0xff]
    %v1793 = vsel %vm1308, %v1303, 0
    %v1796 = vsel %vm1308, %v1304, 0
    %1798 = vmatprep.subr.mxu0 0.0
    %1799 = vmatpush1.msra.mxu0 %v1789
    %1800 = vmatprep.subr.mxu0 0.0
    %1801 = vmatpush1.msra.mxu0 0.0
    %1802 = vmatprep.subr.mxu0 0.0
    %1803 = vmatpush1.msra.mxu0 0.0
    %1804 = vmatprep.subr.mxu0 0.0
    %1805 = vmatpush1.msra.mxu0 0.0
    %1806 = vmatprep.subr.mxu0 0.0
    %1807 = vmatpush1.msra.mxu0 0.0
    %1808 = vmatprep.subr.mxu0 0.0
    %1809 = vmatpush1.msra.mxu0 0.0
    %1810 = vmatprep.subr.mxu0 0.0
    %1811 = vmatpush1.msra.mxu0 0.0
    %1812 = vmatprep.subr.mxu0 0.0
    %1813 = vmatpush1.msra.mxu0 0.0
    %1814 = vmatprep.subr.mxu0 0.0
    %1815 = vmatpush1.msra.mxu0 0.0
    %1816 = vmatprep.subr.mxu0 0.0
    %1817 = vmatpush1.msra.mxu0 0.0
    %1818 = vmatprep.subr.mxu0 0.0
    %1819 = vmatpush1.msra.mxu0 0.0
    %1820 = vmatprep.subr.mxu0 0.0
    %1821 = vmatpush1.msra.mxu0 0.0
    %1822 = vmatprep.subr.mxu0 0.0
    %1823 = vmatpush1.msra.mxu0 0.0
    %1824 = vmatprep.subr.mxu0 0.0
    %1825 = vmatpush1.msra.mxu0 0.0
    %1826 = vmatprep.subr.mxu0 0.0
    %1827 = vmatpush1.msra.mxu0 0.0
    %1828 = vmatprep.subr.mxu0 0.0
    %1829 = vmatpush1.msra.mxu0 0.0
    %1830 = vmatprep.subr.mxu0 0.0
    %1831 = vmatpush1.msra.mxu0 0.0
    %1832 = vmatprep.subr.mxu0 0.0
    %1833 = vmatpush1.msra.mxu0 0.0
    %1834 = vmatprep.subr.mxu0 0.0
    %1835 = vmatpush1.msra.mxu0 0.0
    %1836 = vmatprep.subr.mxu0 0.0
    %1837 = vmatpush1.msra.mxu0 0.0
    %1838 = vmatprep.subr.mxu0 0.0
    %1839 = vmatpush1.msra.mxu0 0.0
    %1840 = vmatprep.subr.mxu0 0.0
    %1841 = vmatpush1.msra.mxu0 0.0
    %1842 = vmatprep.subr.mxu0 0.0
    %1843 = vmatpush1.msra.mxu0 0.0
    %1844 = vmatprep.subr.mxu0 0.0
    %1845 = vmatpush1.msra.mxu0 0.0
    %1846 = vmatprep.subr.mxu0 0.0
    %1847 = vmatpush1.msra.mxu0 0.0
    %1848 = vmatprep.subr.mxu0 0.0
    %1849 = vmatpush1.msra.mxu0 0.0
    %1850 = vmatprep.subr.mxu0 0.0
    %1851 = vmatpush1.msra.mxu0 0.0
    %1852 = vmatprep.subr.mxu0 0.0
    %1853 = vmatpush1.msra.mxu0 0.0
    %1854 = vmatprep.subr.mxu0 0.0
    %1855 = vmatpush1.msra.mxu0 0.0
    %1856 = vmatprep.subr.mxu0 0.0
    %1857 = vmatpush1.msra.mxu0 0.0
    %1858 = vmatprep.subr.mxu0 0.0
    %1859 = vmatpush1.msra.mxu0 0.0
    %1860 = vmatprep.subr.mxu0 0.0
    %1861 = vmatpush1.msra.mxu0 0.0
    %1862 = vmatprep.mubr.f32.mxu0 0.0
    %1863 = vmatmul.mubr.f32.gmra.mrb[0].mxu0 %v1793
    %v1864 = vpop.f32.mrb[0].mxu0
    %v1865 = vadd.f32 0.0, %v1864
    %v1866 = vpop.f32.mrb[0].mxu0
    %1867 = vmatprep.mubr.f32.mxu0 0.0
    %1868 = vmatmul.mubr.f32.gmra.mrb[0].mxu0 %v1796
    %v1869 = vpop.f32.mrb[0].mxu0
    %v1870 = vadd.f32 0.0, %v1869
    %v1871 = vpop.f32.mrb[0].mxu0
    %1872 = vdwg.mxu0
    %v1874 = vsel %vm338, %v1865, 0
    %v1877 = vsel %vm338, %v1870, 0
    %1879 = vmatprep.subr.mxu0 0.0
    %1880 = vmatpush1.msra.mxu0 %v1790
    %1881 = vmatprep.subr.mxu0 0.0
    %1882 = vmatpush1.msra.mxu0 %v1791
    %1883 = vmatprep.subr.mxu0 0.0
    %1884 = vmatpush1.msra.mxu0 0.0
    %1885 = vmatprep.subr.mxu0 0.0
    %1886 = vmatpush1.msra.mxu0 0.0
    %1887 = vmatprep.subr.mxu0 0.0
    %1888 = vmatpush1.msra.mxu0 0.0
    %1889 = vmatprep.subr.mxu0 0.0
    %1890 = vmatpush1.msra.mxu0 0.0
    %1891 = vmatprep.subr.mxu0 0.0
    %1892 = vmatpush1.msra.mxu0 0.0
    %1893 = vmatprep.subr.mxu0 0.0
    %1894 = vmatpush1.msra.mxu0 0.0
    %1895 = vmatprep.subr.mxu0 0.0
    %1896 = vmatpush1.msra.mxu0 0.0
    %1897 = vmatprep.subr.mxu0 0.0
    %1898 = vmatpush1.msra.mxu0 0.0
    %1899 = vmatprep.subr.mxu0 0.0
    %1900 = vmatpush1.msra.mxu0 0.0
    %1901 = vmatprep.subr.mxu0 0.0
    %1902 = vmatpush1.msra.mxu0 0.0
    %1903 = vmatprep.subr.mxu0 0.0
    %1904 = vmatpush1.msra.mxu0 0.0
    %1905 = vmatprep.subr.mxu0 0.0
    %1906 = vmatpush1.msra.mxu0 0.0
    %1907 = vmatprep.subr.mxu0 0.0
    %1908 = vmatpush1.msra.mxu0 0.0
    %1909 = vmatprep.subr.mxu0 0.0
    %1910 = vmatpush1.msra.mxu0 0.0
    %1911 = vmatprep.subr.mxu0 0.0
    %1912 = vmatpush1.msra.mxu0 0.0
    %1913 = vmatprep.subr.mxu0 0.0
    %1914 = vmatpush1.msra.mxu0 0.0
    %1915 = vmatprep.subr.mxu0 0.0
    %1916 = vmatpush1.msra.mxu0 0.0
    %1917 = vmatprep.subr.mxu0 0.0
    %1918 = vmatpush1.msra.mxu0 0.0
    %1919 = vmatprep.subr.mxu0 0.0
    %1920 = vmatpush1.msra.mxu0 0.0
    %1921 = vmatprep.subr.mxu0 0.0
    %1922 = vmatpush1.msra.mxu0 0.0
    %1923 = vmatprep.subr.mxu0 0.0
    %1924 = vmatpush1.msra.mxu0 0.0
    %1925 = vmatprep.subr.mxu0 0.0
    %1926 = vmatpush1.msra.mxu0 0.0
    %1927 = vmatprep.subr.mxu0 0.0
    %1928 = vmatpush1.msra.mxu0 0.0
    %1929 = vmatprep.subr.mxu0 0.0
    %1930 = vmatpush1.msra.mxu0 0.0
    %1931 = vmatprep.subr.mxu0 0.0
    %1932 = vmatpush1.msra.mxu0 0.0
    %1933 = vmatprep.subr.mxu0 0.0
    %1934 = vmatpush1.msra.mxu0 0.0
    %1935 = vmatprep.subr.mxu0 0.0
    %1936 = vmatpush1.msra.mxu0 0.0
    %1937 = vmatprep.subr.mxu0 0.0
    %1938 = vmatpush1.msra.mxu0 0.0
    %1939 = vmatprep.subr.mxu0 0.0
    %1940 = vmatpush1.msra.mxu0 0.0
    %1941 = vmatprep.subr.mxu0 0.0
    %1942 = vmatpush1.msra.mxu0 0.0
    %1943 = vmatprep.mubr.f32.mxu0 0.0
    %1944 = vmatmul.mubr.f32.gmra.mrb[0].mxu0 %v1874
    %v1945 = vpop.f32.mrb[0].mxu0
    %v1946 = vadd.f32 0.0, %v1945
    %v1947 = vpop.f32.mrb[0].mxu0
    %1948 = vmatprep.mubr.f32.mxu0 0.0
    %1949 = vmatmul.mubr.f32.gmra.mrb[0].mxu0 %v1877
    %v1950 = vpop.f32.mrb[0].mxu0
    %v1951 = vadd.f32 0.0, %v1950
    %v1952 = vpop.f32.mrb[0].mxu0
    %1953 = vdwg.mxu0
    %1956 = vrot.lane.b32.xlu0 %v1946, 126
    %v1957 = vpop.permute.xlu0 %1956
    %1958 = vrot.lane.b32.xlu0 %v1951, 126
    %v1959 = vpop.permute.xlu0 %1958
    %1962 = vxpose.xlu0.b32.start [1/16] %v1957, 128
    %1963 = vxpose.xlu0.b32.cont [2/16] %v1959, 128
    %1964 = vxpose.xlu0.b32.cont [3/16] 0.0, 128
    %1965 = vxpose.xlu0.b32.cont [4/16] 0.0, 128
    %1966 = vxpose.xlu0.b32.cont [5/16] 0.0, 128
    %1967 = vxpose.xlu0.b32.cont [6/16] 0.0, 128
    %1968 = vxpose.xlu0.b32.cont [7/16] 0.0, 128
    %1969 = vxpose.xlu0.b32.cont [8/16] 0.0, 128
    %1970 = vxpose.xlu0.b32.cont [9/16] 0.0, 128
    %1971 = vxpose.xlu0.b32.cont [10/16] 0.0, 128
    %1972 = vxpose.xlu0.b32.cont [11/16] 0.0, 128
    %1973 = vxpose.xlu0.b32.cont [12/16] 0.0, 128
    %1974 = vxpose.xlu0.b32.cont [13/16] 0.0, 128
    %1975 = vxpose.xlu0.b32.cont [14/16] 0.0, 128
    %1976 = vxpose.xlu0.b32.cont [15/16] 0.0, 128
    %1977 = vxpose.xlu0.b32.end [16/16] 0.0, 128
    %v1978 = vpop.trf.xlu0
    %v1979 = vpop.trf.xlu0
    %v1980 = vpop.trf.xlu0
    %v1981 = vpop.trf.xlu0
    %v1982 = vpop.trf.xlu0
    %v1983 = vpop.trf.xlu0
    %v1984 = vpop.trf.xlu0
    %v1985 = vpop.trf.xlu0
    %v1986 = vpop.trf.xlu0
    %v1987 = vpop.trf.xlu0
    %v1988 = vpop.trf.xlu0
    %v1989 = vpop.trf.xlu0
    %v1990 = vpop.trf.xlu0
    %v1991 = vpop.trf.xlu0
    %v1992 = vpop.trf.xlu0
    %v1993 = vpop.trf.xlu0
    %1994 = vset.pattern.permute.xlu0 0
    %1995 = vperm.xlu0 %1994, %v1946
    %v1996 = vpop.permute.xlu0 %1995
    %1998 = vset.pattern.permute.xlu0 0
    %1999 = vperm.xlu0 %1998, %v1951
    %v2000 = vpop.permute.xlu0 %1999
    %v2002 = vlaneseq
    %v2003 = vshrl.u32 %v2002, 7
    %v2004 = vsub.s32 0, %v2003
    %v2005 = vrot.slane %v1978, %v2004
    %v2006 = vadd.f32 %v1996, %v2005
    %v2007 = vadd.f32 %v2000, %v2005
    %vm2008 = vcmp.gt.f32.partialorder %v2006, 0.0
    %vm2009 = vcmp.gt.f32.partialorder %v2007, 0.0
    %v2010 = vmul.f32 %v2006, 0.2
    %v2011 = vmul.f32 %v2007, 0.2
    %v2012 = vsel %vm2008, %v2006, %v2010
    %v2013 = vsel %vm2009, %v2007, %v2011
    %v2014 = vadd.f32 %v2012, %v332
    %v2015 = vadd.f32 %v2013, %v333
    %v2016 = vsel %vm338, %v2014, -inf
    %2017 = vmax.xlane.f32.xlu0 %v2016
    %v2018 = vpop.xlane.xlu0 %2017
    %v2019 = vsel %vm338, %v2015, -inf
    %2020 = vmax.xlane.f32.xlu0 %v2019
    %v2021 = vpop.xlane.xlu0 %2020
    %v2022 = vsub.f32 %v2014, %v2018
    %v2023 = vsub.f32 %v2015, %v2021
    %v2024 = vmul.f32 %v2022, 1.442695
    %v2025 = vpow.pop %v2024
    %v2026 = vmul.f32 %v2023, 1.442695
    %v2027 = vpow.pop %v2026
    %v2028 = vsel %vm338, %v2025, 0.0
    %2029 = vadd.xlane.f32.xlu0 %v2028
    %v2030 = vpop.xlane.xlu0 %2029
    %v2031 = vsel %vm338, %v2027, 0.0
    %2032 = vadd.xlane.f32.xlu0 %v2031
    %v2033 = vpop.xlane.xlu0 %2032
    %v2034 = vrcp.pop %v2030
    %v2035 = vmul.f32 %v2025, %v2034
    %v2036 = vrcp.pop %v2033
    %v2037 = vmul.f32 %v2027, %v2036
    %2038 = vset.pattern.permute.xlu0 1
    %2039 = vperm.xlu0 %2038, %v1946
    %v2040 = vpop.permute.xlu0 %2039
    %2042 = vset.pattern.permute.xlu0 1
    %2043 = vperm.xlu0 %2042, %v1951
    %v2044 = vpop.permute.xlu0 %2043
    %v2046 = vlaneseq
    %v2047 = vshrl.u32 %v2046, 7
    %v2048 = vsub.s32 1, %v2047
    %v2049 = vrot.slane %v1978, %v2048
    %v2050 = vadd.f32 %v2040, %v2049
    %v2051 = vadd.f32 %v2044, %v2049
    %vm2052 = vcmp.gt.f32.partialorder %v2050, 0.0
    %vm2053 = vcmp.gt.f32.partialorder %v2051, 0.0
    %v2054 = vmul.f32 %v2050, 0.2
    %v2055 = vmul.f32 %v2051, 0.2
    %v2056 = vsel %vm2052, %v2050, %v2054
    %v2057 = vsel %vm2053, %v2051, %v2055
    %v2058 = vadd.f32 %v2056, %v332
    %v2059 = vadd.f32 %v2057, %v333
    %v2060 = vsel %vm338, %v2058, -inf
    %2061 = vmax.xlane.f32.xlu0 %v2060
    %v2062 = vpop.xlane.xlu0 %2061
    %v2063 = vsel %vm338, %v2059, -inf
    %2064 = vmax.xlane.f32.xlu0 %v2063
    %v2065 = vpop.xlane.xlu0 %2064
    %v2066 = vsub.f32 %v2058, %v2062
    %v2067 = vsub.f32 %v2059, %v2065
    %v2068 = vmul.f32 %v2066, 1.442695
    %v2069 = vpow.pop %v2068
    %v2070 = vmul.f32 %v2067, 1.442695
    %v2071 = vpow.pop %v2070
    %v2072 = vsel %vm338, %v2069, 0.0
    %2073 = vadd.xlane.f32.xlu0 %v2072
    %v2074 = vpop.xlane.xlu0 %2073
    %v2075 = vsel %vm338, %v2071, 0.0
    %2076 = vadd.xlane.f32.xlu0 %v2075
    %v2077 = vpop.xlane.xlu0 %2076
    %v2078 = vrcp.pop %v2074
    %v2079 = vmul.f32 %v2069, %v2078
    %v2080 = vrcp.pop %v2077
    %v2081 = vmul.f32 %v2071, %v2080
    %2082 = vrot.lane.b32.xlu0 %v1865, 120
    %v2083 = vpop.permute.xlu0 %2082
    %2084 = vrot.lane.b32.xlu0 %v1870, 120
    %v2085 = vpop.permute.xlu0 %2084
    %v2089 = vsel %vm338, %v2079, 0
    %v2092 = vsel %vm338, %v2081, 0
    %2094 = vmatprep.subr.mxu0 0.0
    %2095 = vmatpush1.msra.mxu0 %v2083
    %2096 = vmatprep.subr.mxu0 0.0
    %2097 = vmatpush1.msra.mxu0 %v2085
    %2098 = vmatprep.subr.mxu0 0.0
    %2099 = vmatpush1.msra.mxu0 0.0
    %2100 = vmatprep.subr.mxu0 0.0
    %2101 = vmatpush1.msra.mxu0 0.0
    %2102 = vmatprep.subr.mxu0 0.0
    %2103 = vmatpush1.msra.mxu0 0.0
    %2104 = vmatprep.subr.mxu0 0.0
    %2105 = vmatpush1.msra.mxu0 0.0
    %2106 = vmatprep.subr.mxu0 0.0
    %2107 = vmatpush1.msra.mxu0 0.0
    %2108 = vmatprep.subr.mxu0 0.0
    %2109 = vmatpush1.msra.mxu0 0.0
    %2110 = vmatprep.subr.mxu0 0.0
    %2111 = vmatpush1.msra.mxu0 0.0
    %2112 = vmatprep.subr.mxu0 0.0
    %2113 = vmatpush1.msra.mxu0 0.0
    %2114 = vmatprep.subr.mxu0 0.0
    %2115 = vmatpush1.msra.mxu0 0.0
    %2116 = vmatprep.subr.mxu0 0.0
    %2117 = vmatpush1.msra.mxu0 0.0
    %2118 = vmatprep.subr.mxu0 0.0
    %2119 = vmatpush1.msra.mxu0 0.0
    %2120 = vmatprep.subr.mxu0 0.0
    %2121 = vmatpush1.msra.mxu0 0.0
    %2122 = vmatprep.subr.mxu0 0.0
    %2123 = vmatpush1.msra.mxu0 0.0
    %2124 = vmatprep.subr.mxu0 0.0
    %2125 = vmatpush1.msra.mxu0 0.0
    %2126 = vmatprep.subr.mxu0 0.0
    %2127 = vmatpush1.msra.mxu0 0.0
    %2128 = vmatprep.subr.mxu0 0.0
    %2129 = vmatpush1.msra.mxu0 0.0
    %2130 = vmatprep.subr.mxu0 0.0
    %2131 = vmatpush1.msra.mxu0 0.0
    %2132 = vmatprep.subr.mxu0 0.0
    %2133 = vmatpush1.msra.mxu0 0.0
    %2134 = vmatprep.subr.mxu0 0.0
    %2135 = vmatpush1.msra.mxu0 0.0
    %2136 = vmatprep.subr.mxu0 0.0
    %2137 = vmatpush1.msra.mxu0 0.0
    %2138 = vmatprep.subr.mxu0 0.0
    %2139 = vmatpush1.msra.mxu0 0.0
    %2140 = vmatprep.subr.mxu0 0.0
    %2141 = vmatpush1.msra.mxu0 0.0
    %2142 = vmatprep.subr.mxu0 0.0
    %2143 = vmatpush1.msra.mxu0 0.0
    %2144 = vmatprep.subr.mxu0 0.0
    %2145 = vmatpush1.msra.mxu0 0.0
    %2146 = vmatprep.subr.mxu0 0.0
    %2147 = vmatpush1.msra.mxu0 0.0
    %2148 = vmatprep.subr.mxu0 0.0
    %2149 = vmatpush1.msra.mxu0 0.0
    %2150 = vmatprep.subr.mxu0 0.0
    %2151 = vmatpush1.msra.mxu0 0.0
    %2152 = vmatprep.subr.mxu0 0.0
    %2153 = vmatpush1.msra.mxu0 0.0
    %2154 = vmatprep.subr.mxu0 0.0
    %2155 = vmatpush1.msra.mxu0 0.0
    %2156 = vmatprep.subr.mxu0 0.0
    %2157 = vmatpush1.msra.mxu0 0.0
    %2158 = vmatprep.mubr.f32.mxu0 0.0
    %2159 = vmatmul.mubr.f32.gmra.mrb[0].mxu0 %v2089
    %v2160 = vpop.f32.mrb[0].mxu0
    %v2161 = vadd.f32 0.0, %v2160
    %v2162 = vpop.f32.mrb[0].mxu0
    %2163 = vmatprep.mubr.f32.mxu0 0.0
    %2164 = vmatmul.mubr.f32.gmra.mrb[0].mxu0 %v2092
    %v2165 = vpop.f32.mrb[0].mxu0
    %v2166 = vadd.f32 0.0, %v2165
    %v2167 = vpop.f32.mrb[0].mxu0
    %2168 = vdwg.mxu0
    %v2170 = vsel %vm338, %v2035, 0
    %v2173 = vsel %vm338, %v2037, 0
    %2175 = vmatprep.subr.mxu0 0.0
    %2176 = vmatpush1.msra.mxu0 %v1865
    %2177 = vmatprep.subr.mxu0 0.0
    %2178 = vmatpush1.msra.mxu0 %v1870
    %2179 = vmatprep.subr.mxu0 0.0
    %2180 = vmatpush1.msra.mxu0 0.0
    %2181 = vmatprep.subr.mxu0 0.0
    %2182 = vmatpush1.msra.mxu0 0.0
    %2183 = vmatprep.subr.mxu0 0.0
    %2184 = vmatpush1.msra.mxu0 0.0
    %2185 = vmatprep.subr.mxu0 0.0
    %2186 = vmatpush1.msra.mxu0 0.0
    %2187 = vmatprep.subr.mxu0 0.0
    %2188 = vmatpush1.msra.mxu0 0.0
    %2189 = vmatprep.subr.mxu0 0.0
    %2190 = vmatpush1.msra.mxu0 0.0
    %2191 = vmatprep.subr.mxu0 0.0
    %2192 = vmatpush1.msra.mxu0 0.0
    %2193 = vmatprep.subr.mxu0 0.0
    %2194 = vmatpush1.msra.mxu0 0.0
    %2195 = vmatprep.subr.mxu0 0.0
    %2196 = vmatpush1.msra.mxu0 0.0
    %2197 = vmatprep.subr.mxu0 0.0
    %2198 = vmatpush1.msra.mxu0 0.0
    %2199 = vmatprep.subr.mxu0 0.0
    %2200 = vmatpush1.msra.mxu0 0.0
    %2201 = vmatprep.subr.mxu0 0.0
    %2202 = vmatpush1.msra.mxu0 0.0
    %2203 = vmatprep.subr.mxu0 0.0
    %2204 = vmatpush1.msra.mxu0 0.0
    %2205 = vmatprep.subr.mxu0 0.0
    %2206 = vmatpush1.msra.mxu0 0.0
    %2207 = vmatprep.subr.mxu0 0.0
    %2208 = vmatpush1.msra.mxu0 0.0
    %2209 = vmatprep.subr.mxu0 0.0
    %2210 = vmatpush1.msra.mxu0 0.0
    %2211 = vmatprep.subr.mxu0 0.0
    %2212 = vmatpush1.msra.mxu0 0.0
    %2213 = vmatprep.subr.mxu0 0.0
    %2214 = vmatpush1.msra.mxu0 0.0
    %2215 = vmatprep.subr.mxu0 0.0
    %2216 = vmatpush1.msra.mxu0 0.0
    %2217 = vmatprep.subr.mxu0 0.0
    %2218 = vmatpush1.msra.mxu0 0.0
    %2219 = vmatprep.subr.mxu0 0.0
    %2220 = vmatpush1.msra.mxu0 0.0
    %2221 = vmatprep.subr.mxu0 0.0
    %2222 = vmatpush1.msra.mxu0 0.0
    %2223 = vmatprep.subr.mxu0 0.0
    %2224 = vmatpush1.msra.mxu0 0.0
    %2225 = vmatprep.subr.mxu0 0.0
    %2226 = vmatpush1.msra.mxu0 0.0
    %2227 = vmatprep.subr.mxu0 0.0
    %2228 = vmatpush1.msra.mxu0 0.0
    %2229 = vmatprep.subr.mxu0 0.0
    %2230 = vmatpush1.msra.mxu0 0.0
    %2231 = vmatprep.subr.mxu0 0.0
    %2232 = vmatpush1.msra.mxu0 0.0
    %2233 = vmatprep.subr.mxu0 0.0
    %2234 = vmatpush1.msra.mxu0 0.0
    %2235 = vmatprep.subr.mxu0 0.0
    %2236 = vmatpush1.msra.mxu0 0.0
    %2237 = vmatprep.subr.mxu0 0.0
    %2238 = vmatpush1.msra.mxu0 0.0
    %2239 = vmatprep.mubr.f32.mxu0 0.0
    %2240 = vmatmul.mubr.f32.gmra.mrb[0].mxu0 %v2170
    %v2241 = vpop.f32.mrb[0].mxu0
    %v2242 = vadd.f32 %v2161, %v2241
    %v2243 = vpop.f32.mrb[0].mxu0
    %2244 = vmatprep.mubr.f32.mxu0 0.0
    %2245 = vmatmul.mubr.f32.gmra.mrb[0].mxu0 %v2173
    %v2246 = vpop.f32.mrb[0].mxu0
    %v2247 = vadd.f32 %v2166, %v2246
    %v2248 = vpop.f32.mrb[0].mxu0
    %2249 = vdwg.mxu0
    %v2250 = vmul.f32 %v2242, 0.5
    %v2251 = vmul.f32 %v2247, 0.5
    %2252 = vrot.lane.b32.xlu0 %v1865, 112
    %v2253 = vpop.permute.xlu0 %2252
    %2254 = vrot.lane.b32.xlu0 %v1870, 112
    %v2255 = vpop.permute.xlu0 %2254
    %v2258 = vadd.f32 %v2250, %v2253
    %v2259 = vadd.f32 %v2251, %v2255
    %v2260 = vmin.f32 %v2258, 0.0
    %v2261 = vmin.f32 %v2259, 0.0
    %vm2262 = vcmp.gt.f32.partialorder %v2258, 0.0
    %vm2263 = vcmp.gt.f32.partialorder %v2259, 0.0
    %v2264 = vmul.f32 %v2260, 1.442695
    %v2265 = vpow.pop %v2264
    %v2266 = vmul.f32 %v2261, 1.442695
    %v2267 = vpow.pop %v2266
    %v2268 = vsub.f32 %v2265, 1.0
    %v2269 = vsub.f32 %v2267, 1.0
    %v2270 = vsel %vm2262, %v2258, %v2268
    %v2271 = vsel %vm2263, %v2259, %v2269
    %v2272 = vsel %vm1308, %v817, 0.0
    %2273 = vadd.xlane.f32.xlu0 %v2272
    %v2274 = vpop.xlane.xlu0 %2273
    %v2275 = vsel %vm1308, %v818, 0.0
    %2276 = vadd.xlane.f32.xlu0 %v2275
    %v2277 = vpop.xlane.xlu0 %2276
    %v2278 = vrcp.pop 8.0
    %v2279 = vmul.f32 %v2274, %v2278
    %v2280 = vmul.f32 %v2277, %v2278
    %v2281 = vadd.f32 %v2279, %v2280
    %v2282 = vrot.slane %v2281, 4
    %v2283 = vadd.f32 %v2281, %v2282
    %v2284 = vrot.slane %v2283, 2
    %v2285 = vadd.f32 %v2283, %v2284
    %v2286 = vrot.slane %v2285, 1
    %v2287 = vadd.f32 %v2285, %v2286
    %v2288 = vrcp.pop 16.0
    %v2289 = vmul.f32 %v2287, %v2288
    %v2290 = vsel %vm1308, %v1787, 0.0
    %2291 = vadd.xlane.f32.xlu0 %v2290
    %v2292 = vpop.xlane.xlu0 %2291
    %v2293 = vsel %vm1308, %v1788, 0.0
    %2294 = vadd.xlane.f32.xlu0 %v2293
    %v2295 = vpop.xlane.xlu0 %2294
    %v2296 = vmul.f32 %v2292, %v2278
    %v2297 = vmul.f32 %v2295, %v2278
    %v2298 = vadd.f32 %v2296, %v2297
    %v2299 = vrot.slane %v2298, 4
    %v2300 = vadd.f32 %v2298, %v2299
    %v2301 = vrot.slane %v2300, 2
    %v2302 = vadd.f32 %v2300, %v2301
    %v2303 = vrot.slane %v2302, 1
    %v2304 = vadd.f32 %v2302, %v2303
    %v2305 = vmul.f32 %v2304, %v2288
    %v2306 = vsel %vm1308, %v1303, 0.0
    %2307 = vadd.xlane.f32.xlu0 %v2306
    %v2308 = vpop.xlane.xlu0 %2307
    %v2309 = vsel %vm1308, %v1304, 0.0
    %2310 = vadd.xlane.f32.xlu0 %v2309
    %v2311 = vpop.xlane.xlu0 %2310
    %v2312 = vmul.f32 %v2308, %v2278
    %v2313 = vmul.f32 %v2311, %v2278
    %v2314 = vadd.f32 %v2312, %v2313
    %v2315 = vrot.slane %v2314, 4
    %v2316 = vadd.f32 %v2314, %v2315
    %v2317 = vrot.slane %v2316, 2
    %v2318 = vadd.f32 %v2316, %v2317
    %v2319 = vrot.slane %v2318, 1
    %v2320 = vadd.f32 %v2318, %v2319
    %v2321 = vmul.f32 %v2320, %v2288
    %v2322 = vsel %vm1308, %v2270, 0.0
    %2323 = vadd.xlane.f32.xlu0 %v2322
    %v2324 = vpop.xlane.xlu0 %2323
    %v2325 = vsel %vm1308, %v2271, 0.0
    %2326 = vadd.xlane.f32.xlu0 %v2325
    %v2327 = vpop.xlane.xlu0 %2326
    %v2328 = vmul.f32 %v2324, %v2278
    %v2329 = vmul.f32 %v2327, %v2278
    %v2330 = vadd.f32 %v2328, %v2329
    %v2331 = vrot.slane %v2330, 4
    %v2332 = vadd.f32 %v2330, %v2331
    %v2333 = vrot.slane %v2332, 2
    %v2334 = vadd.f32 %v2332, %v2333
    %v2335 = vrot.slane %v2334, 1
    %v2336 = vadd.f32 %v2334, %v2335
    %v2337 = vmul.f32 %v2336, %v2288
    %vm2338 = vcmask 7168
    %v2339 = vsel %vm2338, %v2289, %v2305
    %vm2340 = vcmask 15360
    %v2341 = vsel %vm2340, %v2339, %v2321
    %vm2342 = vcmask 23552
    %v2343 = vsel %vm2342, %v2341, %v2337
    %v2344 = vld [vmem:[%s29] sm:$0xf]
    %v2345 = vld [vmem:[#allocation10] sm:$0x1]
    %vm2346 = vcmask 31744
    %v2348 = vsel %vm2346, %v2343, 0
    %vm2350 = vcmask 1043456
    %v2352 = vsel %vm2350, %v2344, 0
    %2354 = vmatprep.subr.mxu0 0.0
    %2355 = vmatpush1.msra.mxu0 %v2352
    %2356 = vmatprep.subr.mxu0 0.0
    %2357 = vmatpush1.msra.mxu0 0.0
    %2358 = vmatprep.subr.mxu0 0.0
    %2359 = vmatpush1.msra.mxu0 0.0
    %2360 = vmatprep.subr.mxu0 0.0
    %2361 = vmatpush1.msra.mxu0 0.0
    %2362 = vmatprep.subr.mxu0 0.0
    %2363 = vmatpush1.msra.mxu0 0.0
    %2364 = vmatprep.subr.mxu0 0.0
    %2365 = vmatpush1.msra.mxu0 0.0
    %2366 = vmatprep.subr.mxu0 0.0
    %2367 = vmatpush1.msra.mxu0 0.0
    %2368 = vmatprep.subr.mxu0 0.0
    %2369 = vmatpush1.msra.mxu0 0.0
    %2370 = vmatprep.subr.mxu0 0.0
    %2371 = vmatpush1.msra.mxu0 0.0
    %2372 = vmatprep.subr.mxu0 0.0
    %2373 = vmatpush1.msra.mxu0 0.0
    %2374 = vmatprep.subr.mxu0 0.0
    %2375 = vmatpush1.msra.mxu0 0.0
    %2376 = vmatprep.subr.mxu0 0.0
    %2377 = vmatpush1.msra.mxu0 0.0
    %2378 = vmatprep.subr.mxu0 0.0
    %2379 = vmatpush1.msra.mxu0 0.0
    %2380 = vmatprep.subr.mxu0 0.0
    %2381 = vmatpush1.msra.mxu0 0.0
    %2382 = vmatprep.subr.mxu0 0.0
    %2383 = vmatpush1.msra.mxu0 0.0
    %2384 = vmatprep.subr.mxu0 0.0
    %2385 = vmatpush1.msra.mxu0 0.0
    %2386 = vmatprep.subr.mxu0 0.0
    %2387 = vmatpush1.msra.mxu0 0.0
    %2388 = vmatprep.subr.mxu0 0.0
    %2389 = vmatpush1.msra.mxu0 0.0
    %2390 = vmatprep.subr.mxu0 0.0
    %2391 = vmatpush1.msra.mxu0 0.0
    %2392 = vmatprep.subr.mxu0 0.0
    %2393 = vmatpush1.msra.mxu0 0.0
    %2394 = vmatprep.subr.mxu0 0.0
    %2395 = vmatpush1.msra.mxu0 0.0
    %2396 = vmatprep.subr.mxu0 0.0
    %2397 = vmatpush1.msra.mxu0 0.0
    %2398 = vmatprep.subr.mxu0 0.0
    %2399 = vmatpush1.msra.mxu0 0.0
    %2400 = vmatprep.subr.mxu0 0.0
    %2401 = vmatpush1.msra.mxu0 0.0
    %2402 = vmatprep.subr.mxu0 0.0
    %2403 = vmatpush1.msra.mxu0 0.0
    %2404 = vmatprep.subr.mxu0 0.0
    %2405 = vmatpush1.msra.mxu0 0.0
    %2406 = vmatprep.subr.mxu0 0.0
    %2407 = vmatpush1.msra.mxu0 0.0
    %2408 = vmatprep.subr.mxu0 0.0
    %2409 = vmatpush1.msra.mxu0 0.0
    %2410 = vmatprep.subr.mxu0 0.0
    %2411 = vmatpush1.msra.mxu0 0.0
    %2412 = vmatprep.subr.mxu0 0.0
    %2413 = vmatpush1.msra.mxu0 0.0
    %2414 = vmatprep.subr.mxu0 0.0
    %2415 = vmatpush1.msra.mxu0 0.0
    %2416 = vmatprep.subr.mxu0 0.0
    %2417 = vmatpush1.msra.mxu0 0.0
    %2418 = vmatprep.mubr.f32.mxu0 0.0
    %2419 = vmatmul.mubr.f32.gmra.mrb[0].mxu0 %v2348
    %v2420 = vpop.f32.mrb[0].mxu0
    %v2421 = vadd.f32 %v2345, %v2420
    %v2422 = vpop.f32.mrb[0].mxu0
    %2423 = vdwg.mxu0
    %v2424 = vld [vmem:[%s33] sm:$0xff]
    %v2425 = vld [vmem:[%s33 + $0x8] sm:$0xff]
    %v2426 = vld [vmem:[%s33 + $0x10] sm:$0xf]
    %v2427 = vld [vmem:[#allocation11] sm:$0x1]
    %vm2428 = vcmask 162816
    %v2430 = vsel %vm2428, %v2421, 0
    %v2433 = vsel %vm2350, %v2426, 0
    %2435 = vmatprep.subr.mxu0 0.0
    %2436 = vmatpush1.msra.mxu0 %v2424
    %2437 = vmatprep.subr.mxu0 0.0
    %2438 = vmatpush1.msra.mxu0 %v2425
    %2439 = vmatprep.subr.mxu0 0.0
    %2440 = vmatpush1.msra.mxu0 %v2433
    %2441 = vmatprep.subr.mxu0 0.0
    %2442 = vmatpush1.msra.mxu0 0.0
    %2443 = vmatprep.subr.mxu0 0.0
    %2444 = vmatpush1.msra.mxu0 0.0
    %2445 = vmatprep.subr.mxu0 0.0
    %2446 = vmatpush1.msra.mxu0 0.0
    %2447 = vmatprep.subr.mxu0 0.0
    %2448 = vmatpush1.msra.mxu0 0.0
    %2449 = vmatprep.subr.mxu0 0.0
    %2450 = vmatpush1.msra.mxu0 0.0
    %2451 = vmatprep.subr.mxu0 0.0
    %2452 = vmatpush1.msra.mxu0 0.0
    %2453 = vmatprep.subr.mxu0 0.0
    %2454 = vmatpush1.msra.mxu0 0.0
    %2455 = vmatprep.subr.mxu0 0.0
    %2456 = vmatpush1.msra.mxu0 0.0
    %2457 = vmatprep.subr.mxu0 0.0
    %2458 = vmatpush1.msra.mxu0 0.0
    %2459 = vmatprep.subr.mxu0 0.0
    %2460 = vmatpush1.msra.mxu0 0.0
    %2461 = vmatprep.subr.mxu0 0.0
    %2462 = vmatpush1.msra.mxu0 0.0
    %2463 = vmatprep.subr.mxu0 0.0
    %2464 = vmatpush1.msra.mxu0 0.0
    %2465 = vmatprep.subr.mxu0 0.0
    %2466 = vmatpush1.msra.mxu0 0.0
    %2467 = vmatprep.subr.mxu0 0.0
    %2468 = vmatpush1.msra.mxu0 0.0
    %2469 = vmatprep.subr.mxu0 0.0
    %2470 = vmatpush1.msra.mxu0 0.0
    %2471 = vmatprep.subr.mxu0 0.0
    %2472 = vmatpush1.msra.mxu0 0.0
    %2473 = vmatprep.subr.mxu0 0.0
    %2474 = vmatpush1.msra.mxu0 0.0
    %2475 = vmatprep.subr.mxu0 0.0
    %2476 = vmatpush1.msra.mxu0 0.0
    %2477 = vmatprep.subr.mxu0 0.0
    %2478 = vmatpush1.msra.mxu0 0.0
    %2479 = vmatprep.subr.mxu0 0.0
    %2480 = vmatpush1.msra.mxu0 0.0
    %2481 = vmatprep.subr.mxu0 0.0
    %2482 = vmatpush1.msra.mxu0 0.0
    %2483 = vmatprep.subr.mxu0 0.0
    %2484 = vmatpush1.msra.mxu0 0.0
    %2485 = vmatprep.subr.mxu0 0.0
    %2486 = vmatpush1.msra.mxu0 0.0
    %2487 = vmatprep.subr.mxu0 0.0
    %2488 = vmatpush1.msra.mxu0 0.0
    %2489 = vmatprep.subr.mxu0 0.0
    %2490 = vmatpush1.msra.mxu0 0.0
    %2491 = vmatprep.subr.mxu0 0.0
    %2492 = vmatpush1.msra.mxu0 0.0
    %2493 = vmatprep.subr.mxu0 0.0
    %2494 = vmatpush1.msra.mxu0 0.0
    %2495 = vmatprep.subr.mxu0 0.0
    %2496 = vmatpush1.msra.mxu0 0.0
    %2497 = vmatprep.subr.mxu0 0.0
    %2498 = vmatpush1.msra.mxu0 0.0
    %2499 = vmatprep.mubr.f32.mxu0 0.0
    %2500 = vmatmul.mubr.f32.gmra.mrb[0].mxu0 %v2430
    %v2501 = vpop.f32.mrb[0].mxu0
    %v2502 = vadd.f32 %v2427, %v2501
    %v2503 = vpop.f32.mrb[0].mxu0
    %2504 = vdwg.mxu0
    %v2505 = vxor.u32 %v2502, 2147483648
    %v2506 = vmul.f32 %v2505, 1.442695
    %v2507 = vpow.pop %v2506
    %v2508 = vadd.f32 %v2507, 1.0
    %v2509 = vrcp.pop %v2508
    %v2510 = vmul.f32 1.0, %v2509
    %s2511 = sld [smem:[#allocation13]]
    %s2512 = vtos %v2510
    %v2513 = vstv %s2512
    %v2514 = vmul.f32 %v2513, %v817
    %v2515 = vmul.f32 %v2513, %v818
    %v2516 = vmax.f32 %v2514, 0.0
    %v2517 = vmax.f32 %v2515, 0.0
    %v2518 = vstv %s2511
    %v2519 = vmul.f32 %v2518, %v2516
    %v2520 = vmul.f32 %v2518, %v2517
    %v2521 = vadd.f32 %v2519, 0.0
    %v2522 = vadd.f32 %v2520, 0.0
    %s2523 = sld [smem:[#allocation13 + $0x1]]
    %2524 = vrot.lane.b32.xlu0 %v2510, 127
    %v2525 = vpop.permute.xlu0 %2524
    %s2526 = vtos %v2525
    %v2527 = vstv %s2526
    %v2528 = vmul.f32 %v2527, %v1787
    %v2529 = vmul.f32 %v2527, %v1788
    %v2530 = vmax.f32 %v2528, 0.0
    %v2531 = vmax.f32 %v2529, 0.0
    %v2532 = vstv %s2523
    %v2533 = vmul.f32 %v2532, %v2530
    %v2534 = vmul.f32 %v2532, %v2531
    %v2535 = vadd.f32 %v2521, %v2533
    %v2536 = vadd.f32 %v2522, %v2534
    %s2537 = sld [smem:[#allocation13 + $0x2]]
    %2538 = vrot.lane.b32.xlu0 %v2510, 126
    %v2539 = vpop.permute.xlu0 %2538
    %s2540 = vtos %v2539
    %v2541 = vstv %s2540
    %v2542 = vmul.f32 %v2541, %v1303
    %v2543 = vmul.f32 %v2541, %v1304
    %v2544 = vmax.f32 %v2542, 0.0
    %v2545 = vmax.f32 %v2543, 0.0
    %v2546 = vstv %s2537
    %v2547 = vmul.f32 %v2546, %v2544
    %v2548 = vmul.f32 %v2546, %v2545
    %v2549 = vadd.f32 %v2535, %v2547
    %v2550 = vadd.f32 %v2536, %v2548
    %s2551 = sld [smem:[#allocation13 + $0x3]]
    %2552 = vrot.lane.b32.xlu0 %v2510, 125
    %v2553 = vpop.permute.xlu0 %2552
    %s2554 = vtos %v2553
    %v2555 = vstv %s2554
    %v2556 = vmul.f32 %v2555, %v2270
    %v2557 = vmul.f32 %v2555, %v2271
    %v2558 = vmax.f32 %v2556, 0.0
    %v2559 = vmax.f32 %v2557, 0.0
    %v2560 = vstv %s2551
    %v2561 = vmul.f32 %v2560, %v2558
    %v2562 = vmul.f32 %v2560, %v2559
    %v2563 = vadd.f32 %v2549, %v2561
    %v2564 = vadd.f32 %v2550, %v2562
    %s2565 = sld [smem:[#allocation2]]
    %v2566 = vstv %s2565
    %v2567 = vadd.f32 %v2563, %v2566
    %v2568 = vadd.f32 %v2564, %v2566
    %v2569 = vld [vmem:[%s3] sm:$0xff]
    %v2570 = vld [vmem:[%s43] sm:$0xff]
    %v2571 = vld [vmem:[%s45] sm:$0xff]
    %v2572 = vld [vmem:[%s47] sm:$0xff]
    %v2573 = vld [vmem:[%s47 + $0x8] sm:$0xff]
    %v2575 = vsel %vm1308, %v2569, 0
    %2577 = vmatprep.subr.mxu0 0.0
    %2578 = vmatpush1.msra.mxu0 %v2571
    %2579 = vmatprep.subr.mxu0 0.0
    %2580 = vmatpush1.msra.mxu0 0.0
    %2581 = vmatprep.subr.mxu0 0.0
    %2582 = vmatpush1.msra.mxu0 0.0
    %2583 = vmatprep.subr.mxu0 0.0
    %2584 = vmatpush1.msra.mxu0 0.0
    %2585 = vmatprep.subr.mxu0 0.0
    %2586 = vmatpush1.msra.mxu0 0.0
    %2587 = vmatprep.subr.mxu0 0.0
    %2588 = vmatpush1.msra.mxu0 0.0
    %2589 = vmatprep.subr.mxu0 0.0
    %2590 = vmatpush1.msra.mxu0 0.0
    %2591 = vmatprep.subr.mxu0 0.0
    %2592 = vmatpush1.msra.mxu0 0.0
    %2593 = vmatprep.subr.mxu0 0.0
    %2594 = vmatpush1.msra.mxu0 0.0
    %2595 = vmatprep.subr.mxu0 0.0
    %2596 = vmatpush1.msra.mxu0 0.0
    %2597 = vmatprep.subr.mxu0 0.0
    %2598 = vmatpush1.msra.mxu0 0.0
    %2599 = vmatprep.subr.mxu0 0.0
    %2600 = vmatpush1.msra.mxu0 0.0
    %2601 = vmatprep.subr.mxu0 0.0
    %2602 = vmatpush1.msra.mxu0 0.0
    %2603 = vmatprep.subr.mxu0 0.0
    %2604 = vmatpush1.msra.mxu0 0.0
    %2605 = vmatprep.subr.mxu0 0.0
    %2606 = vmatpush1.msra.mxu0 0.0
    %2607 = vmatprep.subr.mxu0 0.0
    %2608 = vmatpush1.msra.mxu0 0.0
    %2609 = vmatprep.subr.mxu0 0.0
    %2610 = vmatpush1.msra.mxu0 0.0
    %2611 = vmatprep.subr.mxu0 0.0
    %2612 = vmatpush1.msra.mxu0 0.0
    %2613 = vmatprep.subr.mxu0 0.0
    %2614 = vmatpush1.msra.mxu0 0.0
    %2615 = vmatprep.subr.mxu0 0.0
    %2616 = vmatpush1.msra.mxu0 0.0
    %2617 = vmatprep.subr.mxu0 0.0
    %2618 = vmatpush1.msra.mxu0 0.0
    %2619 = vmatprep.subr.mxu0 0.0
    %2620 = vmatpush1.msra.mxu0 0.0
    %2621 = vmatprep.subr.mxu0 0.0
    %2622 = vmatpush1.msra.mxu0 0.0
    %2623 = vmatprep.subr.mxu0 0.0
    %2624 = vmatpush1.msra.mxu0 0.0
    %2625 = vmatprep.subr.mxu0 0.0
    %2626 = vmatpush1.msra.mxu0 0.0
    %2627 = vmatprep.subr.mxu0 0.0
    %2628 = vmatpush1.msra.mxu0 0.0
    %2629 = vmatprep.subr.mxu0 0.0
    %2630 = vmatpush1.msra.mxu0 0.0
    %2631 = vmatprep.subr.mxu0 0.0
    %2632 = vmatpush1.msra.mxu0 0.0
    %2633 = vmatprep.subr.mxu0 0.0
    %2634 = vmatpush1.msra.mxu0 0.0
    %2635 = vmatprep.subr.mxu0 0.0
    %2636 = vmatpush1.msra.mxu0 0.0
    %2637 = vmatprep.subr.mxu0 0.0
    %2638 = vmatpush1.msra.mxu0 0.0
    %2639 = vmatprep.subr.mxu0 0.0
    %2640 = vmatpush1.msra.mxu0 0.0
    %2641 = vmatprep.mubr.f32.mxu0 0.0
    %2642 = vmatmul.mubr.f32.gmra.mrb[0].mxu0 %v2575
    %v2643 = vpop.f32.mrb[0].mxu0
    %v2644 = vadd.f32 0.0, %v2643
    %v2645 = vpop.f32.mrb[0].mxu0
    %2646 = vdwg.mxu0
    %v2648 = vsel %vm338, %v2644, 0
    %2650 = vmatprep.subr.mxu0 0.0
    %2651 = vmatpush1.msra.mxu0 %v2572
    %2652 = vmatprep.subr.mxu0 0.0
    %2653 = vmatpush1.msra.mxu0 %v2573
    %2654 = vmatprep.subr.mxu0 0.0
    %2655 = vmatpush1.msra.mxu0 0.0
    %2656 = vmatprep.subr.mxu0 0.0
    %2657 = vmatpush1.msra.mxu0 0.0
    %2658 = vmatprep.subr.mxu0 0.0
    %2659 = vmatpush1.msra.mxu0 0.0
    %2660 = vmatprep.subr.mxu0 0.0
    %2661 = vmatpush1.msra.mxu0 0.0
    %2662 = vmatprep.subr.mxu0 0.0
    %2663 = vmatpush1.msra.mxu0 0.0
    %2664 = vmatprep.subr.mxu0 0.0
    %2665 = vmatpush1.msra.mxu0 0.0
    %2666 = vmatprep.subr.mxu0 0.0
    %2667 = vmatpush1.msra.mxu0 0.0
    %2668 = vmatprep.subr.mxu0 0.0
    %2669 = vmatpush1.msra.mxu0 0.0
    %2670 = vmatprep.subr.mxu0 0.0
    %2671 = vmatpush1.msra.mxu0 0.0
    %2672 = vmatprep.subr.mxu0 0.0
    %2673 = vmatpush1.msra.mxu0 0.0
    %2674 = vmatprep.subr.mxu0 0.0
    %2675 = vmatpush1.msra.mxu0 0.0
    %2676 = vmatprep.subr.mxu0 0.0
    %2677 = vmatpush1.msra.mxu0 0.0
    %2678 = vmatprep.subr.mxu0 0.0
    %2679 = vmatpush1.msra.mxu0 0.0
    %2680 = vmatprep.subr.mxu0 0.0
    %2681 = vmatpush1.msra.mxu0 0.0
    %2682 = vmatprep.subr.mxu0 0.0
    %2683 = vmatpush1.msra.mxu0 0.0
    %2684 = vmatprep.subr.mxu0 0.0
    %2685 = vmatpush1.msra.mxu0 0.0
    %2686 = vmatprep.subr.mxu0 0.0
    %2687 = vmatpush1.msra.mxu0 0.0
    %2688 = vmatprep.subr.mxu0 0.0
    %2689 = vmatpush1.msra.mxu0 0.0
    %2690 = vmatprep.subr.mxu0 0.0
    %2691 = vmatpush1.msra.mxu0 0.0
    %2692 = vmatprep.subr.mxu0 0.0
    %2693 = vmatpush1.msra.mxu0 0.0
    %2694 = vmatprep.subr.mxu0 0.0
    %2695 = vmatpush1.msra.mxu0 0.0
    %2696 = vmatprep.subr.mxu0 0.0
    %2697 = vmatpush1.msra.mxu0 0.0
    %2698 = vmatprep.subr.mxu0 0.0
    %2699 = vmatpush1.msra.mxu0 0.0
    %2700 = vmatprep.subr.mxu0 0.0
    %2701 = vmatpush1.msra.mxu0 0.0
    %2702 = vmatprep.subr.mxu0 0.0
    %2703 = vmatpush1.msra.mxu0 0.0
    %2704 = vmatprep.subr.mxu0 0.0
    %2705 = vmatpush1.msra.mxu0 0.0
    %2706 = vmatprep.subr.mxu0 0.0
    %2707 = vmatpush1.msra.mxu0 0.0
    %2708 = vmatprep.subr.mxu0 0.0
    %2709 = vmatpush1.msra.mxu0 0.0
    %2710 = vmatprep.subr.mxu0 0.0
    %2711 = vmatpush1.msra.mxu0 0.0
    %2712 = vmatprep.subr.mxu0 0.0
    %2713 = vmatpush1.msra.mxu0 0.0
    %2714 = vmatprep.mubr.f32.mxu0 0.0
    %2715 = vmatmul.mubr.f32.gmra.mrb[0].mxu0 %v2648
    %v2716 = vpop.f32.mrb[0].mxu0
    %v2717 = vadd.f32 0.0, %v2716
    %v2718 = vpop.f32.mrb[0].mxu0
    %2719 = vdwg.mxu0
    %2721 = vrot.lane.b32.xlu0 %v2717, 126
    %v2722 = vpop.permute.xlu0 %2721
    %2724 = vxpose.xlu0.b32.start [1/16] %v2722, 128
    %2725 = vxpose.xlu0.b32.cont [2/16] 0.0, 128
    %2726 = vxpose.xlu0.b32.cont [3/16] 0.0, 128
    %2727 = vxpose.xlu0.b32.cont [4/16] 0.0, 128
    %2728 = vxpose.xlu0.b32.cont [5/16] 0.0, 128
    %2729 = vxpose.xlu0.b32.cont [6/16] 0.0, 128
    %2730 = vxpose.xlu0.b32.cont [7/16] 0.0, 128
    %2731 = vxpose.xlu0.b32.cont [8/16] 0.0, 128
    %2732 = vxpose.xlu0.b32.cont [9/16] 0.0, 128
    %2733 = vxpose.xlu0.b32.cont [10/16] 0.0, 128
    %2734 = vxpose.xlu0.b32.cont [11/16] 0.0, 128
    %2735 = vxpose.xlu0.b32.cont [12/16] 0.0, 128
    %2736 = vxpose.xlu0.b32.cont [13/16] 0.0, 128
    %2737 = vxpose.xlu0.b32.cont [14/16] 0.0, 128
    %2738 = vxpose.xlu0.b32.cont [15/16] 0.0, 128
    %2739 = vxpose.xlu0.b32.end [16/16] 0.0, 128
    %v2740 = vpop.trf.xlu0
    %v2741 = vpop.trf.xlu0
    %v2742 = vpop.trf.xlu0
    %v2743 = vpop.trf.xlu0
    %v2744 = vpop.trf.xlu0
    %v2745 = vpop.trf.xlu0
    %v2746 = vpop.trf.xlu0
    %v2747 = vpop.trf.xlu0
    %v2748 = vpop.trf.xlu0
    %v2749 = vpop.trf.xlu0
    %v2750 = vpop.trf.xlu0
    %v2751 = vpop.trf.xlu0
    %v2752 = vpop.trf.xlu0
    %v2753 = vpop.trf.xlu0
    %v2754 = vpop.trf.xlu0
    %v2755 = vpop.trf.xlu0
    %2756 = vset.pattern.permute.xlu0 0
    %2757 = vperm.xlu0 %2756, %v2717
    %v2758 = vpop.permute.xlu0 %2757
    %v2760 = vlaneseq
    %v2761 = vshrl.u32 %v2760, 7
    %v2762 = vsub.s32 0, %v2761
    %v2763 = vrot.slane %v2740, %v2762
    %v2764 = vadd.f32 %v2758, %v2763
    %vm2765 = vcmp.gt.f32.partialorder %v2764, 0.0
    %v2766 = vmul.f32 %v2764, 0.2
    %v2767 = vsel %vm2765, %v2764, %v2766
    %v2768 = vadd.f32 %v2767, %v2570
    %v2769 = vsel %vm1308, %v2768, -inf
    %2770 = vmax.xlane.f32.xlu0 %v2769
    %v2771 = vpop.xlane.xlu0 %2770
    %v2772 = vsub.f32 %v2768, %v2771
    %v2773 = vmul.f32 %v2772, 1.442695
    %v2774 = vpow.pop %v2773
    %v2775 = vsel %vm1308, %v2774, 0.0
    %2776 = vadd.xlane.f32.xlu0 %v2775
    %v2777 = vpop.xlane.xlu0 %2776
    %v2778 = vrcp.pop %v2777
    %v2779 = vmul.f32 %v2774, %v2778
    %2780 = vset.pattern.permute.xlu0 1
    %2781 = vperm.xlu0 %2780, %v2717
    %v2782 = vpop.permute.xlu0 %2781
    %v2784 = vlaneseq
    %v2785 = vshrl.u32 %v2784, 7
    %v2786 = vsub.s32 1, %v2785
    %v2787 = vrot.slane %v2740, %v2786
    %v2788 = vadd.f32 %v2782, %v2787
    %vm2789 = vcmp.gt.f32.partialorder %v2788, 0.0
    %v2790 = vmul.f32 %v2788, 0.2
    %v2791 = vsel %vm2789, %v2788, %v2790
    %v2792 = vadd.f32 %v2791, %v2570
    %v2793 = vsel %vm1308, %v2792, -inf
    %2794 = vmax.xlane.f32.xlu0 %v2793
    %v2795 = vpop.xlane.xlu0 %2794
    %v2796 = vsub.f32 %v2792, %v2795
    %v2797 = vmul.f32 %v2796, 1.442695
    %v2798 = vpow.pop %v2797
    %v2799 = vsel %vm1308, %v2798, 0.0
    %2800 = vadd.xlane.f32.xlu0 %v2799
    %v2801 = vpop.xlane.xlu0 %2800
    %v2802 = vrcp.pop %v2801
    %v2803 = vmul.f32 %v2798, %v2802
    %2804 = vrot.lane.b32.xlu0 %v2644, 120
    %v2805 = vpop.permute.xlu0 %2804
    %v2808 = vsel %vm1308, %v2803, 0
    %2810 = vmatprep.subr.mxu0 0.0
    %2811 = vmatpush1.msra.mxu0 %v2805
    %2812 = vmatprep.subr.mxu0 0.0
    %2813 = vmatpush1.msra.mxu0 0.0
    %2814 = vmatprep.subr.mxu0 0.0
    %2815 = vmatpush1.msra.mxu0 0.0
    %2816 = vmatprep.subr.mxu0 0.0
    %2817 = vmatpush1.msra.mxu0 0.0
    %2818 = vmatprep.subr.mxu0 0.0
    %2819 = vmatpush1.msra.mxu0 0.0
    %2820 = vmatprep.subr.mxu0 0.0
    %2821 = vmatpush1.msra.mxu0 0.0
    %2822 = vmatprep.subr.mxu0 0.0
    %2823 = vmatpush1.msra.mxu0 0.0
    %2824 = vmatprep.subr.mxu0 0.0
    %2825 = vmatpush1.msra.mxu0 0.0
    %2826 = vmatprep.subr.mxu0 0.0
    %2827 = vmatpush1.msra.mxu0 0.0
    %2828 = vmatprep.subr.mxu0 0.0
    %2829 = vmatpush1.msra.mxu0 0.0
    %2830 = vmatprep.subr.mxu0 0.0
    %2831 = vmatpush1.msra.mxu0 0.0
    %2832 = vmatprep.subr.mxu0 0.0
    %2833 = vmatpush1.msra.mxu0 0.0
    %2834 = vmatprep.subr.mxu0 0.0
    %2835 = vmatpush1.msra.mxu0 0.0
    %2836 = vmatprep.subr.mxu0 0.0
    %2837 = vmatpush1.msra.mxu0 0.0
    %2838 = vmatprep.subr.mxu0 0.0
    %2839 = vmatpush1.msra.mxu0 0.0
    %2840 = vmatprep.subr.mxu0 0.0
    %2841 = vmatpush1.msra.mxu0 0.0
    %2842 = vmatprep.subr.mxu0 0.0
    %2843 = vmatpush1.msra.mxu0 0.0
    %2844 = vmatprep.subr.mxu0 0.0
    %2845 = vmatpush1.msra.mxu0 0.0
    %2846 = vmatprep.subr.mxu0 0.0
    %2847 = vmatpush1.msra.mxu0 0.0
    %2848 = vmatprep.subr.mxu0 0.0
    %2849 = vmatpush1.msra.mxu0 0.0
    %2850 = vmatprep.subr.mxu0 0.0
    %2851 = vmatpush1.msra.mxu0 0.0
    %2852 = vmatprep.subr.mxu0 0.0
    %2853 = vmatpush1.msra.mxu0 0.0
    %2854 = vmatprep.subr.mxu0 0.0
    %2855 = vmatpush1.msra.mxu0 0.0
    %2856 = vmatprep.subr.mxu0 0.0
    %2857 = vmatpush1.msra.mxu0 0.0
    %2858 = vmatprep.subr.mxu0 0.0
    %2859 = vmatpush1.msra.mxu0 0.0
    %2860 = vmatprep.subr.mxu0 0.0
    %2861 = vmatpush1.msra.mxu0 0.0
    %2862 = vmatprep.subr.mxu0 0.0
    %2863 = vmatpush1.msra.mxu0 0.0
    %2864 = vmatprep.subr.mxu0 0.0
    %2865 = vmatpush1.msra.mxu0 0.0
    %2866 = vmatprep.subr.mxu0 0.0
    %2867 = vmatpush1.msra.mxu0 0.0
    %2868 = vmatprep.subr.mxu0 0.0
    %2869 = vmatpush1.msra.mxu0 0.0
    %2870 = vmatprep.subr.mxu0 0.0
    %2871 = vmatpush1.msra.mxu0 0.0
    %2872 = vmatprep.subr.mxu0 0.0
    %2873 = vmatpush1.msra.mxu0 0.0
    %2874 = vmatprep.mubr.f32.mxu0 0.0
    %2875 = vmatmul.mubr.f32.gmra.mrb[0].mxu0 %v2808
    %v2876 = vpop.f32.mrb[0].mxu0
    %v2877 = vadd.f32 0.0, %v2876
    %v2878 = vpop.f32.mrb[0].mxu0
    %2879 = vdwg.mxu0
    %v2881 = vsel %vm1308, %v2779, 0
    %2883 = vmatprep.subr.mxu0 0.0
    %2884 = vmatpush1.msra.mxu0 %v2644
    %2885 = vmatprep.subr.mxu0 0.0
    %2886 = vmatpush1.msra.mxu0 0.0
    %2887 = vmatprep.subr.mxu0 0.0
    %2888 = vmatpush1.msra.mxu0 0.0
    %2889 = vmatprep.subr.mxu0 0.0
    %2890 = vmatpush1.msra.mxu0 0.0
    %2891 = vmatprep.subr.mxu0 0.0
    %2892 = vmatpush1.msra.mxu0 0.0
    %2893 = vmatprep.subr.mxu0 0.0
    %2894 = vmatpush1.msra.mxu0 0.0
    %2895 = vmatprep.subr.mxu0 0.0
    %2896 = vmatpush1.msra.mxu0 0.0
    %2897 = vmatprep.subr.mxu0 0.0
    %2898 = vmatpush1.msra.mxu0 0.0
    %2899 = vmatprep.subr.mxu0 0.0
    %2900 = vmatpush1.msra.mxu0 0.0
    %2901 = vmatprep.subr.mxu0 0.0
    %2902 = vmatpush1.msra.mxu0 0.0
    %2903 = vmatprep.subr.mxu0 0.0
    %2904 = vmatpush1.msra.mxu0 0.0
    %2905 = vmatprep.subr.mxu0 0.0
    %2906 = vmatpush1.msra.mxu0 0.0
    %2907 = vmatprep.subr.mxu0 0.0
    %2908 = vmatpush1.msra.mxu0 0.0
    %2909 = vmatprep.subr.mxu0 0.0
    %2910 = vmatpush1.msra.mxu0 0.0
    %2911 = vmatprep.subr.mxu0 0.0
    %2912 = vmatpush1.msra.mxu0 0.0
    %2913 = vmatprep.subr.mxu0 0.0
    %2914 = vmatpush1.msra.mxu0 0.0
    %2915 = vmatprep.subr.mxu0 0.0
    %2916 = vmatpush1.msra.mxu0 0.0
    %2917 = vmatprep.subr.mxu0 0.0
    %2918 = vmatpush1.msra.mxu0 0.0
    %2919 = vmatprep.subr.mxu0 0.0
    %2920 = vmatpush1.msra.mxu0 0.0
    %2921 = vmatprep.subr.mxu0 0.0
    %2922 = vmatpush1.msra.mxu0 0.0
    %2923 = vmatprep.subr.mxu0 0.0
    %2924 = vmatpush1.msra.mxu0 0.0
    %2925 = vmatprep.subr.mxu0 0.0
    %2926 = vmatpush1.msra.mxu0 0.0
    %2927 = vmatprep.subr.mxu0 0.0
    %2928 = vmatpush1.msra.mxu0 0.0
    %2929 = vmatprep.subr.mxu0 0.0
    %2930 = vmatpush1.msra.mxu0 0.0
    %2931 = vmatprep.subr.mxu0 0.0
    %2932 = vmatpush1.msra.mxu0 0.0
    %2933 = vmatprep.subr.mxu0 0.0
    %2934 = vmatpush1.msra.mxu0 0.0
    %2935 = vmatprep.subr.mxu0 0.0
    %2936 = vmatpush1.msra.mxu0 0.0
    %2937 = vmatprep.subr.mxu0 0.0
    %2938 = vmatpush1.msra.mxu0 0.0
    %2939 = vmatprep.subr.mxu0 0.0
    %2940 = vmatpush1.msra.mxu0 0.0
    %2941 = vmatprep.subr.mxu0 0.0
    %2942 = vmatpush1.msra.mxu0 0.0
    %2943 = vmatprep.subr.mxu0 0.0
    %2944 = vmatpush1.msra.mxu0 0.0
    %2945 = vmatprep.subr.mxu0 0.0
    %2946 = vmatpush1.msra.mxu0 0.0
    %2947 = vmatprep.mubr.f32.mxu0 0.0
    %2948 = vmatmul.mubr.f32.gmra.mrb[0].mxu0 %v2881
    %v2949 = vpop.f32.mrb[0].mxu0
    %v2950 = vadd.f32 %v2877, %v2949
    %v2951 = vpop.f32.mrb[0].mxu0
    %2952 = vdwg.mxu0
    %v2953 = vmul.f32 %v2950, 0.5
    %2954 = vrot.lane.b32.xlu0 %v2644, 112
    %v2955 = vpop.permute.xlu0 %2954
    %v2957 = vadd.f32 %v2953, %v2955
    %v2958 = vmin.f32 %v2957, 0.0
    %vm2959 = vcmp.gt.f32.partialorder %v2957, 0.0
    %v2960 = vmul.f32 %v2958, 1.442695
    %v2961 = vpow.pop %v2960
    %v2962 = vsub.f32 %v2961, 1.0
    %v2963 = vsel %vm2959, %v2957, %v2962
    %v2964 = vld [vmem:[%s41] sm:$0xff]
    %v2965 = vld [vmem:[%s49] sm:$0xff]
    %v2966 = vld [vmem:[%s49 + $0x8] sm:$0xff]
    %v2967 = vld [vmem:[%s51] sm:$0xff]
    %v2968 = vld [vmem:[%s51 + $0x8] sm:$0xff]
    %v2970 = vsel %vm338, %v2964, 0
    %2972 = vmatprep.subr.mxu0 0.0
    %2973 = vmatpush1.msra.mxu0 %v2965
    %2974 = vmatprep.subr.mxu0 0.0
    %2975 = vmatpush1.msra.mxu0 %v2966
    %2976 = vmatprep.subr.mxu0 0.0
    %2977 = vmatpush1.msra.mxu0 0.0
    %2978 = vmatprep.subr.mxu0 0.0
    %2979 = vmatpush1.msra.mxu0 0.0
    %2980 = vmatprep.subr.mxu0 0.0
    %2981 = vmatpush1.msra.mxu0 0.0
    %2982 = vmatprep.subr.mxu0 0.0
    %2983 = vmatpush1.msra.mxu0 0.0
    %2984 = vmatprep.subr.mxu0 0.0
    %2985 = vmatpush1.msra.mxu0 0.0
    %2986 = vmatprep.subr.mxu0 0.0
    %2987 = vmatpush1.msra.mxu0 0.0
    %2988 = vmatprep.subr.mxu0 0.0
    %2989 = vmatpush1.msra.mxu0 0.0
    %2990 = vmatprep.subr.mxu0 0.0
    %2991 = vmatpush1.msra.mxu0 0.0
    %2992 = vmatprep.subr.mxu0 0.0
    %2993 = vmatpush1.msra.mxu0 0.0
    %2994 = vmatprep.subr.mxu0 0.0
    %2995 = vmatpush1.msra.mxu0 0.0
    %2996 = vmatprep.subr.mxu0 0.0
    %2997 = vmatpush1.msra.mxu0 0.0
    %2998 = vmatprep.subr.mxu0 0.0
    %2999 = vmatpush1.msra.mxu0 0.0
    %3000 = vmatprep.subr.mxu0 0.0
    %3001 = vmatpush1.msra.mxu0 0.0
    %3002 = vmatprep.subr.mxu0 0.0
    %3003 = vmatpush1.msra.mxu0 0.0
    %3004 = vmatprep.subr.mxu0 0.0
    %3005 = vmatpush1.msra.mxu0 0.0
    %3006 = vmatprep.subr.mxu0 0.0
    %3007 = vmatpush1.msra.mxu0 0.0
    %3008 = vmatprep.subr.mxu0 0.0
    %3009 = vmatpush1.msra.mxu0 0.0
    %3010 = vmatprep.subr.mxu0 0.0
    %3011 = vmatpush1.msra.mxu0 0.0
    %3012 = vmatprep.subr.mxu0 0.0
    %3013 = vmatpush1.msra.mxu0 0.0
    %3014 = vmatprep.subr.mxu0 0.0
    %3015 = vmatpush1.msra.mxu0 0.0
    %3016 = vmatprep.subr.mxu0 0.0
    %3017 = vmatpush1.msra.mxu0 0.0
    %3018 = vmatprep.subr.mxu0 0.0
    %3019 = vmatpush1.msra.mxu0 0.0
    %3020 = vmatprep.subr.mxu0 0.0
    %3021 = vmatpush1.msra.mxu0 0.0
    %3022 = vmatprep.subr.mxu0 0.0
    %3023 = vmatpush1.msra.mxu0 0.0
    %3024 = vmatprep.subr.mxu0 0.0
    %3025 = vmatpush1.msra.mxu0 0.0
    %3026 = vmatprep.subr.mxu0 0.0
    %3027 = vmatpush1.msra.mxu0 0.0
    %3028 = vmatprep.subr.mxu0 0.0
    %3029 = vmatpush1.msra.mxu0 0.0
    %3030 = vmatprep.subr.mxu0 0.0
    %3031 = vmatpush1.msra.mxu0 0.0
    %3032 = vmatprep.subr.mxu0 0.0
    %3033 = vmatpush1.msra.mxu0 0.0
    %3034 = vmatprep.subr.mxu0 0.0
    %3035 = vmatpush1.msra.mxu0 0.0
    %3036 = vmatprep.mubr.f32.mxu0 0.0
    %3037 = vmatmul.mubr.f32.gmra.mrb[0].mxu0 %v2970
    %v3038 = vpop.f32.mrb[0].mxu0
    %v3039 = vadd.f32 0.0, %v3038
    %v3040 = vpop.f32.mrb[0].mxu0
    %3041 = vdwg.mxu0
    %v3043 = vsel %vm338, %v3039, 0
    %3045 = vmatprep.subr.mxu0 0.0
    %3046 = vmatpush1.msra.mxu0 %v2967
    %3047 = vmatprep.subr.mxu0 0.0
    %3048 = vmatpush1.msra.mxu0 %v2968
    %3049 = vmatprep.subr.mxu0 0.0
    %3050 = vmatpush1.msra.mxu0 0.0
    %3051 = vmatprep.subr.mxu0 0.0
    %3052 = vmatpush1.msra.mxu0 0.0
    %3053 = vmatprep.subr.mxu0 0.0
    %3054 = vmatpush1.msra.mxu0 0.0
    %3055 = vmatprep.subr.mxu0 0.0
    %3056 = vmatpush1.msra.mxu0 0.0
    %3057 = vmatprep.subr.mxu0 0.0
    %3058 = vmatpush1.msra.mxu0 0.0
    %3059 = vmatprep.subr.mxu0 0.0
    %3060 = vmatpush1.msra.mxu0 0.0
    %3061 = vmatprep.subr.mxu0 0.0
    %3062 = vmatpush1.msra.mxu0 0.0
    %3063 = vmatprep.subr.mxu0 0.0
    %3064 = vmatpush1.msra.mxu0 0.0
    %3065 = vmatprep.subr.mxu0 0.0
    %3066 = vmatpush1.msra.mxu0 0.0
    %3067 = vmatprep.subr.mxu0 0.0
    %3068 = vmatpush1.msra.mxu0 0.0
    %3069 = vmatprep.subr.mxu0 0.0
    %3070 = vmatpush1.msra.mxu0 0.0
    %3071 = vmatprep.subr.mxu0 0.0
    %3072 = vmatpush1.msra.mxu0 0.0
    %3073 = vmatprep.subr.mxu0 0.0
    %3074 = vmatpush1.msra.mxu0 0.0
    %3075 = vmatprep.subr.mxu0 0.0
    %3076 = vmatpush1.msra.mxu0 0.0
    %3077 = vmatprep.subr.mxu0 0.0
    %3078 = vmatpush1.msra.mxu0 0.0
    %3079 = vmatprep.subr.mxu0 0.0
    %3080 = vmatpush1.msra.mxu0 0.0
    %3081 = vmatprep.subr.mxu0 0.0
    %3082 = vmatpush1.msra.mxu0 0.0
    %3083 = vmatprep.subr.mxu0 0.0
    %3084 = vmatpush1.msra.mxu0 0.0
    %3085 = vmatprep.subr.mxu0 0.0
    %3086 = vmatpush1.msra.mxu0 0.0
    %3087 = vmatprep.subr.mxu0 0.0
    %3088 = vmatpush1.msra.mxu0 0.0
    %3089 = vmatprep.subr.mxu0 0.0
    %3090 = vmatpush1.msra.mxu0 0.0
    %3091 = vmatprep.subr.mxu0 0.0
    %3092 = vmatpush1.msra.mxu0 0.0
    %3093 = vmatprep.subr.mxu0 0.0
    %3094 = vmatpush1.msra.mxu0 0.0
    %3095 = vmatprep.subr.mxu0 0.0
    %3096 = vmatpush1.msra.mxu0 0.0
    %3097 = vmatprep.subr.mxu0 0.0
    %3098 = vmatpush1.msra.mxu0 0.0
    %3099 = vmatprep.subr.mxu0 0.0
    %3100 = vmatpush1.msra.mxu0 0.0
    %3101 = vmatprep.subr.mxu0 0.0
    %3102 = vmatpush1.msra.mxu0 0.0
    %3103 = vmatprep.subr.mxu0 0.0
    %3104 = vmatpush1.msra.mxu0 0.0
    %3105 = vmatprep.subr.mxu0 0.0
    %3106 = vmatpush1.msra.mxu0 0.0
    %3107 = vmatprep.subr.mxu0 0.0
    %3108 = vmatpush1.msra.mxu0 0.0
    %3109 = vmatprep.mubr.f32.mxu0 0.0
    %3110 = vmatmul.mubr.f32.gmra.mrb[0].mxu0 %v3043
    %v3111 = vpop.f32.mrb[0].mxu0
    %v3112 = vadd.f32 0.0, %v3111
    %v3113 = vpop.f32.mrb[0].mxu0
    %3114 = vdwg.mxu0
    %3116 = vrot.lane.b32.xlu0 %v3112, 126
    %v3117 = vpop.permute.xlu0 %3116
    %3119 = vxpose.xlu0.b32.start [1/16] %v3117, 128
    %3120 = vxpose.xlu0.b32.cont [2/16] 0.0, 128
    %3121 = vxpose.xlu0.b32.cont [3/16] 0.0, 128
    %3122 = vxpose.xlu0.b32.cont [4/16] 0.0, 128
    %3123 = vxpose.xlu0.b32.cont [5/16] 0.0, 128
    %3124 = vxpose.xlu0.b32.cont [6/16] 0.0, 128
    %3125 = vxpose.xlu0.b32.cont [7/16] 0.0, 128
    %3126 = vxpose.xlu0.b32.cont [8/16] 0.0, 128
    %3127 = vxpose.xlu0.b32.cont [9/16] 0.0, 128
    %3128 = vxpose.xlu0.b32.cont [10/16] 0.0, 128
    %3129 = vxpose.xlu0.b32.cont [11/16] 0.0, 128
    %3130 = vxpose.xlu0.b32.cont [12/16] 0.0, 128
    %3131 = vxpose.xlu0.b32.cont [13/16] 0.0, 128
    %3132 = vxpose.xlu0.b32.cont [14/16] 0.0, 128
    %3133 = vxpose.xlu0.b32.cont [15/16] 0.0, 128
    %3134 = vxpose.xlu0.b32.end [16/16] 0.0, 128
    %v3135 = vpop.trf.xlu0
    %v3136 = vpop.trf.xlu0
    %v3137 = vpop.trf.xlu0
    %v3138 = vpop.trf.xlu0
    %v3139 = vpop.trf.xlu0
    %v3140 = vpop.trf.xlu0
    %v3141 = vpop.trf.xlu0
    %v3142 = vpop.trf.xlu0
    %v3143 = vpop.trf.xlu0
    %v3144 = vpop.trf.xlu0
    %v3145 = vpop.trf.xlu0
    %v3146 = vpop.trf.xlu0
    %v3147 = vpop.trf.xlu0
    %v3148 = vpop.trf.xlu0
    %v3149 = vpop.trf.xlu0
    %v3150 = vpop.trf.xlu0
    %3151 = vset.pattern.permute.xlu0 0
    %3152 = vperm.xlu0 %3151, %v3112
    %v3153 = vpop.permute.xlu0 %3152
    %v3155 = vlaneseq
    %v3156 = vshrl.u32 %v3155, 7
    %v3157 = vsub.s32 0, %v3156
    %v3158 = vrot.slane %v3135, %v3157
    %v3159 = vadd.f32 %v3153, %v3158
    %vm3160 = vcmp.gt.f32.partialorder %v3159, 0.0
    %v3161 = vmul.f32 %v3159, 0.2
    %v3162 = vsel %vm3160, %v3159, %v3161
    %v3163 = vadd.f32 %v3162, %v2570
    %v3164 = vsel %vm1308, %v3163, -inf
    %3165 = vmax.xlane.f32.xlu0 %v3164
    %v3166 = vpop.xlane.xlu0 %3165
    %v3167 = vsub.f32 %v3163, %v3166
    %v3168 = vmul.f32 %v3167, 1.442695
    %v3169 = vpow.pop %v3168
    %v3170 = vsel %vm1308, %v3169, 0.0
    %3171 = vadd.xlane.f32.xlu0 %v3170
    %v3172 = vpop.xlane.xlu0 %3171
    %v3173 = vrcp.pop %v3172
    %v3174 = vmul.f32 %v3169, %v3173
    %3175 = vset.pattern.permute.xlu0 1
    %3176 = vperm.xlu0 %3175, %v3112
    %v3177 = vpop.permute.xlu0 %3176
    %v3179 = vlaneseq
    %v3180 = vshrl.u32 %v3179, 7
    %v3181 = vsub.s32 1, %v3180
    %v3182 = vrot.slane %v3135, %v3181
    %v3183 = vadd.f32 %v3177, %v3182
    %vm3184 = vcmp.gt.f32.partialorder %v3183, 0.0
    %v3185 = vmul.f32 %v3183, 0.2
    %v3186 = vsel %vm3184, %v3183, %v3185
    %v3187 = vadd.f32 %v3186, %v2570
    %v3188 = vsel %vm1308, %v3187, -inf
    %3189 = vmax.xlane.f32.xlu0 %v3188
    %v3190 = vpop.xlane.xlu0 %3189
    %v3191 = vsub.f32 %v3187, %v3190
    %v3192 = vmul.f32 %v3191, 1.442695
    %v3193 = vpow.pop %v3192
    %v3194 = vsel %vm1308, %v3193, 0.0
    %3195 = vadd.xlane.f32.xlu0 %v3194
    %v3196 = vpop.xlane.xlu0 %3195
    %v3197 = vrcp.pop %v3196
    %v3198 = vmul.f32 %v3193, %v3197
    %3199 = vrot.lane.b32.xlu0 %v3039, 120
    %v3200 = vpop.permute.xlu0 %3199
    %v3203 = vsel %vm1308, %v3198, 0
    %3205 = vmatprep.subr.mxu0 0.0
    %3206 = vmatpush1.msra.mxu0 %v3200
    %3207 = vmatprep.subr.mxu0 0.0
    %3208 = vmatpush1.msra.mxu0 0.0
    %3209 = vmatprep.subr.mxu0 0.0
    %3210 = vmatpush1.msra.mxu0 0.0
    %3211 = vmatprep.subr.mxu0 0.0
    %3212 = vmatpush1.msra.mxu0 0.0
    %3213 = vmatprep.subr.mxu0 0.0
    %3214 = vmatpush1.msra.mxu0 0.0
    %3215 = vmatprep.subr.mxu0 0.0
    %3216 = vmatpush1.msra.mxu0 0.0
    %3217 = vmatprep.subr.mxu0 0.0
    %3218 = vmatpush1.msra.mxu0 0.0
    %3219 = vmatprep.subr.mxu0 0.0
    %3220 = vmatpush1.msra.mxu0 0.0
    %3221 = vmatprep.subr.mxu0 0.0
    %3222 = vmatpush1.msra.mxu0 0.0
    %3223 = vmatprep.subr.mxu0 0.0
    %3224 = vmatpush1.msra.mxu0 0.0
    %3225 = vmatprep.subr.mxu0 0.0
    %3226 = vmatpush1.msra.mxu0 0.0
    %3227 = vmatprep.subr.mxu0 0.0
    %3228 = vmatpush1.msra.mxu0 0.0
    %3229 = vmatprep.subr.mxu0 0.0
    %3230 = vmatpush1.msra.mxu0 0.0
    %3231 = vmatprep.subr.mxu0 0.0
    %3232 = vmatpush1.msra.mxu0 0.0
    %3233 = vmatprep.subr.mxu0 0.0
    %3234 = vmatpush1.msra.mxu0 0.0
    %3235 = vmatprep.subr.mxu0 0.0
    %3236 = vmatpush1.msra.mxu0 0.0
    %3237 = vmatprep.subr.mxu0 0.0
    %3238 = vmatpush1.msra.mxu0 0.0
    %3239 = vmatprep.subr.mxu0 0.0
    %3240 = vmatpush1.msra.mxu0 0.0
    %3241 = vmatprep.subr.mxu0 0.0
    %3242 = vmatpush1.msra.mxu0 0.0
    %3243 = vmatprep.subr.mxu0 0.0
    %3244 = vmatpush1.msra.mxu0 0.0
    %3245 = vmatprep.subr.mxu0 0.0
    %3246 = vmatpush1.msra.mxu0 0.0
    %3247 = vmatprep.subr.mxu0 0.0
    %3248 = vmatpush1.msra.mxu0 0.0
    %3249 = vmatprep.subr.mxu0 0.0
    %3250 = vmatpush1.msra.mxu0 0.0
    %3251 = vmatprep.subr.mxu0 0.0
    %3252 = vmatpush1.msra.mxu0 0.0
    %3253 = vmatprep.subr.mxu0 0.0
    %3254 = vmatpush1.msra.mxu0 0.0
    %3255 = vmatprep.subr.mxu0 0.0
    %3256 = vmatpush1.msra.mxu0 0.0
    %3257 = vmatprep.subr.mxu0 0.0
    %3258 = vmatpush1.msra.mxu0 0.0
    %3259 = vmatprep.subr.mxu0 0.0
    %3260 = vmatpush1.msra.mxu0 0.0
    %3261 = vmatprep.subr.mxu0 0.0
    %3262 = vmatpush1.msra.mxu0 0.0
    %3263 = vmatprep.subr.mxu0 0.0
    %3264 = vmatpush1.msra.mxu0 0.0
    %3265 = vmatprep.subr.mxu0 0.0
    %3266 = vmatpush1.msra.mxu0 0.0
    %3267 = vmatprep.subr.mxu0 0.0
    %3268 = vmatpush1.msra.mxu0 0.0
    %3269 = vmatprep.mubr.f32.mxu0 0.0
    %3270 = vmatmul.mubr.f32.gmra.mrb[0].mxu0 %v3203
    %v3271 = vpop.f32.mrb[0].mxu0
    %v3272 = vadd.f32 0.0, %v3271
    %v3273 = vpop.f32.mrb[0].mxu0
    %3274 = vdwg.mxu0
    %v3276 = vsel %vm1308, %v3174, 0
    %3278 = vmatprep.subr.mxu0 0.0
    %3279 = vmatpush1.msra.mxu0 %v3039
    %3280 = vmatprep.subr.mxu0 0.0
    %3281 = vmatpush1.msra.mxu0 0.0
    %3282 = vmatprep.subr.mxu0 0.0
    %3283 = vmatpush1.msra.mxu0 0.0
    %3284 = vmatprep.subr.mxu0 0.0
    %3285 = vmatpush1.msra.mxu0 0.0
    %3286 = vmatprep.subr.mxu0 0.0
    %3287 = vmatpush1.msra.mxu0 0.0
    %3288 = vmatprep.subr.mxu0 0.0
    %3289 = vmatpush1.msra.mxu0 0.0
    %3290 = vmatprep.subr.mxu0 0.0
    %3291 = vmatpush1.msra.mxu0 0.0
    %3292 = vmatprep.subr.mxu0 0.0
    %3293 = vmatpush1.msra.mxu0 0.0
    %3294 = vmatprep.subr.mxu0 0.0
    %3295 = vmatpush1.msra.mxu0 0.0
    %3296 = vmatprep.subr.mxu0 0.0
    %3297 = vmatpush1.msra.mxu0 0.0
    %3298 = vmatprep.subr.mxu0 0.0
    %3299 = vmatpush1.msra.mxu0 0.0
    %3300 = vmatprep.subr.mxu0 0.0
    %3301 = vmatpush1.msra.mxu0 0.0
    %3302 = vmatprep.subr.mxu0 0.0
    %3303 = vmatpush1.msra.mxu0 0.0
    %3304 = vmatprep.subr.mxu0 0.0
    %3305 = vmatpush1.msra.mxu0 0.0
    %3306 = vmatprep.subr.mxu0 0.0
    %3307 = vmatpush1.msra.mxu0 0.0
    %3308 = vmatprep.subr.mxu0 0.0
    %3309 = vmatpush1.msra.mxu0 0.0
    %3310 = vmatprep.subr.mxu0 0.0
    %3311 = vmatpush1.msra.mxu0 0.0
    %3312 = vmatprep.subr.mxu0 0.0
    %3313 = vmatpush1.msra.mxu0 0.0
    %3314 = vmatprep.subr.mxu0 0.0
    %3315 = vmatpush1.msra.mxu0 0.0
    %3316 = vmatprep.subr.mxu0 0.0
    %3317 = vmatpush1.msra.mxu0 0.0
    %3318 = vmatprep.subr.mxu0 0.0
    %3319 = vmatpush1.msra.mxu0 0.0
    %3320 = vmatprep.subr.mxu0 0.0
    %3321 = vmatpush1.msra.mxu0 0.0
    %3322 = vmatprep.subr.mxu0 0.0
    %3323 = vmatpush1.msra.mxu0 0.0
    %3324 = vmatprep.subr.mxu0 0.0
    %3325 = vmatpush1.msra.mxu0 0.0
    %3326 = vmatprep.subr.mxu0 0.0
    %3327 = vmatpush1.msra.mxu0 0.0
    %3328 = vmatprep.subr.mxu0 0.0
    %3329 = vmatpush1.msra.mxu0 0.0
    %3330 = vmatprep.subr.mxu0 0.0
    %3331 = vmatpush1.msra.mxu0 0.0
    %3332 = vmatprep.subr.mxu0 0.0
    %3333 = vmatpush1.msra.mxu0 0.0
    %3334 = vmatprep.subr.mxu0 0.0
    %3335 = vmatpush1.msra.mxu0 0.0
    %3336 = vmatprep.subr.mxu0 0.0
    %3337 = vmatpush1.msra.mxu0 0.0
    %3338 = vmatprep.subr.mxu0 0.0
    %3339 = vmatpush1.msra.mxu0 0.0
    %3340 = vmatprep.subr.mxu0 0.0
    %3341 = vmatpush1.msra.mxu0 0.0
    %3342 = vmatprep.mubr.f32.mxu0 0.0
    %3343 = vmatmul.mubr.f32.gmra.mrb[0].mxu0 %v3276
    %v3344 = vpop.f32.mrb[0].mxu0
    %v3345 = vadd.f32 %v3272, %v3344
    %v3346 = vpop.f32.mrb[0].mxu0
    %3347 = vdwg.mxu0
    %v3348 = vmul.f32 %v3345, 0.5
    %3349 = vrot.lane.b32.xlu0 %v3039, 112
    %v3350 = vpop.permute.xlu0 %3349
    %v3352 = vadd.f32 %v3348, %v3350
    %v3353 = vmin.f32 %v3352, 0.0
    %vm3354 = vcmp.gt.f32.partialorder %v3352, 0.0
    %v3355 = vmul.f32 %v3353, 1.442695
    %v3356 = vpow.pop %v3355
    %v3357 = vsub.f32 %v3356, 1.0
    %v3358 = vsel %vm3354, %v3352, %v3357
    %v3359 = vld [vmem:[%s53] sm:$0xff]
    %v3360 = vld [vmem:[%s55] sm:$0xff]
    %v3361 = vld [vmem:[%s55 + $0x8] sm:$0xff]
    %v3363 = vsel %vm1308, %v2963, 0
    %3365 = vmatprep.subr.mxu0 0.0
    %3366 = vmatpush1.msra.mxu0 %v3359
    %3367 = vmatprep.subr.mxu0 0.0
    %3368 = vmatpush1.msra.mxu0 0.0
    %3369 = vmatprep.subr.mxu0 0.0
    %3370 = vmatpush1.msra.mxu0 0.0
    %3371 = vmatprep.subr.mxu0 0.0
    %3372 = vmatpush1.msra.mxu0 0.0
    %3373 = vmatprep.subr.mxu0 0.0
    %3374 = vmatpush1.msra.mxu0 0.0
    %3375 = vmatprep.subr.mxu0 0.0
    %3376 = vmatpush1.msra.mxu0 0.0
    %3377 = vmatprep.subr.mxu0 0.0
    %3378 = vmatpush1.msra.mxu0 0.0
    %3379 = vmatprep.subr.mxu0 0.0
    %3380 = vmatpush1.msra.mxu0 0.0
    %3381 = vmatprep.subr.mxu0 0.0
    %3382 = vmatpush1.msra.mxu0 0.0
    %3383 = vmatprep.subr.mxu0 0.0
    %3384 = vmatpush1.msra.mxu0 0.0
    %3385 = vmatprep.subr.mxu0 0.0
    %3386 = vmatpush1.msra.mxu0 0.0
    %3387 = vmatprep.subr.mxu0 0.0
    %3388 = vmatpush1.msra.mxu0 0.0
    %3389 = vmatprep.subr.mxu0 0.0
    %3390 = vmatpush1.msra.mxu0 0.0
    %3391 = vmatprep.subr.mxu0 0.0
    %3392 = vmatpush1.msra.mxu0 0.0
    %3393 = vmatprep.subr.mxu0 0.0
    %3394 = vmatpush1.msra.mxu0 0.0
    %3395 = vmatprep.subr.mxu0 0.0
    %3396 = vmatpush1.msra.mxu0 0.0
    %3397 = vmatprep.subr.mxu0 0.0
    %3398 = vmatpush1.msra.mxu0 0.0
    %3399 = vmatprep.subr.mxu0 0.0
    %3400 = vmatpush1.msra.mxu0 0.0
    %3401 = vmatprep.subr.mxu0 0.0
    %3402 = vmatpush1.msra.mxu0 0.0
    %3403 = vmatprep.subr.mxu0 0.0
    %3404 = vmatpush1.msra.mxu0 0.0
    %3405 = vmatprep.subr.mxu0 0.0
    %3406 = vmatpush1.msra.mxu0 0.0
    %3407 = vmatprep.subr.mxu0 0.0
    %3408 = vmatpush1.msra.mxu0 0.0
    %3409 = vmatprep.subr.mxu0 0.0
    %3410 = vmatpush1.msra.mxu0 0.0
    %3411 = vmatprep.subr.mxu0 0.0
    %3412 = vmatpush1.msra.mxu0 0.0
    %3413 = vmatprep.subr.mxu0 0.0
    %3414 = vmatpush1.msra.mxu0 0.0
    %3415 = vmatprep.subr.mxu0 0.0
    %3416 = vmatpush1.msra.mxu0 0.0
    %3417 = vmatprep.subr.mxu0 0.0
    %3418 = vmatpush1.msra.mxu0 0.0
    %3419 = vmatprep.subr.mxu0 0.0
    %3420 = vmatpush1.msra.mxu0 0.0
    %3421 = vmatprep.subr.mxu0 0.0
    %3422 = vmatpush1.msra.mxu0 0.0
    %3423 = vmatprep.subr.mxu0 0.0
    %3424 = vmatpush1.msra.mxu0 0.0
    %3425 = vmatprep.subr.mxu0 0.0
    %3426 = vmatpush1.msra.mxu0 0.0
    %3427 = vmatprep.subr.mxu0 0.0
    %3428 = vmatpush1.msra.mxu0 0.0
    %3429 = vmatprep.mubr.f32.mxu0 0.0
    %3430 = vmatmul.mubr.f32.gmra.mrb[0].mxu0 %v3363
    %v3431 = vpop.f32.mrb[0].mxu0
    %v3432 = vadd.f32 0.0, %v3431
    %v3433 = vpop.f32.mrb[0].mxu0
    %3434 = vdwg.mxu0
    %v3436 = vsel %vm338, %v3432, 0
    %3438 = vmatprep.subr.mxu0 0.0
    %3439 = vmatpush1.msra.mxu0 %v3360
    %3440 = vmatprep.subr.mxu0 0.0
    %3441 = vmatpush1.msra.mxu0 %v3361
    %3442 = vmatprep.subr.mxu0 0.0
    %3443 = vmatpush1.msra.mxu0 0.0
    %3444 = vmatprep.subr.mxu0 0.0
    %3445 = vmatpush1.msra.mxu0 0.0
    %3446 = vmatprep.subr.mxu0 0.0
    %3447 = vmatpush1.msra.mxu0 0.0
    %3448 = vmatprep.subr.mxu0 0.0
    %3449 = vmatpush1.msra.mxu0 0.0
    %3450 = vmatprep.subr.mxu0 0.0
    %3451 = vmatpush1.msra.mxu0 0.0
    %3452 = vmatprep.subr.mxu0 0.0
    %3453 = vmatpush1.msra.mxu0 0.0
    %3454 = vmatprep.subr.mxu0 0.0
    %3455 = vmatpush1.msra.mxu0 0.0
    %3456 = vmatprep.subr.mxu0 0.0
    %3457 = vmatpush1.msra.mxu0 0.0
    %3458 = vmatprep.subr.mxu0 0.0
    %3459 = vmatpush1.msra.mxu0 0.0
    %3460 = vmatprep.subr.mxu0 0.0
    %3461 = vmatpush1.msra.mxu0 0.0
    %3462 = vmatprep.subr.mxu0 0.0
    %3463 = vmatpush1.msra.mxu0 0.0
    %3464 = vmatprep.subr.mxu0 0.0
    %3465 = vmatpush1.msra.mxu0 0.0
    %3466 = vmatprep.subr.mxu0 0.0
    %3467 = vmatpush1.msra.mxu0 0.0
    %3468 = vmatprep.subr.mxu0 0.0
    %3469 = vmatpush1.msra.mxu0 0.0
    %3470 = vmatprep.subr.mxu0 0.0
    %3471 = vmatpush1.msra.mxu0 0.0
    %3472 = vmatprep.subr.mxu0 0.0
    %3473 = vmatpush1.msra.mxu0 0.0
    %3474 = vmatprep.subr.mxu0 0.0
    %3475 = vmatpush1.msra.mxu0 0.0
    %3476 = vmatprep.subr.mxu0 0.0
    %3477 = vmatpush1.msra.mxu0 0.0
    %3478 = vmatprep.subr.mxu0 0.0
    %3479 = vmatpush1.msra.mxu0 0.0
    %3480 = vmatprep.subr.mxu0 0.0
    %3481 = vmatpush1.msra.mxu0 0.0
    %3482 = vmatprep.subr.mxu0 0.0
    %3483 = vmatpush1.msra.mxu0 0.0
    %3484 = vmatprep.subr.mxu0 0.0
    %3485 = vmatpush1.msra.mxu0 0.0
    %3486 = vmatprep.subr.mxu0 0.0
    %3487 = vmatpush1.msra.mxu0 0.0
    %3488 = vmatprep.subr.mxu0 0.0
    %3489 = vmatpush1.msra.mxu0 0.0
    %3490 = vmatprep.subr.mxu0 0.0
    %3491 = vmatpush1.msra.mxu0 0.0
    %3492 = vmatprep.subr.mxu0 0.0
    %3493 = vmatpush1.msra.mxu0 0.0
    %3494 = vmatprep.subr.mxu0 0.0
    %3495 = vmatpush1.msra.mxu0 0.0
    %3496 = vmatprep.subr.mxu0 0.0
    %3497 = vmatpush1.msra.mxu0 0.0
    %3498 = vmatprep.subr.mxu0 0.0
    %3499 = vmatpush1.msra.mxu0 0.0
    %3500 = vmatprep.subr.mxu0 0.0
    %3501 = vmatpush1.msra.mxu0 0.0
    %3502 = vmatprep.mubr.f32.mxu0 0.0
    %3503 = vmatmul.mubr.f32.gmra.mrb[0].mxu0 %v3436
    %v3504 = vpop.f32.mrb[0].mxu0
    %v3505 = vadd.f32 0.0, %v3504
    %v3506 = vpop.f32.mrb[0].mxu0
    %3507 = vdwg.mxu0
    %3509 = vrot.lane.b32.xlu0 %v3505, 126
    %v3510 = vpop.permute.xlu0 %3509
    %3512 = vxpose.xlu0.b32.start [1/16] %v3510, 128
    %3513 = vxpose.xlu0.b32.cont [2/16] 0.0, 128
    %3514 = vxpose.xlu0.b32.cont [3/16] 0.0, 128
    %3515 = vxpose.xlu0.b32.cont [4/16] 0.0, 128
    %3516 = vxpose.xlu0.b32.cont [5/16] 0.0, 128
    %3517 = vxpose.xlu0.b32.cont [6/16] 0.0, 128
    %3518 = vxpose.xlu0.b32.cont [7/16] 0.0, 128
    %3519 = vxpose.xlu0.b32.cont [8/16] 0.0, 128
    %3520 = vxpose.xlu0.b32.cont [9/16] 0.0, 128
    %3521 = vxpose.xlu0.b32.cont [10/16] 0.0, 128
    %3522 = vxpose.xlu0.b32.cont [11/16] 0.0, 128
    %3523 = vxpose.xlu0.b32.cont [12/16] 0.0, 128
    %3524 = vxpose.xlu0.b32.cont [13/16] 0.0, 128
    %3525 = vxpose.xlu0.b32.cont [14/16] 0.0, 128
    %3526 = vxpose.xlu0.b32.cont [15/16] 0.0, 128
    %3527 = vxpose.xlu0.b32.end [16/16] 0.0, 128
    %v3528 = vpop.trf.xlu0
    %v3529 = vpop.trf.xlu0
    %v3530 = vpop.trf.xlu0
    %v3531 = vpop.trf.xlu0
    %v3532 = vpop.trf.xlu0
    %v3533 = vpop.trf.xlu0
    %v3534 = vpop.trf.xlu0
    %v3535 = vpop.trf.xlu0
    %v3536 = vpop.trf.xlu0
    %v3537 = vpop.trf.xlu0
    %v3538 = vpop.trf.xlu0
    %v3539 = vpop.trf.xlu0
    %v3540 = vpop.trf.xlu0
    %v3541 = vpop.trf.xlu0
    %v3542 = vpop.trf.xlu0
    %v3543 = vpop.trf.xlu0
    %3544 = vset.pattern.permute.xlu0 0
    %3545 = vperm.xlu0 %3544, %v3505
    %v3546 = vpop.permute.xlu0 %3545
    %v3548 = vlaneseq
    %v3549 = vshrl.u32 %v3548, 7
    %v3550 = vsub.s32 0, %v3549
    %v3551 = vrot.slane %v3528, %v3550
    %v3552 = vadd.f32 %v3546, %v3551
    %vm3553 = vcmp.gt.f32.partialorder %v3552, 0.0
    %v3554 = vmul.f32 %v3552, 0.2
    %v3555 = vsel %vm3553, %v3552, %v3554
    %v3556 = vadd.f32 %v3555, %v2570
    %v3557 = vsel %vm1308, %v3556, -inf
    %3558 = vmax.xlane.f32.xlu0 %v3557
    %v3559 = vpop.xlane.xlu0 %3558
    %v3560 = vsub.f32 %v3556, %v3559
    %v3561 = vmul.f32 %v3560, 1.442695
    %v3562 = vpow.pop %v3561
    %v3563 = vsel %vm1308, %v3562, 0.0
    %3564 = vadd.xlane.f32.xlu0 %v3563
    %v3565 = vpop.xlane.xlu0 %3564
    %v3566 = vrcp.pop %v3565
    %v3567 = vmul.f32 %v3562, %v3566
    %3568 = vset.pattern.permute.xlu0 1
    %3569 = vperm.xlu0 %3568, %v3505
    %v3570 = vpop.permute.xlu0 %3569
    %v3572 = vlaneseq
    %v3573 = vshrl.u32 %v3572, 7
    %v3574 = vsub.s32 1, %v3573
    %v3575 = vrot.slane %v3528, %v3574
    %v3576 = vadd.f32 %v3570, %v3575
    %vm3577 = vcmp.gt.f32.partialorder %v3576, 0.0
    %v3578 = vmul.f32 %v3576, 0.2
    %v3579 = vsel %vm3577, %v3576, %v3578
    %v3580 = vadd.f32 %v3579, %v2570
    %v3581 = vsel %vm1308, %v3580, -inf
    %3582 = vmax.xlane.f32.xlu0 %v3581
    %v3583 = vpop.xlane.xlu0 %3582
    %v3584 = vsub.f32 %v3580, %v3583
    %v3585 = vmul.f32 %v3584, 1.442695
    %v3586 = vpow.pop %v3585
    %v3587 = vsel %vm1308, %v3586, 0.0
    %3588 = vadd.xlane.f32.xlu0 %v3587
    %v3589 = vpop.xlane.xlu0 %3588
    %v3590 = vrcp.pop %v3589
    %v3591 = vmul.f32 %v3586, %v3590
    %3592 = vrot.lane.b32.xlu0 %v3432, 120
    %v3593 = vpop.permute.xlu0 %3592
    %v3596 = vsel %vm1308, %v3591, 0
    %3598 = vmatprep.subr.mxu0 0.0
    %3599 = vmatpush1.msra.mxu0 %v3593
    %3600 = vmatprep.subr.mxu0 0.0
    %3601 = vmatpush1.msra.mxu0 0.0
    %3602 = vmatprep.subr.mxu0 0.0
    %3603 = vmatpush1.msra.mxu0 0.0
    %3604 = vmatprep.subr.mxu0 0.0
    %3605 = vmatpush1.msra.mxu0 0.0
    %3606 = vmatprep.subr.mxu0 0.0
    %3607 = vmatpush1.msra.mxu0 0.0
    %3608 = vmatprep.subr.mxu0 0.0
    %3609 = vmatpush1.msra.mxu0 0.0
    %3610 = vmatprep.subr.mxu0 0.0
    %3611 = vmatpush1.msra.mxu0 0.0
    %3612 = vmatprep.subr.mxu0 0.0
    %3613 = vmatpush1.msra.mxu0 0.0
    %3614 = vmatprep.subr.mxu0 0.0
    %3615 = vmatpush1.msra.mxu0 0.0
    %3616 = vmatprep.subr.mxu0 0.0
    %3617 = vmatpush1.msra.mxu0 0.0
    %3618 = vmatprep.subr.mxu0 0.0
    %3619 = vmatpush1.msra.mxu0 0.0
    %3620 = vmatprep.subr.mxu0 0.0
    %3621 = vmatpush1.msra.mxu0 0.0
    %3622 = vmatprep.subr.mxu0 0.0
    %3623 = vmatpush1.msra.mxu0 0.0
    %3624 = vmatprep.subr.mxu0 0.0
    %3625 = vmatpush1.msra.mxu0 0.0
    %3626 = vmatprep.subr.mxu0 0.0
    %3627 = vmatpush1.msra.mxu0 0.0
    %3628 = vmatprep.subr.mxu0 0.0
    %3629 = vmatpush1.msra.mxu0 0.0
    %3630 = vmatprep.subr.mxu0 0.0
    %3631 = vmatpush1.msra.mxu0 0.0
    %3632 = vmatprep.subr.mxu0 0.0
    %3633 = vmatpush1.msra.mxu0 0.0
    %3634 = vmatprep.subr.mxu0 0.0
    %3635 = vmatpush1.msra.mxu0 0.0
    %3636 = vmatprep.subr.mxu0 0.0
    %3637 = vmatpush1.msra.mxu0 0.0
    %3638 = vmatprep.subr.mxu0 0.0
    %3639 = vmatpush1.msra.mxu0 0.0
    %3640 = vmatprep.subr.mxu0 0.0
    %3641 = vmatpush1.msra.mxu0 0.0
    %3642 = vmatprep.subr.mxu0 0.0
    %3643 = vmatpush1.msra.mxu0 0.0
    %3644 = vmatprep.subr.mxu0 0.0
    %3645 = vmatpush1.msra.mxu0 0.0
    %3646 = vmatprep.subr.mxu0 0.0
    %3647 = vmatpush1.msra.mxu0 0.0
    %3648 = vmatprep.subr.mxu0 0.0
    %3649 = vmatpush1.msra.mxu0 0.0
    %3650 = vmatprep.subr.mxu0 0.0
    %3651 = vmatpush1.msra.mxu0 0.0
    %3652 = vmatprep.subr.mxu0 0.0
    %3653 = vmatpush1.msra.mxu0 0.0
    %3654 = vmatprep.subr.mxu0 0.0
    %3655 = vmatpush1.msra.mxu0 0.0
    %3656 = vmatprep.subr.mxu0 0.0
    %3657 = vmatpush1.msra.mxu0 0.0
    %3658 = vmatprep.subr.mxu0 0.0
    %3659 = vmatpush1.msra.mxu0 0.0
    %3660 = vmatprep.subr.mxu0 0.0
    %3661 = vmatpush1.msra.mxu0 0.0
    %3662 = vmatprep.mubr.f32.mxu0 0.0
    %3663 = vmatmul.mubr.f32.gmra.mrb[0].mxu0 %v3596
    %v3664 = vpop.f32.mrb[0].mxu0
    %v3665 = vadd.f32 0.0, %v3664
    %v3666 = vpop.f32.mrb[0].mxu0
    %3667 = vdwg.mxu0
    %v3669 = vsel %vm1308, %v3567, 0
    %3671 = vmatprep.subr.mxu0 0.0
    %3672 = vmatpush1.msra.mxu0 %v3432
    %3673 = vmatprep.subr.mxu0 0.0
    %3674 = vmatpush1.msra.mxu0 0.0
    %3675 = vmatprep.subr.mxu0 0.0
    %3676 = vmatpush1.msra.mxu0 0.0
    %3677 = vmatprep.subr.mxu0 0.0
    %3678 = vmatpush1.msra.mxu0 0.0
    %3679 = vmatprep.subr.mxu0 0.0
    %3680 = vmatpush1.msra.mxu0 0.0
    %3681 = vmatprep.subr.mxu0 0.0
    %3682 = vmatpush1.msra.mxu0 0.0
    %3683 = vmatprep.subr.mxu0 0.0
    %3684 = vmatpush1.msra.mxu0 0.0
    %3685 = vmatprep.subr.mxu0 0.0
    %3686 = vmatpush1.msra.mxu0 0.0
    %3687 = vmatprep.subr.mxu0 0.0
    %3688 = vmatpush1.msra.mxu0 0.0
    %3689 = vmatprep.subr.mxu0 0.0
    %3690 = vmatpush1.msra.mxu0 0.0
    %3691 = vmatprep.subr.mxu0 0.0
    %3692 = vmatpush1.msra.mxu0 0.0
    %3693 = vmatprep.subr.mxu0 0.0
    %3694 = vmatpush1.msra.mxu0 0.0
    %3695 = vmatprep.subr.mxu0 0.0
    %3696 = vmatpush1.msra.mxu0 0.0
    %3697 = vmatprep.subr.mxu0 0.0
    %3698 = vmatpush1.msra.mxu0 0.0
    %3699 = vmatprep.subr.mxu0 0.0
    %3700 = vmatpush1.msra.mxu0 0.0
    %3701 = vmatprep.subr.mxu0 0.0
    %3702 = vmatpush1.msra.mxu0 0.0
    %3703 = vmatprep.subr.mxu0 0.0
    %3704 = vmatpush1.msra.mxu0 0.0
    %3705 = vmatprep.subr.mxu0 0.0
    %3706 = vmatpush1.msra.mxu0 0.0
    %3707 = vmatprep.subr.mxu0 0.0
    %3708 = vmatpush1.msra.mxu0 0.0
    %3709 = vmatprep.subr.mxu0 0.0
    %3710 = vmatpush1.msra.mxu0 0.0
    %3711 = vmatprep.subr.mxu0 0.0
    %3712 = vmatpush1.msra.mxu0 0.0
    %3713 = vmatprep.subr.mxu0 0.0
    %3714 = vmatpush1.msra.mxu0 0.0
    %3715 = vmatprep.subr.mxu0 0.0
    %3716 = vmatpush1.msra.mxu0 0.0
    %3717 = vmatprep.subr.mxu0 0.0
    %3718 = vmatpush1.msra.mxu0 0.0
    %3719 = vmatprep.subr.mxu0 0.0
    %3720 = vmatpush1.msra.mxu0 0.0
    %3721 = vmatprep.subr.mxu0 0.0
    %3722 = vmatpush1.msra.mxu0 0.0
    %3723 = vmatprep.subr.mxu0 0.0
    %3724 = vmatpush1.msra.mxu0 0.0
    %3725 = vmatprep.subr.mxu0 0.0
    %3726 = vmatpush1.msra.mxu0 0.0
    %3727 = vmatprep.subr.mxu0 0.0
    %3728 = vmatpush1.msra.mxu0 0.0
    %3729 = vmatprep.subr.mxu0 0.0
    %3730 = vmatpush1.msra.mxu0 0.0
    %3731 = vmatprep.subr.mxu0 0.0
    %3732 = vmatpush1.msra.mxu0 0.0
    %3733 = vmatprep.subr.mxu0 0.0
    %3734 = vmatpush1.msra.mxu0 0.0
    %3735 = vmatprep.mubr.f32.mxu0 0.0
    %3736 = vmatmul.mubr.f32.gmra.mrb[0].mxu0 %v3669
    %v3737 = vpop.f32.mrb[0].mxu0
    %v3738 = vadd.f32 %v3665, %v3737
    %v3739 = vpop.f32.mrb[0].mxu0
    %3740 = vdwg.mxu0
    %v3741 = vmul.f32 %v3738, 0.5
    %3742 = vrot.lane.b32.xlu0 %v3432, 112
    %v3743 = vpop.permute.xlu0 %3742
    %v3745 = vadd.f32 %v3741, %v3743
    %v3746 = vmin.f32 %v3745, 0.0
    %vm3747 = vcmp.gt.f32.partialorder %v3745, 0.0
    %v3748 = vmul.f32 %v3746, 1.442695
    %v3749 = vpow.pop %v3748
    %v3750 = vsub.f32 %v3749, 1.0
    %v3751 = vsel %vm3747, %v3745, %v3750
    %v3752 = vld [vmem:[%s57] sm:$0xff]
    %v3753 = vld [vmem:[%s59] sm:$0xff]
    %v3754 = vld [vmem:[%s59 + $0x8] sm:$0xff]
    %v3756 = vsel %vm1308, %v3358, 0
    %3758 = vmatprep.subr.mxu0 0.0
    %3759 = vmatpush1.msra.mxu0 %v3752
    %3760 = vmatprep.subr.mxu0 0.0
    %3761 = vmatpush1.msra.mxu0 0.0
    %3762 = vmatprep.subr.mxu0 0.0
    %3763 = vmatpush1.msra.mxu0 0.0
    %3764 = vmatprep.subr.mxu0 0.0
    %3765 = vmatpush1.msra.mxu0 0.0
    %3766 = vmatprep.subr.mxu0 0.0
    %3767 = vmatpush1.msra.mxu0 0.0
    %3768 = vmatprep.subr.mxu0 0.0
    %3769 = vmatpush1.msra.mxu0 0.0
    %3770 = vmatprep.subr.mxu0 0.0
    %3771 = vmatpush1.msra.mxu0 0.0
    %3772 = vmatprep.subr.mxu0 0.0
    %3773 = vmatpush1.msra.mxu0 0.0
    %3774 = vmatprep.subr.mxu0 0.0
    %3775 = vmatpush1.msra.mxu0 0.0
    %3776 = vmatprep.subr.mxu0 0.0
    %3777 = vmatpush1.msra.mxu0 0.0
    %3778 = vmatprep.subr.mxu0 0.0
    %3779 = vmatpush1.msra.mxu0 0.0
    %3780 = vmatprep.subr.mxu0 0.0
    %3781 = vmatpush1.msra.mxu0 0.0
    %3782 = vmatprep.subr.mxu0 0.0
    %3783 = vmatpush1.msra.mxu0 0.0
    %3784 = vmatprep.subr.mxu0 0.0
    %3785 = vmatpush1.msra.mxu0 0.0
    %3786 = vmatprep.subr.mxu0 0.0
    %3787 = vmatpush1.msra.mxu0 0.0
    %3788 = vmatprep.subr.mxu0 0.0
    %3789 = vmatpush1.msra.mxu0 0.0
    %3790 = vmatprep.subr.mxu0 0.0
    %3791 = vmatpush1.msra.mxu0 0.0
    %3792 = vmatprep.subr.mxu0 0.0
    %3793 = vmatpush1.msra.mxu0 0.0
    %3794 = vmatprep.subr.mxu0 0.0
    %3795 = vmatpush1.msra.mxu0 0.0
    %3796 = vmatprep.subr.mxu0 0.0
    %3797 = vmatpush1.msra.mxu0 0.0
    %3798 = vmatprep.subr.mxu0 0.0
    %3799 = vmatpush1.msra.mxu0 0.0
    %3800 = vmatprep.subr.mxu0 0.0
    %3801 = vmatpush1.msra.mxu0 0.0
    %3802 = vmatprep.subr.mxu0 0.0
    %3803 = vmatpush1.msra.mxu0 0.0
    %3804 = vmatprep.subr.mxu0 0.0
    %3805 = vmatpush1.msra.mxu0 0.0
    %3806 = vmatprep.subr.mxu0 0.0
    %3807 = vmatpush1.msra.mxu0 0.0
    %3808 = vmatprep.subr.mxu0 0.0
    %3809 = vmatpush1.msra.mxu0 0.0
    %3810 = vmatprep.subr.mxu0 0.0
    %3811 = vmatpush1.msra.mxu0 0.0
    %3812 = vmatprep.subr.mxu0 0.0
    %3813 = vmatpush1.msra.mxu0 0.0
    %3814 = vmatprep.subr.mxu0 0.0
    %3815 = vmatpush1.msra.mxu0 0.0
    %3816 = vmatprep.subr.mxu0 0.0
    %3817 = vmatpush1.msra.mxu0 0.0
    %3818 = vmatprep.subr.mxu0 0.0
    %3819 = vmatpush1.msra.mxu0 0.0
    %3820 = vmatprep.subr.mxu0 0.0
    %3821 = vmatpush1.msra.mxu0 0.0
    %3822 = vmatprep.mubr.f32.mxu0 0.0
    %3823 = vmatmul.mubr.f32.gmra.mrb[0].mxu0 %v3756
    %v3824 = vpop.f32.mrb[0].mxu0
    %v3825 = vadd.f32 0.0, %v3824
    %v3826 = vpop.f32.mrb[0].mxu0
    %3827 = vdwg.mxu0
    %v3829 = vsel %vm338, %v3825, 0
    %3831 = vmatprep.subr.mxu0 0.0
    %3832 = vmatpush1.msra.mxu0 %v3753
    %3833 = vmatprep.subr.mxu0 0.0
    %3834 = vmatpush1.msra.mxu0 %v3754
    %3835 = vmatprep.subr.mxu0 0.0
    %3836 = vmatpush1.msra.mxu0 0.0
    %3837 = vmatprep.subr.mxu0 0.0
    %3838 = vmatpush1.msra.mxu0 0.0
    %3839 = vmatprep.subr.mxu0 0.0
    %3840 = vmatpush1.msra.mxu0 0.0
    %3841 = vmatprep.subr.mxu0 0.0
    %3842 = vmatpush1.msra.mxu0 0.0
    %3843 = vmatprep.subr.mxu0 0.0
    %3844 = vmatpush1.msra.mxu0 0.0
    %3845 = vmatprep.subr.mxu0 0.0
    %3846 = vmatpush1.msra.mxu0 0.0
    %3847 = vmatprep.subr.mxu0 0.0
    %3848 = vmatpush1.msra.mxu0 0.0
    %3849 = vmatprep.subr.mxu0 0.0
    %3850 = vmatpush1.msra.mxu0 0.0
    %3851 = vmatprep.subr.mxu0 0.0
    %3852 = vmatpush1.msra.mxu0 0.0
    %3853 = vmatprep.subr.mxu0 0.0
    %3854 = vmatpush1.msra.mxu0 0.0
    %3855 = vmatprep.subr.mxu0 0.0
    %3856 = vmatpush1.msra.mxu0 0.0
    %3857 = vmatprep.subr.mxu0 0.0
    %3858 = vmatpush1.msra.mxu0 0.0
    %3859 = vmatprep.subr.mxu0 0.0
    %3860 = vmatpush1.msra.mxu0 0.0
    %3861 = vmatprep.subr.mxu0 0.0
    %3862 = vmatpush1.msra.mxu0 0.0
    %3863 = vmatprep.subr.mxu0 0.0
    %3864 = vmatpush1.msra.mxu0 0.0
    %3865 = vmatprep.subr.mxu0 0.0
    %3866 = vmatpush1.msra.mxu0 0.0
    %3867 = vmatprep.subr.mxu0 0.0
    %3868 = vmatpush1.msra.mxu0 0.0
    %3869 = vmatprep.subr.mxu0 0.0
    %3870 = vmatpush1.msra.mxu0 0.0
    %3871 = vmatprep.subr.mxu0 0.0
    %3872 = vmatpush1.msra.mxu0 0.0
    %3873 = vmatprep.subr.mxu0 0.0
    %3874 = vmatpush1.msra.mxu0 0.0
    %3875 = vmatprep.subr.mxu0 0.0
    %3876 = vmatpush1.msra.mxu0 0.0
    %3877 = vmatprep.subr.mxu0 0.0
    %3878 = vmatpush1.msra.mxu0 0.0
    %3879 = vmatprep.subr.mxu0 0.0
    %3880 = vmatpush1.msra.mxu0 0.0
    %3881 = vmatprep.subr.mxu0 0.0
    %3882 = vmatpush1.msra.mxu0 0.0
    %3883 = vmatprep.subr.mxu0 0.0
    %3884 = vmatpush1.msra.mxu0 0.0
    %3885 = vmatprep.subr.mxu0 0.0
    %3886 = vmatpush1.msra.mxu0 0.0
    %3887 = vmatprep.subr.mxu0 0.0
    %3888 = vmatpush1.msra.mxu0 0.0
    %3889 = vmatprep.subr.mxu0 0.0
    %3890 = vmatpush1.msra.mxu0 0.0
    %3891 = vmatprep.subr.mxu0 0.0
    %3892 = vmatpush1.msra.mxu0 0.0
    %3893 = vmatprep.subr.mxu0 0.0
    %3894 = vmatpush1.msra.mxu0 0.0
    %3895 = vmatprep.mubr.f32.mxu0 0.0
    %3896 = vmatmul.mubr.f32.gmra.mrb[0].mxu0 %v3829
    %v3897 = vpop.f32.mrb[0].mxu0
    %v3898 = vadd.f32 0.0, %v3897
    %v3899 = vpop.f32.mrb[0].mxu0
    %3900 = vdwg.mxu0
    %3902 = vrot.lane.b32.xlu0 %v3898, 126
    %v3903 = vpop.permute.xlu0 %3902
    %3905 = vxpose.xlu0.b32.start [1/16] %v3903, 128
    %3906 = vxpose.xlu0.b32.cont [2/16] 0.0, 128
    %3907 = vxpose.xlu0.b32.cont [3/16] 0.0, 128
    %3908 = vxpose.xlu0.b32.cont [4/16] 0.0, 128
    %3909 = vxpose.xlu0.b32.cont [5/16] 0.0, 128
    %3910 = vxpose.xlu0.b32.cont [6/16] 0.0, 128
    %3911 = vxpose.xlu0.b32.cont [7/16] 0.0, 128
    %3912 = vxpose.xlu0.b32.cont [8/16] 0.0, 128
    %3913 = vxpose.xlu0.b32.cont [9/16] 0.0, 128
    %3914 = vxpose.xlu0.b32.cont [10/16] 0.0, 128
    %3915 = vxpose.xlu0.b32.cont [11/16] 0.0, 128
    %3916 = vxpose.xlu0.b32.cont [12/16] 0.0, 128
    %3917 = vxpose.xlu0.b32.cont [13/16] 0.0, 128
    %3918 = vxpose.xlu0.b32.cont [14/16] 0.0, 128
    %3919 = vxpose.xlu0.b32.cont [15/16] 0.0, 128
    %3920 = vxpose.xlu0.b32.end [16/16] 0.0, 128
    %v3921 = vpop.trf.xlu0
    %v3922 = vpop.trf.xlu0
    %v3923 = vpop.trf.xlu0
    %v3924 = vpop.trf.xlu0
    %v3925 = vpop.trf.xlu0
    %v3926 = vpop.trf.xlu0
    %v3927 = vpop.trf.xlu0
    %v3928 = vpop.trf.xlu0
    %v3929 = vpop.trf.xlu0
    %v3930 = vpop.trf.xlu0
    %v3931 = vpop.trf.xlu0
    %v3932 = vpop.trf.xlu0
    %v3933 = vpop.trf.xlu0
    %v3934 = vpop.trf.xlu0
    %v3935 = vpop.trf.xlu0
    %v3936 = vpop.trf.xlu0
    %3937 = vset.pattern.permute.xlu0 0
    %3938 = vperm.xlu0 %3937, %v3898
    %v3939 = vpop.permute.xlu0 %3938
    %v3941 = vlaneseq
    %v3942 = vshrl.u32 %v3941, 7
    %v3943 = vsub.s32 0, %v3942
    %v3944 = vrot.slane %v3921, %v3943
    %v3945 = vadd.f32 %v3939, %v3944
    %vm3946 = vcmp.gt.f32.partialorder %v3945, 0.0
    %v3947 = vmul.f32 %v3945, 0.2
    %v3948 = vsel %vm3946, %v3945, %v3947
    %v3949 = vadd.f32 %v3948, %v2570
    %v3950 = vsel %vm1308, %v3949, -inf
    %3951 = vmax.xlane.f32.xlu0 %v3950
    %v3952 = vpop.xlane.xlu0 %3951
    %v3953 = vsub.f32 %v3949, %v3952
    %v3954 = vmul.f32 %v3953, 1.442695
    %v3955 = vpow.pop %v3954
    %v3956 = vsel %vm1308, %v3955, 0.0
    %3957 = vadd.xlane.f32.xlu0 %v3956
    %v3958 = vpop.xlane.xlu0 %3957
    %v3959 = vrcp.pop %v3958
    %v3960 = vmul.f32 %v3955, %v3959
    %3961 = vset.pattern.permute.xlu0 1
    %3962 = vperm.xlu0 %3961, %v3898
    %v3963 = vpop.permute.xlu0 %3962
    %v3965 = vlaneseq
    %v3966 = vshrl.u32 %v3965, 7
    %v3967 = vsub.s32 1, %v3966
    %v3968 = vrot.slane %v3921, %v3967
    %v3969 = vadd.f32 %v3963, %v3968
    %vm3970 = vcmp.gt.f32.partialorder %v3969, 0.0
    %v3971 = vmul.f32 %v3969, 0.2
    %v3972 = vsel %vm3970, %v3969, %v3971
    %v3973 = vadd.f32 %v3972, %v2570
    %v3974 = vsel %vm1308, %v3973, -inf
    %3975 = vmax.xlane.f32.xlu0 %v3974
    %v3976 = vpop.xlane.xlu0 %3975
    %v3977 = vsub.f32 %v3973, %v3976
    %v3978 = vmul.f32 %v3977, 1.442695
    %v3979 = vpow.pop %v3978
    %v3980 = vsel %vm1308, %v3979, 0.0
    %3981 = vadd.xlane.f32.xlu0 %v3980
    %v3982 = vpop.xlane.xlu0 %3981
    %v3983 = vrcp.pop %v3982
    %v3984 = vmul.f32 %v3979, %v3983
    %3985 = vrot.lane.b32.xlu0 %v3825, 120
    %v3986 = vpop.permute.xlu0 %3985
    %v3989 = vsel %vm1308, %v3984, 0
    %3991 = vmatprep.subr.mxu0 0.0
    %3992 = vmatpush1.msra.mxu0 %v3986
    %3993 = vmatprep.subr.mxu0 0.0
    %3994 = vmatpush1.msra.mxu0 0.0
    %3995 = vmatprep.subr.mxu0 0.0
    %3996 = vmatpush1.msra.mxu0 0.0
    %3997 = vmatprep.subr.mxu0 0.0
    %3998 = vmatpush1.msra.mxu0 0.0
    %3999 = vmatprep.subr.mxu0 0.0
    %4000 = vmatpush1.msra.mxu0 0.0
    %4001 = vmatprep.subr.mxu0 0.0
    %4002 = vmatpush1.msra.mxu0 0.0
    %4003 = vmatprep.subr.mxu0 0.0
    %4004 = vmatpush1.msra.mxu0 0.0
    %4005 = vmatprep.subr.mxu0 0.0
    %4006 = vmatpush1.msra.mxu0 0.0
    %4007 = vmatprep.subr.mxu0 0.0
    %4008 = vmatpush1.msra.mxu0 0.0
    %4009 = vmatprep.subr.mxu0 0.0
    %4010 = vmatpush1.msra.mxu0 0.0
    %4011 = vmatprep.subr.mxu0 0.0
    %4012 = vmatpush1.msra.mxu0 0.0
    %4013 = vmatprep.subr.mxu0 0.0
    %4014 = vmatpush1.msra.mxu0 0.0
    %4015 = vmatprep.subr.mxu0 0.0
    %4016 = vmatpush1.msra.mxu0 0.0
    %4017 = vmatprep.subr.mxu0 0.0
    %4018 = vmatpush1.msra.mxu0 0.0
    %4019 = vmatprep.subr.mxu0 0.0
    %4020 = vmatpush1.msra.mxu0 0.0
    %4021 = vmatprep.subr.mxu0 0.0
    %4022 = vmatpush1.msra.mxu0 0.0
    %4023 = vmatprep.subr.mxu0 0.0
    %4024 = vmatpush1.msra.mxu0 0.0
    %4025 = vmatprep.subr.mxu0 0.0
    %4026 = vmatpush1.msra.mxu0 0.0
    %4027 = vmatprep.subr.mxu0 0.0
    %4028 = vmatpush1.msra.mxu0 0.0
    %4029 = vmatprep.subr.mxu0 0.0
    %4030 = vmatpush1.msra.mxu0 0.0
    %4031 = vmatprep.subr.mxu0 0.0
    %4032 = vmatpush1.msra.mxu0 0.0
    %4033 = vmatprep.subr.mxu0 0.0
    %4034 = vmatpush1.msra.mxu0 0.0
    %4035 = vmatprep.subr.mxu0 0.0
    %4036 = vmatpush1.msra.mxu0 0.0
    %4037 = vmatprep.subr.mxu0 0.0
    %4038 = vmatpush1.msra.mxu0 0.0
    %4039 = vmatprep.subr.mxu0 0.0
    %4040 = vmatpush1.msra.mxu0 0.0
    %4041 = vmatprep.subr.mxu0 0.0
    %4042 = vmatpush1.msra.mxu0 0.0
    %4043 = vmatprep.subr.mxu0 0.0
    %4044 = vmatpush1.msra.mxu0 0.0
    %4045 = vmatprep.subr.mxu0 0.0
    %4046 = vmatpush1.msra.mxu0 0.0
    %4047 = vmatprep.subr.mxu0 0.0
    %4048 = vmatpush1.msra.mxu0 0.0
    %4049 = vmatprep.subr.mxu0 0.0
    %4050 = vmatpush1.msra.mxu0 0.0
    %4051 = vmatprep.subr.mxu0 0.0
    %4052 = vmatpush1.msra.mxu0 0.0
    %4053 = vmatprep.subr.mxu0 0.0
    %4054 = vmatpush1.msra.mxu0 0.0
    %4055 = vmatprep.mubr.f32.mxu0 0.0
    %4056 = vmatmul.mubr.f32.gmra.mrb[0].mxu0 %v3989
    %v4057 = vpop.f32.mrb[0].mxu0
    %v4058 = vadd.f32 0.0, %v4057
    %v4059 = vpop.f32.mrb[0].mxu0
    %4060 = vdwg.mxu0
    %v4062 = vsel %vm1308, %v3960, 0
    %4064 = vmatprep.subr.mxu0 0.0
    %4065 = vmatpush1.msra.mxu0 %v3825
    %4066 = vmatprep.subr.mxu0 0.0
    %4067 = vmatpush1.msra.mxu0 0.0
    %4068 = vmatprep.subr.mxu0 0.0
    %4069 = vmatpush1.msra.mxu0 0.0
    %4070 = vmatprep.subr.mxu0 0.0
    %4071 = vmatpush1.msra.mxu0 0.0
    %4072 = vmatprep.subr.mxu0 0.0
    %4073 = vmatpush1.msra.mxu0 0.0
    %4074 = vmatprep.subr.mxu0 0.0
    %4075 = vmatpush1.msra.mxu0 0.0
    %4076 = vmatprep.subr.mxu0 0.0
    %4077 = vmatpush1.msra.mxu0 0.0
    %4078 = vmatprep.subr.mxu0 0.0
    %4079 = vmatpush1.msra.mxu0 0.0
    %4080 = vmatprep.subr.mxu0 0.0
    %4081 = vmatpush1.msra.mxu0 0.0
    %4082 = vmatprep.subr.mxu0 0.0
    %4083 = vmatpush1.msra.mxu0 0.0
    %4084 = vmatprep.subr.mxu0 0.0
    %4085 = vmatpush1.msra.mxu0 0.0
    %4086 = vmatprep.subr.mxu0 0.0
    %4087 = vmatpush1.msra.mxu0 0.0
    %4088 = vmatprep.subr.mxu0 0.0
    %4089 = vmatpush1.msra.mxu0 0.0
    %4090 = vmatprep.subr.mxu0 0.0
    %4091 = vmatpush1.msra.mxu0 0.0
    %4092 = vmatprep.subr.mxu0 0.0
    %4093 = vmatpush1.msra.mxu0 0.0
    %4094 = vmatprep.subr.mxu0 0.0
    %4095 = vmatpush1.msra.mxu0 0.0
    %4096 = vmatprep.subr.mxu0 0.0
    %4097 = vmatpush1.msra.mxu0 0.0
    %4098 = vmatprep.subr.mxu0 0.0
    %4099 = vmatpush1.msra.mxu0 0.0
    %4100 = vmatprep.subr.mxu0 0.0
    %4101 = vmatpush1.msra.mxu0 0.0
    %4102 = vmatprep.subr.mxu0 0.0
    %4103 = vmatpush1.msra.mxu0 0.0
    %4104 = vmatprep.subr.mxu0 0.0
    %4105 = vmatpush1.msra.mxu0 0.0
    %4106 = vmatprep.subr.mxu0 0.0
    %4107 = vmatpush1.msra.mxu0 0.0
    %4108 = vmatprep.subr.mxu0 0.0
    %4109 = vmatpush1.msra.mxu0 0.0
    %4110 = vmatprep.subr.mxu0 0.0
    %4111 = vmatpush1.msra.mxu0 0.0
    %4112 = vmatprep.subr.mxu0 0.0
    %4113 = vmatpush1.msra.mxu0 0.0
    %4114 = vmatprep.subr.mxu0 0.0
    %4115 = vmatpush1.msra.mxu0 0.0
    %4116 = vmatprep.subr.mxu0 0.0
    %4117 = vmatpush1.msra.mxu0 0.0
    %4118 = vmatprep.subr.mxu0 0.0
    %4119 = vmatpush1.msra.mxu0 0.0
    %4120 = vmatprep.subr.mxu0 0.0
    %4121 = vmatpush1.msra.mxu0 0.0
    %4122 = vmatprep.subr.mxu0 0.0
    %4123 = vmatpush1.msra.mxu0 0.0
    %4124 = vmatprep.subr.mxu0 0.0
    %4125 = vmatpush1.msra.mxu0 0.0
    %4126 = vmatprep.subr.mxu0 0.0
    %4127 = vmatpush1.msra.mxu0 0.0
    %4128 = vmatprep.mubr.f32.mxu0 0.0
    %4129 = vmatmul.mubr.f32.gmra.mrb[0].mxu0 %v4062
    %v4130 = vpop.f32.mrb[0].mxu0
    %v4131 = vadd.f32 %v4058, %v4130
    %v4132 = vpop.f32.mrb[0].mxu0
    %4133 = vdwg.mxu0
    %v4134 = vmul.f32 %v4131, 0.5
    %4135 = vrot.lane.b32.xlu0 %v3825, 112
    %v4136 = vpop.permute.xlu0 %4135
    %v4138 = vadd.f32 %v4134, %v4136
    %v4139 = vmin.f32 %v4138, 0.0
    %vm4140 = vcmp.gt.f32.partialorder %v4138, 0.0
    %v4141 = vmul.f32 %v4139, 1.442695
    %v4142 = vpow.pop %v4141
    %v4143 = vsub.f32 %v4142, 1.0
    %v4144 = vsel %vm4140, %v4138, %v4143
    %v4145 = vsel %vm1308, %v2963, 0.0
    %4146 = vadd.xlane.f32.xlu0 %v4145
    %v4147 = vpop.xlane.xlu0 %4146
    %v4148 = vmul.f32 %v4147, %v2278
    %v4149 = vrot.slane %v4148, 4
    %v4150 = vadd.f32 %v4148, %v4149
    %v4151 = vrot.slane %v4150, 2
    %v4152 = vadd.f32 %v4150, %v4151
    %v4153 = vrot.slane %v4152, 1
    %v4154 = vadd.f32 %v4152, %v4153
    %v4155 = vmul.f32 %v4154, %v2278
    %v4156 = vsel %vm1308, %v3751, 0.0
    %4157 = vadd.xlane.f32.xlu0 %v4156
    %v4158 = vpop.xlane.xlu0 %4157
    %v4159 = vmul.f32 %v4158, %v2278
    %v4160 = vrot.slane %v4159, 4
    %v4161 = vadd.f32 %v4159, %v4160
    %v4162 = vrot.slane %v4161, 2
    %v4163 = vadd.f32 %v4161, %v4162
    %v4164 = vrot.slane %v4163, 1
    %v4165 = vadd.f32 %v4163, %v4164
    %v4166 = vmul.f32 %v4165, %v2278
    %v4167 = vsel %vm1308, %v3358, 0.0
    %4168 = vadd.xlane.f32.xlu0 %v4167
    %v4169 = vpop.xlane.xlu0 %4168
    %v4170 = vmul.f32 %v4169, %v2278
    %v4171 = vrot.slane %v4170, 4
    %v4172 = vadd.f32 %v4170, %v4171
    %v4173 = vrot.slane %v4172, 2
    %v4174 = vadd.f32 %v4172, %v4173
    %v4175 = vrot.slane %v4174, 1
    %v4176 = vadd.f32 %v4174, %v4175
    %v4177 = vmul.f32 %v4176, %v2278
    %v4178 = vsel %vm1308, %v4144, 0.0
    %4179 = vadd.xlane.f32.xlu0 %v4178
    %v4180 = vpop.xlane.xlu0 %4179
    %v4181 = vmul.f32 %v4180, %v2278
    %v4182 = vrot.slane %v4181, 4
    %v4183 = vadd.f32 %v4181, %v4182
    %v4184 = vrot.slane %v4183, 2
    %v4185 = vadd.f32 %v4183, %v4184
    %v4186 = vrot.slane %v4185, 1
    %v4187 = vadd.f32 %v4185, %v4186
    %v4188 = vmul.f32 %v4187, %v2278
    %v4189 = vsel %vm2338, %v4155, %v4166
    %v4190 = vsel %vm2340, %v4189, %v4177
    %v4191 = vsel %vm2342, %v4190, %v4188
    %v4192 = vld [vmem:[%s61] sm:$0xf]
    %v4193 = vld [vmem:[#allocation14] sm:$0x1]
    %v4195 = vsel %vm2346, %v4191, 0
    %v4198 = vsel %vm2350, %v4192, 0
    %4200 = vmatprep.subr.mxu0 0.0
    %4201 = vmatpush1.msra.mxu0 %v4198
    %4202 = vmatprep.subr.mxu0 0.0
    %4203 = vmatpush1.msra.mxu0 0.0
    %4204 = vmatprep.subr.mxu0 0.0
    %4205 = vmatpush1.msra.mxu0 0.0
    %4206 = vmatprep.subr.mxu0 0.0
    %4207 = vmatpush1.msra.mxu0 0.0
    %4208 = vmatprep.subr.mxu0 0.0
    %4209 = vmatpush1.msra.mxu0 0.0
    %4210 = vmatprep.subr.mxu0 0.0
    %4211 = vmatpush1.msra.mxu0 0.0
    %4212 = vmatprep.subr.mxu0 0.0
    %4213 = vmatpush1.msra.mxu0 0.0
    %4214 = vmatprep.subr.mxu0 0.0
    %4215 = vmatpush1.msra.mxu0 0.0
    %4216 = vmatprep.subr.mxu0 0.0
    %4217 = vmatpush1.msra.mxu0 0.0
    %4218 = vmatprep.subr.mxu0 0.0
    %4219 = vmatpush1.msra.mxu0 0.0
    %4220 = vmatprep.subr.mxu0 0.0
    %4221 = vmatpush1.msra.mxu0 0.0
    %4222 = vmatprep.subr.mxu0 0.0
    %4223 = vmatpush1.msra.mxu0 0.0
    %4224 = vmatprep.subr.mxu0 0.0
    %4225 = vmatpush1.msra.mxu0 0.0
    %4226 = vmatprep.subr.mxu0 0.0
    %4227 = vmatpush1.msra.mxu0 0.0
    %4228 = vmatprep.subr.mxu0 0.0
    %4229 = vmatpush1.msra.mxu0 0.0
    %4230 = vmatprep.subr.mxu0 0.0
    %4231 = vmatpush1.msra.mxu0 0.0
    %4232 = vmatprep.subr.mxu0 0.0
    %4233 = vmatpush1.msra.mxu0 0.0
    %4234 = vmatprep.subr.mxu0 0.0
    %4235 = vmatpush1.msra.mxu0 0.0
    %4236 = vmatprep.subr.mxu0 0.0
    %4237 = vmatpush1.msra.mxu0 0.0
    %4238 = vmatprep.subr.mxu0 0.0
    %4239 = vmatpush1.msra.mxu0 0.0
    %4240 = vmatprep.subr.mxu0 0.0
    %4241 = vmatpush1.msra.mxu0 0.0
    %4242 = vmatprep.subr.mxu0 0.0
    %4243 = vmatpush1.msra.mxu0 0.0
    %4244 = vmatprep.subr.mxu0 0.0
    %4245 = vmatpush1.msra.mxu0 0.0
    %4246 = vmatprep.subr.mxu0 0.0
    %4247 = vmatpush1.msra.mxu0 0.0
    %4248 = vmatprep.subr.mxu0 0.0
    %4249 = vmatpush1.msra.mxu0 0.0
    %4250 = vmatprep.subr.mxu0 0.0
    %4251 = vmatpush1.msra.mxu0 0.0
    %4252 = vmatprep.subr.mxu0 0.0
    %4253 = vmatpush1.msra.mxu0 0.0
    %4254 = vmatprep.subr.mxu0 0.0
    %4255 = vmatpush1.msra.mxu0 0.0
    %4256 = vmatprep.subr.mxu0 0.0
    %4257 = vmatpush1.msra.mxu0 0.0
    %4258 = vmatprep.subr.mxu0 0.0
    %4259 = vmatpush1.msra.mxu0 0.0
    %4260 = vmatprep.subr.mxu0 0.0
    %4261 = vmatpush1.msra.mxu0 0.0
    %4262 = vmatprep.subr.mxu0 0.0
    %4263 = vmatpush1.msra.mxu0 0.0
    %4264 = vmatprep.mubr.f32.mxu0 0.0
    %4265 = vmatmul.mubr.f32.gmra.mrb[0].mxu0 %v4195
    %v4266 = vpop.f32.mrb[0].mxu0
    %v4267 = vadd.f32 %v4193, %v4266
    %v4268 = vpop.f32.mrb[0].mxu0
    %4269 = vdwg.mxu0
    %v4270 = vld [vmem:[%s65] sm:$0xff]
    %v4271 = vld [vmem:[%s65 + $0x8] sm:$0xff]
    %v4272 = vld [vmem:[%s65 + $0x10] sm:$0xf]
    %v4273 = vld [vmem:[#allocation15] sm:$0x1]
    %v4275 = vsel %vm2428, %v4267, 0
    %v4278 = vsel %vm2350, %v4272, 0
    %4280 = vmatprep.subr.mxu0 0.0
    %4281 = vmatpush1.msra.mxu0 %v4270
    %4282 = vmatprep.subr.mxu0 0.0
    %4283 = vmatpush1.msra.mxu0 %v4271
    %4284 = vmatprep.subr.mxu0 0.0
    %4285 = vmatpush1.msra.mxu0 %v4278
    %4286 = vmatprep.subr.mxu0 0.0
    %4287 = vmatpush1.msra.mxu0 0.0
    %4288 = vmatprep.subr.mxu0 0.0
    %4289 = vmatpush1.msra.mxu0 0.0
    %4290 = vmatprep.subr.mxu0 0.0
    %4291 = vmatpush1.msra.mxu0 0.0
    %4292 = vmatprep.subr.mxu0 0.0
    %4293 = vmatpush1.msra.mxu0 0.0
    %4294 = vmatprep.subr.mxu0 0.0
    %4295 = vmatpush1.msra.mxu0 0.0
    %4296 = vmatprep.subr.mxu0 0.0
    %4297 = vmatpush1.msra.mxu0 0.0
    %4298 = vmatprep.subr.mxu0 0.0
    %4299 = vmatpush1.msra.mxu0 0.0
    %4300 = vmatprep.subr.mxu0 0.0
    %4301 = vmatpush1.msra.mxu0 0.0
    %4302 = vmatprep.subr.mxu0 0.0
    %4303 = vmatpush1.msra.mxu0 0.0
    %4304 = vmatprep.subr.mxu0 0.0
    %4305 = vmatpush1.msra.mxu0 0.0
    %4306 = vmatprep.subr.mxu0 0.0
    %4307 = vmatpush1.msra.mxu0 0.0
    %4308 = vmatprep.subr.mxu0 0.0
    %4309 = vmatpush1.msra.mxu0 0.0
    %4310 = vmatprep.subr.mxu0 0.0
    %4311 = vmatpush1.msra.mxu0 0.0
    %4312 = vmatprep.subr.mxu0 0.0
    %4313 = vmatpush1.msra.mxu0 0.0
    %4314 = vmatprep.subr.mxu0 0.0
    %4315 = vmatpush1.msra.mxu0 0.0
    %4316 = vmatprep.subr.mxu0 0.0
    %4317 = vmatpush1.msra.mxu0 0.0
    %4318 = vmatprep.subr.mxu0 0.0
    %4319 = vmatpush1.msra.mxu0 0.0
    %4320 = vmatprep.subr.mxu0 0.0
    %4321 = vmatpush1.msra.mxu0 0.0
    %4322 = vmatprep.subr.mxu0 0.0
    %4323 = vmatpush1.msra.mxu0 0.0
    %4324 = vmatprep.subr.mxu0 0.0
    %4325 = vmatpush1.msra.mxu0 0.0
    %4326 = vmatprep.subr.mxu0 0.0
    %4327 = vmatpush1.msra.mxu0 0.0
    %4328 = vmatprep.subr.mxu0 0.0
    %4329 = vmatpush1.msra.mxu0 0.0
    %4330 = vmatprep.subr.mxu0 0.0
    %4331 = vmatpush1.msra.mxu0 0.0
    %4332 = vmatprep.subr.mxu0 0.0
    %4333 = vmatpush1.msra.mxu0 0.0
    %4334 = vmatprep.subr.mxu0 0.0
    %4335 = vmatpush1.msra.mxu0 0.0
    %4336 = vmatprep.subr.mxu0 0.0
    %4337 = vmatpush1.msra.mxu0 0.0
    %4338 = vmatprep.subr.mxu0 0.0
    %4339 = vmatpush1.msra.mxu0 0.0
    %4340 = vmatprep.subr.mxu0 0.0
    %4341 = vmatpush1.msra.mxu0 0.0
    %4342 = vmatprep.subr.mxu0 0.0
    %4343 = vmatpush1.msra.mxu0 0.0
    %4344 = vmatprep.mubr.f32.mxu0 0.0
    %4345 = vmatmul.mubr.f32.gmra.mrb[0].mxu0 %v4275
    %v4346 = vpop.f32.mrb[0].mxu0
    %v4347 = vadd.f32 %v4273, %v4346
    %v4348 = vpop.f32.mrb[0].mxu0
    %4349 = vdwg.mxu0
    %v4350 = vxor.u32 %v4347, 2147483648
    %v4351 = vmul.f32 %v4350, 1.442695
    %v4352 = vpow.pop %v4351
    %v4353 = vadd.f32 %v4352, 1.0
    %v4354 = vrcp.pop %v4353
    %v4355 = vmul.f32 1.0, %v4354
    %s4356 = sld [smem:[#allocation17]]
    %s4357 = vtos %v4355
    %v4358 = vstv %s4357
    %v4359 = vmul.f32 %v4358, %v2963
    %v4360 = vmax.f32 %v4359, 0.0
    %v4361 = vstv %s4356
    %v4362 = vmul.f32 %v4361, %v4360
    %v4363 = vadd.f32 %v4362, 0.0
    %s4364 = sld [smem:[#allocation17 + $0x1]]
    %4365 = vrot.lane.b32.xlu0 %v4355, 127
    %v4366 = vpop.permute.xlu0 %4365
    %s4367 = vtos %v4366
    %v4368 = vstv %s4367
    %v4369 = vmul.f32 %v4368, %v3751
    %v4370 = vmax.f32 %v4369, 0.0
    %v4371 = vstv %s4364
    %v4372 = vmul.f32 %v4371, %v4370
    %v4373 = vadd.f32 %v4363, %v4372
    %s4374 = sld [smem:[#allocation17 + $0x2]]
    %4375 = vrot.lane.b32.xlu0 %v4355, 126
    %v4376 = vpop.permute.xlu0 %4375
    %s4377 = vtos %v4376
    %v4378 = vstv %s4377
    %v4379 = vmul.f32 %v4378, %v3358
    %v4380 = vmax.f32 %v4379, 0.0
    %v4381 = vstv %s4374
    %v4382 = vmul.f32 %v4381, %v4380
    %v4383 = vadd.f32 %v4373, %v4382
    %s4384 = sld [smem:[#allocation17 + $0x3]]
    %4385 = vrot.lane.b32.xlu0 %v4355, 125
    %v4386 = vpop.permute.xlu0 %4385
    %s4387 = vtos %v4386
    %v4388 = vstv %s4387
    %v4389 = vmul.f32 %v4388, %v4144
    %v4390 = vmax.f32 %v4389, 0.0
    %v4391 = vstv %s4384
    %v4392 = vmul.f32 %v4391, %v4390
    %v4393 = vadd.f32 %v4383, %v4392
    %s4394 = sld [smem:[#allocation3]]
    %v4395 = vstv %s4394
    %v4396 = vadd.f32 %v4393, %v4395
    %v4397 = vld [vmem:[%s5] sm:$0xff]
    %v4398 = vld [vmem:[%s75] sm:$0xff]
    %v4399 = vld [vmem:[%s77] sm:$0xff]
    %v4400 = vld [vmem:[%s79] sm:$0xff]
    %v4401 = vld [vmem:[%s79 + $0x8] sm:$0xff]
    %v4403 = vsel %vm1308, %v4397, 0
    %4405 = vmatprep.subr.mxu0 0.0
    %4406 = vmatpush1.msra.mxu0 %v4399
    %4407 = vmatprep.subr.mxu0 0.0
    %4408 = vmatpush1.msra.mxu0 0.0
    %4409 = vmatprep.subr.mxu0 0.0
    %4410 = vmatpush1.msra.mxu0 0.0
    %4411 = vmatprep.subr.mxu0 0.0
    %4412 = vmatpush1.msra.mxu0 0.0
    %4413 = vmatprep.subr.mxu0 0.0
    %4414 = vmatpush1.msra.mxu0 0.0
    %4415 = vmatprep.subr.mxu0 0.0
    %4416 = vmatpush1.msra.mxu0 0.0
    %4417 = vmatprep.subr.mxu0 0.0
    %4418 = vmatpush1.msra.mxu0 0.0
    %4419 = vmatprep.subr.mxu0 0.0
    %4420 = vmatpush1.msra.mxu0 0.0
    %4421 = vmatprep.subr.mxu0 0.0
    %4422 = vmatpush1.msra.mxu0 0.0
    %4423 = vmatprep.subr.mxu0 0.0
    %4424 = vmatpush1.msra.mxu0 0.0
    %4425 = vmatprep.subr.mxu0 0.0
    %4426 = vmatpush1.msra.mxu0 0.0
    %4427 = vmatprep.subr.mxu0 0.0
    %4428 = vmatpush1.msra.mxu0 0.0
    %4429 = vmatprep.subr.mxu0 0.0
    %4430 = vmatpush1.msra.mxu0 0.0
    %4431 = vmatprep.subr.mxu0 0.0
    %4432 = vmatpush1.msra.mxu0 0.0
    %4433 = vmatprep.subr.mxu0 0.0
    %4434 = vmatpush1.msra.mxu0 0.0
    %4435 = vmatprep.subr.mxu0 0.0
    %4436 = vmatpush1.msra.mxu0 0.0
    %4437 = vmatprep.subr.mxu0 0.0
    %4438 = vmatpush1.msra.mxu0 0.0
    %4439 = vmatprep.subr.mxu0 0.0
    %4440 = vmatpush1.msra.mxu0 0.0
    %4441 = vmatprep.subr.mxu0 0.0
    %4442 = vmatpush1.msra.mxu0 0.0
    %4443 = vmatprep.subr.mxu0 0.0
    %4444 = vmatpush1.msra.mxu0 0.0
    %4445 = vmatprep.subr.mxu0 0.0
    %4446 = vmatpush1.msra.mxu0 0.0
    %4447 = vmatprep.subr.mxu0 0.0
    %4448 = vmatpush1.msra.mxu0 0.0
    %4449 = vmatprep.subr.mxu0 0.0
    %4450 = vmatpush1.msra.mxu0 0.0
    %4451 = vmatprep.subr.mxu0 0.0
    %4452 = vmatpush1.msra.mxu0 0.0
    %4453 = vmatprep.subr.mxu0 0.0
    %4454 = vmatpush1.msra.mxu0 0.0
    %4455 = vmatprep.subr.mxu0 0.0
    %4456 = vmatpush1.msra.mxu0 0.0
    %4457 = vmatprep.subr.mxu0 0.0
    %4458 = vmatpush1.msra.mxu0 0.0
    %4459 = vmatprep.subr.mxu0 0.0
    %4460 = vmatpush1.msra.mxu0 0.0
    %4461 = vmatprep.subr.mxu0 0.0
    %4462 = vmatpush1.msra.mxu0 0.0
    %4463 = vmatprep.subr.mxu0 0.0
    %4464 = vmatpush1.msra.mxu0 0.0
    %4465 = vmatprep.subr.mxu0 0.0
    %4466 = vmatpush1.msra.mxu0 0.0
    %4467 = vmatprep.subr.mxu0 0.0
    %4468 = vmatpush1.msra.mxu0 0.0
    %4469 = vmatprep.mubr.f32.mxu0 0.0
    %4470 = vmatmul.mubr.f32.gmra.mrb[0].mxu0 %v4403
    %v4471 = vpop.f32.mrb[0].mxu0
    %v4472 = vadd.f32 0.0, %v4471
    %v4473 = vpop.f32.mrb[0].mxu0
    %4474 = vdwg.mxu0
    %v4476 = vsel %vm338, %v4472, 0
    %4478 = vmatprep.subr.mxu0 0.0
    %4479 = vmatpush1.msra.mxu0 %v4400
    %4480 = vmatprep.subr.mxu0 0.0
    %4481 = vmatpush1.msra.mxu0 %v4401
    %4482 = vmatprep.subr.mxu0 0.0
    %4483 = vmatpush1.msra.mxu0 0.0
    %4484 = vmatprep.subr.mxu0 0.0
    %4485 = vmatpush1.msra.mxu0 0.0
    %4486 = vmatprep.subr.mxu0 0.0
    %4487 = vmatpush1.msra.mxu0 0.0
    %4488 = vmatprep.subr.mxu0 0.0
    %4489 = vmatpush1.msra.mxu0 0.0
    %4490 = vmatprep.subr.mxu0 0.0
    %4491 = vmatpush1.msra.mxu0 0.0
    %4492 = vmatprep.subr.mxu0 0.0
    %4493 = vmatpush1.msra.mxu0 0.0
    %4494 = vmatprep.subr.mxu0 0.0
    %4495 = vmatpush1.msra.mxu0 0.0
    %4496 = vmatprep.subr.mxu0 0.0
    %4497 = vmatpush1.msra.mxu0 0.0
    %4498 = vmatprep.subr.mxu0 0.0
    %4499 = vmatpush1.msra.mxu0 0.0
    %4500 = vmatprep.subr.mxu0 0.0
    %4501 = vmatpush1.msra.mxu0 0.0
    %4502 = vmatprep.subr.mxu0 0.0
    %4503 = vmatpush1.msra.mxu0 0.0
    %4504 = vmatprep.subr.mxu0 0.0
    %4505 = vmatpush1.msra.mxu0 0.0
    %4506 = vmatprep.subr.mxu0 0.0
    %4507 = vmatpush1.msra.mxu0 0.0
    %4508 = vmatprep.subr.mxu0 0.0
    %4509 = vmatpush1.msra.mxu0 0.0
    %4510 = vmatprep.subr.mxu0 0.0
    %4511 = vmatpush1.msra.mxu0 0.0
    %4512 = vmatprep.subr.mxu0 0.0
    %4513 = vmatpush1.msra.mxu0 0.0
    %4514 = vmatprep.subr.mxu0 0.0
    %4515 = vmatpush1.msra.mxu0 0.0
    %4516 = vmatprep.subr.mxu0 0.0
    %4517 = vmatpush1.msra.mxu0 0.0
    %4518 = vmatprep.subr.mxu0 0.0
    %4519 = vmatpush1.msra.mxu0 0.0
    %4520 = vmatprep.subr.mxu0 0.0
    %4521 = vmatpush1.msra.mxu0 0.0
    %4522 = vmatprep.subr.mxu0 0.0
    %4523 = vmatpush1.msra.mxu0 0.0
    %4524 = vmatprep.subr.mxu0 0.0
    %4525 = vmatpush1.msra.mxu0 0.0
    %4526 = vmatprep.subr.mxu0 0.0
    %4527 = vmatpush1.msra.mxu0 0.0
    %4528 = vmatprep.subr.mxu0 0.0
    %4529 = vmatpush1.msra.mxu0 0.0
    %4530 = vmatprep.subr.mxu0 0.0
    %4531 = vmatpush1.msra.mxu0 0.0
    %4532 = vmatprep.subr.mxu0 0.0
    %4533 = vmatpush1.msra.mxu0 0.0
    %4534 = vmatprep.subr.mxu0 0.0
    %4535 = vmatpush1.msra.mxu0 0.0
    %4536 = vmatprep.subr.mxu0 0.0
    %4537 = vmatpush1.msra.mxu0 0.0
    %4538 = vmatprep.subr.mxu0 0.0
    %4539 = vmatpush1.msra.mxu0 0.0
    %4540 = vmatprep.subr.mxu0 0.0
    %4541 = vmatpush1.msra.mxu0 0.0
    %4542 = vmatprep.mubr.f32.mxu0 0.0
    %4543 = vmatmul.mubr.f32.gmra.mrb[0].mxu0 %v4476
    %v4544 = vpop.f32.mrb[0].mxu0
    %v4545 = vadd.f32 0.0, %v4544
    %v4546 = vpop.f32.mrb[0].mxu0
    %4547 = vdwg.mxu0
    %4549 = vrot.lane.b32.xlu0 %v4545, 126
    %v4550 = vpop.permute.xlu0 %4549
    %4552 = vxpose.xlu0.b32.start [1/16] %v4550, 128
    %4553 = vxpose.xlu0.b32.cont [2/16] 0.0, 128
    %4554 = vxpose.xlu0.b32.cont [3/16] 0.0, 128
    %4555 = vxpose.xlu0.b32.cont [4/16] 0.0, 128
    %4556 = vxpose.xlu0.b32.cont [5/16] 0.0, 128
    %4557 = vxpose.xlu0.b32.cont [6/16] 0.0, 128
    %4558 = vxpose.xlu0.b32.cont [7/16] 0.0, 128
    %4559 = vxpose.xlu0.b32.cont [8/16] 0.0, 128
    %4560 = vxpose.xlu0.b32.cont [9/16] 0.0, 128
    %4561 = vxpose.xlu0.b32.cont [10/16] 0.0, 128
    %4562 = vxpose.xlu0.b32.cont [11/16] 0.0, 128
    %4563 = vxpose.xlu0.b32.cont [12/16] 0.0, 128
    %4564 = vxpose.xlu0.b32.cont [13/16] 0.0, 128
    %4565 = vxpose.xlu0.b32.cont [14/16] 0.0, 128
    %4566 = vxpose.xlu0.b32.cont [15/16] 0.0, 128
    %4567 = vxpose.xlu0.b32.end [16/16] 0.0, 128
    %v4568 = vpop.trf.xlu0
    %v4569 = vpop.trf.xlu0
    %v4570 = vpop.trf.xlu0
    %v4571 = vpop.trf.xlu0
    %v4572 = vpop.trf.xlu0
    %v4573 = vpop.trf.xlu0
    %v4574 = vpop.trf.xlu0
    %v4575 = vpop.trf.xlu0
    %v4576 = vpop.trf.xlu0
    %v4577 = vpop.trf.xlu0
    %v4578 = vpop.trf.xlu0
    %v4579 = vpop.trf.xlu0
    %v4580 = vpop.trf.xlu0
    %v4581 = vpop.trf.xlu0
    %v4582 = vpop.trf.xlu0
    %v4583 = vpop.trf.xlu0
    %4584 = vset.pattern.permute.xlu0 0
    %4585 = vperm.xlu0 %4584, %v4545
    %v4586 = vpop.permute.xlu0 %4585
    %v4588 = vlaneseq
    %v4589 = vshrl.u32 %v4588, 7
    %v4590 = vsub.s32 0, %v4589
    %v4591 = vrot.slane %v4568, %v4590
    %v4592 = vadd.f32 %v4586, %v4591
    %vm4593 = vcmp.gt.f32.partialorder %v4592, 0.0
    %v4594 = vmul.f32 %v4592, 0.2
    %v4595 = vsel %vm4593, %v4592, %v4594
    %v4596 = vadd.f32 %v4595, %v4398
    %v4597 = vsel %vm1308, %v4596, -inf
    %4598 = vmax.xlane.f32.xlu0 %v4597
    %v4599 = vpop.xlane.xlu0 %4598
    %v4600 = vsub.f32 %v4596, %v4599
    %v4601 = vmul.f32 %v4600, 1.442695
    %v4602 = vpow.pop %v4601
    %v4603 = vsel %vm1308, %v4602, 0.0
    %4604 = vadd.xlane.f32.xlu0 %v4603
    %v4605 = vpop.xlane.xlu0 %4604
    %v4606 = vrcp.pop %v4605
    %v4607 = vmul.f32 %v4602, %v4606
    %4608 = vset.pattern.permute.xlu0 1
    %4609 = vperm.xlu0 %4608, %v4545
    %v4610 = vpop.permute.xlu0 %4609
    %v4612 = vlaneseq
    %v4613 = vshrl.u32 %v4612, 7
    %v4614 = vsub.s32 1, %v4613
    %v4615 = vrot.slane %v4568, %v4614
    %v4616 = vadd.f32 %v4610, %v4615
    %vm4617 = vcmp.gt.f32.partialorder %v4616, 0.0
    %v4618 = vmul.f32 %v4616, 0.2
    %v4619 = vsel %vm4617, %v4616, %v4618
    %v4620 = vadd.f32 %v4619, %v4398
    %v4621 = vsel %vm1308, %v4620, -inf
    %4622 = vmax.xlane.f32.xlu0 %v4621
    %v4623 = vpop.xlane.xlu0 %4622
    %v4624 = vsub.f32 %v4620, %v4623
    %v4625 = vmul.f32 %v4624, 1.442695
    %v4626 = vpow.pop %v4625
    %v4627 = vsel %vm1308, %v4626, 0.0
    %4628 = vadd.xlane.f32.xlu0 %v4627
    %v4629 = vpop.xlane.xlu0 %4628
    %v4630 = vrcp.pop %v4629
    %v4631 = vmul.f32 %v4626, %v4630
    %4632 = vrot.lane.b32.xlu0 %v4472, 120
    %v4633 = vpop.permute.xlu0 %4632
    %v4636 = vsel %vm1308, %v4631, 0
    %4638 = vmatprep.subr.mxu0 0.0
    %4639 = vmatpush1.msra.mxu0 %v4633
    %4640 = vmatprep.subr.mxu0 0.0
    %4641 = vmatpush1.msra.mxu0 0.0
    %4642 = vmatprep.subr.mxu0 0.0
    %4643 = vmatpush1.msra.mxu0 0.0
    %4644 = vmatprep.subr.mxu0 0.0
    %4645 = vmatpush1.msra.mxu0 0.0
    %4646 = vmatprep.subr.mxu0 0.0
    %4647 = vmatpush1.msra.mxu0 0.0
    %4648 = vmatprep.subr.mxu0 0.0
    %4649 = vmatpush1.msra.mxu0 0.0
    %4650 = vmatprep.subr.mxu0 0.0
    %4651 = vmatpush1.msra.mxu0 0.0
    %4652 = vmatprep.subr.mxu0 0.0
    %4653 = vmatpush1.msra.mxu0 0.0
    %4654 = vmatprep.subr.mxu0 0.0
    %4655 = vmatpush1.msra.mxu0 0.0
    %4656 = vmatprep.subr.mxu0 0.0
    %4657 = vmatpush1.msra.mxu0 0.0
    %4658 = vmatprep.subr.mxu0 0.0
    %4659 = vmatpush1.msra.mxu0 0.0
    %4660 = vmatprep.subr.mxu0 0.0
    %4661 = vmatpush1.msra.mxu0 0.0
    %4662 = vmatprep.subr.mxu0 0.0
    %4663 = vmatpush1.msra.mxu0 0.0
    %4664 = vmatprep.subr.mxu0 0.0
    %4665 = vmatpush1.msra.mxu0 0.0
    %4666 = vmatprep.subr.mxu0 0.0
    %4667 = vmatpush1.msra.mxu0 0.0
    %4668 = vmatprep.subr.mxu0 0.0
    %4669 = vmatpush1.msra.mxu0 0.0
    %4670 = vmatprep.subr.mxu0 0.0
    %4671 = vmatpush1.msra.mxu0 0.0
    %4672 = vmatprep.subr.mxu0 0.0
    %4673 = vmatpush1.msra.mxu0 0.0
    %4674 = vmatprep.subr.mxu0 0.0
    %4675 = vmatpush1.msra.mxu0 0.0
    %4676 = vmatprep.subr.mxu0 0.0
    %4677 = vmatpush1.msra.mxu0 0.0
    %4678 = vmatprep.subr.mxu0 0.0
    %4679 = vmatpush1.msra.mxu0 0.0
    %4680 = vmatprep.subr.mxu0 0.0
    %4681 = vmatpush1.msra.mxu0 0.0
    %4682 = vmatprep.subr.mxu0 0.0
    %4683 = vmatpush1.msra.mxu0 0.0
    %4684 = vmatprep.subr.mxu0 0.0
    %4685 = vmatpush1.msra.mxu0 0.0
    %4686 = vmatprep.subr.mxu0 0.0
    %4687 = vmatpush1.msra.mxu0 0.0
    %4688 = vmatprep.subr.mxu0 0.0
    %4689 = vmatpush1.msra.mxu0 0.0
    %4690 = vmatprep.subr.mxu0 0.0
    %4691 = vmatpush1.msra.mxu0 0.0
    %4692 = vmatprep.subr.mxu0 0.0
    %4693 = vmatpush1.msra.mxu0 0.0
    %4694 = vmatprep.subr.mxu0 0.0
    %4695 = vmatpush1.msra.mxu0 0.0
    %4696 = vmatprep.subr.mxu0 0.0
    %4697 = vmatpush1.msra.mxu0 0.0
    %4698 = vmatprep.subr.mxu0 0.0
    %4699 = vmatpush1.msra.mxu0 0.0
    %4700 = vmatprep.subr.mxu0 0.0
    %4701 = vmatpush1.msra.mxu0 0.0
    %4702 = vmatprep.mubr.f32.mxu0 0.0
    %4703 = vmatmul.mubr.f32.gmra.mrb[0].mxu0 %v4636
    %v4704 = vpop.f32.mrb[0].mxu0
    %v4705 = vadd.f32 0.0, %v4704
    %v4706 = vpop.f32.mrb[0].mxu0
    %4707 = vdwg.mxu0
    %v4709 = vsel %vm1308, %v4607, 0
    %4711 = vmatprep.subr.mxu0 0.0
    %4712 = vmatpush1.msra.mxu0 %v4472
    %4713 = vmatprep.subr.mxu0 0.0
    %4714 = vmatpush1.msra.mxu0 0.0
    %4715 = vmatprep.subr.mxu0 0.0
    %4716 = vmatpush1.msra.mxu0 0.0
    %4717 = vmatprep.subr.mxu0 0.0
    %4718 = vmatpush1.msra.mxu0 0.0
    %4719 = vmatprep.subr.mxu0 0.0
    %4720 = vmatpush1.msra.mxu0 0.0
    %4721 = vmatprep.subr.mxu0 0.0
    %4722 = vmatpush1.msra.mxu0 0.0
    %4723 = vmatprep.subr.mxu0 0.0
    %4724 = vmatpush1.msra.mxu0 0.0
    %4725 = vmatprep.subr.mxu0 0.0
    %4726 = vmatpush1.msra.mxu0 0.0
    %4727 = vmatprep.subr.mxu0 0.0
    %4728 = vmatpush1.msra.mxu0 0.0
    %4729 = vmatprep.subr.mxu0 0.0
    %4730 = vmatpush1.msra.mxu0 0.0
    %4731 = vmatprep.subr.mxu0 0.0
    %4732 = vmatpush1.msra.mxu0 0.0
    %4733 = vmatprep.subr.mxu0 0.0
    %4734 = vmatpush1.msra.mxu0 0.0
    %4735 = vmatprep.subr.mxu0 0.0
    %4736 = vmatpush1.msra.mxu0 0.0
    %4737 = vmatprep.subr.mxu0 0.0
    %4738 = vmatpush1.msra.mxu0 0.0
    %4739 = vmatprep.subr.mxu0 0.0
    %4740 = vmatpush1.msra.mxu0 0.0
    %4741 = vmatprep.subr.mxu0 0.0
    %4742 = vmatpush1.msra.mxu0 0.0
    %4743 = vmatprep.subr.mxu0 0.0
    %4744 = vmatpush1.msra.mxu0 0.0
    %4745 = vmatprep.subr.mxu0 0.0
    %4746 = vmatpush1.msra.mxu0 0.0
    %4747 = vmatprep.subr.mxu0 0.0
    %4748 = vmatpush1.msra.mxu0 0.0
    %4749 = vmatprep.subr.mxu0 0.0
    %4750 = vmatpush1.msra.mxu0 0.0
    %4751 = vmatprep.subr.mxu0 0.0
    %4752 = vmatpush1.msra.mxu0 0.0
    %4753 = vmatprep.subr.mxu0 0.0
    %4754 = vmatpush1.msra.mxu0 0.0
    %4755 = vmatprep.subr.mxu0 0.0
    %4756 = vmatpush1.msra.mxu0 0.0
    %4757 = vmatprep.subr.mxu0 0.0
    %4758 = vmatpush1.msra.mxu0 0.0
    %4759 = vmatprep.subr.mxu0 0.0
    %4760 = vmatpush1.msra.mxu0 0.0
    %4761 = vmatprep.subr.mxu0 0.0
    %4762 = vmatpush1.msra.mxu0 0.0
    %4763 = vmatprep.subr.mxu0 0.0
    %4764 = vmatpush1.msra.mxu0 0.0
    %4765 = vmatprep.subr.mxu0 0.0
    %4766 = vmatpush1.msra.mxu0 0.0
    %4767 = vmatprep.subr.mxu0 0.0
    %4768 = vmatpush1.msra.mxu0 0.0
    %4769 = vmatprep.subr.mxu0 0.0
    %4770 = vmatpush1.msra.mxu0 0.0
    %4771 = vmatprep.subr.mxu0 0.0
    %4772 = vmatpush1.msra.mxu0 0.0
    %4773 = vmatprep.subr.mxu0 0.0
    %4774 = vmatpush1.msra.mxu0 0.0
    %4775 = vmatprep.mubr.f32.mxu0 0.0
    %4776 = vmatmul.mubr.f32.gmra.mrb[0].mxu0 %v4709
    %v4777 = vpop.f32.mrb[0].mxu0
    %v4778 = vadd.f32 %v4705, %v4777
    %v4779 = vpop.f32.mrb[0].mxu0
    %4780 = vdwg.mxu0
    %v4781 = vmul.f32 %v4778, 0.5
    %4782 = vrot.lane.b32.xlu0 %v4472, 112
    %v4783 = vpop.permute.xlu0 %4782
    %v4785 = vadd.f32 %v4781, %v4783
    %v4786 = vmin.f32 %v4785, 0.0
    %vm4787 = vcmp.gt.f32.partialorder %v4785, 0.0
    %v4788 = vmul.f32 %v4786, 1.442695
    %v4789 = vpow.pop %v4788
    %v4790 = vsub.f32 %v4789, 1.0
    %v4791 = vsel %vm4787, %v4785, %v4790
    %v4792 = vld [vmem:[%s73] sm:$0xff]
    %v4793 = vld [vmem:[%s81] sm:$0xff]
    %v4794 = vld [vmem:[%s81 + $0x8] sm:$0xff]
    %v4795 = vld [vmem:[%s83] sm:$0xff]
    %v4796 = vld [vmem:[%s83 + $0x8] sm:$0xff]
    %v4798 = vsel %vm338, %v4792, 0
    %4800 = vmatprep.subr.mxu0 0.0
    %4801 = vmatpush1.msra.mxu0 %v4793
    %4802 = vmatprep.subr.mxu0 0.0
    %4803 = vmatpush1.msra.mxu0 %v4794
    %4804 = vmatprep.subr.mxu0 0.0
    %4805 = vmatpush1.msra.mxu0 0.0
    %4806 = vmatprep.subr.mxu0 0.0
    %4807 = vmatpush1.msra.mxu0 0.0
    %4808 = vmatprep.subr.mxu0 0.0
    %4809 = vmatpush1.msra.mxu0 0.0
    %4810 = vmatprep.subr.mxu0 0.0
    %4811 = vmatpush1.msra.mxu0 0.0
    %4812 = vmatprep.subr.mxu0 0.0
    %4813 = vmatpush1.msra.mxu0 0.0
    %4814 = vmatprep.subr.mxu0 0.0
    %4815 = vmatpush1.msra.mxu0 0.0
    %4816 = vmatprep.subr.mxu0 0.0
    %4817 = vmatpush1.msra.mxu0 0.0
    %4818 = vmatprep.subr.mxu0 0.0
    %4819 = vmatpush1.msra.mxu0 0.0
    %4820 = vmatprep.subr.mxu0 0.0
    %4821 = vmatpush1.msra.mxu0 0.0
    %4822 = vmatprep.subr.mxu0 0.0
    %4823 = vmatpush1.msra.mxu0 0.0
    %4824 = vmatprep.subr.mxu0 0.0
    %4825 = vmatpush1.msra.mxu0 0.0
    %4826 = vmatprep.subr.mxu0 0.0
    %4827 = vmatpush1.msra.mxu0 0.0
    %4828 = vmatprep.subr.mxu0 0.0
    %4829 = vmatpush1.msra.mxu0 0.0
    %4830 = vmatprep.subr.mxu0 0.0
    %4831 = vmatpush1.msra.mxu0 0.0
    %4832 = vmatprep.subr.mxu0 0.0
    %4833 = vmatpush1.msra.mxu0 0.0
    %4834 = vmatprep.subr.mxu0 0.0
    %4835 = vmatpush1.msra.mxu0 0.0
    %4836 = vmatprep.subr.mxu0 0.0
    %4837 = vmatpush1.msra.mxu0 0.0
    %4838 = vmatprep.subr.mxu0 0.0
    %4839 = vmatpush1.msra.mxu0 0.0
    %4840 = vmatprep.subr.mxu0 0.0
    %4841 = vmatpush1.msra.mxu0 0.0
    %4842 = vmatprep.subr.mxu0 0.0
    %4843 = vmatpush1.msra.mxu0 0.0
    %4844 = vmatprep.subr.mxu0 0.0
    %4845 = vmatpush1.msra.mxu0 0.0
    %4846 = vmatprep.subr.mxu0 0.0
    %4847 = vmatpush1.msra.mxu0 0.0
    %4848 = vmatprep.subr.mxu0 0.0
    %4849 = vmatpush1.msra.mxu0 0.0
    %4850 = vmatprep.subr.mxu0 0.0
    %4851 = vmatpush1.msra.mxu0 0.0
    %4852 = vmatprep.subr.mxu0 0.0
    %4853 = vmatpush1.msra.mxu0 0.0
    %4854 = vmatprep.subr.mxu0 0.0
    %4855 = vmatpush1.msra.mxu0 0.0
    %4856 = vmatprep.subr.mxu0 0.0
    %4857 = vmatpush1.msra.mxu0 0.0
    %4858 = vmatprep.subr.mxu0 0.0
    %4859 = vmatpush1.msra.mxu0 0.0
    %4860 = vmatprep.subr.mxu0 0.0
    %4861 = vmatpush1.msra.mxu0 0.0
    %4862 = vmatprep.subr.mxu0 0.0
    %4863 = vmatpush1.msra.mxu0 0.0
    %4864 = vmatprep.mubr.f32.mxu0 0.0
    %4865 = vmatmul.mubr.f32.gmra.mrb[0].mxu0 %v4798
    %v4866 = vpop.f32.mrb[0].mxu0
    %v4867 = vadd.f32 0.0, %v4866
    %v4868 = vpop.f32.mrb[0].mxu0
    %4869 = vdwg.mxu0
    %v4871 = vsel %vm338, %v4867, 0
    %4873 = vmatprep.subr.mxu0 0.0
    %4874 = vmatpush1.msra.mxu0 %v4795
    %4875 = vmatprep.subr.mxu0 0.0
    %4876 = vmatpush1.msra.mxu0 %v4796
    %4877 = vmatprep.subr.mxu0 0.0
    %4878 = vmatpush1.msra.mxu0 0.0
    %4879 = vmatprep.subr.mxu0 0.0
    %4880 = vmatpush1.msra.mxu0 0.0
    %4881 = vmatprep.subr.mxu0 0.0
    %4882 = vmatpush1.msra.mxu0 0.0
    %4883 = vmatprep.subr.mxu0 0.0
    %4884 = vmatpush1.msra.mxu0 0.0
    %4885 = vmatprep.subr.mxu0 0.0
    %4886 = vmatpush1.msra.mxu0 0.0
    %4887 = vmatprep.subr.mxu0 0.0
    %4888 = vmatpush1.msra.mxu0 0.0
    %4889 = vmatprep.subr.mxu0 0.0
    %4890 = vmatpush1.msra.mxu0 0.0
    %4891 = vmatprep.subr.mxu0 0.0
    %4892 = vmatpush1.msra.mxu0 0.0
    %4893 = vmatprep.subr.mxu0 0.0
    %4894 = vmatpush1.msra.mxu0 0.0
    %4895 = vmatprep.subr.mxu0 0.0
    %4896 = vmatpush1.msra.mxu0 0.0
    %4897 = vmatprep.subr.mxu0 0.0
    %4898 = vmatpush1.msra.mxu0 0.0
    %4899 = vmatprep.subr.mxu0 0.0
    %4900 = vmatpush1.msra.mxu0 0.0
    %4901 = vmatprep.subr.mxu0 0.0
    %4902 = vmatpush1.msra.mxu0 0.0
    %4903 = vmatprep.subr.mxu0 0.0
    %4904 = vmatpush1.msra.mxu0 0.0
    %4905 = vmatprep.subr.mxu0 0.0
    %4906 = vmatpush1.msra.mxu0 0.0
    %4907 = vmatprep.subr.mxu0 0.0
    %4908 = vmatpush1.msra.mxu0 0.0
    %4909 = vmatprep.subr.mxu0 0.0
    %4910 = vmatpush1.msra.mxu0 0.0
    %4911 = vmatprep.subr.mxu0 0.0
    %4912 = vmatpush1.msra.mxu0 0.0
    %4913 = vmatprep.subr.mxu0 0.0
    %4914 = vmatpush1.msra.mxu0 0.0
    %4915 = vmatprep.subr.mxu0 0.0
    %4916 = vmatpush1.msra.mxu0 0.0
    %4917 = vmatprep.subr.mxu0 0.0
    %4918 = vmatpush1.msra.mxu0 0.0
    %4919 = vmatprep.subr.mxu0 0.0
    %4920 = vmatpush1.msra.mxu0 0.0
    %4921 = vmatprep.subr.mxu0 0.0
    %4922 = vmatpush1.msra.mxu0 0.0
    %4923 = vmatprep.subr.mxu0 0.0
    %4924 = vmatpush1.msra.mxu0 0.0
    %4925 = vmatprep.subr.mxu0 0.0
    %4926 = vmatpush1.msra.mxu0 0.0
    %4927 = vmatprep.subr.mxu0 0.0
    %4928 = vmatpush1.msra.mxu0 0.0
    %4929 = vmatprep.subr.mxu0 0.0
    %4930 = vmatpush1.msra.mxu0 0.0
    %4931 = vmatprep.subr.mxu0 0.0
    %4932 = vmatpush1.msra.mxu0 0.0
    %4933 = vmatprep.subr.mxu0 0.0
    %4934 = vmatpush1.msra.mxu0 0.0
    %4935 = vmatprep.subr.mxu0 0.0
    %4936 = vmatpush1.msra.mxu0 0.0
    %4937 = vmatprep.mubr.f32.mxu0 0.0
    %4938 = vmatmul.mubr.f32.gmra.mrb[0].mxu0 %v4871
    %v4939 = vpop.f32.mrb[0].mxu0
    %v4940 = vadd.f32 0.0, %v4939
    %v4941 = vpop.f32.mrb[0].mxu0
    %4942 = vdwg.mxu0
    %4944 = vrot.lane.b32.xlu0 %v4940, 126
    %v4945 = vpop.permute.xlu0 %4944
    %4947 = vxpose.xlu0.b32.start [1/16] %v4945, 128
    %4948 = vxpose.xlu0.b32.cont [2/16] 0.0, 128
    %4949 = vxpose.xlu0.b32.cont [3/16] 0.0, 128
    %4950 = vxpose.xlu0.b32.cont [4/16] 0.0, 128
    %4951 = vxpose.xlu0.b32.cont [5/16] 0.0, 128
    %4952 = vxpose.xlu0.b32.cont [6/16] 0.0, 128
    %4953 = vxpose.xlu0.b32.cont [7/16] 0.0, 128
    %4954 = vxpose.xlu0.b32.cont [8/16] 0.0, 128
    %4955 = vxpose.xlu0.b32.cont [9/16] 0.0, 128
    %4956 = vxpose.xlu0.b32.cont [10/16] 0.0, 128
    %4957 = vxpose.xlu0.b32.cont [11/16] 0.0, 128
    %4958 = vxpose.xlu0.b32.cont [12/16] 0.0, 128
    %4959 = vxpose.xlu0.b32.cont [13/16] 0.0, 128
    %4960 = vxpose.xlu0.b32.cont [14/16] 0.0, 128
    %4961 = vxpose.xlu0.b32.cont [15/16] 0.0, 128
    %4962 = vxpose.xlu0.b32.end [16/16] 0.0, 128
    %v4963 = vpop.trf.xlu0
    %v4964 = vpop.trf.xlu0
    %v4965 = vpop.trf.xlu0
    %v4966 = vpop.trf.xlu0
    %v4967 = vpop.trf.xlu0
    %v4968 = vpop.trf.xlu0
    %v4969 = vpop.trf.xlu0
    %v4970 = vpop.trf.xlu0
    %v4971 = vpop.trf.xlu0
    %v4972 = vpop.trf.xlu0
    %v4973 = vpop.trf.xlu0
    %v4974 = vpop.trf.xlu0
    %v4975 = vpop.trf.xlu0
    %v4976 = vpop.trf.xlu0
    %v4977 = vpop.trf.xlu0
    %v4978 = vpop.trf.xlu0
    %4979 = vset.pattern.permute.xlu0 0
    %4980 = vperm.xlu0 %4979, %v4940
    %v4981 = vpop.permute.xlu0 %4980
    %v4983 = vlaneseq
    %v4984 = vshrl.u32 %v4983, 7
    %v4985 = vsub.s32 0, %v4984
    %v4986 = vrot.slane %v4963, %v4985
    %v4987 = vadd.f32 %v4981, %v4986
    %vm4988 = vcmp.gt.f32.partialorder %v4987, 0.0
    %v4989 = vmul.f32 %v4987, 0.2
    %v4990 = vsel %vm4988, %v4987, %v4989
    %v4991 = vadd.f32 %v4990, %v4398
    %v4992 = vsel %vm1308, %v4991, -inf
    %4993 = vmax.xlane.f32.xlu0 %v4992
    %v4994 = vpop.xlane.xlu0 %4993
    %v4995 = vsub.f32 %v4991, %v4994
    %v4996 = vmul.f32 %v4995, 1.442695
    %v4997 = vpow.pop %v4996
    %v4998 = vsel %vm1308, %v4997, 0.0
    %4999 = vadd.xlane.f32.xlu0 %v4998
    %v5000 = vpop.xlane.xlu0 %4999
    %v5001 = vrcp.pop %v5000
    %v5002 = vmul.f32 %v4997, %v5001
    %5003 = vset.pattern.permute.xlu0 1
    %5004 = vperm.xlu0 %5003, %v4940
    %v5005 = vpop.permute.xlu0 %5004
    %v5007 = vlaneseq
    %v5008 = vshrl.u32 %v5007, 7
    %v5009 = vsub.s32 1, %v5008
    %v5010 = vrot.slane %v4963, %v5009
    %v5011 = vadd.f32 %v5005, %v5010
    %vm5012 = vcmp.gt.f32.partialorder %v5011, 0.0
    %v5013 = vmul.f32 %v5011, 0.2
    %v5014 = vsel %vm5012, %v5011, %v5013
    %v5015 = vadd.f32 %v5014, %v4398
    %v5016 = vsel %vm1308, %v5015, -inf
    %5017 = vmax.xlane.f32.xlu0 %v5016
    %v5018 = vpop.xlane.xlu0 %5017
    %v5019 = vsub.f32 %v5015, %v5018
    %v5020 = vmul.f32 %v5019, 1.442695
    %v5021 = vpow.pop %v5020
    %v5022 = vsel %vm1308, %v5021, 0.0
    %5023 = vadd.xlane.f32.xlu0 %v5022
    %v5024 = vpop.xlane.xlu0 %5023
    %v5025 = vrcp.pop %v5024
    %v5026 = vmul.f32 %v5021, %v5025
    %5027 = vrot.lane.b32.xlu0 %v4867, 120
    %v5028 = vpop.permute.xlu0 %5027
    %v5031 = vsel %vm1308, %v5026, 0
    %5033 = vmatprep.subr.mxu0 0.0
    %5034 = vmatpush1.msra.mxu0 %v5028
    %5035 = vmatprep.subr.mxu0 0.0
    %5036 = vmatpush1.msra.mxu0 0.0
    %5037 = vmatprep.subr.mxu0 0.0
    %5038 = vmatpush1.msra.mxu0 0.0
    %5039 = vmatprep.subr.mxu0 0.0
    %5040 = vmatpush1.msra.mxu0 0.0
    %5041 = vmatprep.subr.mxu0 0.0
    %5042 = vmatpush1.msra.mxu0 0.0
    %5043 = vmatprep.subr.mxu0 0.0
    %5044 = vmatpush1.msra.mxu0 0.0
    %5045 = vmatprep.subr.mxu0 0.0
    %5046 = vmatpush1.msra.mxu0 0.0
    %5047 = vmatprep.subr.mxu0 0.0
    %5048 = vmatpush1.msra.mxu0 0.0
    %5049 = vmatprep.subr.mxu0 0.0
    %5050 = vmatpush1.msra.mxu0 0.0
    %5051 = vmatprep.subr.mxu0 0.0
    %5052 = vmatpush1.msra.mxu0 0.0
    %5053 = vmatprep.subr.mxu0 0.0
    %5054 = vmatpush1.msra.mxu0 0.0
    %5055 = vmatprep.subr.mxu0 0.0
    %5056 = vmatpush1.msra.mxu0 0.0
    %5057 = vmatprep.subr.mxu0 0.0
    %5058 = vmatpush1.msra.mxu0 0.0
    %5059 = vmatprep.subr.mxu0 0.0
    %5060 = vmatpush1.msra.mxu0 0.0
    %5061 = vmatprep.subr.mxu0 0.0
    %5062 = vmatpush1.msra.mxu0 0.0
    %5063 = vmatprep.subr.mxu0 0.0
    %5064 = vmatpush1.msra.mxu0 0.0
    %5065 = vmatprep.subr.mxu0 0.0
    %5066 = vmatpush1.msra.mxu0 0.0
    %5067 = vmatprep.subr.mxu0 0.0
    %5068 = vmatpush1.msra.mxu0 0.0
    %5069 = vmatprep.subr.mxu0 0.0
    %5070 = vmatpush1.msra.mxu0 0.0
    %5071 = vmatprep.subr.mxu0 0.0
    %5072 = vmatpush1.msra.mxu0 0.0
    %5073 = vmatprep.subr.mxu0 0.0
    %5074 = vmatpush1.msra.mxu0 0.0
    %5075 = vmatprep.subr.mxu0 0.0
    %5076 = vmatpush1.msra.mxu0 0.0
    %5077 = vmatprep.subr.mxu0 0.0
    %5078 = vmatpush1.msra.mxu0 0.0
    %5079 = vmatprep.subr.mxu0 0.0
    %5080 = vmatpush1.msra.mxu0 0.0
    %5081 = vmatprep.subr.mxu0 0.0
    %5082 = vmatpush1.msra.mxu0 0.0
    %5083 = vmatprep.subr.mxu0 0.0
    %5084 = vmatpush1.msra.mxu0 0.0
    %5085 = vmatprep.subr.mxu0 0.0
    %5086 = vmatpush1.msra.mxu0 0.0
    %5087 = vmatprep.subr.mxu0 0.0
    %5088 = vmatpush1.msra.mxu0 0.0
    %5089 = vmatprep.subr.mxu0 0.0
    %5090 = vmatpush1.msra.mxu0 0.0
    %5091 = vmatprep.subr.mxu0 0.0
    %5092 = vmatpush1.msra.mxu0 0.0
    %5093 = vmatprep.subr.mxu0 0.0
    %5094 = vmatpush1.msra.mxu0 0.0
    %5095 = vmatprep.subr.mxu0 0.0
    %5096 = vmatpush1.msra.mxu0 0.0
    %5097 = vmatprep.mubr.f32.mxu0 0.0
    %5098 = vmatmul.mubr.f32.gmra.mrb[0].mxu0 %v5031
    %v5099 = vpop.f32.mrb[0].mxu0
    %v5100 = vadd.f32 0.0, %v5099
    %v5101 = vpop.f32.mrb[0].mxu0
    %5102 = vdwg.mxu0
    %v5104 = vsel %vm1308, %v5002, 0
    %5106 = vmatprep.subr.mxu0 0.0
    %5107 = vmatpush1.msra.mxu0 %v4867
    %5108 = vmatprep.subr.mxu0 0.0
    %5109 = vmatpush1.msra.mxu0 0.0
    %5110 = vmatprep.subr.mxu0 0.0
    %5111 = vmatpush1.msra.mxu0 0.0
    %5112 = vmatprep.subr.mxu0 0.0
    %5113 = vmatpush1.msra.mxu0 0.0
    %5114 = vmatprep.subr.mxu0 0.0
    %5115 = vmatpush1.msra.mxu0 0.0
    %5116 = vmatprep.subr.mxu0 0.0
    %5117 = vmatpush1.msra.mxu0 0.0
    %5118 = vmatprep.subr.mxu0 0.0
    %5119 = vmatpush1.msra.mxu0 0.0
    %5120 = vmatprep.subr.mxu0 0.0
    %5121 = vmatpush1.msra.mxu0 0.0
    %5122 = vmatprep.subr.mxu0 0.0
    %5123 = vmatpush1.msra.mxu0 0.0
    %5124 = vmatprep.subr.mxu0 0.0
    %5125 = vmatpush1.msra.mxu0 0.0
    %5126 = vmatprep.subr.mxu0 0.0
    %5127 = vmatpush1.msra.mxu0 0.0
    %5128 = vmatprep.subr.mxu0 0.0
    %5129 = vmatpush1.msra.mxu0 0.0
    %5130 = vmatprep.subr.mxu0 0.0
    %5131 = vmatpush1.msra.mxu0 0.0
    %5132 = vmatprep.subr.mxu0 0.0
    %5133 = vmatpush1.msra.mxu0 0.0
    %5134 = vmatprep.subr.mxu0 0.0
    %5135 = vmatpush1.msra.mxu0 0.0
    %5136 = vmatprep.subr.mxu0 0.0
    %5137 = vmatpush1.msra.mxu0 0.0
    %5138 = vmatprep.subr.mxu0 0.0
    %5139 = vmatpush1.msra.mxu0 0.0
    %5140 = vmatprep.subr.mxu0 0.0
    %5141 = vmatpush1.msra.mxu0 0.0
    %5142 = vmatprep.subr.mxu0 0.0
    %5143 = vmatpush1.msra.mxu0 0.0
    %5144 = vmatprep.subr.mxu0 0.0
    %5145 = vmatpush1.msra.mxu0 0.0
    %5146 = vmatprep.subr.mxu0 0.0
    %5147 = vmatpush1.msra.mxu0 0.0
    %5148 = vmatprep.subr.mxu0 0.0
    %5149 = vmatpush1.msra.mxu0 0.0
    %5150 = vmatprep.subr.mxu0 0.0
    %5151 = vmatpush1.msra.mxu0 0.0
    %5152 = vmatprep.subr.mxu0 0.0
    %5153 = vmatpush1.msra.mxu0 0.0
    %5154 = vmatprep.subr.mxu0 0.0
    %5155 = vmatpush1.msra.mxu0 0.0
    %5156 = vmatprep.subr.mxu0 0.0
    %5157 = vmatpush1.msra.mxu0 0.0
    %5158 = vmatprep.subr.mxu0 0.0
    %5159 = vmatpush1.msra.mxu0 0.0
    %5160 = vmatprep.subr.mxu0 0.0
    %5161 = vmatpush1.msra.mxu0 0.0
    %5162 = vmatprep.subr.mxu0 0.0
    %5163 = vmatpush1.msra.mxu0 0.0
    %5164 = vmatprep.subr.mxu0 0.0
    %5165 = vmatpush1.msra.mxu0 0.0
    %5166 = vmatprep.subr.mxu0 0.0
    %5167 = vmatpush1.msra.mxu0 0.0
    %5168 = vmatprep.subr.mxu0 0.0
    %5169 = vmatpush1.msra.mxu0 0.0
    %5170 = vmatprep.mubr.f32.mxu0 0.0
    %5171 = vmatmul.mubr.f32.gmra.mrb[0].mxu0 %v5104
    %v5172 = vpop.f32.mrb[0].mxu0
    %v5173 = vadd.f32 %v5100, %v5172
    %v5174 = vpop.f32.mrb[0].mxu0
    %5175 = vdwg.mxu0
    %v5176 = vmul.f32 %v5173, 0.5
    %5177 = vrot.lane.b32.xlu0 %v4867, 112
    %v5178 = vpop.permute.xlu0 %5177
    %v5180 = vadd.f32 %v5176, %v5178
    %v5181 = vmin.f32 %v5180, 0.0
    %vm5182 = vcmp.gt.f32.partialorder %v5180, 0.0
    %v5183 = vmul.f32 %v5181, 1.442695
    %v5184 = vpow.pop %v5183
    %v5185 = vsub.f32 %v5184, 1.0
    %v5186 = vsel %vm5182, %v5180, %v5185
    %v5187 = vld [vmem:[%s85] sm:$0xff]
    %v5188 = vld [vmem:[%s87] sm:$0xff]
    %v5189 = vld [vmem:[%s87 + $0x8] sm:$0xff]
    %v5191 = vsel %vm1308, %v4791, 0
    %5193 = vmatprep.subr.mxu0 0.0
    %5194 = vmatpush1.msra.mxu0 %v5187
    %5195 = vmatprep.subr.mxu0 0.0
    %5196 = vmatpush1.msra.mxu0 0.0
    %5197 = vmatprep.subr.mxu0 0.0
    %5198 = vmatpush1.msra.mxu0 0.0
    %5199 = vmatprep.subr.mxu0 0.0
    %5200 = vmatpush1.msra.mxu0 0.0
    %5201 = vmatprep.subr.mxu0 0.0
    %5202 = vmatpush1.msra.mxu0 0.0
    %5203 = vmatprep.subr.mxu0 0.0
    %5204 = vmatpush1.msra.mxu0 0.0
    %5205 = vmatprep.subr.mxu0 0.0
    %5206 = vmatpush1.msra.mxu0 0.0
    %5207 = vmatprep.subr.mxu0 0.0
    %5208 = vmatpush1.msra.mxu0 0.0
    %5209 = vmatprep.subr.mxu0 0.0
    %5210 = vmatpush1.msra.mxu0 0.0
    %5211 = vmatprep.subr.mxu0 0.0
    %5212 = vmatpush1.msra.mxu0 0.0
    %5213 = vmatprep.subr.mxu0 0.0
    %5214 = vmatpush1.msra.mxu0 0.0
    %5215 = vmatprep.subr.mxu0 0.0
    %5216 = vmatpush1.msra.mxu0 0.0
    %5217 = vmatprep.subr.mxu0 0.0
    %5218 = vmatpush1.msra.mxu0 0.0
    %5219 = vmatprep.subr.mxu0 0.0
    %5220 = vmatpush1.msra.mxu0 0.0
    %5221 = vmatprep.subr.mxu0 0.0
    %5222 = vmatpush1.msra.mxu0 0.0
    %5223 = vmatprep.subr.mxu0 0.0
    %5224 = vmatpush1.msra.mxu0 0.0
    %5225 = vmatprep.subr.mxu0 0.0
    %5226 = vmatpush1.msra.mxu0 0.0
    %5227 = vmatprep.subr.mxu0 0.0
    %5228 = vmatpush1.msra.mxu0 0.0
    %5229 = vmatprep.subr.mxu0 0.0
    %5230 = vmatpush1.msra.mxu0 0.0
    %5231 = vmatprep.subr.mxu0 0.0
    %5232 = vmatpush1.msra.mxu0 0.0
    %5233 = vmatprep.subr.mxu0 0.0
    %5234 = vmatpush1.msra.mxu0 0.0
    %5235 = vmatprep.subr.mxu0 0.0
    %5236 = vmatpush1.msra.mxu0 0.0
    %5237 = vmatprep.subr.mxu0 0.0
    %5238 = vmatpush1.msra.mxu0 0.0
    %5239 = vmatprep.subr.mxu0 0.0
    %5240 = vmatpush1.msra.mxu0 0.0
    %5241 = vmatprep.subr.mxu0 0.0
    %5242 = vmatpush1.msra.mxu0 0.0
    %5243 = vmatprep.subr.mxu0 0.0
    %5244 = vmatpush1.msra.mxu0 0.0
    %5245 = vmatprep.subr.mxu0 0.0
    %5246 = vmatpush1.msra.mxu0 0.0
    %5247 = vmatprep.subr.mxu0 0.0
    %5248 = vmatpush1.msra.mxu0 0.0
    %5249 = vmatprep.subr.mxu0 0.0
    %5250 = vmatpush1.msra.mxu0 0.0
    %5251 = vmatprep.subr.mxu0 0.0
    %5252 = vmatpush1.msra.mxu0 0.0
    %5253 = vmatprep.subr.mxu0 0.0
    %5254 = vmatpush1.msra.mxu0 0.0
    %5255 = vmatprep.subr.mxu0 0.0
    %5256 = vmatpush1.msra.mxu0 0.0
    %5257 = vmatprep.mubr.f32.mxu0 0.0
    %5258 = vmatmul.mubr.f32.gmra.mrb[0].mxu0 %v5191
    %v5259 = vpop.f32.mrb[0].mxu0
    %v5260 = vadd.f32 0.0, %v5259
    %v5261 = vpop.f32.mrb[0].mxu0
    %5262 = vdwg.mxu0
    %v5264 = vsel %vm338, %v5260, 0
    %5266 = vmatprep.subr.mxu0 0.0
    %5267 = vmatpush1.msra.mxu0 %v5188
    %5268 = vmatprep.subr.mxu0 0.0
    %5269 = vmatpush1.msra.mxu0 %v5189
    %5270 = vmatprep.subr.mxu0 0.0
    %5271 = vmatpush1.msra.mxu0 0.0
    %5272 = vmatprep.subr.mxu0 0.0
    %5273 = vmatpush1.msra.mxu0 0.0
    %5274 = vmatprep.subr.mxu0 0.0
    %5275 = vmatpush1.msra.mxu0 0.0
    %5276 = vmatprep.subr.mxu0 0.0
    %5277 = vmatpush1.msra.mxu0 0.0
    %5278 = vmatprep.subr.mxu0 0.0
    %5279 = vmatpush1.msra.mxu0 0.0
    %5280 = vmatprep.subr.mxu0 0.0
    %5281 = vmatpush1.msra.mxu0 0.0
    %5282 = vmatprep.subr.mxu0 0.0
    %5283 = vmatpush1.msra.mxu0 0.0
    %5284 = vmatprep.subr.mxu0 0.0
    %5285 = vmatpush1.msra.mxu0 0.0
    %5286 = vmatprep.subr.mxu0 0.0
    %5287 = vmatpush1.msra.mxu0 0.0
    %5288 = vmatprep.subr.mxu0 0.0
    %5289 = vmatpush1.msra.mxu0 0.0
    %5290 = vmatprep.subr.mxu0 0.0
    %5291 = vmatpush1.msra.mxu0 0.0
    %5292 = vmatprep.subr.mxu0 0.0
    %5293 = vmatpush1.msra.mxu0 0.0
    %5294 = vmatprep.subr.mxu0 0.0
    %5295 = vmatpush1.msra.mxu0 0.0
    %5296 = vmatprep.subr.mxu0 0.0
    %5297 = vmatpush1.msra.mxu0 0.0
    %5298 = vmatprep.subr.mxu0 0.0
    %5299 = vmatpush1.msra.mxu0 0.0
    %5300 = vmatprep.subr.mxu0 0.0
    %5301 = vmatpush1.msra.mxu0 0.0
    %5302 = vmatprep.subr.mxu0 0.0
    %5303 = vmatpush1.msra.mxu0 0.0
    %5304 = vmatprep.subr.mxu0 0.0
    %5305 = vmatpush1.msra.mxu0 0.0
    %5306 = vmatprep.subr.mxu0 0.0
    %5307 = vmatpush1.msra.mxu0 0.0
    %5308 = vmatprep.subr.mxu0 0.0
    %5309 = vmatpush1.msra.mxu0 0.0
    %5310 = vmatprep.subr.mxu0 0.0
    %5311 = vmatpush1.msra.mxu0 0.0
    %5312 = vmatprep.subr.mxu0 0.0
    %5313 = vmatpush1.msra.mxu0 0.0
    %5314 = vmatprep.subr.mxu0 0.0
    %5315 = vmatpush1.msra.mxu0 0.0
    %5316 = vmatprep.subr.mxu0 0.0
    %5317 = vmatpush1.msra.mxu0 0.0
    %5318 = vmatprep.subr.mxu0 0.0
    %5319 = vmatpush1.msra.mxu0 0.0
    %5320 = vmatprep.subr.mxu0 0.0
    %5321 = vmatpush1.msra.mxu0 0.0
    %5322 = vmatprep.subr.mxu0 0.0
    %5323 = vmatpush1.msra.mxu0 0.0
    %5324 = vmatprep.subr.mxu0 0.0
    %5325 = vmatpush1.msra.mxu0 0.0
    %5326 = vmatprep.subr.mxu0 0.0
    %5327 = vmatpush1.msra.mxu0 0.0
    %5328 = vmatprep.subr.mxu0 0.0
    %5329 = vmatpush1.msra.mxu0 0.0
    %5330 = vmatprep.mubr.f32.mxu0 0.0
    %5331 = vmatmul.mubr.f32.gmra.mrb[0].mxu0 %v5264
    %v5332 = vpop.f32.mrb[0].mxu0
    %v5333 = vadd.f32 0.0, %v5332
    %v5334 = vpop.f32.mrb[0].mxu0
    %5335 = vdwg.mxu0
    %5337 = vrot.lane.b32.xlu0 %v5333, 126
    %v5338 = vpop.permute.xlu0 %5337
    %5340 = vxpose.xlu0.b32.start [1/16] %v5338, 128
    %5341 = vxpose.xlu0.b32.cont [2/16] 0.0, 128
    %5342 = vxpose.xlu0.b32.cont [3/16] 0.0, 128
    %5343 = vxpose.xlu0.b32.cont [4/16] 0.0, 128
    %5344 = vxpose.xlu0.b32.cont [5/16] 0.0, 128
    %5345 = vxpose.xlu0.b32.cont [6/16] 0.0, 128
    %5346 = vxpose.xlu0.b32.cont [7/16] 0.0, 128
    %5347 = vxpose.xlu0.b32.cont [8/16] 0.0, 128
    %5348 = vxpose.xlu0.b32.cont [9/16] 0.0, 128
    %5349 = vxpose.xlu0.b32.cont [10/16] 0.0, 128
    %5350 = vxpose.xlu0.b32.cont [11/16] 0.0, 128
    %5351 = vxpose.xlu0.b32.cont [12/16] 0.0, 128
    %5352 = vxpose.xlu0.b32.cont [13/16] 0.0, 128
    %5353 = vxpose.xlu0.b32.cont [14/16] 0.0, 128
    %5354 = vxpose.xlu0.b32.cont [15/16] 0.0, 128
    %5355 = vxpose.xlu0.b32.end [16/16] 0.0, 128
    %v5356 = vpop.trf.xlu0
    %v5357 = vpop.trf.xlu0
    %v5358 = vpop.trf.xlu0
    %v5359 = vpop.trf.xlu0
    %v5360 = vpop.trf.xlu0
    %v5361 = vpop.trf.xlu0
    %v5362 = vpop.trf.xlu0
    %v5363 = vpop.trf.xlu0
    %v5364 = vpop.trf.xlu0
    %v5365 = vpop.trf.xlu0
    %v5366 = vpop.trf.xlu0
    %v5367 = vpop.trf.xlu0
    %v5368 = vpop.trf.xlu0
    %v5369 = vpop.trf.xlu0
    %v5370 = vpop.trf.xlu0
    %v5371 = vpop.trf.xlu0
    %5372 = vset.pattern.permute.xlu0 0
    %5373 = vperm.xlu0 %5372, %v5333
    %v5374 = vpop.permute.xlu0 %5373
    %v5376 = vlaneseq
    %v5377 = vshrl.u32 %v5376, 7
    %v5378 = vsub.s32 0, %v5377
    %v5379 = vrot.slane %v5356, %v5378
    %v5380 = vadd.f32 %v5374, %v5379
    %vm5381 = vcmp.gt.f32.partialorder %v5380, 0.0
    %v5382 = vmul.f32 %v5380, 0.2
    %v5383 = vsel %vm5381, %v5380, %v5382
    %v5384 = vadd.f32 %v5383, %v4398
    %v5385 = vsel %vm1308, %v5384, -inf
    %5386 = vmax.xlane.f32.xlu0 %v5385
    %v5387 = vpop.xlane.xlu0 %5386
    %v5388 = vsub.f32 %v5384, %v5387
    %v5389 = vmul.f32 %v5388, 1.442695
    %v5390 = vpow.pop %v5389
    %v5391 = vsel %vm1308, %v5390, 0.0
    %5392 = vadd.xlane.f32.xlu0 %v5391
    %v5393 = vpop.xlane.xlu0 %5392
    %v5394 = vrcp.pop %v5393
    %v5395 = vmul.f32 %v5390, %v5394
    %5396 = vset.pattern.permute.xlu0 1
    %5397 = vperm.xlu0 %5396, %v5333
    %v5398 = vpop.permute.xlu0 %5397
    %v5400 = vlaneseq
    %v5401 = vshrl.u32 %v5400, 7
    %v5402 = vsub.s32 1, %v5401
    %v5403 = vrot.slane %v5356, %v5402
    %v5404 = vadd.f32 %v5398, %v5403
    %vm5405 = vcmp.gt.f32.partialorder %v5404, 0.0
    %v5406 = vmul.f32 %v5404, 0.2
    %v5407 = vsel %vm5405, %v5404, %v5406
    %v5408 = vadd.f32 %v5407, %v4398
    %v5409 = vsel %vm1308, %v5408, -inf
    %5410 = vmax.xlane.f32.xlu0 %v5409
    %v5411 = vpop.xlane.xlu0 %5410
    %v5412 = vsub.f32 %v5408, %v5411
    %v5413 = vmul.f32 %v5412, 1.442695
    %v5414 = vpow.pop %v5413
    %v5415 = vsel %vm1308, %v5414, 0.0
    %5416 = vadd.xlane.f32.xlu0 %v5415
    %v5417 = vpop.xlane.xlu0 %5416
    %v5418 = vrcp.pop %v5417
    %v5419 = vmul.f32 %v5414, %v5418
    %5420 = vrot.lane.b32.xlu0 %v5260, 120
    %v5421 = vpop.permute.xlu0 %5420
    %v5424 = vsel %vm1308, %v5419, 0
    %5426 = vmatprep.subr.mxu0 0.0
    %5427 = vmatpush1.msra.mxu0 %v5421
    %5428 = vmatprep.subr.mxu0 0.0
    %5429 = vmatpush1.msra.mxu0 0.0
    %5430 = vmatprep.subr.mxu0 0.0
    %5431 = vmatpush1.msra.mxu0 0.0
    %5432 = vmatprep.subr.mxu0 0.0
    %5433 = vmatpush1.msra.mxu0 0.0
    %5434 = vmatprep.subr.mxu0 0.0
    %5435 = vmatpush1.msra.mxu0 0.0
    %5436 = vmatprep.subr.mxu0 0.0
    %5437 = vmatpush1.msra.mxu0 0.0
    %5438 = vmatprep.subr.mxu0 0.0
    %5439 = vmatpush1.msra.mxu0 0.0
    %5440 = vmatprep.subr.mxu0 0.0
    %5441 = vmatpush1.msra.mxu0 0.0
    %5442 = vmatprep.subr.mxu0 0.0
    %5443 = vmatpush1.msra.mxu0 0.0
    %5444 = vmatprep.subr.mxu0 0.0
    %5445 = vmatpush1.msra.mxu0 0.0
    %5446 = vmatprep.subr.mxu0 0.0
    %5447 = vmatpush1.msra.mxu0 0.0
    %5448 = vmatprep.subr.mxu0 0.0
    %5449 = vmatpush1.msra.mxu0 0.0
    %5450 = vmatprep.subr.mxu0 0.0
    %5451 = vmatpush1.msra.mxu0 0.0
    %5452 = vmatprep.subr.mxu0 0.0
    %5453 = vmatpush1.msra.mxu0 0.0
    %5454 = vmatprep.subr.mxu0 0.0
    %5455 = vmatpush1.msra.mxu0 0.0
    %5456 = vmatprep.subr.mxu0 0.0
    %5457 = vmatpush1.msra.mxu0 0.0
    %5458 = vmatprep.subr.mxu0 0.0
    %5459 = vmatpush1.msra.mxu0 0.0
    %5460 = vmatprep.subr.mxu0 0.0
    %5461 = vmatpush1.msra.mxu0 0.0
    %5462 = vmatprep.subr.mxu0 0.0
    %5463 = vmatpush1.msra.mxu0 0.0
    %5464 = vmatprep.subr.mxu0 0.0
    %5465 = vmatpush1.msra.mxu0 0.0
    %5466 = vmatprep.subr.mxu0 0.0
    %5467 = vmatpush1.msra.mxu0 0.0
    %5468 = vmatprep.subr.mxu0 0.0
    %5469 = vmatpush1.msra.mxu0 0.0
    %5470 = vmatprep.subr.mxu0 0.0
    %5471 = vmatpush1.msra.mxu0 0.0
    %5472 = vmatprep.subr.mxu0 0.0
    %5473 = vmatpush1.msra.mxu0 0.0
    %5474 = vmatprep.subr.mxu0 0.0
    %5475 = vmatpush1.msra.mxu0 0.0
    %5476 = vmatprep.subr.mxu0 0.0
    %5477 = vmatpush1.msra.mxu0 0.0
    %5478 = vmatprep.subr.mxu0 0.0
    %5479 = vmatpush1.msra.mxu0 0.0
    %5480 = vmatprep.subr.mxu0 0.0
    %5481 = vmatpush1.msra.mxu0 0.0
    %5482 = vmatprep.subr.mxu0 0.0
    %5483 = vmatpush1.msra.mxu0 0.0
    %5484 = vmatprep.subr.mxu0 0.0
    %5485 = vmatpush1.msra.mxu0 0.0
    %5486 = vmatprep.subr.mxu0 0.0
    %5487 = vmatpush1.msra.mxu0 0.0
    %5488 = vmatprep.subr.mxu0 0.0
    %5489 = vmatpush1.msra.mxu0 0.0
    %5490 = vmatprep.mubr.f32.mxu0 0.0
    %5491 = vmatmul.mubr.f32.gmra.mrb[0].mxu0 %v5424
    %v5492 = vpop.f32.mrb[0].mxu0
    %v5493 = vadd.f32 0.0, %v5492
    %v5494 = vpop.f32.mrb[0].mxu0
    %5495 = vdwg.mxu0
    %v5497 = vsel %vm1308, %v5395, 0
    %5499 = vmatprep.subr.mxu0 0.0
    %5500 = vmatpush1.msra.mxu0 %v5260
    %5501 = vmatprep.subr.mxu0 0.0
    %5502 = vmatpush1.msra.mxu0 0.0
    %5503 = vmatprep.subr.mxu0 0.0
    %5504 = vmatpush1.msra.mxu0 0.0
    %5505 = vmatprep.subr.mxu0 0.0
    %5506 = vmatpush1.msra.mxu0 0.0
    %5507 = vmatprep.subr.mxu0 0.0
    %5508 = vmatpush1.msra.mxu0 0.0
    %5509 = vmatprep.subr.mxu0 0.0
    %5510 = vmatpush1.msra.mxu0 0.0
    %5511 = vmatprep.subr.mxu0 0.0
    %5512 = vmatpush1.msra.mxu0 0.0
    %5513 = vmatprep.subr.mxu0 0.0
    %5514 = vmatpush1.msra.mxu0 0.0
    %5515 = vmatprep.subr.mxu0 0.0
    %5516 = vmatpush1.msra.mxu0 0.0
    %5517 = vmatprep.subr.mxu0 0.0
    %5518 = vmatpush1.msra.mxu0 0.0
    %5519 = vmatprep.subr.mxu0 0.0
    %5520 = vmatpush1.msra.mxu0 0.0
    %5521 = vmatprep.subr.mxu0 0.0
    %5522 = vmatpush1.msra.mxu0 0.0
    %5523 = vmatprep.subr.mxu0 0.0
    %5524 = vmatpush1.msra.mxu0 0.0
    %5525 = vmatprep.subr.mxu0 0.0
    %5526 = vmatpush1.msra.mxu0 0.0
    %5527 = vmatprep.subr.mxu0 0.0
    %5528 = vmatpush1.msra.mxu0 0.0
    %5529 = vmatprep.subr.mxu0 0.0
    %5530 = vmatpush1.msra.mxu0 0.0
    %5531 = vmatprep.subr.mxu0 0.0
    %5532 = vmatpush1.msra.mxu0 0.0
    %5533 = vmatprep.subr.mxu0 0.0
    %5534 = vmatpush1.msra.mxu0 0.0
    %5535 = vmatprep.subr.mxu0 0.0
    %5536 = vmatpush1.msra.mxu0 0.0
    %5537 = vmatprep.subr.mxu0 0.0
    %5538 = vmatpush1.msra.mxu0 0.0
    %5539 = vmatprep.subr.mxu0 0.0
    %5540 = vmatpush1.msra.mxu0 0.0
    %5541 = vmatprep.subr.mxu0 0.0
    %5542 = vmatpush1.msra.mxu0 0.0
    %5543 = vmatprep.subr.mxu0 0.0
    %5544 = vmatpush1.msra.mxu0 0.0
    %5545 = vmatprep.subr.mxu0 0.0
    %5546 = vmatpush1.msra.mxu0 0.0
    %5547 = vmatprep.subr.mxu0 0.0
    %5548 = vmatpush1.msra.mxu0 0.0
    %5549 = vmatprep.subr.mxu0 0.0
    %5550 = vmatpush1.msra.mxu0 0.0
    %5551 = vmatprep.subr.mxu0 0.0
    %5552 = vmatpush1.msra.mxu0 0.0
    %5553 = vmatprep.subr.mxu0 0.0
    %5554 = vmatpush1.msra.mxu0 0.0
    %5555 = vmatprep.subr.mxu0 0.0
    %5556 = vmatpush1.msra.mxu0 0.0
    %5557 = vmatprep.subr.mxu0 0.0
    %5558 = vmatpush1.msra.mxu0 0.0
    %5559 = vmatprep.subr.mxu0 0.0
    %5560 = vmatpush1.msra.mxu0 0.0
    %5561 = vmatprep.subr.mxu0 0.0
    %5562 = vmatpush1.msra.mxu0 0.0
    %5563 = vmatprep.mubr.f32.mxu0 0.0
    %5564 = vmatmul.mubr.f32.gmra.mrb[0].mxu0 %v5497
    %v5565 = vpop.f32.mrb[0].mxu0
    %v5566 = vadd.f32 %v5493, %v5565
    %v5567 = vpop.f32.mrb[0].mxu0
    %5568 = vdwg.mxu0
    %v5569 = vmul.f32 %v5566, 0.5
    %5570 = vrot.lane.b32.xlu0 %v5260, 112
    %v5571 = vpop.permute.xlu0 %5570
    %v5573 = vadd.f32 %v5569, %v5571
    %v5574 = vmin.f32 %v5573, 0.0
    %vm5575 = vcmp.gt.f32.partialorder %v5573, 0.0
    %v5576 = vmul.f32 %v5574, 1.442695
    %v5577 = vpow.pop %v5576
    %v5578 = vsub.f32 %v5577, 1.0
    %v5579 = vsel %vm5575, %v5573, %v5578
    %v5580 = vld [vmem:[%s89] sm:$0xff]
    %v5581 = vld [vmem:[%s91] sm:$0xff]
    %v5582 = vld [vmem:[%s91 + $0x8] sm:$0xff]
    %v5584 = vsel %vm1308, %v5186, 0
    %5586 = vmatprep.subr.mxu0 0.0
    %5587 = vmatpush1.msra.mxu0 %v5580
    %5588 = vmatprep.subr.mxu0 0.0
    %5589 = vmatpush1.msra.mxu0 0.0
    %5590 = vmatprep.subr.mxu0 0.0
    %5591 = vmatpush1.msra.mxu0 0.0
    %5592 = vmatprep.subr.mxu0 0.0
    %5593 = vmatpush1.msra.mxu0 0.0
    %5594 = vmatprep.subr.mxu0 0.0
    %5595 = vmatpush1.msra.mxu0 0.0
    %5596 = vmatprep.subr.mxu0 0.0
    %5597 = vmatpush1.msra.mxu0 0.0
    %5598 = vmatprep.subr.mxu0 0.0
    %5599 = vmatpush1.msra.mxu0 0.0
    %5600 = vmatprep.subr.mxu0 0.0
    %5601 = vmatpush1.msra.mxu0 0.0
    %5602 = vmatprep.subr.mxu0 0.0
    %5603 = vmatpush1.msra.mxu0 0.0
    %5604 = vmatprep.subr.mxu0 0.0
    %5605 = vmatpush1.msra.mxu0 0.0
    %5606 = vmatprep.subr.mxu0 0.0
    %5607 = vmatpush1.msra.mxu0 0.0
    %5608 = vmatprep.subr.mxu0 0.0
    %5609 = vmatpush1.msra.mxu0 0.0
    %5610 = vmatprep.subr.mxu0 0.0
    %5611 = vmatpush1.msra.mxu0 0.0
    %5612 = vmatprep.subr.mxu0 0.0
    %5613 = vmatpush1.msra.mxu0 0.0
    %5614 = vmatprep.subr.mxu0 0.0
    %5615 = vmatpush1.msra.mxu0 0.0
    %5616 = vmatprep.subr.mxu0 0.0
    %5617 = vmatpush1.msra.mxu0 0.0
    %5618 = vmatprep.subr.mxu0 0.0
    %5619 = vmatpush1.msra.mxu0 0.0
    %5620 = vmatprep.subr.mxu0 0.0
    %5621 = vmatpush1.msra.mxu0 0.0
    %5622 = vmatprep.subr.mxu0 0.0
    %5623 = vmatpush1.msra.mxu0 0.0
    %5624 = vmatprep.subr.mxu0 0.0
    %5625 = vmatpush1.msra.mxu0 0.0
    %5626 = vmatprep.subr.mxu0 0.0
    %5627 = vmatpush1.msra.mxu0 0.0
    %5628 = vmatprep.subr.mxu0 0.0
    %5629 = vmatpush1.msra.mxu0 0.0
    %5630 = vmatprep.subr.mxu0 0.0
    %5631 = vmatpush1.msra.mxu0 0.0
    %5632 = vmatprep.subr.mxu0 0.0
    %5633 = vmatpush1.msra.mxu0 0.0
    %5634 = vmatprep.subr.mxu0 0.0
    %5635 = vmatpush1.msra.mxu0 0.0
    %5636 = vmatprep.subr.mxu0 0.0
    %5637 = vmatpush1.msra.mxu0 0.0
    %5638 = vmatprep.subr.mxu0 0.0
    %5639 = vmatpush1.msra.mxu0 0.0
    %5640 = vmatprep.subr.mxu0 0.0
    %5641 = vmatpush1.msra.mxu0 0.0
    %5642 = vmatprep.subr.mxu0 0.0
    %5643 = vmatpush1.msra.mxu0 0.0
    %5644 = vmatprep.subr.mxu0 0.0
    %5645 = vmatpush1.msra.mxu0 0.0
    %5646 = vmatprep.subr.mxu0 0.0
    %5647 = vmatpush1.msra.mxu0 0.0
    %5648 = vmatprep.subr.mxu0 0.0
    %5649 = vmatpush1.msra.mxu0 0.0
    %5650 = vmatprep.mubr.f32.mxu0 0.0
    %5651 = vmatmul.mubr.f32.gmra.mrb[0].mxu0 %v5584
    %v5652 = vpop.f32.mrb[0].mxu0
    %v5653 = vadd.f32 0.0, %v5652
    %v5654 = vpop.f32.mrb[0].mxu0
    %5655 = vdwg.mxu0
    %v5657 = vsel %vm338, %v5653, 0
    %5659 = vmatprep.subr.mxu0 0.0
    %5660 = vmatpush1.msra.mxu0 %v5581
    %5661 = vmatprep.subr.mxu0 0.0
    %5662 = vmatpush1.msra.mxu0 %v5582
    %5663 = vmatprep.subr.mxu0 0.0
    %5664 = vmatpush1.msra.mxu0 0.0
    %5665 = vmatprep.subr.mxu0 0.0
    %5666 = vmatpush1.msra.mxu0 0.0
    %5667 = vmatprep.subr.mxu0 0.0
    %5668 = vmatpush1.msra.mxu0 0.0
    %5669 = vmatprep.subr.mxu0 0.0
    %5670 = vmatpush1.msra.mxu0 0.0
    %5671 = vmatprep.subr.mxu0 0.0
    %5672 = vmatpush1.msra.mxu0 0.0
    %5673 = vmatprep.subr.mxu0 0.0
    %5674 = vmatpush1.msra.mxu0 0.0
    %5675 = vmatprep.subr.mxu0 0.0
    %5676 = vmatpush1.msra.mxu0 0.0
    %5677 = vmatprep.subr.mxu0 0.0
    %5678 = vmatpush1.msra.mxu0 0.0
    %5679 = vmatprep.subr.mxu0 0.0
    %5680 = vmatpush1.msra.mxu0 0.0
    %5681 = vmatprep.subr.mxu0 0.0
    %5682 = vmatpush1.msra.mxu0 0.0
    %5683 = vmatprep.subr.mxu0 0.0
    %5684 = vmatpush1.msra.mxu0 0.0
    %5685 = vmatprep.subr.mxu0 0.0
    %5686 = vmatpush1.msra.mxu0 0.0
    %5687 = vmatprep.subr.mxu0 0.0
    %5688 = vmatpush1.msra.mxu0 0.0
    %5689 = vmatprep.subr.mxu0 0.0
    %5690 = vmatpush1.msra.mxu0 0.0
    %5691 = vmatprep.subr.mxu0 0.0
    %5692 = vmatpush1.msra.mxu0 0.0
    %5693 = vmatprep.subr.mxu0 0.0
    %5694 = vmatpush1.msra.mxu0 0.0
    %5695 = vmatprep.subr.mxu0 0.0
    %5696 = vmatpush1.msra.mxu0 0.0
    %5697 = vmatprep.subr.mxu0 0.0
    %5698 = vmatpush1.msra.mxu0 0.0
    %5699 = vmatprep.subr.mxu0 0.0
    %5700 = vmatpush1.msra.mxu0 0.0
    %5701 = vmatprep.subr.mxu0 0.0
    %5702 = vmatpush1.msra.mxu0 0.0
    %5703 = vmatprep.subr.mxu0 0.0
    %5704 = vmatpush1.msra.mxu0 0.0
    %5705 = vmatprep.subr.mxu0 0.0
    %5706 = vmatpush1.msra.mxu0 0.0
    %5707 = vmatprep.subr.mxu0 0.0
    %5708 = vmatpush1.msra.mxu0 0.0
    %5709 = vmatprep.subr.mxu0 0.0
    %5710 = vmatpush1.msra.mxu0 0.0
    %5711 = vmatprep.subr.mxu0 0.0
    %5712 = vmatpush1.msra.mxu0 0.0
    %5713 = vmatprep.subr.mxu0 0.0
    %5714 = vmatpush1.msra.mxu0 0.0
    %5715 = vmatprep.subr.mxu0 0.0
    %5716 = vmatpush1.msra.mxu0 0.0
    %5717 = vmatprep.subr.mxu0 0.0
    %5718 = vmatpush1.msra.mxu0 0.0
    %5719 = vmatprep.subr.mxu0 0.0
    %5720 = vmatpush1.msra.mxu0 0.0
    %5721 = vmatprep.subr.mxu0 0.0
    %5722 = vmatpush1.msra.mxu0 0.0
    %5723 = vmatprep.mubr.f32.mxu0 0.0
    %5724 = vmatmul.mubr.f32.gmra.mrb[0].mxu0 %v5657
    %v5725 = vpop.f32.mrb[0].mxu0
    %v5726 = vadd.f32 0.0, %v5725
    %v5727 = vpop.f32.mrb[0].mxu0
    %5728 = vdwg.mxu0
    %5730 = vrot.lane.b32.xlu0 %v5726, 126
    %v5731 = vpop.permute.xlu0 %5730
    %5733 = vxpose.xlu0.b32.start [1/16] %v5731, 128
    %5734 = vxpose.xlu0.b32.cont [2/16] 0.0, 128
    %5735 = vxpose.xlu0.b32.cont [3/16] 0.0, 128
    %5736 = vxpose.xlu0.b32.cont [4/16] 0.0, 128
    %5737 = vxpose.xlu0.b32.cont [5/16] 0.0, 128
    %5738 = vxpose.xlu0.b32.cont [6/16] 0.0, 128
    %5739 = vxpose.xlu0.b32.cont [7/16] 0.0, 128
    %5740 = vxpose.xlu0.b32.cont [8/16] 0.0, 128
    %5741 = vxpose.xlu0.b32.cont [9/16] 0.0, 128
    %5742 = vxpose.xlu0.b32.cont [10/16] 0.0, 128
    %5743 = vxpose.xlu0.b32.cont [11/16] 0.0, 128
    %5744 = vxpose.xlu0.b32.cont [12/16] 0.0, 128
    %5745 = vxpose.xlu0.b32.cont [13/16] 0.0, 128
    %5746 = vxpose.xlu0.b32.cont [14/16] 0.0, 128
    %5747 = vxpose.xlu0.b32.cont [15/16] 0.0, 128
    %5748 = vxpose.xlu0.b32.end [16/16] 0.0, 128
    %v5749 = vpop.trf.xlu0
    %v5750 = vpop.trf.xlu0
    %v5751 = vpop.trf.xlu0
    %v5752 = vpop.trf.xlu0
    %v5753 = vpop.trf.xlu0
    %v5754 = vpop.trf.xlu0
    %v5755 = vpop.trf.xlu0
    %v5756 = vpop.trf.xlu0
    %v5757 = vpop.trf.xlu0
    %v5758 = vpop.trf.xlu0
    %v5759 = vpop.trf.xlu0
    %v5760 = vpop.trf.xlu0
    %v5761 = vpop.trf.xlu0
    %v5762 = vpop.trf.xlu0
    %v5763 = vpop.trf.xlu0
    %v5764 = vpop.trf.xlu0
    %5765 = vset.pattern.permute.xlu0 0
    %5766 = vperm.xlu0 %5765, %v5726
    %v5767 = vpop.permute.xlu0 %5766
    %v5769 = vlaneseq
    %v5770 = vshrl.u32 %v5769, 7
    %v5771 = vsub.s32 0, %v5770
    %v5772 = vrot.slane %v5749, %v5771
    %v5773 = vadd.f32 %v5767, %v5772
    %vm5774 = vcmp.gt.f32.partialorder %v5773, 0.0
    %v5775 = vmul.f32 %v5773, 0.2
    %v5776 = vsel %vm5774, %v5773, %v5775
    %v5777 = vadd.f32 %v5776, %v4398
    %v5778 = vsel %vm1308, %v5777, -inf
    %5779 = vmax.xlane.f32.xlu0 %v5778
    %v5780 = vpop.xlane.xlu0 %5779
    %v5781 = vsub.f32 %v5777, %v5780
    %v5782 = vmul.f32 %v5781, 1.442695
    %v5783 = vpow.pop %v5782
    %v5784 = vsel %vm1308, %v5783, 0.0
    %5785 = vadd.xlane.f32.xlu0 %v5784
    %v5786 = vpop.xlane.xlu0 %5785
    %v5787 = vrcp.pop %v5786
    %v5788 = vmul.f32 %v5783, %v5787
    %5789 = vset.pattern.permute.xlu0 1
    %5790 = vperm.xlu0 %5789, %v5726
    %v5791 = vpop.permute.xlu0 %5790
    %v5793 = vlaneseq
    %v5794 = vshrl.u32 %v5793, 7
    %v5795 = vsub.s32 1, %v5794
    %v5796 = vrot.slane %v5749, %v5795
    %v5797 = vadd.f32 %v5791, %v5796
    %vm5798 = vcmp.gt.f32.partialorder %v5797, 0.0
    %v5799 = vmul.f32 %v5797, 0.2
    %v5800 = vsel %vm5798, %v5797, %v5799
    %v5801 = vadd.f32 %v5800, %v4398
    %v5802 = vsel %vm1308, %v5801, -inf
    %5803 = vmax.xlane.f32.xlu0 %v5802
    %v5804 = vpop.xlane.xlu0 %5803
    %v5805 = vsub.f32 %v5801, %v5804
    %v5806 = vmul.f32 %v5805, 1.442695
    %v5807 = vpow.pop %v5806
    %v5808 = vsel %vm1308, %v5807, 0.0
    %5809 = vadd.xlane.f32.xlu0 %v5808
    %v5810 = vpop.xlane.xlu0 %5809
    %v5811 = vrcp.pop %v5810
    %v5812 = vmul.f32 %v5807, %v5811
    %5813 = vrot.lane.b32.xlu0 %v5653, 120
    %v5814 = vpop.permute.xlu0 %5813
    %v5817 = vsel %vm1308, %v5812, 0
    %5819 = vmatprep.subr.mxu0 0.0
    %5820 = vmatpush1.msra.mxu0 %v5814
    %5821 = vmatprep.subr.mxu0 0.0
    %5822 = vmatpush1.msra.mxu0 0.0
    %5823 = vmatprep.subr.mxu0 0.0
    %5824 = vmatpush1.msra.mxu0 0.0
    %5825 = vmatprep.subr.mxu0 0.0
    %5826 = vmatpush1.msra.mxu0 0.0
    %5827 = vmatprep.subr.mxu0 0.0
    %5828 = vmatpush1.msra.mxu0 0.0
    %5829 = vmatprep.subr.mxu0 0.0
    %5830 = vmatpush1.msra.mxu0 0.0
    %5831 = vmatprep.subr.mxu0 0.0
    %5832 = vmatpush1.msra.mxu0 0.0
    %5833 = vmatprep.subr.mxu0 0.0
    %5834 = vmatpush1.msra.mxu0 0.0
    %5835 = vmatprep.subr.mxu0 0.0
    %5836 = vmatpush1.msra.mxu0 0.0
    %5837 = vmatprep.subr.mxu0 0.0
    %5838 = vmatpush1.msra.mxu0 0.0
    %5839 = vmatprep.subr.mxu0 0.0
    %5840 = vmatpush1.msra.mxu0 0.0
    %5841 = vmatprep.subr.mxu0 0.0
    %5842 = vmatpush1.msra.mxu0 0.0
    %5843 = vmatprep.subr.mxu0 0.0
    %5844 = vmatpush1.msra.mxu0 0.0
    %5845 = vmatprep.subr.mxu0 0.0
    %5846 = vmatpush1.msra.mxu0 0.0
    %5847 = vmatprep.subr.mxu0 0.0
    %5848 = vmatpush1.msra.mxu0 0.0
    %5849 = vmatprep.subr.mxu0 0.0
    %5850 = vmatpush1.msra.mxu0 0.0
    %5851 = vmatprep.subr.mxu0 0.0
    %5852 = vmatpush1.msra.mxu0 0.0
    %5853 = vmatprep.subr.mxu0 0.0
    %5854 = vmatpush1.msra.mxu0 0.0
    %5855 = vmatprep.subr.mxu0 0.0
    %5856 = vmatpush1.msra.mxu0 0.0
    %5857 = vmatprep.subr.mxu0 0.0
    %5858 = vmatpush1.msra.mxu0 0.0
    %5859 = vmatprep.subr.mxu0 0.0
    %5860 = vmatpush1.msra.mxu0 0.0
    %5861 = vmatprep.subr.mxu0 0.0
    %5862 = vmatpush1.msra.mxu0 0.0
    %5863 = vmatprep.subr.mxu0 0.0
    %5864 = vmatpush1.msra.mxu0 0.0
    %5865 = vmatprep.subr.mxu0 0.0
    %5866 = vmatpush1.msra.mxu0 0.0
    %5867 = vmatprep.subr.mxu0 0.0
    %5868 = vmatpush1.msra.mxu0 0.0
    %5869 = vmatprep.subr.mxu0 0.0
    %5870 = vmatpush1.msra.mxu0 0.0
    %5871 = vmatprep.subr.mxu0 0.0
    %5872 = vmatpush1.msra.mxu0 0.0
    %5873 = vmatprep.subr.mxu0 0.0
    %5874 = vmatpush1.msra.mxu0 0.0
    %5875 = vmatprep.subr.mxu0 0.0
    %5876 = vmatpush1.msra.mxu0 0.0
    %5877 = vmatprep.subr.mxu0 0.0
    %5878 = vmatpush1.msra.mxu0 0.0
    %5879 = vmatprep.subr.mxu0 0.0
    %5880 = vmatpush1.msra.mxu0 0.0
    %5881 = vmatprep.subr.mxu0 0.0
    %5882 = vmatpush1.msra.mxu0 0.0
    %5883 = vmatprep.mubr.f32.mxu0 0.0
    %5884 = vmatmul.mubr.f32.gmra.mrb[0].mxu0 %v5817
    %v5885 = vpop.f32.mrb[0].mxu0
    %v5886 = vadd.f32 0.0, %v5885
    %v5887 = vpop.f32.mrb[0].mxu0
    %5888 = vdwg.mxu0
    %v5890 = vsel %vm1308, %v5788, 0
    %5892 = vmatprep.subr.mxu0 0.0
    %5893 = vmatpush1.msra.mxu0 %v5653
    %5894 = vmatprep.subr.mxu0 0.0
    %5895 = vmatpush1.msra.mxu0 0.0
    %5896 = vmatprep.subr.mxu0 0.0
    %5897 = vmatpush1.msra.mxu0 0.0
    %5898 = vmatprep.subr.mxu0 0.0
    %5899 = vmatpush1.msra.mxu0 0.0
    %5900 = vmatprep.subr.mxu0 0.0
    %5901 = vmatpush1.msra.mxu0 0.0
    %5902 = vmatprep.subr.mxu0 0.0
    %5903 = vmatpush1.msra.mxu0 0.0
    %5904 = vmatprep.subr.mxu0 0.0
    %5905 = vmatpush1.msra.mxu0 0.0
    %5906 = vmatprep.subr.mxu0 0.0
    %5907 = vmatpush1.msra.mxu0 0.0
    %5908 = vmatprep.subr.mxu0 0.0
    %5909 = vmatpush1.msra.mxu0 0.0
    %5910 = vmatprep.subr.mxu0 0.0
    %5911 = vmatpush1.msra.mxu0 0.0
    %5912 = vmatprep.subr.mxu0 0.0
    %5913 = vmatpush1.msra.mxu0 0.0
    %5914 = vmatprep.subr.mxu0 0.0
    %5915 = vmatpush1.msra.mxu0 0.0
    %5916 = vmatprep.subr.mxu0 0.0
    %5917 = vmatpush1.msra.mxu0 0.0
    %5918 = vmatprep.subr.mxu0 0.0
    %5919 = vmatpush1.msra.mxu0 0.0
    %5920 = vmatprep.subr.mxu0 0.0
    %5921 = vmatpush1.msra.mxu0 0.0
    %5922 = vmatprep.subr.mxu0 0.0
    %5923 = vmatpush1.msra.mxu0 0.0
    %5924 = vmatprep.subr.mxu0 0.0
    %5925 = vmatpush1.msra.mxu0 0.0
    %5926 = vmatprep.subr.mxu0 0.0
    %5927 = vmatpush1.msra.mxu0 0.0
    %5928 = vmatprep.subr.mxu0 0.0
    %5929 = vmatpush1.msra.mxu0 0.0
    %5930 = vmatprep.subr.mxu0 0.0
    %5931 = vmatpush1.msra.mxu0 0.0
    %5932 = vmatprep.subr.mxu0 0.0
    %5933 = vmatpush1.msra.mxu0 0.0
    %5934 = vmatprep.subr.mxu0 0.0
    %5935 = vmatpush1.msra.mxu0 0.0
    %5936 = vmatprep.subr.mxu0 0.0
    %5937 = vmatpush1.msra.mxu0 0.0
    %5938 = vmatprep.subr.mxu0 0.0
    %5939 = vmatpush1.msra.mxu0 0.0
    %5940 = vmatprep.subr.mxu0 0.0
    %5941 = vmatpush1.msra.mxu0 0.0
    %5942 = vmatprep.subr.mxu0 0.0
    %5943 = vmatpush1.msra.mxu0 0.0
    %5944 = vmatprep.subr.mxu0 0.0
    %5945 = vmatpush1.msra.mxu0 0.0
    %5946 = vmatprep.subr.mxu0 0.0
    %5947 = vmatpush1.msra.mxu0 0.0
    %5948 = vmatprep.subr.mxu0 0.0
    %5949 = vmatpush1.msra.mxu0 0.0
    %5950 = vmatprep.subr.mxu0 0.0
    %5951 = vmatpush1.msra.mxu0 0.0
    %5952 = vmatprep.subr.mxu0 0.0
    %5953 = vmatpush1.msra.mxu0 0.0
    %5954 = vmatprep.subr.mxu0 0.0
    %5955 = vmatpush1.msra.mxu0 0.0
    %5956 = vmatprep.mubr.f32.mxu0 0.0
    %5957 = vmatmul.mubr.f32.gmra.mrb[0].mxu0 %v5890
    %v5958 = vpop.f32.mrb[0].mxu0
    %v5959 = vadd.f32 %v5886, %v5958
    %v5960 = vpop.f32.mrb[0].mxu0
    %5961 = vdwg.mxu0
    %v5962 = vmul.f32 %v5959, 0.5
    %5963 = vrot.lane.b32.xlu0 %v5653, 112
    %v5964 = vpop.permute.xlu0 %5963
    %v5966 = vadd.f32 %v5962, %v5964
    %v5967 = vmin.f32 %v5966, 0.0
    %vm5968 = vcmp.gt.f32.partialorder %v5966, 0.0
    %v5969 = vmul.f32 %v5967, 1.442695
    %v5970 = vpow.pop %v5969
    %v5971 = vsub.f32 %v5970, 1.0
    %v5972 = vsel %vm5968, %v5966, %v5971
    %v5973 = vsel %vm1308, %v4791, 0.0
    %5974 = vadd.xlane.f32.xlu0 %v5973
    %v5975 = vpop.xlane.xlu0 %5974
    %v5976 = vmul.f32 %v5975, %v2278
    %v5977 = vrot.slane %v5976, 4
    %v5978 = vadd.f32 %v5976, %v5977
    %v5979 = vrot.slane %v5978, 2
    %v5980 = vadd.f32 %v5978, %v5979
    %v5981 = vrot.slane %v5980, 1
    %v5982 = vadd.f32 %v5980, %v5981
    %v5983 = vmul.f32 %v5982, %v2278
    %v5984 = vsel %vm1308, %v5579, 0.0
    %5985 = vadd.xlane.f32.xlu0 %v5984
    %v5986 = vpop.xlane.xlu0 %5985
    %v5987 = vmul.f32 %v5986, %v2278
    %v5988 = vrot.slane %v5987, 4
    %v5989 = vadd.f32 %v5987, %v5988
    %v5990 = vrot.slane %v5989, 2
    %v5991 = vadd.f32 %v5989, %v5990
    %v5992 = vrot.slane %v5991, 1
    %v5993 = vadd.f32 %v5991, %v5992
    %v5994 = vmul.f32 %v5993, %v2278
    %v5995 = vsel %vm1308, %v5186, 0.0
    %5996 = vadd.xlane.f32.xlu0 %v5995
    %v5997 = vpop.xlane.xlu0 %5996
    %v5998 = vmul.f32 %v5997, %v2278
    %v5999 = vrot.slane %v5998, 4
    %v6000 = vadd.f32 %v5998, %v5999
    %v6001 = vrot.slane %v6000, 2
    %v6002 = vadd.f32 %v6000, %v6001
    %v6003 = vrot.slane %v6002, 1
    %v6004 = vadd.f32 %v6002, %v6003
    %v6005 = vmul.f32 %v6004, %v2278
    %v6006 = vsel %vm1308, %v5972, 0.0
    %6007 = vadd.xlane.f32.xlu0 %v6006
    %v6008 = vpop.xlane.xlu0 %6007
    %v6009 = vmul.f32 %v6008, %v2278
    %v6010 = vrot.slane %v6009, 4
    %v6011 = vadd.f32 %v6009, %v6010
    %v6012 = vrot.slane %v6011, 2
    %v6013 = vadd.f32 %v6011, %v6012
    %v6014 = vrot.slane %v6013, 1
    %v6015 = vadd.f32 %v6013, %v6014
    %v6016 = vmul.f32 %v6015, %v2278
    %v6017 = vsel %vm2338, %v5983, %v5994
    %v6018 = vsel %vm2340, %v6017, %v6005
    %v6019 = vsel %vm2342, %v6018, %v6016
    %v6020 = vld [vmem:[%s93] sm:$0xf]
    %v6021 = vld [vmem:[#allocation19] sm:$0x1]
    %v6023 = vsel %vm2346, %v6019, 0
    %v6026 = vsel %vm2350, %v6020, 0
    %6028 = vmatprep.subr.mxu0 0.0
    %6029 = vmatpush1.msra.mxu0 %v6026
    %6030 = vmatprep.subr.mxu0 0.0
    %6031 = vmatpush1.msra.mxu0 0.0
    %6032 = vmatprep.subr.mxu0 0.0
    %6033 = vmatpush1.msra.mxu0 0.0
    %6034 = vmatprep.subr.mxu0 0.0
    %6035 = vmatpush1.msra.mxu0 0.0
    %6036 = vmatprep.subr.mxu0 0.0
    %6037 = vmatpush1.msra.mxu0 0.0
    %6038 = vmatprep.subr.mxu0 0.0
    %6039 = vmatpush1.msra.mxu0 0.0
    %6040 = vmatprep.subr.mxu0 0.0
    %6041 = vmatpush1.msra.mxu0 0.0
    %6042 = vmatprep.subr.mxu0 0.0
    %6043 = vmatpush1.msra.mxu0 0.0
    %6044 = vmatprep.subr.mxu0 0.0
    %6045 = vmatpush1.msra.mxu0 0.0
    %6046 = vmatprep.subr.mxu0 0.0
    %6047 = vmatpush1.msra.mxu0 0.0
    %6048 = vmatprep.subr.mxu0 0.0
    %6049 = vmatpush1.msra.mxu0 0.0
    %6050 = vmatprep.subr.mxu0 0.0
    %6051 = vmatpush1.msra.mxu0 0.0
    %6052 = vmatprep.subr.mxu0 0.0
    %6053 = vmatpush1.msra.mxu0 0.0
    %6054 = vmatprep.subr.mxu0 0.0
    %6055 = vmatpush1.msra.mxu0 0.0
    %6056 = vmatprep.subr.mxu0 0.0
    %6057 = vmatpush1.msra.mxu0 0.0
    %6058 = vmatprep.subr.mxu0 0.0
    %6059 = vmatpush1.msra.mxu0 0.0
    %6060 = vmatprep.subr.mxu0 0.0
    %6061 = vmatpush1.msra.mxu0 0.0
    %6062 = vmatprep.subr.mxu0 0.0
    %6063 = vmatpush1.msra.mxu0 0.0
    %6064 = vmatprep.subr.mxu0 0.0
    %6065 = vmatpush1.msra.mxu0 0.0
    %6066 = vmatprep.subr.mxu0 0.0
    %6067 = vmatpush1.msra.mxu0 0.0
    %6068 = vmatprep.subr.mxu0 0.0
    %6069 = vmatpush1.msra.mxu0 0.0
    %6070 = vmatprep.subr.mxu0 0.0
    %6071 = vmatpush1.msra.mxu0 0.0
    %6072 = vmatprep.subr.mxu0 0.0
    %6073 = vmatpush1.msra.mxu0 0.0
    %6074 = vmatprep.subr.mxu0 0.0
    %6075 = vmatpush1.msra.mxu0 0.0
    %6076 = vmatprep.subr.mxu0 0.0
    %6077 = vmatpush1.msra.mxu0 0.0
    %6078 = vmatprep.subr.mxu0 0.0
    %6079 = vmatpush1.msra.mxu0 0.0
    %6080 = vmatprep.subr.mxu0 0.0
    %6081 = vmatpush1.msra.mxu0 0.0
    %6082 = vmatprep.subr.mxu0 0.0
    %6083 = vmatpush1.msra.mxu0 0.0
    %6084 = vmatprep.subr.mxu0 0.0
    %6085 = vmatpush1.msra.mxu0 0.0
    %6086 = vmatprep.subr.mxu0 0.0
    %6087 = vmatpush1.msra.mxu0 0.0
    %6088 = vmatprep.subr.mxu0 0.0
    %6089 = vmatpush1.msra.mxu0 0.0
    %6090 = vmatprep.subr.mxu0 0.0
    %6091 = vmatpush1.msra.mxu0 0.0
    %6092 = vmatprep.mubr.f32.mxu0 0.0
    %6093 = vmatmul.mubr.f32.gmra.mrb[0].mxu0 %v6023
    %v6094 = vpop.f32.mrb[0].mxu0
    %v6095 = vadd.f32 %v6021, %v6094
    %v6096 = vpop.f32.mrb[0].mxu0
    %6097 = vdwg.mxu0
    %v6098 = vld [vmem:[%s97] sm:$0xff]
    %v6099 = vld [vmem:[%s97 + $0x8] sm:$0xff]
    %v6100 = vld [vmem:[%s97 + $0x10] sm:$0xf]
    %v6101 = vld [vmem:[#allocation20] sm:$0x1]
    %v6103 = vsel %vm2428, %v6095, 0
    %v6106 = vsel %vm2350, %v6100, 0
    %6108 = vmatprep.subr.mxu0 0.0
    %6109 = vmatpush1.msra.mxu0 %v6098
    %6110 = vmatprep.subr.mxu0 0.0
    %6111 = vmatpush1.msra.mxu0 %v6099
    %6112 = vmatprep.subr.mxu0 0.0
    %6113 = vmatpush1.msra.mxu0 %v6106
    %6114 = vmatprep.subr.mxu0 0.0
    %6115 = vmatpush1.msra.mxu0 0.0
    %6116 = vmatprep.subr.mxu0 0.0
    %6117 = vmatpush1.msra.mxu0 0.0
    %6118 = vmatprep.subr.mxu0 0.0
    %6119 = vmatpush1.msra.mxu0 0.0
    %6120 = vmatprep.subr.mxu0 0.0
    %6121 = vmatpush1.msra.mxu0 0.0
    %6122 = vmatprep.subr.mxu0 0.0
    %6123 = vmatpush1.msra.mxu0 0.0
    %6124 = vmatprep.subr.mxu0 0.0
    %6125 = vmatpush1.msra.mxu0 0.0
    %6126 = vmatprep.subr.mxu0 0.0
    %6127 = vmatpush1.msra.mxu0 0.0
    %6128 = vmatprep.subr.mxu0 0.0
    %6129 = vmatpush1.msra.mxu0 0.0
    %6130 = vmatprep.subr.mxu0 0.0
    %6131 = vmatpush1.msra.mxu0 0.0
    %6132 = vmatprep.subr.mxu0 0.0
    %6133 = vmatpush1.msra.mxu0 0.0
    %6134 = vmatprep.subr.mxu0 0.0
    %6135 = vmatpush1.msra.mxu0 0.0
    %6136 = vmatprep.subr.mxu0 0.0
    %6137 = vmatpush1.msra.mxu0 0.0
    %6138 = vmatprep.subr.mxu0 0.0
    %6139 = vmatpush1.msra.mxu0 0.0
    %6140 = vmatprep.subr.mxu0 0.0
    %6141 = vmatpush1.msra.mxu0 0.0
    %6142 = vmatprep.subr.mxu0 0.0
    %6143 = vmatpush1.msra.mxu0 0.0
    %6144 = vmatprep.subr.mxu0 0.0
    %6145 = vmatpush1.msra.mxu0 0.0
    %6146 = vmatprep.subr.mxu0 0.0
    %6147 = vmatpush1.msra.mxu0 0.0
    %6148 = vmatprep.subr.mxu0 0.0
    %6149 = vmatpush1.msra.mxu0 0.0
    %6150 = vmatprep.subr.mxu0 0.0
    %6151 = vmatpush1.msra.mxu0 0.0
    %6152 = vmatprep.subr.mxu0 0.0
    %6153 = vmatpush1.msra.mxu0 0.0
    %6154 = vmatprep.subr.mxu0 0.0
    %6155 = vmatpush1.msra.mxu0 0.0
    %6156 = vmatprep.subr.mxu0 0.0
    %6157 = vmatpush1.msra.mxu0 0.0
    %6158 = vmatprep.subr.mxu0 0.0
    %6159 = vmatpush1.msra.mxu0 0.0
    %6160 = vmatprep.subr.mxu0 0.0
    %6161 = vmatpush1.msra.mxu0 0.0
    %6162 = vmatprep.subr.mxu0 0.0
    %6163 = vmatpush1.msra.mxu0 0.0
    %6164 = vmatprep.subr.mxu0 0.0
    %6165 = vmatpush1.msra.mxu0 0.0
    %6166 = vmatprep.subr.mxu0 0.0
    %6167 = vmatpush1.msra.mxu0 0.0
    %6168 = vmatprep.subr.mxu0 0.0
    %6169 = vmatpush1.msra.mxu0 0.0
    %6170 = vmatprep.subr.mxu0 0.0
    %6171 = vmatpush1.msra.mxu0 0.0
    %6172 = vmatprep.mubr.f32.mxu0 0.0
    %6173 = vmatmul.mubr.f32.gmra.mrb[0].mxu0 %v6103
    %v6174 = vpop.f32.mrb[0].mxu0
    %v6175 = vadd.f32 %v6101, %v6174
    %v6176 = vpop.f32.mrb[0].mxu0
    %6177 = vdwg.mxu0
    %v6178 = vxor.u32 %v6175, 2147483648
    %v6179 = vmul.f32 %v6178, 1.442695
    %v6180 = vpow.pop %v6179
    %v6181 = vadd.f32 %v6180, 1.0
    %v6182 = vrcp.pop %v6181
    %v6183 = vmul.f32 1.0, %v6182
    %s6184 = sld [smem:[#allocation22]]
    %s6185 = vtos %v6183
    %v6186 = vstv %s6185
    %v6187 = vmul.f32 %v6186, %v4791
    %v6188 = vmax.f32 %v6187, 0.0
    %v6189 = vstv %s6184
    %v6190 = vmul.f32 %v6189, %v6188
    %v6191 = vadd.f32 %v6190, 0.0
    %s6192 = sld [smem:[#allocation22 + $0x1]]
    %6193 = vrot.lane.b32.xlu0 %v6183, 127
    %v6194 = vpop.permute.xlu0 %6193
    %s6195 = vtos %v6194
    %v6196 = vstv %s6195
    %v6197 = vmul.f32 %v6196, %v5579
    %v6198 = vmax.f32 %v6197, 0.0
    %v6199 = vstv %s6192
    %v6200 = vmul.f32 %v6199, %v6198
    %v6201 = vadd.f32 %v6191, %v6200
    %s6202 = sld [smem:[#allocation22 + $0x2]]
    %6203 = vrot.lane.b32.xlu0 %v6183, 126
    %v6204 = vpop.permute.xlu0 %6203
    %s6205 = vtos %v6204
    %v6206 = vstv %s6205
    %v6207 = vmul.f32 %v6206, %v5186
    %v6208 = vmax.f32 %v6207, 0.0
    %v6209 = vstv %s6202
    %v6210 = vmul.f32 %v6209, %v6208
    %v6211 = vadd.f32 %v6201, %v6210
    %s6212 = sld [smem:[#allocation22 + $0x3]]
    %6213 = vrot.lane.b32.xlu0 %v6183, 125
    %v6214 = vpop.permute.xlu0 %6213
    %s6215 = vtos %v6214
    %v6216 = vstv %s6215
    %v6217 = vmul.f32 %v6216, %v5972
    %v6218 = vmax.f32 %v6217, 0.0
    %v6219 = vstv %s6212
    %v6220 = vmul.f32 %v6219, %v6218
    %v6221 = vadd.f32 %v6211, %v6220
    %s6222 = sld [smem:[#allocation4]]
    %v6223 = vstv %s6222
    %v6224 = vadd.f32 %v6221, %v6223
    %s6225 = sld [smem:[#allocation5]]
    %s6226 = sld [smem:[#allocation5 + $0x1]]
    %v6227 = vstv %s6225
    %v6228 = vmul.f32 %v6227, %v2567
    %v6229 = vstv %s6226
    %v6230 = vmul.f32 %v6229, %v4396
    %v6231 = vadd.f32 %v6228, %v6230
    %v6232 = vmul.f32 %v6227, %v2568
    %v6233 = vmul.f32 %v6229, %v6224
    %v6234 = vadd.f32 %v6232, %v6233
    %v6236 = vsel %vm1308, %v6231, 0
    %v6239 = vsel %vm1308, %v6234, 0
    %6241 = vmatprep.subr.mxu0 0.0
    %6242 = vmatpush1.xpose.msra.mxu0 %v6239
    %6243 = vmatprep.subr.mxu0 0.0
    %6244 = vmatpush1.xpose.msra.mxu0 0.0
    %6245 = vmatprep.subr.mxu0 0.0
    %6246 = vmatpush1.xpose.msra.mxu0 0.0
    %6247 = vmatprep.subr.mxu0 0.0
    %6248 = vmatpush1.xpose.msra.mxu0 0.0
    %6249 = vmatprep.subr.mxu0 0.0
    %6250 = vmatpush1.xpose.msra.mxu0 0.0
    %6251 = vmatprep.subr.mxu0 0.0
    %6252 = vmatpush1.xpose.msra.mxu0 0.0
    %6253 = vmatprep.subr.mxu0 0.0
    %6254 = vmatpush1.xpose.msra.mxu0 0.0
    %6255 = vmatprep.subr.mxu0 0.0
    %6256 = vmatpush1.xpose.msra.mxu0 0.0
    %6257 = vmatprep.subr.mxu0 0.0
    %6258 = vmatpush1.xpose.msra.mxu0 0.0
    %6259 = vmatprep.subr.mxu0 0.0
    %6260 = vmatpush1.xpose.msra.mxu0 0.0
    %6261 = vmatprep.subr.mxu0 0.0
    %6262 = vmatpush1.xpose.msra.mxu0 0.0
    %6263 = vmatprep.subr.mxu0 0.0
    %6264 = vmatpush1.xpose.msra.mxu0 0.0
    %6265 = vmatprep.subr.mxu0 0.0
    %6266 = vmatpush1.xpose.msra.mxu0 0.0
    %6267 = vmatprep.subr.mxu0 0.0
    %6268 = vmatpush1.xpose.msra.mxu0 0.0
    %6269 = vmatprep.subr.mxu0 0.0
    %6270 = vmatpush1.xpose.msra.mxu0 0.0
    %6271 = vmatprep.subr.mxu0 0.0
    %6272 = vmatpush1.xpose.msra.mxu0 0.0
    %6273 = vmatprep.subr.mxu0 0.0
    %6274 = vmatpush1.xpose.msra.mxu0 0.0
    %6275 = vmatprep.subr.mxu0 0.0
    %6276 = vmatpush1.xpose.msra.mxu0 0.0
    %6277 = vmatprep.subr.mxu0 0.0
    %6278 = vmatpush1.xpose.msra.mxu0 0.0
    %6279 = vmatprep.subr.mxu0 0.0
    %6280 = vmatpush1.xpose.msra.mxu0 0.0
    %6281 = vmatprep.subr.mxu0 0.0
    %6282 = vmatpush1.xpose.msra.mxu0 0.0
    %6283 = vmatprep.subr.mxu0 0.0
    %6284 = vmatpush1.xpose.msra.mxu0 0.0
    %6285 = vmatprep.subr.mxu0 0.0
    %6286 = vmatpush1.xpose.msra.mxu0 0.0
    %6287 = vmatprep.subr.mxu0 0.0
    %6288 = vmatpush1.xpose.msra.mxu0 0.0
    %6289 = vmatprep.subr.mxu0 0.0
    %6290 = vmatpush1.xpose.msra.mxu0 0.0
    %6291 = vmatprep.subr.mxu0 0.0
    %6292 = vmatpush1.xpose.msra.mxu0 0.0
    %6293 = vmatprep.subr.mxu0 0.0
    %6294 = vmatpush1.xpose.msra.mxu0 0.0
    %6295 = vmatprep.subr.mxu0 0.0
    %6296 = vmatpush1.xpose.msra.mxu0 0.0
    %6297 = vmatprep.subr.mxu0 0.0
    %6298 = vmatpush1.xpose.msra.mxu0 0.0
    %6299 = vmatprep.subr.mxu0 0.0
    %6300 = vmatpush1.xpose.msra.mxu0 0.0
    %6301 = vmatprep.subr.mxu0 0.0
    %6302 = vmatpush1.xpose.msra.mxu0 0.0
    %6303 = vmatprep.subr.mxu0 0.0
    %6304 = vmatpush1.xpose.msra.mxu0 0.0
    %6305 = vmatprep.mubr.f32.mxu0 0.0
    %6306 = vmatmul.mubr.f32.gmra.mrb[0].mxu0 %v6236
    %v6307 = vpop.f32.mrb[0].mxu0
    %v6308 = vadd.f32 0.0, %v6307
    %v6309 = vpop.f32.mrb[0].mxu0
    %6310 = vdwg.mxu0
    %v6311 = vxor.u32 %v6308, 2147483648
    %v6312 = vmul.f32 %v6311, 1.442695
    %v6313 = vpow.pop %v6312
    %v6314 = vadd.f32 %v6313, 1.0
    %v6315 = vrcp.pop %v6314
    %v6316 = vmul.f32 1.0, %v6315
    %6317 = vst.msk [vmem:[#allocation23] sm:$0xff] %vm1308, %v6316
    // Predicated region
    $region250: #{model_forward.1} parent=1 // pred_check
      _
    $region251: #{model_forward.1} parent=1 // pred_check_branch
      %6319 = sbr.rel (0) target = $region253
    $region252: #{model_forward.1} parent=1 // pred_region
      %s6321 = ssub.s32 128, 128
      %6322 = vsyncadd [#allocation7], %s6321
      %s6324 = sshll.u32 [#allocation23], 4
      %s6325 = int_to_ptr.vmem [resolvable:$true] %s6324
      %6327 = dma.vmem_to_hbm [thread:$0]  %s6325, 128, %s105, [#allocation7]
    $region253: #{model_forward.1} parent=1 // pred_fallthru
      _
    // Predicated region
    $region254: #{model_forward.1} parent=1 // pred_check
      _
    $region255: #{model_forward.1} parent=1 // pred_check_branch
      %6329 = sbr.rel (0) target = $region257
    $region256: #{model_forward.1} parent=1 // pred_region
      %6330 = dma.done [#allocation7], 128
    $region257: #{model_forward.1} parent=1 // pred_fallthru
      _
    %6331 = vsyncpa [#allocation6], 1
    %6332 = vsyncpa [#allocation12], 1
    %6333 = vsyncpa [#allocation16], 1
    %6334 = vsyncpa [#allocation21], 1
    %6335 = vsyncpa [#allocation7], 1
    %6336 = vsyncpa [#allocation8], 1
    %6337 = vsyncpa [#allocation18], 1
    %6338 = vsyncpa [#allocation9], 1

</llo_original>
